<compile_context>
chip_gen: v6e
topology: v6e:2x2x1
jax: 0.10.0
libtpu: 0.0.40
codegen_flags: <defaults>
</compile_context>

<pallas_src>
import jax
import jax.numpy as jnp
from jax import lax
from jax.experimental import pallas as pl
from jax.experimental.pallas import tpu as pltpu

KSIZE = 7
PAD = KSIZE // 2
EPS_RMS = 1e-6
MATMUL_DTYPE = jnp.bfloat16   # set to jnp.float32 for bit-closer parity with fp32 torch


def _rup(n, m=128):
    return ((n + m - 1) // m) * m


def _mish(x):
    # mish(x) = x * tanh(softplus(x)) = x * ((1+e^x)^2 - 1) / ((1+e^x)^2 + 1)
    # One EUP exp + one approx reciprocal; mish(0) == 0 so padded lanes stay zero.
    t = jnp.exp(jnp.minimum(x, 20.0))
    u = (1.0 + t) * (1.0 + t)
    return x * (u - 1.0) * pl.reciprocal(u + 1.0, approx=True)


# --------------------------- fused Blocks kernel ---------------------------
def _make_blocks_kernel(H, W, C, HI_P):
    N = H * W
    NP = (H + 2 * PAD) * W        # flat length of the H-zero-padded c slab

    def kernel(x_ref, wn_ref, w1g_ref, w1v_ref, b1g_ref, b1v_ref,
               wk_ref, bk_ref, w2i_ref, w2c_ref, b2_ref, o_ref):
        C_P = wn_ref.shape[-1]
        l = pl.program_id(1)

        # Residual stream lives in the resident output block (same block index for all l),
        # initialised from the input at the first block of this batch element.
        @pl.when(l == 0)
        def _init():
            o_ref[0] = x_ref[0]

        x = o_ref[0]                                              # (N, C_P) f32

        # ---- RMSNorm (f32; statistics over the real C channels; padded lanes are 0) ----
        ms = jnp.sum(x * x, axis=-1, keepdims=True) * (1.0 / C)
        y = x * lax.rsqrt(ms + EPS_RMS) * wn_ref[0]
        yc = y.astype(w1g_ref.dtype)

        # ---- fc1: two lane-dense matmuls (gate | value), groups padded to 128 ----
        g = jnp.dot(yc, w1g_ref[0], preferred_element_type=jnp.float32) + b1g_ref[0]
        v = jnp.dot(yc, w1v_ref[0], preferred_element_type=jnp.float32) + b1v_ref[0]

        # ---- 7x7 depthwise conv on the c branch (128-aligned lane slice of `v`) ----
        # Zero-pad along H only (tile-aligned sublane concat: PAD*W is a multiple of 8
        # when W%8==0); handle the 7 column shifts with XLU rolls of the flat slab, with
        # the W-boundary masks folded into the taps (wrap contamination only ever lands
        # in masked-out columns).
        c_flat = v[:, HI_P:]                                      # (N, C_P)
        zrows = jnp.zeros((PAD * W, C_P), jnp.float32)
        pad_flat = jnp.concatenate([zrows, c_flat, zrows], axis=0)  # (NP, C_P)
        wk_l = wk_ref[0]                                          # (49, C_P) taps
        w_idx = lax.broadcasted_iota(jnp.int32, (W, 1), 0)

        acc = None
        for dx in range(KSIZE):
            dxo = dx - PAD
            col = pltpu.roll(pad_flat, (-dxo) % NP, axis=0) if dxo else pad_flat
            col3 = col.reshape(H + 2 * PAD, W, C_P)
            cmask = ((w_idx + dxo >= 0) & (w_idx + dxo < W)).astype(jnp.float32)  # (W,1)
            for dy in range(KSIZE):
                k = dy * KSIZE + dx
                tap = wk_l[k:k + 1, :] * cmask                    # (W, C_P), mask folded
                term = col3[dy:dy + H] * tap                      # leading-dim slice
                acc = term if acc is None else acc + term
        conv = acc.reshape(N, C_P) + bk_ref[0]

        # ---- Mish gating + fc2 (row split at the 128-aligned HI_P boundary) + residual ----
        mg = _mish(g)
        act_i = (mg[:, :HI_P] * v[:, :HI_P]).astype(w2i_ref.dtype)
        act_c = (mg[:, HI_P:] * conv).astype(w2c_ref.dtype)
        x = (jnp.dot(act_i, w2i_ref[0], preferred_element_type=jnp.float32)
             + jnp.dot(act_c, w2c_ref[0], preferred_element_type=jnp.float32)
             + b2_ref[0] + x)
        o_ref[0] = x

    return kernel


_WEIGHT_ORDER = ("wn", "w1g", "w1v", "b1g", "b1v", "wk", "bk", "w2i", "w2c", "b2")


def blocks_forward(x_nchw, packed):
    """x_nchw: (B, C, H, W) f32.  packed: dict of per-block-stacked, 128-padded weights."""
    B, C, H, W = x_nchw.shape
    N = H * W
    n_block = packed["wn"].shape[0]
    C_P = packed["wn"].shape[-1]
    HI_P = packed["w2i"].shape[1]
    weights = [packed[k] for k in _WEIGHT_ORDER]

    x_seq = x_nchw.reshape(B, C, N).transpose(0, 2, 1)            # (B, N, C)
    x_seq = jnp.pad(x_seq, ((0, 0), (0, 0), (0, C_P - C)))        # lane-dense residual

    def wspec(arr):                                               # stream block l's weights
        zeros = (0,) * (arr.ndim - 1)
        return pl.BlockSpec((1,) + arr.shape[1:], lambda b, l: (l,) + zeros)

    seq_spec = pl.BlockSpec((1, N, C_P), lambda b, l: (b, 0, 0))

    out = pl.pallas_call(
        _make_blocks_kernel(H, W, C, HI_P),
        out_shape=jax.ShapeDtypeStruct((B, N, C_P), jnp.float32),
        grid=(B, n_block),
        in_specs=[seq_spec] + [wspec(w) for w in weights],
        out_specs=seq_spec,
        input_output_aliases={0: 0},                              # residual in == out buffer
        compiler_params=pltpu.CompilerParams(
            dimension_semantics=("parallel", "arbitrary"),
            vmem_limit_bytes=48 * 1024 * 1024),
    )(x_seq, *weights)

    return out[..., :C].transpose(0, 2, 1).reshape(B, C, H, W)


# --------------------------- parameters ---------------------------
def init_block_params(key, dim):
    """Synthetic per-block parameters (torch module layout, row-major (in, out) weights)."""
    hidden = int(8 / 3 * dim)
    ks = jax.random.split(key, 7)
    nrm = lambda k, shape, s=0.02: (s * jax.random.normal(k, shape)).astype(jnp.float32)
    return {
        "wn": 1.0 + nrm(ks[0], (1, dim), 0.1),          # RMSNorm weight
        "w1": nrm(ks[1], (dim, 2 * hidden)),            # fc1 (in, out)
        "b1": nrm(ks[2], (1, 2 * hidden)),
        "wk": nrm(ks[3], (KSIZE, KSIZE, dim)),          # depthwise taps [ky, kx, C]
        "bk": nrm(ks[4], (1, dim)),
        "w2": nrm(ks[5], (hidden, dim)),                # fc2 (in, out)
        "b2": nrm(ks[6], (1, dim)),
    }


def pack_params(raw_list, dim):
    """Zero-pad every channel group to a multiple of 128 lanes, re-lay fc1 as
    [g_i|pad|g_c|pad] / [i|pad|c|pad], split fc2 rows at the padded HI boundary,
    flatten the conv taps to (49, C_P), stack blocks along a leading axis, and cast
    matmul weights to MATMUL_DTYPE."""
    hidden = int(8 / 3 * dim)
    hi = hidden - dim
    C_P, HI_P = _rup(dim), _rup(hi)
    HID_P = HI_P + C_P

    def one(p):
        def fc1_half(w_cols, b_cols):
            wg = jnp.zeros((C_P, HID_P), jnp.float32)
            wg = wg.at[:dim, :hi].set(w_cols[:, :hi])
            wg = wg.at[:dim, HI_P:HI_P + dim].set(w_cols[:, hi:])
            bg = jnp.zeros((1, HID_P), jnp.float32)
            bg = bg.at[:, :hi].set(b_cols[:, :hi])
            bg = bg.at[:, HI_P:HI_P + dim].set(b_cols[:, hi:])
            return wg, bg

        w1g, b1g = fc1_half(p["w1"][:, :hidden], p["b1"][:, :hidden])
        w1v, b1v = fc1_half(p["w1"][:, hidden:], p["b1"][:, hidden:])
        w2i = jnp.zeros((HI_P, C_P), jnp.float32).at[:hi, :dim].set(p["w2"][:hi, :])
        w2c = jnp.zeros((C_P, C_P), jnp.float32).at[:dim, :dim].set(p["w2"][hi:, :])
        return {
            "wn":  jnp.zeros((1, C_P), jnp.float32).at[:, :dim].set(p["wn"]),
            "w1g": w1g.astype(MATMUL_DTYPE), "w1v": w1v.astype(MATMUL_DTYPE),
            "b1g": b1g, "b1v": b1v,
            "wk":  jnp.zeros((KSIZE * KSIZE, C_P), jnp.float32)
                      .at[:, :dim].set(p["wk"].reshape(KSIZE * KSIZE, dim)),
            "bk":  jnp.zeros((1, C_P), jnp.float32).at[:, :dim].set(p["bk"]),
            "w2i": w2i.astype(MATMUL_DTYPE), "w2c": w2c.astype(MATMUL_DTYPE),
            "b2":  jnp.zeros((1, C_P), jnp.float32).at[:, :dim].set(p["b2"]),
        }

    per_block = [one(p) for p in raw_list]
    return {k: jnp.stack([pb[k] for pb in per_block], axis=0) for k in per_block[0]}


# --------------------------- pure-JAX reference (for self-check) ---------------------------
def blocks_reference(x_nchw, raw_list):
    B, C, H, W = x_nchw.shape
    N = H * W
    x = x_nchw.reshape(B, C, N).transpose(0, 2, 1)
    mish = lambda v: v * jnp.tanh(jax.nn.softplus(v))
    for p in raw_list:
        hidden = p["w2"].shape[0]
        y = x * lax.rsqrt(jnp.mean(x * x, axis=-1, keepdims=True) + EPS_RMS) * p["wn"]
        z = jnp.dot(y, p["w1"], precision=lax.Precision.HIGHEST) + p["b1"]
        g = z[..., :hidden]
        i = z[..., hidden:2 * hidden - C]
        c = z[..., 2 * hidden - C:]
        c_pad = jnp.pad(c.reshape(B, H, W, C), ((0, 0), (PAD, PAD), (PAD, PAD), (0, 0)))
        conv = sum(c_pad[:, dy:dy + H, dx:dx + W, :] * p["wk"][dy, dx]
                   for dy in range(KSIZE) for dx in range(KSIZE)) + p["bk"]
        act = mish(g) * jnp.concatenate([i, conv.reshape(B, N, C)], axis=-1)
        x = jnp.dot(act, p["w2"], precision=lax.Precision.HIGHEST) + p["b2"] + x
    return x.transpose(0, 2, 1).reshape(B, C, H, W)


if __name__ == "__main__":
    key = jax.random.PRNGKey(0)
    dim, n_block = 32, 2
    B, H, W = 2, 16, 16

    kx, kp = jax.random.split(key)
    x = jax.random.normal(kx, (B, dim, H, W), jnp.float32)
    raw = [init_block_params(k, dim) for k in jax.random.split(kp, n_block)]
    packed = pack_params(raw, dim)

    fwd = jax.jit(lambda xs: blocks_forward(xs, packed))
    out = fwd(x)
    jax.block_until_ready(out)

    assert out.shape == (B, dim, H, W) and out.dtype == jnp.float32
    ref = blocks_reference(x, raw)
    err = float(jnp.max(jnp.abs(out - ref)))
    assert err < 2e-2, f"kernel/reference mismatch: max abs err = {err}"
    print("KERNEL_OK")
</pallas_src>

<mosaic_0001>
module attributes {stable_mosaic.version = 11 : i64} {
  func.func @kernel(%arg0: i32, %arg1: i32, %arg2: memref<1x256x128xf32, #tpu.memory_space<vmem>>, %arg3: memref<1x1x128xf32, #tpu.memory_space<vmem>>, %arg4: memref<1x128x256xbf16, #tpu.memory_space<vmem>>, %arg5: memref<1x128x256xbf16, #tpu.memory_space<vmem>>, %arg6: memref<1x1x256xf32, #tpu.memory_space<vmem>>, %arg7: memref<1x1x256xf32, #tpu.memory_space<vmem>>, %arg8: memref<1x49x128xf32, #tpu.memory_space<vmem>>, %arg9: memref<1x1x128xf32, #tpu.memory_space<vmem>>, %arg10: memref<1x128x128xbf16, #tpu.memory_space<vmem>>, %arg11: memref<1x128x128xbf16, #tpu.memory_space<vmem>>, %arg12: memref<1x1x128xf32, #tpu.memory_space<vmem>>, %arg13: memref<1x256x128xf32, #tpu.memory_space<vmem>>) attributes {dimension_semantics = [#tpu.dimension_semantics<parallel>, #tpu.dimension_semantics<arbitrary>], iteration_bounds = array<i64: 2, 2>, scalar_prefetch = 0 : i64, scratch_operands = 0 : i64, tpu.core_type = #tpu.core_type<tc>, window_params = [{transform_indices = @transform_0, window_bounds = array<i64: 1, 256, 128>}, {transform_indices = @transform_1, window_bounds = array<i64: 1, 1, 128>}, {transform_indices = @transform_2, window_bounds = array<i64: 1, 128, 256>}, {transform_indices = @transform_3, window_bounds = array<i64: 1, 128, 256>}, {transform_indices = @transform_4, window_bounds = array<i64: 1, 1, 256>}, {transform_indices = @transform_5, window_bounds = array<i64: 1, 1, 256>}, {transform_indices = @transform_6, window_bounds = array<i64: 1, 49, 128>}, {transform_indices = @transform_7, window_bounds = array<i64: 1, 1, 128>}, {transform_indices = @transform_8, window_bounds = array<i64: 1, 128, 128>}, {transform_indices = @transform_9, window_bounds = array<i64: 1, 128, 128>}, {transform_indices = @transform_10, window_bounds = array<i64: 1, 1, 128>}, {transform_indices = @transform_11, window_bounds = array<i64: 1, 256, 128>}]} {
    %c0_i32 = arith.constant 0 : i32
    %0 = arith.cmpi eq, %arg1, %c0_i32 : i32
    %1 = arith.extui %0 : i1 to i32
    %c0_i32_0 = arith.constant 0 : i32
    %2 = arith.cmpi ne, %1, %c0_i32_0 : i32
    scf.if %2 {
      %c0_72 = arith.constant 0 : index
      %c0_73 = arith.constant 0 : index
      %c0_74 = arith.constant 0 : index
      %612 = vector.load %arg2[%c0_72, %c0_73, %c0_74] : memref<1x256x128xf32, #tpu.memory_space<vmem>>, vector<1x256x128xf32>
      %613 = vector.shape_cast %612 : vector<1x256x128xf32> to vector<256x128xf32>
      %c0_75 = arith.constant 0 : index
      %c0_76 = arith.constant 0 : index
      %c0_77 = arith.constant 0 : index
      %614 = vector.load %arg13[%c0_75, %c0_76, %c0_77] : memref<1x256x128xf32, #tpu.memory_space<vmem>>, vector<1x256x128xf32>
      %615 = vector.shape_cast %614 : vector<1x256x128xf32> to vector<256x128xf32>
      %616 = vector.shape_cast %613 : vector<256x128xf32> to vector<1x256x128xf32>
      tpu.vector_store %arg13[%c0_75, %c0_76, %c0_77], %616 {strides = array<i32>} : memref<1x256x128xf32, #tpu.memory_space<vmem>>, vector<1x256x128xf32>,
    } else {
    }
    %c0 = arith.constant 0 : index
    %c0_1 = arith.constant 0 : index
    %c0_2 = arith.constant 0 : index
    %3 = vector.load %arg13[%c0, %c0_1, %c0_2] : memref<1x256x128xf32, #tpu.memory_space<vmem>>, vector<1x256x128xf32>
    %4 = vector.shape_cast %3 : vector<1x256x128xf32> to vector<256x128xf32>
    %5 = arith.mulf %4, %4 : vector<256x128xf32>
    %cst = arith.constant dense<0.000000e+00> : vector<256xf32>
    %6 = vector.multi_reduction <add>, %5, %cst [1] : vector<256x128xf32> to vector<256xf32>
    %7 = vector.shape_cast %6 : vector<256xf32> to vector<256x1xf32>
    %cst_3 = arith.constant 3.125000e-02 : f32
    %8 = vector.broadcast %cst_3 : f32 to vector<256x1xf32>
    %9 = arith.mulf %7, %8 : vector<256x1xf32>
    %cst_4 = arith.constant 9.99999997E-7 : f32
    %10 = vector.broadcast %cst_4 : f32 to vector<256x1xf32>
    %11 = arith.addf %9, %10 : vector<256x1xf32>
    %12 = math.rsqrt %11 : vector<256x1xf32>
    %13 = vector.broadcast %12 : vector<256x1xf32> to vector<256x128xf32>
    %14 = arith.mulf %4, %13 : vector<256x128xf32>
    %c0_5 = arith.constant 0 : index
    %c0_6 = arith.constant 0 : index
    %c0_7 = arith.constant 0 : index
    %15 = vector.load %arg3[%c0_5, %c0_6, %c0_7] : memref<1x1x128xf32, #tpu.memory_space<vmem>>, vector<1x1x128xf32>
    %16 = vector.shape_cast %15 : vector<1x1x128xf32> to vector<1x128xf32>
    %17 = vector.broadcast %16 : vector<1x128xf32> to vector<256x128xf32>
    %18 = arith.mulf %14, %17 : vector<256x128xf32>
    %19 = arith.truncf %18 : vector<256x128xf32> to vector<256x128xbf16>
    %c0_8 = arith.constant 0 : index
    %c0_9 = arith.constant 0 : index
    %c0_10 = arith.constant 0 : index
    %20 = vector.load %arg4[%c0_8, %c0_9, %c0_10] : memref<1x128x256xbf16, #tpu.memory_space<vmem>>, vector<1x128x256xbf16>
    %21 = vector.shape_cast %20 : vector<1x128x256xbf16> to vector<128x256xbf16>
    %cst_11 = arith.constant dense<0.000000e+00> : vector<256x256xf32>
    %22 = tpu.matmul %19, %21, %cst_11 {dimension_numbers = #tpu.dot_dimension_numbers<[1], [0], [0], [1], [0, 0, 1, 1], [], []>} : vector<256x128xbf16>, vector<128x256xbf16>, vector<256x256xf32> -> vector<256x256xf32>
    %c0_12 = arith.constant 0 : index
    %c0_13 = arith.constant 0 : index
    %c0_14 = arith.constant 0 : index
    %23 = vector.load %arg6[%c0_12, %c0_13, %c0_14] : memref<1x1x256xf32, #tpu.memory_space<vmem>>, vector<1x1x256xf32>
    %24 = vector.shape_cast %23 : vector<1x1x256xf32> to vector<1x256xf32>
    %25 = vector.broadcast %24 : vector<1x256xf32> to vector<256x256xf32>
    %26 = arith.addf %22, %25 : vector<256x256xf32>
    %c0_15 = arith.constant 0 : index
    %c0_16 = arith.constant 0 : index
    %c0_17 = arith.constant 0 : index
    %27 = vector.load %arg5[%c0_15, %c0_16, %c0_17] : memref<1x128x256xbf16, #tpu.memory_space<vmem>>, vector<1x128x256xbf16>
    %28 = vector.shape_cast %27 : vector<1x128x256xbf16> to vector<128x256xbf16>
    %cst_18 = arith.constant dense<0.000000e+00> : vector<256x256xf32>
    %29 = tpu.matmul %19, %28, %cst_18 {dimension_numbers = #tpu.dot_dimension_numbers<[1], [0], [0], [1], [0, 0, 1, 1], [], []>} : vector<256x128xbf16>, vector<128x256xbf16>, vector<256x256xf32> -> vector<256x256xf32>
    %c0_19 = arith.constant 0 : index
    %c0_20 = arith.constant 0 : index
    %c0_21 = arith.constant 0 : index
    %30 = vector.load %arg7[%c0_19, %c0_20, %c0_21] : memref<1x1x256xf32, #tpu.memory_space<vmem>>, vector<1x1x256xf32>
    %31 = vector.shape_cast %30 : vector<1x1x256xf32> to vector<1x256xf32>
    %32 = vector.broadcast %31 : vector<1x256xf32> to vector<256x256xf32>
    %33 = arith.addf %29, %32 : vector<256x256xf32>
    %34 = vector.extract_strided_slice %33 {offsets = [0, 128], sizes = [256, 128], strides = [1, 1]} : vector<256x256xf32> to vector<256x128xf32>
    %cst_22 = arith.constant 0.000000e+00 : f32
    %35 = vector.broadcast %cst_22 : f32 to vector<48x128xf32>
    %36 = tpu.concatenate %35, %34, %35 in 0 : vector<48x128xf32>, vector<256x128xf32>, vector<48x128xf32> -> vector<352x128xf32>
    %c0_23 = arith.constant 0 : index
    %c0_24 = arith.constant 0 : index
    %c0_25 = arith.constant 0 : index
    %37 = vector.load %arg8[%c0_23, %c0_24, %c0_25] : memref<1x49x128xf32, #tpu.memory_space<vmem>>, vector<1x49x128xf32>
    %38 = vector.shape_cast %37 : vector<1x49x128xf32> to vector<49x128xf32>
    %39 = tpu.iota {dimensions = array<i32: 0>} : vector<16x1xi32>
    %c3_i32 = arith.constant 3 : i32
    %40 = tpu.dynamic_rotate %36 by %c3_i32 dim 0 : vector<352x128xf32>, i32 -> vector<352x128xf32>
    %41 = vector.shape_cast %40 : vector<352x128xf32> to vector<22x16x128xf32>
    %c-3_i32 = arith.constant -3 : i32
    %42 = vector.broadcast %c-3_i32 : i32 to vector<16x1xi32>
    %43 = arith.addi %39, %42 : vector<16x1xi32>
    %c0_i32_26 = arith.constant 0 : i32
    %44 = vector.broadcast %c0_i32_26 : i32 to vector<16x1xi32>
    %45 = arith.cmpi sge, %43, %44 : vector<16x1xi32>
    %c-3_i32_27 = arith.constant -3 : i32
    %46 = vector.broadcast %c-3_i32_27 : i32 to vector<16x1xi32>
    %47 = arith.addi %39, %46 : vector<16x1xi32>
    %c16_i32 = arith.constant 16 : i32
    %48 = vector.broadcast %c16_i32 : i32 to vector<16x1xi32>
    %49 = arith.cmpi slt, %47, %48 : vector<16x1xi32>
    %50 = arith.andi %45, %49 : vector<16x1xi1>
    %51 = arith.extui %50 : vector<16x1xi1> to vector<16x1xi32>
    %52 = arith.sitofp %51 : vector<16x1xi32> to vector<16x1xf32>
    %53 = vector.extract_strided_slice %38 {offsets = [0, 0], sizes = [1, 128], strides = [1, 1]} : vector<49x128xf32> to vector<1x128xf32>
    %54 = vector.broadcast %53 : vector<1x128xf32> to vector<16x128xf32>
    %55 = vector.broadcast %52 : vector<16x1xf32> to vector<16x128xf32>
    %56 = arith.mulf %54, %55 : vector<16x128xf32>
    %57 = vector.extract_strided_slice %41 {offsets = [0, 0, 0], sizes = [16, 16, 128], strides = [1, 1, 1]} : vector<22x16x128xf32> to vector<16x16x128xf32>
    %58 = vector.shape_cast %56 : vector<16x128xf32> to vector<1x16x128xf32>
    %59 = vector.broadcast %58 : vector<1x16x128xf32> to vector<16x16x128xf32>
    %60 = arith.mulf %57, %59 : vector<16x16x128xf32>
    %61 = vector.extract_strided_slice %38 {offsets = [7, 0], sizes = [1, 128], strides = [1, 1]} : vector<49x128xf32> to vector<1x128xf32>
    %62 = vector.broadcast %61 : vector<1x128xf32> to vector<16x128xf32>
    %63 = vector.broadcast %52 : vector<16x1xf32> to vector<16x128xf32>
    %64 = arith.mulf %62, %63 : vector<16x128xf32>
    %65 = vector.extract_strided_slice %41 {offsets = [1, 0, 0], sizes = [16, 16, 128], strides = [1, 1, 1]} : vector<22x16x128xf32> to vector<16x16x128xf32>
    %66 = vector.shape_cast %64 : vector<16x128xf32> to vector<1x16x128xf32>
    %67 = vector.broadcast %66 : vector<1x16x128xf32> to vector<16x16x128xf32>
    %68 = arith.mulf %65, %67 : vector<16x16x128xf32>
    %69 = arith.addf %60, %68 : vector<16x16x128xf32>
    %70 = vector.extract_strided_slice %38 {offsets = [14, 0], sizes = [1, 128], strides = [1, 1]} : vector<49x128xf32> to vector<1x128xf32>
    %71 = vector.broadcast %70 : vector<1x128xf32> to vector<16x128xf32>
    %72 = vector.broadcast %52 : vector<16x1xf32> to vector<16x128xf32>
    %73 = arith.mulf %71, %72 : vector<16x128xf32>
    %74 = vector.extract_strided_slice %41 {offsets = [2, 0, 0], sizes = [16, 16, 128], strides = [1, 1, 1]} : vector<22x16x128xf32> to vector<16x16x128xf32>
    %75 = vector.shape_cast %73 : vector<16x128xf32> to vector<1x16x128xf32>
    %76 = vector.broadcast %75 : vector<1x16x128xf32> to vector<16x16x128xf32>
    %77 = arith.mulf %74, %76 : vector<16x16x128xf32>
    %78 = arith.addf %69, %77 : vector<16x16x128xf32>
    %79 = vector.extract_strided_slice %38 {offsets = [21, 0], sizes = [1, 128], strides = [1, 1]} : vector<49x128xf32> to vector<1x128xf32>
    %80 = vector.broadcast %79 : vector<1x128xf32> to vector<16x128xf32>
    %81 = vector.broadcast %52 : vector<16x1xf32> to vector<16x128xf32>
    %82 = arith.mulf %80, %81 : vector<16x128xf32>
    %83 = vector.extract_strided_slice %41 {offsets = [3, 0, 0], sizes = [16, 16, 128], strides = [1, 1, 1]} : vector<22x16x128xf32> to vector<16x16x128xf32>
    %84 = vector.shape_cast %82 : vector<16x128xf32> to vector<1x16x128xf32>
    %85 = vector.broadcast %84 : vector<1x16x128xf32> to vector<16x16x128xf32>
    %86 = arith.mulf %83, %85 : vector<16x16x128xf32>
    %87 = arith.addf %78, %86 : vector<16x16x128xf32>
    %88 = vector.extract_strided_slice %38 {offsets = [28, 0], sizes = [1, 128], strides = [1, 1]} : vector<49x128xf32> to vector<1x128xf32>
    %89 = vector.broadcast %88 : vector<1x128xf32> to vector<16x128xf32>
    %90 = vector.broadcast %52 : vector<16x1xf32> to vector<16x128xf32>
    %91 = arith.mulf %89, %90 : vector<16x128xf32>
    %92 = vector.extract_strided_slice %41 {offsets = [4, 0, 0], sizes = [16, 16, 128], strides = [1, 1, 1]} : vector<22x16x128xf32> to vector<16x16x128xf32>
    %93 = vector.shape_cast %91 : vector<16x128xf32> to vector<1x16x128xf32>
    %94 = vector.broadcast %93 : vector<1x16x128xf32> to vector<16x16x128xf32>
    %95 = arith.mulf %92, %94 : vector<16x16x128xf32>
    %96 = arith.addf %87, %95 : vector<16x16x128xf32>
    %97 = vector.extract_strided_slice %38 {offsets = [35, 0], sizes = [1, 128], strides = [1, 1]} : vector<49x128xf32> to vector<1x128xf32>
    %98 = vector.broadcast %97 : vector<1x128xf32> to vector<16x128xf32>
    %99 = vector.broadcast %52 : vector<16x1xf32> to vector<16x128xf32>
    %100 = arith.mulf %98, %99 : vector<16x128xf32>
    %101 = vector.extract_strided_slice %41 {offsets = [5, 0, 0], sizes = [16, 16, 128], strides = [1, 1, 1]} : vector<22x16x128xf32> to vector<16x16x128xf32>
    %102 = vector.shape_cast %100 : vector<16x128xf32> to vector<1x16x128xf32>
    %103 = vector.broadcast %102 : vector<1x16x128xf32> to vector<16x16x128xf32>
    %104 = arith.mulf %101, %103 : vector<16x16x128xf32>
    %105 = arith.addf %96, %104 : vector<16x16x128xf32>
    %106 = vector.extract_strided_slice %38 {offsets = [42, 0], sizes = [1, 128], strides = [1, 1]} : vector<49x128xf32> to vector<1x128xf32>
    %107 = vector.broadcast %106 : vector<1x128xf32> to vector<16x128xf32>
    %108 = vector.broadcast %52 : vector<16x1xf32> to vector<16x128xf32>
    %109 = arith.mulf %107, %108 : vector<16x128xf32>
    %110 = vector.extract_strided_slice %41 {offsets = [6, 0, 0], sizes = [16, 16, 128], strides = [1, 1, 1]} : vector<22x16x128xf32> to vector<16x16x128xf32>
    %111 = vector.shape_cast %109 : vector<16x128xf32> to vector<1x16x128xf32>
    %112 = vector.broadcast %111 : vector<1x16x128xf32> to vector<16x16x128xf32>
    %113 = arith.mulf %110, %112 : vector<16x16x128xf32>
    %114 = arith.addf %105, %113 : vector<16x16x128xf32>
    %c2_i32 = arith.constant 2 : i32
    %115 = tpu.dynamic_rotate %36 by %c2_i32 dim 0 : vector<352x128xf32>, i32 -> vector<352x128xf32>
    %116 = vector.shape_cast %115 : vector<352x128xf32> to vector<22x16x128xf32>
    %c-2_i32 = arith.constant -2 : i32
    %117 = vector.broadcast %c-2_i32 : i32 to vector<16x1xi32>
    %118 = arith.addi %39, %117 : vector<16x1xi32>
    %c0_i32_28 = arith.constant 0 : i32
    %119 = vector.broadcast %c0_i32_28 : i32 to vector<16x1xi32>
    %120 = arith.cmpi sge, %118, %119 : vector<16x1xi32>
    %c-2_i32_29 = arith.constant -2 : i32
    %121 = vector.broadcast %c-2_i32_29 : i32 to vector<16x1xi32>
    %122 = arith.addi %39, %121 : vector<16x1xi32>
    %c16_i32_30 = arith.constant 16 : i32
    %123 = vector.broadcast %c16_i32_30 : i32 to vector<16x1xi32>
    %124 = arith.cmpi slt, %122, %123 : vector<16x1xi32>
    %125 = arith.andi %120, %124 : vector<16x1xi1>
    %126 = arith.extui %125 : vector<16x1xi1> to vector<16x1xi32>
    %127 = arith.sitofp %126 : vector<16x1xi32> to vector<16x1xf32>
    %128 = vector.extract_strided_slice %38 {offsets = [1, 0], sizes = [1, 128], strides = [1, 1]} : vector<49x128xf32> to vector<1x128xf32>
    %129 = vector.broadcast %128 : vector<1x128xf32> to vector<16x128xf32>
    %130 = vector.broadcast %127 : vector<16x1xf32> to vector<16x128xf32>
    %131 = arith.mulf %129, %130 : vector<16x128xf32>
    %132 = vector.extract_strided_slice %116 {offsets = [0, 0, 0], sizes = [16, 16, 128], strides = [1, 1, 1]} : vector<22x16x128xf32> to vector<16x16x128xf32>
    %133 = vector.shape_cast %131 : vector<16x128xf32> to vector<1x16x128xf32>
    %134 = vector.broadcast %133 : vector<1x16x128xf32> to vector<16x16x128xf32>
    %135 = arith.mulf %132, %134 : vector<16x16x128xf32>
    %136 = arith.addf %114, %135 : vector<16x16x128xf32>
    %137 = vector.extract_strided_slice %38 {offsets = [8, 0], sizes = [1, 128], strides = [1, 1]} : vector<49x128xf32> to vector<1x128xf32>
    %138 = vector.broadcast %137 : vector<1x128xf32> to vector<16x128xf32>
    %139 = vector.broadcast %127 : vector<16x1xf32> to vector<16x128xf32>
    %140 = arith.mulf %138, %139 : vector<16x128xf32>
    %141 = vector.extract_strided_slice %116 {offsets = [1, 0, 0], sizes = [16, 16, 128], strides = [1, 1, 1]} : vector<22x16x128xf32> to vector<16x16x128xf32>
    %142 = vector.shape_cast %140 : vector<16x128xf32> to vector<1x16x128xf32>
    %143 = vector.broadcast %142 : vector<1x16x128xf32> to vector<16x16x128xf32>
    %144 = arith.mulf %141, %143 : vector<16x16x128xf32>
    %145 = arith.addf %136, %144 : vector<16x16x128xf32>
    %146 = vector.extract_strided_slice %38 {offsets = [15, 0], sizes = [1, 128], strides = [1, 1]} : vector<49x128xf32> to vector<1x128xf32>
    %147 = vector.broadcast %146 : vector<1x128xf32> to vector<16x128xf32>
    %148 = vector.broadcast %127 : vector<16x1xf32> to vector<16x128xf32>
    %149 = arith.mulf %147, %148 : vector<16x128xf32>
    %150 = vector.extract_strided_slice %116 {offsets = [2, 0, 0], sizes = [16, 16, 128], strides = [1, 1, 1]} : vector<22x16x128xf32> to vector<16x16x128xf32>
    %151 = vector.shape_cast %149 : vector<16x128xf32> to vector<1x16x128xf32>
    %152 = vector.broadcast %151 : vector<1x16x128xf32> to vector<16x16x128xf32>
    %153 = arith.mulf %150, %152 : vector<16x16x128xf32>
    %154 = arith.addf %145, %153 : vector<16x16x128xf32>
    %155 = vector.extract_strided_slice %38 {offsets = [22, 0], sizes = [1, 128], strides = [1, 1]} : vector<49x128xf32> to vector<1x128xf32>
    %156 = vector.broadcast %155 : vector<1x128xf32> to vector<16x128xf32>
    %157 = vector.broadcast %127 : vector<16x1xf32> to vector<16x128xf32>
    %158 = arith.mulf %156, %157 : vector<16x128xf32>
    %159 = vector.extract_strided_slice %116 {offsets = [3, 0, 0], sizes = [16, 16, 128], strides = [1, 1, 1]} : vector<22x16x128xf32> to vector<16x16x128xf32>
    %160 = vector.shape_cast %158 : vector<16x128xf32> to vector<1x16x128xf32>
    %161 = vector.broadcast %160 : vector<1x16x128xf32> to vector<16x16x128xf32>
    %162 = arith.mulf %159, %161 : vector<16x16x128xf32>
    %163 = arith.addf %154, %162 : vector<16x16x128xf32>
    %164 = vector.extract_strided_slice %38 {offsets = [29, 0], sizes = [1, 128], strides = [1, 1]} : vector<49x128xf32> to vector<1x128xf32>
    %165 = vector.broadcast %164 : vector<1x128xf32> to vector<16x128xf32>
    %166 = vector.broadcast %127 : vector<16x1xf32> to vector<16x128xf32>
    %167 = arith.mulf %165, %166 : vector<16x128xf32>
    %168 = vector.extract_strided_slice %116 {offsets = [4, 0, 0], sizes = [16, 16, 128], strides = [1, 1, 1]} : vector<22x16x128xf32> to vector<16x16x128xf32>
    %169 = vector.shape_cast %167 : vector<16x128xf32> to vector<1x16x128xf32>
    %170 = vector.broadcast %169 : vector<1x16x128xf32> to vector<16x16x128xf32>
    %171 = arith.mulf %168, %170 : vector<16x16x128xf32>
    %172 = arith.addf %163, %171 : vector<16x16x128xf32>
    %173 = vector.extract_strided_slice %38 {offsets = [36, 0], sizes = [1, 128], strides = [1, 1]} : vector<49x128xf32> to vector<1x128xf32>
    %174 = vector.broadcast %173 : vector<1x128xf32> to vector<16x128xf32>
    %175 = vector.broadcast %127 : vector<16x1xf32> to vector<16x128xf32>
    %176 = arith.mulf %174, %175 : vector<16x128xf32>
    %177 = vector.extract_strided_slice %116 {offsets = [5, 0, 0], sizes = [16, 16, 128], strides = [1, 1, 1]} : vector<22x16x128xf32> to vector<16x16x128xf32>
    %178 = vector.shape_cast %176 : vector<16x128xf32> to vector<1x16x128xf32>
    %179 = vector.broadcast %178 : vector<1x16x128xf32> to vector<16x16x128xf32>
    %180 = arith.mulf %177, %179 : vector<16x16x128xf32>
    %181 = arith.addf %172, %180 : vector<16x16x128xf32>
    %182 = vector.extract_strided_slice %38 {offsets = [43, 0], sizes = [1, 128], strides = [1, 1]} : vector<49x128xf32> to vector<1x128xf32>
    %183 = vector.broadcast %182 : vector<1x128xf32> to vector<16x128xf32>
    %184 = vector.broadcast %127 : vector<16x1xf32> to vector<16x128xf32>
    %185 = arith.mulf %183, %184 : vector<16x128xf32>
    %186 = vector.extract_strided_slice %116 {offsets = [6, 0, 0], sizes = [16, 16, 128], strides = [1, 1, 1]} : vector<22x16x128xf32> to vector<16x16x128xf32>
    %187 = vector.shape_cast %185 : vector<16x128xf32> to vector<1x16x128xf32>
    %188 = vector.broadcast %187 : vector<1x16x128xf32> to vector<16x16x128xf32>
    %189 = arith.mulf %186, %188 : vector<16x16x128xf32>
    %190 = arith.addf %181, %189 : vector<16x16x128xf32>
    %c1_i32 = arith.constant 1 : i32
    %191 = tpu.dynamic_rotate %36 by %c1_i32 dim 0 : vector<352x128xf32>, i32 -> vector<352x128xf32>
    %192 = vector.shape_cast %191 : vector<352x128xf32> to vector<22x16x128xf32>
    %c-1_i32 = arith.constant -1 : i32
    %193 = vector.broadcast %c-1_i32 : i32 to vector<16x1xi32>
    %194 = arith.addi %39, %193 : vector<16x1xi32>
    %c0_i32_31 = arith.constant 0 : i32
    %195 = vector.broadcast %c0_i32_31 : i32 to vector<16x1xi32>
    %196 = arith.cmpi sge, %194, %195 : vector<16x1xi32>
    %c-1_i32_32 = arith.constant -1 : i32
    %197 = vector.broadcast %c-1_i32_32 : i32 to vector<16x1xi32>
    %198 = arith.addi %39, %197 : vector<16x1xi32>
    %c16_i32_33 = arith.constant 16 : i32
    %199 = vector.broadcast %c16_i32_33 : i32 to vector<16x1xi32>
    %200 = arith.cmpi slt, %198, %199 : vector<16x1xi32>
    %201 = arith.andi %196, %200 : vector<16x1xi1>
    %202 = arith.extui %201 : vector<16x1xi1> to vector<16x1xi32>
    %203 = arith.sitofp %202 : vector<16x1xi32> to vector<16x1xf32>
    %204 = vector.extract_strided_slice %38 {offsets = [2, 0], sizes = [1, 128], strides = [1, 1]} : vector<49x128xf32> to vector<1x128xf32>
    %205 = vector.broadcast %204 : vector<1x128xf32> to vector<16x128xf32>
    %206 = vector.broadcast %203 : vector<16x1xf32> to vector<16x128xf32>
    %207 = arith.mulf %205, %206 : vector<16x128xf32>
    %208 = vector.extract_strided_slice %192 {offsets = [0, 0, 0], sizes = [16, 16, 128], strides = [1, 1, 1]} : vector<22x16x128xf32> to vector<16x16x128xf32>
    %209 = vector.shape_cast %207 : vector<16x128xf32> to vector<1x16x128xf32>
    %210 = vector.broadcast %209 : vector<1x16x128xf32> to vector<16x16x128xf32>
    %211 = arith.mulf %208, %210 : vector<16x16x128xf32>
    %212 = arith.addf %190, %211 : vector<16x16x128xf32>
    %213 = vector.extract_strided_slice %38 {offsets = [9, 0], sizes = [1, 128], strides = [1, 1]} : vector<49x128xf32> to vector<1x128xf32>
    %214 = vector.broadcast %213 : vector<1x128xf32> to vector<16x128xf32>
    %215 = vector.broadcast %203 : vector<16x1xf32> to vector<16x128xf32>
    %216 = arith.mulf %214, %215 : vector<16x128xf32>
    %217 = vector.extract_strided_slice %192 {offsets = [1, 0, 0], sizes = [16, 16, 128], strides = [1, 1, 1]} : vector<22x16x128xf32> to vector<16x16x128xf32>
    %218 = vector.shape_cast %216 : vector<16x128xf32> to vector<1x16x128xf32>
    %219 = vector.broadcast %218 : vector<1x16x128xf32> to vector<16x16x128xf32>
    %220 = arith.mulf %217, %219 : vector<16x16x128xf32>
    %221 = arith.addf %212, %220 : vector<16x16x128xf32>
    %222 = vector.extract_strided_slice %38 {offsets = [16, 0], sizes = [1, 128], strides = [1, 1]} : vector<49x128xf32> to vector<1x128xf32>
    %223 = vector.broadcast %222 : vector<1x128xf32> to vector<16x128xf32>
    %224 = vector.broadcast %203 : vector<16x1xf32> to vector<16x128xf32>
    %225 = arith.mulf %223, %224 : vector<16x128xf32>
    %226 = vector.extract_strided_slice %192 {offsets = [2, 0, 0], sizes = [16, 16, 128], strides = [1, 1, 1]} : vector<22x16x128xf32> to vector<16x16x128xf32>
    %227 = vector.shape_cast %225 : vector<16x128xf32> to vector<1x16x128xf32>
    %228 = vector.broadcast %227 : vector<1x16x128xf32> to vector<16x16x128xf32>
    %229 = arith.mulf %226, %228 : vector<16x16x128xf32>
    %230 = arith.addf %221, %229 : vector<16x16x128xf32>
    %231 = vector.extract_strided_slice %38 {offsets = [23, 0], sizes = [1, 128], strides = [1, 1]} : vector<49x128xf32> to vector<1x128xf32>
    %232 = vector.broadcast %231 : vector<1x128xf32> to vector<16x128xf32>
    %233 = vector.broadcast %203 : vector<16x1xf32> to vector<16x128xf32>
    %234 = arith.mulf %232, %233 : vector<16x128xf32>
    %235 = vector.extract_strided_slice %192 {offsets = [3, 0, 0], sizes = [16, 16, 128], strides = [1, 1, 1]} : vector<22x16x128xf32> to vector<16x16x128xf32>
    %236 = vector.shape_cast %234 : vector<16x128xf32> to vector<1x16x128xf32>
    %237 = vector.broadcast %236 : vector<1x16x128xf32> to vector<16x16x128xf32>
    %238 = arith.mulf %235, %237 : vector<16x16x128xf32>
    %239 = arith.addf %230, %238 : vector<16x16x128xf32>
    %240 = vector.extract_strided_slice %38 {offsets = [30, 0], sizes = [1, 128], strides = [1, 1]} : vector<49x128xf32> to vector<1x128xf32>
    %241 = vector.broadcast %240 : vector<1x128xf32> to vector<16x128xf32>
    %242 = vector.broadcast %203 : vector<16x1xf32> to vector<16x128xf32>
    %243 = arith.mulf %241, %242 : vector<16x128xf32>
    %244 = vector.extract_strided_slice %192 {offsets = [4, 0, 0], sizes = [16, 16, 128], strides = [1, 1, 1]} : vector<22x16x128xf32> to vector<16x16x128xf32>
    %245 = vector.shape_cast %243 : vector<16x128xf32> to vector<1x16x128xf32>
    %246 = vector.broadcast %245 : vector<1x16x128xf32> to vector<16x16x128xf32>
    %247 = arith.mulf %244, %246 : vector<16x16x128xf32>
    %248 = arith.addf %239, %247 : vector<16x16x128xf32>
    %249 = vector.extract_strided_slice %38 {offsets = [37, 0], sizes = [1, 128], strides = [1, 1]} : vector<49x128xf32> to vector<1x128xf32>
    %250 = vector.broadcast %249 : vector<1x128xf32> to vector<16x128xf32>
    %251 = vector.broadcast %203 : vector<16x1xf32> to vector<16x128xf32>
    %252 = arith.mulf %250, %251 : vector<16x128xf32>
    %253 = vector.extract_strided_slice %192 {offsets = [5, 0, 0], sizes = [16, 16, 128], strides = [1, 1, 1]} : vector<22x16x128xf32> to vector<16x16x128xf32>
    %254 = vector.shape_cast %252 : vector<16x128xf32> to vector<1x16x128xf32>
    %255 = vector.broadcast %254 : vector<1x16x128xf32> to vector<16x16x128xf32>
    %256 = arith.mulf %253, %255 : vector<16x16x128xf32>
    %257 = arith.addf %248, %256 : vector<16x16x128xf32>
    %258 = vector.extract_strided_slice %38 {offsets = [44, 0], sizes = [1, 128], strides = [1, 1]} : vector<49x128xf32> to vector<1x128xf32>
    %259 = vector.broadcast %258 : vector<1x128xf32> to vector<16x128xf32>
    %260 = vector.broadcast %203 : vector<16x1xf32> to vector<16x128xf32>
    %261 = arith.mulf %259, %260 : vector<16x128xf32>
    %262 = vector.extract_strided_slice %192 {offsets = [6, 0, 0], sizes = [16, 16, 128], strides = [1, 1, 1]} : vector<22x16x128xf32> to vector<16x16x128xf32>
    %263 = vector.shape_cast %261 : vector<16x128xf32> to vector<1x16x128xf32>
    %264 = vector.broadcast %263 : vector<1x16x128xf32> to vector<16x16x128xf32>
    %265 = arith.mulf %262, %264 : vector<16x16x128xf32>
    %266 = arith.addf %257, %265 : vector<16x16x128xf32>
    %267 = vector.shape_cast %36 : vector<352x128xf32> to vector<22x16x128xf32>
    %c0_i32_34 = arith.constant 0 : i32
    %268 = vector.broadcast %c0_i32_34 : i32 to vector<16x1xi32>
    %269 = arith.addi %39, %268 : vector<16x1xi32>
    %c0_i32_35 = arith.constant 0 : i32
    %270 = vector.broadcast %c0_i32_35 : i32 to vector<16x1xi32>
    %271 = arith.cmpi sge, %269, %270 : vector<16x1xi32>
    %c0_i32_36 = arith.constant 0 : i32
    %272 = vector.broadcast %c0_i32_36 : i32 to vector<16x1xi32>
    %273 = arith.addi %39, %272 : vector<16x1xi32>
    %c16_i32_37 = arith.constant 16 : i32
    %274 = vector.broadcast %c16_i32_37 : i32 to vector<16x1xi32>
    %275 = arith.cmpi slt, %273, %274 : vector<16x1xi32>
    %276 = arith.andi %271, %275 : vector<16x1xi1>
    %277 = arith.extui %276 : vector<16x1xi1> to vector<16x1xi32>
    %278 = arith.sitofp %277 : vector<16x1xi32> to vector<16x1xf32>
    %279 = vector.extract_strided_slice %38 {offsets = [3, 0], sizes = [1, 128], strides = [1, 1]} : vector<49x128xf32> to vector<1x128xf32>
    %280 = vector.broadcast %279 : vector<1x128xf32> to vector<16x128xf32>
    %281 = vector.broadcast %278 : vector<16x1xf32> to vector<16x128xf32>
    %282 = arith.mulf %280, %281 : vector<16x128xf32>
    %283 = vector.extract_strided_slice %267 {offsets = [0, 0, 0], sizes = [16, 16, 128], strides = [1, 1, 1]} : vector<22x16x128xf32> to vector<16x16x128xf32>
    %284 = vector.shape_cast %282 : vector<16x128xf32> to vector<1x16x128xf32>
    %285 = vector.broadcast %284 : vector<1x16x128xf32> to vector<16x16x128xf32>
    %286 = arith.mulf %283, %285 : vector<16x16x128xf32>
    %287 = arith.addf %266, %286 : vector<16x16x128xf32>
    %288 = vector.extract_strided_slice %38 {offsets = [10, 0], sizes = [1, 128], strides = [1, 1]} : vector<49x128xf32> to vector<1x128xf32>
    %289 = vector.broadcast %288 : vector<1x128xf32> to vector<16x128xf32>
    %290 = vector.broadcast %278 : vector<16x1xf32> to vector<16x128xf32>
    %291 = arith.mulf %289, %290 : vector<16x128xf32>
    %292 = vector.extract_strided_slice %267 {offsets = [1, 0, 0], sizes = [16, 16, 128], strides = [1, 1, 1]} : vector<22x16x128xf32> to vector<16x16x128xf32>
    %293 = vector.shape_cast %291 : vector<16x128xf32> to vector<1x16x128xf32>
    %294 = vector.broadcast %293 : vector<1x16x128xf32> to vector<16x16x128xf32>
    %295 = arith.mulf %292, %294 : vector<16x16x128xf32>
    %296 = arith.addf %287, %295 : vector<16x16x128xf32>
    %297 = vector.extract_strided_slice %38 {offsets = [17, 0], sizes = [1, 128], strides = [1, 1]} : vector<49x128xf32> to vector<1x128xf32>
    %298 = vector.broadcast %297 : vector<1x128xf32> to vector<16x128xf32>
    %299 = vector.broadcast %278 : vector<16x1xf32> to vector<16x128xf32>
    %300 = arith.mulf %298, %299 : vector<16x128xf32>
    %301 = vector.extract_strided_slice %267 {offsets = [2, 0, 0], sizes = [16, 16, 128], strides = [1, 1, 1]} : vector<22x16x128xf32> to vector<16x16x128xf32>
    %302 = vector.shape_cast %300 : vector<16x128xf32> to vector<1x16x128xf32>
    %303 = vector.broadcast %302 : vector<1x16x128xf32> to vector<16x16x128xf32>
    %304 = arith.mulf %301, %303 : vector<16x16x128xf32>
    %305 = arith.addf %296, %304 : vector<16x16x128xf32>
    %306 = vector.extract_strided_slice %38 {offsets = [24, 0], sizes = [1, 128], strides = [1, 1]} : vector<49x128xf32> to vector<1x128xf32>
    %307 = vector.broadcast %306 : vector<1x128xf32> to vector<16x128xf32>
    %308 = vector.broadcast %278 : vector<16x1xf32> to vector<16x128xf32>
    %309 = arith.mulf %307, %308 : vector<16x128xf32>
    %310 = vector.extract_strided_slice %267 {offsets = [3, 0, 0], sizes = [16, 16, 128], strides = [1, 1, 1]} : vector<22x16x128xf32> to vector<16x16x128xf32>
    %311 = vector.shape_cast %309 : vector<16x128xf32> to vector<1x16x128xf32>
    %312 = vector.broadcast %311 : vector<1x16x128xf32> to vector<16x16x128xf32>
    %313 = arith.mulf %310, %312 : vector<16x16x128xf32>
    %314 = arith.addf %305, %313 : vector<16x16x128xf32>
    %315 = vector.extract_strided_slice %38 {offsets = [31, 0], sizes = [1, 128], strides = [1, 1]} : vector<49x128xf32> to vector<1x128xf32>
    %316 = vector.broadcast %315 : vector<1x128xf32> to vector<16x128xf32>
    %317 = vector.broadcast %278 : vector<16x1xf32> to vector<16x128xf32>
    %318 = arith.mulf %316, %317 : vector<16x128xf32>
    %319 = vector.extract_strided_slice %267 {offsets = [4, 0, 0], sizes = [16, 16, 128], strides = [1, 1, 1]} : vector<22x16x128xf32> to vector<16x16x128xf32>
    %320 = vector.shape_cast %318 : vector<16x128xf32> to vector<1x16x128xf32>
    %321 = vector.broadcast %320 : vector<1x16x128xf32> to vector<16x16x128xf32>
    %322 = arith.mulf %319, %321 : vector<16x16x128xf32>
    %323 = arith.addf %314, %322 : vector<16x16x128xf32>
    %324 = vector.extract_strided_slice %38 {offsets = [38, 0], sizes = [1, 128], strides = [1, 1]} : vector<49x128xf32> to vector<1x128xf32>
    %325 = vector.broadcast %324 : vector<1x128xf32> to vector<16x128xf32>
    %326 = vector.broadcast %278 : vector<16x1xf32> to vector<16x128xf32>
    %327 = arith.mulf %325, %326 : vector<16x128xf32>
    %328 = vector.extract_strided_slice %267 {offsets = [5, 0, 0], sizes = [16, 16, 128], strides = [1, 1, 1]} : vector<22x16x128xf32> to vector<16x16x128xf32>
    %329 = vector.shape_cast %327 : vector<16x128xf32> to vector<1x16x128xf32>
    %330 = vector.broadcast %329 : vector<1x16x128xf32> to vector<16x16x128xf32>
    %331 = arith.mulf %328, %330 : vector<16x16x128xf32>
    %332 = arith.addf %323, %331 : vector<16x16x128xf32>
    %333 = vector.extract_strided_slice %38 {offsets = [45, 0], sizes = [1, 128], strides = [1, 1]} : vector<49x128xf32> to vector<1x128xf32>
    %334 = vector.broadcast %333 : vector<1x128xf32> to vector<16x128xf32>
    %335 = vector.broadcast %278 : vector<16x1xf32> to vector<16x128xf32>
    %336 = arith.mulf %334, %335 : vector<16x128xf32>
    %337 = vector.extract_strided_slice %267 {offsets = [6, 0, 0], sizes = [16, 16, 128], strides = [1, 1, 1]} : vector<22x16x128xf32> to vector<16x16x128xf32>
    %338 = vector.shape_cast %336 : vector<16x128xf32> to vector<1x16x128xf32>
    %339 = vector.broadcast %338 : vector<1x16x128xf32> to vector<16x16x128xf32>
    %340 = arith.mulf %337, %339 : vector<16x16x128xf32>
    %341 = arith.addf %332, %340 : vector<16x16x128xf32>
    %c351_i32 = arith.constant 351 : i32
    %342 = tpu.dynamic_rotate %36 by %c351_i32 dim 0 : vector<352x128xf32>, i32 -> vector<352x128xf32>
    %343 = vector.shape_cast %342 : vector<352x128xf32> to vector<22x16x128xf32>
    %c1_i32_38 = arith.constant 1 : i32
    %344 = vector.broadcast %c1_i32_38 : i32 to vector<16x1xi32>
    %345 = arith.addi %39, %344 : vector<16x1xi32>
    %c0_i32_39 = arith.constant 0 : i32
    %346 = vector.broadcast %c0_i32_39 : i32 to vector<16x1xi32>
    %347 = arith.cmpi sge, %345, %346 : vector<16x1xi32>
    %c1_i32_40 = arith.constant 1 : i32
    %348 = vector.broadcast %c1_i32_40 : i32 to vector<16x1xi32>
    %349 = arith.addi %39, %348 : vector<16x1xi32>
    %c16_i32_41 = arith.constant 16 : i32
    %350 = vector.broadcast %c16_i32_41 : i32 to vector<16x1xi32>
    %351 = arith.cmpi slt, %349, %350 : vector<16x1xi32>
    %352 = arith.andi %347, %351 : vector<16x1xi1>
    %353 = arith.extui %352 : vector<16x1xi1> to vector<16x1xi32>
    %354 = arith.sitofp %353 : vector<16x1xi32> to vector<16x1xf32>
    %355 = vector.extract_strided_slice %38 {offsets = [4, 0], sizes = [1, 128], strides = [1, 1]} : vector<49x128xf32> to vector<1x128xf32>
    %356 = vector.broadcast %355 : vector<1x128xf32> to vector<16x128xf32>
    %357 = vector.broadcast %354 : vector<16x1xf32> to vector<16x128xf32>
    %358 = arith.mulf %356, %357 : vector<16x128xf32>
    %359 = vector.extract_strided_slice %343 {offsets = [0, 0, 0], sizes = [16, 16, 128], strides = [1, 1, 1]} : vector<22x16x128xf32> to vector<16x16x128xf32>
    %360 = vector.shape_cast %358 : vector<16x128xf32> to vector<1x16x128xf32>
    %361 = vector.broadcast %360 : vector<1x16x128xf32> to vector<16x16x128xf32>
    %362 = arith.mulf %359, %361 : vector<16x16x128xf32>
    %363 = arith.addf %341, %362 : vector<16x16x128xf32>
    %364 = vector.extract_strided_slice %38 {offsets = [11, 0], sizes = [1, 128], strides = [1, 1]} : vector<49x128xf32> to vector<1x128xf32>
    %365 = vector.broadcast %364 : vector<1x128xf32> to vector<16x128xf32>
    %366 = vector.broadcast %354 : vector<16x1xf32> to vector<16x128xf32>
    %367 = arith.mulf %365, %366 : vector<16x128xf32>
    %368 = vector.extract_strided_slice %343 {offsets = [1, 0, 0], sizes = [16, 16, 128], strides = [1, 1, 1]} : vector<22x16x128xf32> to vector<16x16x128xf32>
    %369 = vector.shape_cast %367 : vector<16x128xf32> to vector<1x16x128xf32>
    %370 = vector.broadcast %369 : vector<1x16x128xf32> to vector<16x16x128xf32>
    %371 = arith.mulf %368, %370 : vector<16x16x128xf32>
    %372 = arith.addf %363, %371 : vector<16x16x128xf32>
    %373 = vector.extract_strided_slice %38 {offsets = [18, 0], sizes = [1, 128], strides = [1, 1]} : vector<49x128xf32> to vector<1x128xf32>
    %374 = vector.broadcast %373 : vector<1x128xf32> to vector<16x128xf32>
    %375 = vector.broadcast %354 : vector<16x1xf32> to vector<16x128xf32>
    %376 = arith.mulf %374, %375 : vector<16x128xf32>
    %377 = vector.extract_strided_slice %343 {offsets = [2, 0, 0], sizes = [16, 16, 128], strides = [1, 1, 1]} : vector<22x16x128xf32> to vector<16x16x128xf32>
    %378 = vector.shape_cast %376 : vector<16x128xf32> to vector<1x16x128xf32>
    %379 = vector.broadcast %378 : vector<1x16x128xf32> to vector<16x16x128xf32>
    %380 = arith.mulf %377, %379 : vector<16x16x128xf32>
    %381 = arith.addf %372, %380 : vector<16x16x128xf32>
    %382 = vector.extract_strided_slice %38 {offsets = [25, 0], sizes = [1, 128], strides = [1, 1]} : vector<49x128xf32> to vector<1x128xf32>
    %383 = vector.broadcast %382 : vector<1x128xf32> to vector<16x128xf32>
    %384 = vector.broadcast %354 : vector<16x1xf32> to vector<16x128xf32>
    %385 = arith.mulf %383, %384 : vector<16x128xf32>
    %386 = vector.extract_strided_slice %343 {offsets = [3, 0, 0], sizes = [16, 16, 128], strides = [1, 1, 1]} : vector<22x16x128xf32> to vector<16x16x128xf32>
    %387 = vector.shape_cast %385 : vector<16x128xf32> to vector<1x16x128xf32>
    %388 = vector.broadcast %387 : vector<1x16x128xf32> to vector<16x16x128xf32>
    %389 = arith.mulf %386, %388 : vector<16x16x128xf32>
    %390 = arith.addf %381, %389 : vector<16x16x128xf32>
    %391 = vector.extract_strided_slice %38 {offsets = [32, 0], sizes = [1, 128], strides = [1, 1]} : vector<49x128xf32> to vector<1x128xf32>
    %392 = vector.broadcast %391 : vector<1x128xf32> to vector<16x128xf32>
    %393 = vector.broadcast %354 : vector<16x1xf32> to vector<16x128xf32>
    %394 = arith.mulf %392, %393 : vector<16x128xf32>
    %395 = vector.extract_strided_slice %343 {offsets = [4, 0, 0], sizes = [16, 16, 128], strides = [1, 1, 1]} : vector<22x16x128xf32> to vector<16x16x128xf32>
    %396 = vector.shape_cast %394 : vector<16x128xf32> to vector<1x16x128xf32>
    %397 = vector.broadcast %396 : vector<1x16x128xf32> to vector<16x16x128xf32>
    %398 = arith.mulf %395, %397 : vector<16x16x128xf32>
    %399 = arith.addf %390, %398 : vector<16x16x128xf32>
    %400 = vector.extract_strided_slice %38 {offsets = [39, 0], sizes = [1, 128], strides = [1, 1]} : vector<49x128xf32> to vector<1x128xf32>
    %401 = vector.broadcast %400 : vector<1x128xf32> to vector<16x128xf32>
    %402 = vector.broadcast %354 : vector<16x1xf32> to vector<16x128xf32>
    %403 = arith.mulf %401, %402 : vector<16x128xf32>
    %404 = vector.extract_strided_slice %343 {offsets = [5, 0, 0], sizes = [16, 16, 128], strides = [1, 1, 1]} : vector<22x16x128xf32> to vector<16x16x128xf32>
    %405 = vector.shape_cast %403 : vector<16x128xf32> to vector<1x16x128xf32>
    %406 = vector.broadcast %405 : vector<1x16x128xf32> to vector<16x16x128xf32>
    %407 = arith.mulf %404, %406 : vector<16x16x128xf32>
    %408 = arith.addf %399, %407 : vector<16x16x128xf32>
    %409 = vector.extract_strided_slice %38 {offsets = [46, 0], sizes = [1, 128], strides = [1, 1]} : vector<49x128xf32> to vector<1x128xf32>
    %410 = vector.broadcast %409 : vector<1x128xf32> to vector<16x128xf32>
    %411 = vector.broadcast %354 : vector<16x1xf32> to vector<16x128xf32>
    %412 = arith.mulf %410, %411 : vector<16x128xf32>
    %413 = vector.extract_strided_slice %343 {offsets = [6, 0, 0], sizes = [16, 16, 128], strides = [1, 1, 1]} : vector<22x16x128xf32> to vector<16x16x128xf32>
    %414 = vector.shape_cast %412 : vector<16x128xf32> to vector<1x16x128xf32>
    %415 = vector.broadcast %414 : vector<1x16x128xf32> to vector<16x16x128xf32>
    %416 = arith.mulf %413, %415 : vector<16x16x128xf32>
    %417 = arith.addf %408, %416 : vector<16x16x128xf32>
    %c350_i32 = arith.constant 350 : i32
    %418 = tpu.dynamic_rotate %36 by %c350_i32 dim 0 : vector<352x128xf32>, i32 -> vector<352x128xf32>
    %419 = vector.shape_cast %418 : vector<352x128xf32> to vector<22x16x128xf32>
    %c2_i32_42 = arith.constant 2 : i32
    %420 = vector.broadcast %c2_i32_42 : i32 to vector<16x1xi32>
    %421 = arith.addi %39, %420 : vector<16x1xi32>
    %c0_i32_43 = arith.constant 0 : i32
    %422 = vector.broadcast %c0_i32_43 : i32 to vector<16x1xi32>
    %423 = arith.cmpi sge, %421, %422 : vector<16x1xi32>
    %c2_i32_44 = arith.constant 2 : i32
    %424 = vector.broadcast %c2_i32_44 : i32 to vector<16x1xi32>
    %425 = arith.addi %39, %424 : vector<16x1xi32>
    %c16_i32_45 = arith.constant 16 : i32
    %426 = vector.broadcast %c16_i32_45 : i32 to vector<16x1xi32>
    %427 = arith.cmpi slt, %425, %426 : vector<16x1xi32>
    %428 = arith.andi %423, %427 : vector<16x1xi1>
    %429 = arith.extui %428 : vector<16x1xi1> to vector<16x1xi32>
    %430 = arith.sitofp %429 : vector<16x1xi32> to vector<16x1xf32>
    %431 = vector.extract_strided_slice %38 {offsets = [5, 0], sizes = [1, 128], strides = [1, 1]} : vector<49x128xf32> to vector<1x128xf32>
    %432 = vector.broadcast %431 : vector<1x128xf32> to vector<16x128xf32>
    %433 = vector.broadcast %430 : vector<16x1xf32> to vector<16x128xf32>
    %434 = arith.mulf %432, %433 : vector<16x128xf32>
    %435 = vector.extract_strided_slice %419 {offsets = [0, 0, 0], sizes = [16, 16, 128], strides = [1, 1, 1]} : vector<22x16x128xf32> to vector<16x16x128xf32>
    %436 = vector.shape_cast %434 : vector<16x128xf32> to vector<1x16x128xf32>
    %437 = vector.broadcast %436 : vector<1x16x128xf32> to vector<16x16x128xf32>
    %438 = arith.mulf %435, %437 : vector<16x16x128xf32>
    %439 = arith.addf %417, %438 : vector<16x16x128xf32>
    %440 = vector.extract_strided_slice %38 {offsets = [12, 0], sizes = [1, 128], strides = [1, 1]} : vector<49x128xf32> to vector<1x128xf32>
    %441 = vector.broadcast %440 : vector<1x128xf32> to vector<16x128xf32>
    %442 = vector.broadcast %430 : vector<16x1xf32> to vector<16x128xf32>
    %443 = arith.mulf %441, %442 : vector<16x128xf32>
    %444 = vector.extract_strided_slice %419 {offsets = [1, 0, 0], sizes = [16, 16, 128], strides = [1, 1, 1]} : vector<22x16x128xf32> to vector<16x16x128xf32>
    %445 = vector.shape_cast %443 : vector<16x128xf32> to vector<1x16x128xf32>
    %446 = vector.broadcast %445 : vector<1x16x128xf32> to vector<16x16x128xf32>
    %447 = arith.mulf %444, %446 : vector<16x16x128xf32>
    %448 = arith.addf %439, %447 : vector<16x16x128xf32>
    %449 = vector.extract_strided_slice %38 {offsets = [19, 0], sizes = [1, 128], strides = [1, 1]} : vector<49x128xf32> to vector<1x128xf32>
    %450 = vector.broadcast %449 : vector<1x128xf32> to vector<16x128xf32>
    %451 = vector.broadcast %430 : vector<16x1xf32> to vector<16x128xf32>
    %452 = arith.mulf %450, %451 : vector<16x128xf32>
    %453 = vector.extract_strided_slice %419 {offsets = [2, 0, 0], sizes = [16, 16, 128], strides = [1, 1, 1]} : vector<22x16x128xf32> to vector<16x16x128xf32>
    %454 = vector.shape_cast %452 : vector<16x128xf32> to vector<1x16x128xf32>
    %455 = vector.broadcast %454 : vector<1x16x128xf32> to vector<16x16x128xf32>
    %456 = arith.mulf %453, %455 : vector<16x16x128xf32>
    %457 = arith.addf %448, %456 : vector<16x16x128xf32>
    %458 = vector.extract_strided_slice %38 {offsets = [26, 0], sizes = [1, 128], strides = [1, 1]} : vector<49x128xf32> to vector<1x128xf32>
    %459 = vector.broadcast %458 : vector<1x128xf32> to vector<16x128xf32>
    %460 = vector.broadcast %430 : vector<16x1xf32> to vector<16x128xf32>
    %461 = arith.mulf %459, %460 : vector<16x128xf32>
    %462 = vector.extract_strided_slice %419 {offsets = [3, 0, 0], sizes = [16, 16, 128], strides = [1, 1, 1]} : vector<22x16x128xf32> to vector<16x16x128xf32>
    %463 = vector.shape_cast %461 : vector<16x128xf32> to vector<1x16x128xf32>
    %464 = vector.broadcast %463 : vector<1x16x128xf32> to vector<16x16x128xf32>
    %465 = arith.mulf %462, %464 : vector<16x16x128xf32>
    %466 = arith.addf %457, %465 : vector<16x16x128xf32>
    %467 = vector.extract_strided_slice %38 {offsets = [33, 0], sizes = [1, 128], strides = [1, 1]} : vector<49x128xf32> to vector<1x128xf32>
    %468 = vector.broadcast %467 : vector<1x128xf32> to vector<16x128xf32>
    %469 = vector.broadcast %430 : vector<16x1xf32> to vector<16x128xf32>
    %470 = arith.mulf %468, %469 : vector<16x128xf32>
    %471 = vector.extract_strided_slice %419 {offsets = [4, 0, 0], sizes = [16, 16, 128], strides = [1, 1, 1]} : vector<22x16x128xf32> to vector<16x16x128xf32>
    %472 = vector.shape_cast %470 : vector<16x128xf32> to vector<1x16x128xf32>
    %473 = vector.broadcast %472 : vector<1x16x128xf32> to vector<16x16x128xf32>
    %474 = arith.mulf %471, %473 : vector<16x16x128xf32>
    %475 = arith.addf %466, %474 : vector<16x16x128xf32>
    %476 = vector.extract_strided_slice %38 {offsets = [40, 0], sizes = [1, 128], strides = [1, 1]} : vector<49x128xf32> to vector<1x128xf32>
    %477 = vector.broadcast %476 : vector<1x128xf32> to vector<16x128xf32>
    %478 = vector.broadcast %430 : vector<16x1xf32> to vector<16x128xf32>
    %479 = arith.mulf %477, %478 : vector<16x128xf32>
    %480 = vector.extract_strided_slice %419 {offsets = [5, 0, 0], sizes = [16, 16, 128], strides = [1, 1, 1]} : vector<22x16x128xf32> to vector<16x16x128xf32>
    %481 = vector.shape_cast %479 : vector<16x128xf32> to vector<1x16x128xf32>
    %482 = vector.broadcast %481 : vector<1x16x128xf32> to vector<16x16x128xf32>
    %483 = arith.mulf %480, %482 : vector<16x16x128xf32>
    %484 = arith.addf %475, %483 : vector<16x16x128xf32>
    %485 = vector.extract_strided_slice %38 {offsets = [47, 0], sizes = [1, 128], strides = [1, 1]} : vector<49x128xf32> to vector<1x128xf32>
    %486 = vector.broadcast %485 : vector<1x128xf32> to vector<16x128xf32>
    %487 = vector.broadcast %430 : vector<16x1xf32> to vector<16x128xf32>
    %488 = arith.mulf %486, %487 : vector<16x128xf32>
    %489 = vector.extract_strided_slice %419 {offsets = [6, 0, 0], sizes = [16, 16, 128], strides = [1, 1, 1]} : vector<22x16x128xf32> to vector<16x16x128xf32>
    %490 = vector.shape_cast %488 : vector<16x128xf32> to vector<1x16x128xf32>
    %491 = vector.broadcast %490 : vector<1x16x128xf32> to vector<16x16x128xf32>
    %492 = arith.mulf %489, %491 : vector<16x16x128xf32>
    %493 = arith.addf %484, %492 : vector<16x16x128xf32>
    %c349_i32 = arith.constant 349 : i32
    %494 = tpu.dynamic_rotate %36 by %c349_i32 dim 0 : vector<352x128xf32>, i32 -> vector<352x128xf32>
    %495 = vector.shape_cast %494 : vector<352x128xf32> to vector<22x16x128xf32>
    %c3_i32_46 = arith.constant 3 : i32
    %496 = vector.broadcast %c3_i32_46 : i32 to vector<16x1xi32>
    %497 = arith.addi %39, %496 : vector<16x1xi32>
    %c0_i32_47 = arith.constant 0 : i32
    %498 = vector.broadcast %c0_i32_47 : i32 to vector<16x1xi32>
    %499 = arith.cmpi sge, %497, %498 : vector<16x1xi32>
    %c3_i32_48 = arith.constant 3 : i32
    %500 = vector.broadcast %c3_i32_48 : i32 to vector<16x1xi32>
    %501 = arith.addi %39, %500 : vector<16x1xi32>
    %c16_i32_49 = arith.constant 16 : i32
    %502 = vector.broadcast %c16_i32_49 : i32 to vector<16x1xi32>
    %503 = arith.cmpi slt, %501, %502 : vector<16x1xi32>
    %504 = arith.andi %499, %503 : vector<16x1xi1>
    %505 = arith.extui %504 : vector<16x1xi1> to vector<16x1xi32>
    %506 = arith.sitofp %505 : vector<16x1xi32> to vector<16x1xf32>
    %507 = vector.extract_strided_slice %38 {offsets = [6, 0], sizes = [1, 128], strides = [1, 1]} : vector<49x128xf32> to vector<1x128xf32>
    %508 = vector.broadcast %507 : vector<1x128xf32> to vector<16x128xf32>
    %509 = vector.broadcast %506 : vector<16x1xf32> to vector<16x128xf32>
    %510 = arith.mulf %508, %509 : vector<16x128xf32>
    %511 = vector.extract_strided_slice %495 {offsets = [0, 0, 0], sizes = [16, 16, 128], strides = [1, 1, 1]} : vector<22x16x128xf32> to vector<16x16x128xf32>
    %512 = vector.shape_cast %510 : vector<16x128xf32> to vector<1x16x128xf32>
    %513 = vector.broadcast %512 : vector<1x16x128xf32> to vector<16x16x128xf32>
    %514 = arith.mulf %511, %513 : vector<16x16x128xf32>
    %515 = arith.addf %493, %514 : vector<16x16x128xf32>
    %516 = vector.extract_strided_slice %38 {offsets = [13, 0], sizes = [1, 128], strides = [1, 1]} : vector<49x128xf32> to vector<1x128xf32>
    %517 = vector.broadcast %516 : vector<1x128xf32> to vector<16x128xf32>
    %518 = vector.broadcast %506 : vector<16x1xf32> to vector<16x128xf32>
    %519 = arith.mulf %517, %518 : vector<16x128xf32>
    %520 = vector.extract_strided_slice %495 {offsets = [1, 0, 0], sizes = [16, 16, 128], strides = [1, 1, 1]} : vector<22x16x128xf32> to vector<16x16x128xf32>
    %521 = vector.shape_cast %519 : vector<16x128xf32> to vector<1x16x128xf32>
    %522 = vector.broadcast %521 : vector<1x16x128xf32> to vector<16x16x128xf32>
    %523 = arith.mulf %520, %522 : vector<16x16x128xf32>
    %524 = arith.addf %515, %523 : vector<16x16x128xf32>
    %525 = vector.extract_strided_slice %38 {offsets = [20, 0], sizes = [1, 128], strides = [1, 1]} : vector<49x128xf32> to vector<1x128xf32>
    %526 = vector.broadcast %525 : vector<1x128xf32> to vector<16x128xf32>
    %527 = vector.broadcast %506 : vector<16x1xf32> to vector<16x128xf32>
    %528 = arith.mulf %526, %527 : vector<16x128xf32>
    %529 = vector.extract_strided_slice %495 {offsets = [2, 0, 0], sizes = [16, 16, 128], strides = [1, 1, 1]} : vector<22x16x128xf32> to vector<16x16x128xf32>
    %530 = vector.shape_cast %528 : vector<16x128xf32> to vector<1x16x128xf32>
    %531 = vector.broadcast %530 : vector<1x16x128xf32> to vector<16x16x128xf32>
    %532 = arith.mulf %529, %531 : vector<16x16x128xf32>
    %533 = arith.addf %524, %532 : vector<16x16x128xf32>
    %534 = vector.extract_strided_slice %38 {offsets = [27, 0], sizes = [1, 128], strides = [1, 1]} : vector<49x128xf32> to vector<1x128xf32>
    %535 = vector.broadcast %534 : vector<1x128xf32> to vector<16x128xf32>
    %536 = vector.broadcast %506 : vector<16x1xf32> to vector<16x128xf32>
    %537 = arith.mulf %535, %536 : vector<16x128xf32>
    %538 = vector.extract_strided_slice %495 {offsets = [3, 0, 0], sizes = [16, 16, 128], strides = [1, 1, 1]} : vector<22x16x128xf32> to vector<16x16x128xf32>
    %539 = vector.shape_cast %537 : vector<16x128xf32> to vector<1x16x128xf32>
    %540 = vector.broadcast %539 : vector<1x16x128xf32> to vector<16x16x128xf32>
    %541 = arith.mulf %538, %540 : vector<16x16x128xf32>
    %542 = arith.addf %533, %541 : vector<16x16x128xf32>
    %543 = vector.extract_strided_slice %38 {offsets = [34, 0], sizes = [1, 128], strides = [1, 1]} : vector<49x128xf32> to vector<1x128xf32>
    %544 = vector.broadcast %543 : vector<1x128xf32> to vector<16x128xf32>
    %545 = vector.broadcast %506 : vector<16x1xf32> to vector<16x128xf32>
    %546 = arith.mulf %544, %545 : vector<16x128xf32>
    %547 = vector.extract_strided_slice %495 {offsets = [4, 0, 0], sizes = [16, 16, 128], strides = [1, 1, 1]} : vector<22x16x128xf32> to vector<16x16x128xf32>
    %548 = vector.shape_cast %546 : vector<16x128xf32> to vector<1x16x128xf32>
    %549 = vector.broadcast %548 : vector<1x16x128xf32> to vector<16x16x128xf32>
    %550 = arith.mulf %547, %549 : vector<16x16x128xf32>
    %551 = arith.addf %542, %550 : vector<16x16x128xf32>
    %552 = vector.extract_strided_slice %38 {offsets = [41, 0], sizes = [1, 128], strides = [1, 1]} : vector<49x128xf32> to vector<1x128xf32>
    %553 = vector.broadcast %552 : vector<1x128xf32> to vector<16x128xf32>
    %554 = vector.broadcast %506 : vector<16x1xf32> to vector<16x128xf32>
    %555 = arith.mulf %553, %554 : vector<16x128xf32>
    %556 = vector.extract_strided_slice %495 {offsets = [5, 0, 0], sizes = [16, 16, 128], strides = [1, 1, 1]} : vector<22x16x128xf32> to vector<16x16x128xf32>
    %557 = vector.shape_cast %555 : vector<16x128xf32> to vector<1x16x128xf32>
    %558 = vector.broadcast %557 : vector<1x16x128xf32> to vector<16x16x128xf32>
    %559 = arith.mulf %556, %558 : vector<16x16x128xf32>
    %560 = arith.addf %551, %559 : vector<16x16x128xf32>
    %561 = vector.extract_strided_slice %38 {offsets = [48, 0], sizes = [1, 128], strides = [1, 1]} : vector<49x128xf32> to vector<1x128xf32>
    %562 = vector.broadcast %561 : vector<1x128xf32> to vector<16x128xf32>
    %563 = vector.broadcast %506 : vector<16x1xf32> to vector<16x128xf32>
    %564 = arith.mulf %562, %563 : vector<16x128xf32>
    %565 = vector.extract_strided_slice %495 {offsets = [6, 0, 0], sizes = [16, 16, 128], strides = [1, 1, 1]} : vector<22x16x128xf32> to vector<16x16x128xf32>
    %566 = vector.shape_cast %564 : vector<16x128xf32> to vector<1x16x128xf32>
    %567 = vector.broadcast %566 : vector<1x16x128xf32> to vector<16x16x128xf32>
    %568 = arith.mulf %565, %567 : vector<16x16x128xf32>
    %569 = arith.addf %560, %568 : vector<16x16x128xf32>
    %570 = vector.shape_cast %569 : vector<16x16x128xf32> to vector<256x128xf32>
    %c0_50 = arith.constant 0 : index
    %c0_51 = arith.constant 0 : index
    %c0_52 = arith.constant 0 : index
    %571 = vector.load %arg9[%c0_50, %c0_51, %c0_52] : memref<1x1x128xf32, #tpu.memory_space<vmem>>, vector<1x1x128xf32>
    %572 = vector.shape_cast %571 : vector<1x1x128xf32> to vector<1x128xf32>
    %573 = vector.broadcast %572 : vector<1x128xf32> to vector<256x128xf32>
    %574 = arith.addf %570, %573 : vector<256x128xf32>
    %cst_53 = arith.constant 2.000000e+01 : f32
    %575 = vector.broadcast %cst_53 : f32 to vector<256x256xf32>
    %576 = arith.minimumf %26, %575 : vector<256x256xf32>
    %577 = math.exp %576 : vector<256x256xf32>
    %cst_54 = arith.constant 1.000000e+00 : f32
    %578 = vector.broadcast %cst_54 : f32 to vector<256x256xf32>
    %579 = arith.addf %578, %577 : vector<256x256xf32>
    %cst_55 = arith.constant 1.000000e+00 : f32
    %580 = vector.broadcast %cst_55 : f32 to vector<256x256xf32>
    %581 = arith.addf %580, %577 : vector<256x256xf32>
    %582 = arith.mulf %579, %581 : vector<256x256xf32>
    %cst_56 = arith.constant 1.000000e+00 : f32
    %583 = vector.broadcast %cst_56 : f32 to vector<256x256xf32>
    %584 = arith.subf %582, %583 : vector<256x256xf32>
    %585 = arith.mulf %26, %584 : vector<256x256xf32>
    %cst_57 = arith.constant 1.000000e+00 : f32
    %586 = vector.broadcast %cst_57 : f32 to vector<256x256xf32>
    %587 = arith.addf %582, %586 : vector<256x256xf32>
    %588 = tpu.reciprocal %587 {approx = true} : vector<256x256xf32> -> vector<256x256xf32>
    %589 = arith.mulf %585, %588 : vector<256x256xf32>
    %590 = vector.extract_strided_slice %589 {offsets = [0, 0], sizes = [256, 128], strides = [1, 1]} : vector<256x256xf32> to vector<256x128xf32>
    %591 = vector.extract_strided_slice %33 {offsets = [0, 0], sizes = [256, 128], strides = [1, 1]} : vector<256x256xf32> to vector<256x128xf32>
    %592 = arith.mulf %590, %591 : vector<256x128xf32>
    %593 = arith.truncf %592 : vector<256x128xf32> to vector<256x128xbf16>
    %594 = vector.extract_strided_slice %589 {offsets = [0, 128], sizes = [256, 128], strides = [1, 1]} : vector<256x256xf32> to vector<256x128xf32>
    %595 = arith.mulf %594, %574 : vector<256x128xf32>
    %596 = arith.truncf %595 : vector<256x128xf32> to vector<256x128xbf16>
    %c0_58 = arith.constant 0 : index
    %c0_59 = arith.constant 0 : index
    %c0_60 = arith.constant 0 : index
    %597 = vector.load %arg10[%c0_58, %c0_59, %c0_60] : memref<1x128x128xbf16, #tpu.memory_space<vmem>>, vector<1x128x128xbf16>
    %598 = vector.shape_cast %597 : vector<1x128x128xbf16> to vector<128x128xbf16>
    %cst_61 = arith.constant dense<0.000000e+00> : vector<256x128xf32>
    %599 = tpu.matmul %593, %598, %cst_61 {dimension_numbers = #tpu.dot_dimension_numbers<[1], [0], [0], [1], [0, 0, 1, 1], [], []>} : vector<256x128xbf16>, vector<128x128xbf16>, vector<256x128xf32> -> vector<256x128xf32>
    %c0_62 = arith.constant 0 : index
    %c0_63 = arith.constant 0 : index
    %c0_64 = arith.constant 0 : index
    %600 = vector.load %arg11[%c0_62, %c0_63, %c0_64] : memref<1x128x128xbf16, #tpu.memory_space<vmem>>, vector<1x128x128xbf16>
    %601 = vector.shape_cast %600 : vector<1x128x128xbf16> to vector<128x128xbf16>
    %cst_65 = arith.constant dense<0.000000e+00> : vector<256x128xf32>
    %602 = tpu.matmul %596, %601, %cst_65 {dimension_numbers = #tpu.dot_dimension_numbers<[1], [0], [0], [1], [0, 0, 1, 1], [], []>} : vector<256x128xbf16>, vector<128x128xbf16>, vector<256x128xf32> -> vector<256x128xf32>
    %603 = arith.addf %599, %602 : vector<256x128xf32>
    %c0_66 = arith.constant 0 : index
    %c0_67 = arith.constant 0 : index
    %c0_68 = arith.constant 0 : index
    %604 = vector.load %arg12[%c0_66, %c0_67, %c0_68] : memref<1x1x128xf32, #tpu.memory_space<vmem>>, vector<1x1x128xf32>
    %605 = vector.shape_cast %604 : vector<1x1x128xf32> to vector<1x128xf32>
    %606 = vector.broadcast %605 : vector<1x128xf32> to vector<256x128xf32>
    %607 = arith.addf %603, %606 : vector<256x128xf32>
    %608 = arith.addf %607, %4 : vector<256x128xf32>
    %c0_69 = arith.constant 0 : index
    %c0_70 = arith.constant 0 : index
    %c0_71 = arith.constant 0 : index
    %609 = vector.load %arg13[%c0_69, %c0_70, %c0_71] : memref<1x256x128xf32, #tpu.memory_space<vmem>>, vector<1x256x128xf32>
    %610 = vector.shape_cast %609 : vector<1x256x128xf32> to vector<256x128xf32>
    %611 = vector.shape_cast %608 : vector<256x128xf32> to vector<1x256x128xf32>
    tpu.vector_store %arg13[%c0_69, %c0_70, %c0_71], %611 {strides = array<i32>} : memref<1x256x128xf32, #tpu.memory_space<vmem>>, vector<1x256x128xf32>,
    return
  }
  func.func @transform_0(%arg0: i32, %arg1: i32) -> (i32, i32, i32) {
    %c0_i32 = arith.constant 0 : i32
    %c0_i32_0 = arith.constant 0 : i32
    %c0_i32_1 = arith.constant 0 : i32
    return %arg0, %c0_i32, %c0_i32_0 : i32, i32, i32
  }
  func.func @transform_1(%arg0: i32, %arg1: i32) -> (i32, i32, i32) {
    %c0_i32 = arith.constant 0 : i32
    %c0_i32_0 = arith.constant 0 : i32
    %c0_i32_1 = arith.constant 0 : i32
    return %arg1, %c0_i32, %c0_i32_0 : i32, i32, i32
  }
  func.func @transform_2(%arg0: i32, %arg1: i32) -> (i32, i32, i32) {
    %c0_i32 = arith.constant 0 : i32
    %c0_i32_0 = arith.constant 0 : i32
    %c0_i32_1 = arith.constant 0 : i32
    return %arg1, %c0_i32, %c0_i32_0 : i32, i32, i32
  }
  func.func @transform_3(%arg0: i32, %arg1: i32) -> (i32, i32, i32) {
    %c0_i32 = arith.constant 0 : i32
    %c0_i32_0 = arith.constant 0 : i32
    %c0_i32_1 = arith.constant 0 : i32
    return %arg1, %c0_i32, %c0_i32_0 : i32, i32, i32
  }
  func.func @transform_4(%arg0: i32, %arg1: i32) -> (i32, i32, i32) {
    %c0_i32 = arith.constant 0 : i32
    %c0_i32_0 = arith.constant 0 : i32
    %c0_i32_1 = arith.constant 0 : i32
    return %arg1, %c0_i32, %c0_i32_0 : i32, i32, i32
  }
  func.func @transform_5(%arg0: i32, %arg1: i32) -> (i32, i32, i32) {
    %c0_i32 = arith.constant 0 : i32
    %c0_i32_0 = arith.constant 0 : i32
    %c0_i32_1 = arith.constant 0 : i32
    return %arg1, %c0_i32, %c0_i32_0 : i32, i32, i32
  }
  func.func @transform_6(%arg0: i32, %arg1: i32) -> (i32, i32, i32) {
    %c0_i32 = arith.constant 0 : i32
    %c0_i32_0 = arith.constant 0 : i32
    %c0_i32_1 = arith.constant 0 : i32
    return %arg1, %c0_i32, %c0_i32_0 : i32, i32, i32
  }
  func.func @transform_7(%arg0: i32, %arg1: i32) -> (i32, i32, i32) {
    %c0_i32 = arith.constant 0 : i32
    %c0_i32_0 = arith.constant 0 : i32
    %c0_i32_1 = arith.constant 0 : i32
    return %arg1, %c0_i32, %c0_i32_0 : i32, i32, i32
  }
  func.func @transform_8(%arg0: i32, %arg1: i32) -> (i32, i32, i32) {
    %c0_i32 = arith.constant 0 : i32
    %c0_i32_0 = arith.constant 0 : i32
    %c0_i32_1 = arith.constant 0 : i32
    return %arg1, %c0_i32, %c0_i32_0 : i32, i32, i32
  }
  func.func @transform_9(%arg0: i32, %arg1: i32) -> (i32, i32, i32) {
    %c0_i32 = arith.constant 0 : i32
    %c0_i32_0 = arith.constant 0 : i32
    %c0_i32_1 = arith.constant 0 : i32
    return %arg1, %c0_i32, %c0_i32_0 : i32, i32, i32
  }
  func.func @transform_10(%arg0: i32, %arg1: i32) -> (i32, i32, i32) {
    %c0_i32 = arith.constant 0 : i32
    %c0_i32_0 = arith.constant 0 : i32
    %c0_i32_1 = arith.constant 0 : i32
    return %arg1, %c0_i32, %c0_i32_0 : i32, i32, i32
  }
  func.func @transform_11(%arg0: i32, %arg1: i32) -> (i32, i32, i32) {
    %c0_i32 = arith.constant 0 : i32
    %c0_i32_0 = arith.constant 0 : i32
    %c0_i32_1 = arith.constant 0 : i32
    return %arg0, %c0_i32, %c0_i32_0 : i32, i32, i32
  }
}

</mosaic_0001>

<llo_original>
// kernel: _lambda_.1
$region0: #{_lambda_.1}
  #allocation0 [shape = 'u32[]', space=smem, size = 0x4, offset = 0x4, fixed_abs, tag = 'smem constant byte address 0x4 - core index']
  #allocation1 [shape = 'u32[144,128]{1,0:T(1,128)}', space=vmem, size = 0x12000, scoped, tag = 'internal scratch']
  %s0 = inlined_call_operand.vmem [shape: f32[2,256,128], index: 0, kind: input, shape index: {}, may-alias: {0,11}]
  %s1 = inlined_call_operand.vmem [shape: f32[2,1,128], index: 1, kind: input, shape index: {}]
  %s2 = inlined_call_operand.vmem [shape: bf16[2,128,256], index: 2, kind: input, shape index: {}]
  %s3 = inlined_call_operand.vmem [shape: bf16[2,128,256], index: 3, kind: input, shape index: {}]
  %s4 = inlined_call_operand.vmem [shape: f32[2,1,256], index: 4, kind: input, shape index: {}]
  %s5 = inlined_call_operand.vmem [shape: f32[2,1,256], index: 5, kind: input, shape index: {}]
  %s6 = inlined_call_operand.vmem [shape: f32[2,49,128], index: 6, kind: input, shape index: {}]
  %s7 = inlined_call_operand.vmem [shape: f32[2,1,128], index: 7, kind: input, shape index: {}]
  %s8 = inlined_call_operand.vmem [shape: bf16[2,128,128], index: 8, kind: input, shape index: {}]
  %s9 = inlined_call_operand.vmem [shape: bf16[2,128,128], index: 9, kind: input, shape index: {}]
  %s10 = inlined_call_operand.vmem [shape: f32[2,1,128], index: 10, kind: input, shape index: {}]
  %s11 = inlined_call_operand.vmem [shape: f32[2,256,128], index: 11, kind: output, shape index: {}, may-alias: {0,11}]
  %s12 = sld [smem:[#allocation0]]
  $region81: #{_lambda_.1} parent=0
    _
  %s14 = ssub.s32 1, %s12
  %s15 = scalar_select 0, %s14, %s12
  loop: start=0, step=1, limit=6
  $region2: #{_lambda_.1} parent=0 // loop_pre_header
    _
  $region3: #{_lambda_.1} parent=0 // loop_header
    %s17 = sphi 0, %s21
    %p18 = scmp.ge.s32.totalorder %s17, 6
    %s24 = sphi 0, %s36
    %s25 = sphi 0, %s32
    %s26 = sphi 0, %s24
    %s27 = sphi 0, %s25
    %s28 = sphi 0, %s26
    %s29 = sphi 0, %s27
    %s39 = sphi 0, %s41
    %s42 = sphi 0, %s39
    %s43 = sphi 0, %s42
    %s59 = sphi 0, %s43
    %s65 = sphi 0, %s67
    %s68 = sphi 0, %s65
    %s69 = sphi 0, %s68
    %s85 = sphi 0, %s69
    %s91 = sphi 0, %s93
    %s94 = sphi 0, %s91
    %s95 = sphi 0, %s94
    %s111 = sphi 0, %s95
    %s117 = sphi 0, %s119
    %s120 = sphi 0, %s117
    %s121 = sphi 0, %s120
    %s137 = sphi 0, %s121
    %s143 = sphi 0, %s145
    %s146 = sphi 0, %s143
    %s147 = sphi 0, %s146
    %s163 = sphi 0, %s147
    %s169 = sphi 0, %s171
    %s172 = sphi 0, %s169
    %s173 = sphi 0, %s172
    %s189 = sphi 0, %s173
    %s195 = sphi 0, %s197
    %s198 = sphi 0, %s195
    %s199 = sphi 0, %s198
    %s215 = sphi 0, %s199
    %s221 = sphi 0, %s223
    %s224 = sphi 0, %s221
    %s225 = sphi 0, %s224
    %s241 = sphi 0, %s225
    %s247 = sphi 0, %s249
    %s250 = sphi 0, %s247
    %s251 = sphi 0, %s250
    %s267 = sphi 0, %s251
    %s273 = sphi 0, %s275
    %s276 = sphi 0, %s273
    %s277 = sphi 0, %s276
    %s293 = sphi 0, %s277
    %s299 = sphi 0, %s301
    %s302 = sphi 0, %s299
    %s303 = sphi 0, %s302
    %s319 = sphi 0, %s303
    %s325 = sphi 0, %s327
    %s328 = sphi 0, %s325
    %s329 = sphi 0, %s328
    %s345 = sphi 0, %s329
  $region4: #{_lambda_.1} parent=0 // loop_header_branch
    %20 = sbr.rel (%p18) target = $region8
  $region5: #{_lambda_.1} parent=0 // loop_body
    %s22 = ssub.s32 %s17, 1
    %s23 = ssub.s32 %s17, 2
    %s30 = sadd.s32 1, %s25
    %p31 = scmp.ge.s32.totalorder %s30, 2
    %s32 = scalar_select %p31, 0, %s30
    %s33 = sadd.s32 1, %s24
    %s34 = scalar_select %p31, %s33, %s24
    %p35 = scmp.ge.s32.totalorder %s34, 2
    %s36 = scalar_select %p35, 0, %s34
    %s37 = ssub.s32 %s24, %s36
    %p38 = scmp.eq.s32.totalorder %s37, 0
    %s40 = sadd.s32 %s39, 1
    %s41 = scalar_select %p38, %s39, %s40
    %p44 = pneg %p38
    %p45 = scmp.eq.s32.totalorder %s17, 3
    %p46 = por %p44, %p45
    %p47 = scmp.ne.s32.totalorder %s39, %s42
    %p48 = scmp.eq.s32.totalorder %s17, 0
    %p49 = por %p47, %p48
    %p50 = scmp.ne.s32.totalorder %s39, %s42
    %p51 = scmp.eq.s32.totalorder %s22, 3
    %p52 = por %p50, %p51
    %p53 = scmp.ne.s32.totalorder %s42, %s43
    %p54 = scmp.eq.s32.totalorder %s22, 0
    %p55 = por %p53, %p54
    %p56 = scmp.ne.s32.totalorder %s42, %s43
    %p57 = scmp.eq.s32.totalorder %s23, 3
    %p58 = por %p56, %p57
    %p60 = scmp.ne.s32.totalorder %s43, %s59
    %p61 = scmp.eq.s32.totalorder %s23, 0
    %p62 = por %p60, %p61
    %s63 = ssub.s32 %s25, %s32
    %p64 = scmp.eq.s32.totalorder %s63, 0
    %s66 = sadd.s32 %s65, 1
    %s67 = scalar_select %p64, %s65, %s66
    %p70 = pneg %p64
    %p71 = scmp.eq.s32.totalorder %s17, 3
    %p72 = por %p70, %p71
    %p73 = scmp.ne.s32.totalorder %s65, %s68
    %p74 = scmp.eq.s32.totalorder %s17, 0
    %p75 = por %p73, %p74
    %p76 = scmp.ne.s32.totalorder %s65, %s68
    %p77 = scmp.eq.s32.totalorder %s22, 3
    %p78 = por %p76, %p77
    %p79 = scmp.ne.s32.totalorder %s68, %s69
    %p80 = scmp.eq.s32.totalorder %s22, 0
    %p81 = por %p79, %p80
    %p82 = scmp.ne.s32.totalorder %s68, %s69
    %p83 = scmp.eq.s32.totalorder %s23, 3
    %p84 = por %p82, %p83
    %p86 = scmp.ne.s32.totalorder %s69, %s85
    %p87 = scmp.eq.s32.totalorder %s23, 0
    %p88 = por %p86, %p87
    %s89 = ssub.s32 %s25, %s32
    %p90 = scmp.eq.s32.totalorder %s89, 0
    %s92 = sadd.s32 %s91, 1
    %s93 = scalar_select %p90, %s91, %s92
    %p96 = pneg %p90
    %p97 = scmp.eq.s32.totalorder %s17, 3
    %p98 = por %p96, %p97
    %p99 = scmp.ne.s32.totalorder %s91, %s94
    %p100 = scmp.eq.s32.totalorder %s17, 0
    %p101 = por %p99, %p100
    %p102 = scmp.ne.s32.totalorder %s91, %s94
    %p103 = scmp.eq.s32.totalorder %s22, 3
    %p104 = por %p102, %p103
    %p105 = scmp.ne.s32.totalorder %s94, %s95
    %p106 = scmp.eq.s32.totalorder %s22, 0
    %p107 = por %p105, %p106
    %p108 = scmp.ne.s32.totalorder %s94, %s95
    %p109 = scmp.eq.s32.totalorder %s23, 3
    %p110 = por %p108, %p109
    %p112 = scmp.ne.s32.totalorder %s95, %s111
    %p113 = scmp.eq.s32.totalorder %s23, 0
    %p114 = por %p112, %p113
    %s115 = ssub.s32 %s25, %s32
    %p116 = scmp.eq.s32.totalorder %s115, 0
    %s118 = sadd.s32 %s117, 1
    %s119 = scalar_select %p116, %s117, %s118
    %p122 = pneg %p116
    %p123 = scmp.eq.s32.totalorder %s17, 3
    %p124 = por %p122, %p123
    %p125 = scmp.ne.s32.totalorder %s117, %s120
    %p126 = scmp.eq.s32.totalorder %s17, 0
    %p127 = por %p125, %p126
    %p128 = scmp.ne.s32.totalorder %s117, %s120
    %p129 = scmp.eq.s32.totalorder %s22, 3
    %p130 = por %p128, %p129
    %p131 = scmp.ne.s32.totalorder %s120, %s121
    %p132 = scmp.eq.s32.totalorder %s22, 0
    %p133 = por %p131, %p132
    %p134 = scmp.ne.s32.totalorder %s120, %s121
    %p135 = scmp.eq.s32.totalorder %s23, 3
    %p136 = por %p134, %p135
    %p138 = scmp.ne.s32.totalorder %s121, %s137
    %p139 = scmp.eq.s32.totalorder %s23, 0
    %p140 = por %p138, %p139
    %s141 = ssub.s32 %s25, %s32
    %p142 = scmp.eq.s32.totalorder %s141, 0
    %s144 = sadd.s32 %s143, 1
    %s145 = scalar_select %p142, %s143, %s144
    %p148 = pneg %p142
    %p149 = scmp.eq.s32.totalorder %s17, 3
    %p150 = por %p148, %p149
    %p151 = scmp.ne.s32.totalorder %s143, %s146
    %p152 = scmp.eq.s32.totalorder %s17, 0
    %p153 = por %p151, %p152
    %p154 = scmp.ne.s32.totalorder %s143, %s146
    %p155 = scmp.eq.s32.totalorder %s22, 3
    %p156 = por %p154, %p155
    %p157 = scmp.ne.s32.totalorder %s146, %s147
    %p158 = scmp.eq.s32.totalorder %s22, 0
    %p159 = por %p157, %p158
    %p160 = scmp.ne.s32.totalorder %s146, %s147
    %p161 = scmp.eq.s32.totalorder %s23, 3
    %p162 = por %p160, %p161
    %p164 = scmp.ne.s32.totalorder %s147, %s163
    %p165 = scmp.eq.s32.totalorder %s23, 0
    %p166 = por %p164, %p165
    %s167 = ssub.s32 %s25, %s32
    %p168 = scmp.eq.s32.totalorder %s167, 0
    %s170 = sadd.s32 %s169, 1
    %s171 = scalar_select %p168, %s169, %s170
    %p174 = pneg %p168
    %p175 = scmp.eq.s32.totalorder %s17, 3
    %p176 = por %p174, %p175
    %p177 = scmp.ne.s32.totalorder %s169, %s172
    %p178 = scmp.eq.s32.totalorder %s17, 0
    %p179 = por %p177, %p178
    %p180 = scmp.ne.s32.totalorder %s169, %s172
    %p181 = scmp.eq.s32.totalorder %s22, 3
    %p182 = por %p180, %p181
    %p183 = scmp.ne.s32.totalorder %s172, %s173
    %p184 = scmp.eq.s32.totalorder %s22, 0
    %p185 = por %p183, %p184
    %p186 = scmp.ne.s32.totalorder %s172, %s173
    %p187 = scmp.eq.s32.totalorder %s23, 3
    %p188 = por %p186, %p187
    %p190 = scmp.ne.s32.totalorder %s173, %s189
    %p191 = scmp.eq.s32.totalorder %s23, 0
    %p192 = por %p190, %p191
    %s193 = ssub.s32 %s25, %s32
    %p194 = scmp.eq.s32.totalorder %s193, 0
    %s196 = sadd.s32 %s195, 1
    %s197 = scalar_select %p194, %s195, %s196
    %p200 = pneg %p194
    %p201 = scmp.eq.s32.totalorder %s17, 3
    %p202 = por %p200, %p201
    %p203 = scmp.ne.s32.totalorder %s195, %s198
    %p204 = scmp.eq.s32.totalorder %s17, 0
    %p205 = por %p203, %p204
    %p206 = scmp.ne.s32.totalorder %s195, %s198
    %p207 = scmp.eq.s32.totalorder %s22, 3
    %p208 = por %p206, %p207
    %p209 = scmp.ne.s32.totalorder %s198, %s199
    %p210 = scmp.eq.s32.totalorder %s22, 0
    %p211 = por %p209, %p210
    %p212 = scmp.ne.s32.totalorder %s198, %s199
    %p213 = scmp.eq.s32.totalorder %s23, 3
    %p214 = por %p212, %p213
    %p216 = scmp.ne.s32.totalorder %s199, %s215
    %p217 = scmp.eq.s32.totalorder %s23, 0
    %p218 = por %p216, %p217
    %s219 = ssub.s32 %s25, %s32
    %p220 = scmp.eq.s32.totalorder %s219, 0
    %s222 = sadd.s32 %s221, 1
    %s223 = scalar_select %p220, %s221, %s222
    %p226 = pneg %p220
    %p227 = scmp.eq.s32.totalorder %s17, 3
    %p228 = por %p226, %p227
    %p229 = scmp.ne.s32.totalorder %s221, %s224
    %p230 = scmp.eq.s32.totalorder %s17, 0
    %p231 = por %p229, %p230
    %p232 = scmp.ne.s32.totalorder %s221, %s224
    %p233 = scmp.eq.s32.totalorder %s22, 3
    %p234 = por %p232, %p233
    %p235 = scmp.ne.s32.totalorder %s224, %s225
    %p236 = scmp.eq.s32.totalorder %s22, 0
    %p237 = por %p235, %p236
    %p238 = scmp.ne.s32.totalorder %s224, %s225
    %p239 = scmp.eq.s32.totalorder %s23, 3
    %p240 = por %p238, %p239
    %p242 = scmp.ne.s32.totalorder %s225, %s241
    %p243 = scmp.eq.s32.totalorder %s23, 0
    %p244 = por %p242, %p243
    %s245 = ssub.s32 %s25, %s32
    %p246 = scmp.eq.s32.totalorder %s245, 0
    %s248 = sadd.s32 %s247, 1
    %s249 = scalar_select %p246, %s247, %s248
    %p252 = pneg %p246
    %p253 = scmp.eq.s32.totalorder %s17, 3
    %p254 = por %p252, %p253
    %p255 = scmp.ne.s32.totalorder %s247, %s250
    %p256 = scmp.eq.s32.totalorder %s17, 0
    %p257 = por %p255, %p256
    %p258 = scmp.ne.s32.totalorder %s247, %s250
    %p259 = scmp.eq.s32.totalorder %s22, 3
    %p260 = por %p258, %p259
    %p261 = scmp.ne.s32.totalorder %s250, %s251
    %p262 = scmp.eq.s32.totalorder %s22, 0
    %p263 = por %p261, %p262
    %p264 = scmp.ne.s32.totalorder %s250, %s251
    %p265 = scmp.eq.s32.totalorder %s23, 3
    %p266 = por %p264, %p265
    %p268 = scmp.ne.s32.totalorder %s251, %s267
    %p269 = scmp.eq.s32.totalorder %s23, 0
    %p270 = por %p268, %p269
    %s271 = ssub.s32 %s25, %s32
    %p272 = scmp.eq.s32.totalorder %s271, 0
    %s274 = sadd.s32 %s273, 1
    %s275 = scalar_select %p272, %s273, %s274
    %p278 = pneg %p272
    %p279 = scmp.eq.s32.totalorder %s17, 3
    %p280 = por %p278, %p279
    %p281 = scmp.ne.s32.totalorder %s273, %s276
    %p282 = scmp.eq.s32.totalorder %s17, 0
    %p283 = por %p281, %p282
    %p284 = scmp.ne.s32.totalorder %s273, %s276
    %p285 = scmp.eq.s32.totalorder %s22, 3
    %p286 = por %p284, %p285
    %p287 = scmp.ne.s32.totalorder %s276, %s277
    %p288 = scmp.eq.s32.totalorder %s22, 0
    %p289 = por %p287, %p288
    %p290 = scmp.ne.s32.totalorder %s276, %s277
    %p291 = scmp.eq.s32.totalorder %s23, 3
    %p292 = por %p290, %p291
    %p294 = scmp.ne.s32.totalorder %s277, %s293
    %p295 = scmp.eq.s32.totalorder %s23, 0
    %p296 = por %p294, %p295
    %s297 = ssub.s32 %s25, %s32
    %p298 = scmp.eq.s32.totalorder %s297, 0
    %s300 = sadd.s32 %s299, 1
    %s301 = scalar_select %p298, %s299, %s300
    %p304 = pneg %p298
    %p305 = scmp.eq.s32.totalorder %s17, 3
    %p306 = por %p304, %p305
    %p307 = scmp.ne.s32.totalorder %s299, %s302
    %p308 = scmp.eq.s32.totalorder %s17, 0
    %p309 = por %p307, %p308
    %p310 = scmp.ne.s32.totalorder %s299, %s302
    %p311 = scmp.eq.s32.totalorder %s22, 3
    %p312 = por %p310, %p311
    %p313 = scmp.ne.s32.totalorder %s302, %s303
    %p314 = scmp.eq.s32.totalorder %s22, 0
    %p315 = por %p313, %p314
    %p316 = scmp.ne.s32.totalorder %s302, %s303
    %p317 = scmp.eq.s32.totalorder %s23, 3
    %p318 = por %p316, %p317
    %p320 = scmp.ne.s32.totalorder %s303, %s319
    %p321 = scmp.eq.s32.totalorder %s23, 0
    %p322 = por %p320, %p321
    %s323 = ssub.s32 %s24, %s36
    %p324 = scmp.eq.s32.totalorder %s323, 0
    %s326 = sadd.s32 %s325, 1
    %s327 = scalar_select %p324, %s325, %s326
    %p330 = pneg %p324
    %p331 = scmp.eq.s32.totalorder %s17, 3
    %p332 = por %p330, %p331
    %p333 = scmp.ne.s32.totalorder %s325, %s328
    %p334 = scmp.eq.s32.totalorder %s17, 0
    %p335 = por %p333, %p334
    %p336 = scmp.ne.s32.totalorder %s325, %s328
    %p337 = scmp.eq.s32.totalorder %s22, 3
    %p338 = por %p336, %p337
    %p339 = scmp.ne.s32.totalorder %s328, %s329
    %p340 = scmp.eq.s32.totalorder %s22, 0
    %p341 = por %p339, %p340
    %p342 = scmp.ne.s32.totalorder %s328, %s329
    %p343 = scmp.eq.s32.totalorder %s23, 3
    %p344 = por %p342, %p343
    %p346 = scmp.ne.s32.totalorder %s329, %s345
    %p347 = scmp.eq.s32.totalorder %s23, 0
    %p348 = por %p346, %p347
    %p349 = scmp.le.s32.totalorder 1, %s17
    %p350 = scmp.lt.s32.totalorder %s17, 5
    %p351 = pnand %p349, %p350
    %p352 = pneg %p351
    // Predicated region
    $region9: #{_lambda_.1} parent=5 // pred_check
      _
    $region10: #{_lambda_.1} parent=5 // pred_check_branch
      %354 = sbr.rel (%p351) target = $region12
    $region11: #{_lambda_.1} parent=5 // pred_region
      %s355 = ssub.s32 %s17, 1
    $region12: #{_lambda_.1} parent=5 // pred_fallthru
      _
    %p356 = scmp.lt.s32.totalorder %s17, 4
    // Predicated region
    $region13: #{_lambda_.1} parent=5 // pred_check
      %p357 = pneg %p356
    $region14: #{_lambda_.1} parent=5 // pred_check_branch
      %359 = sbr.rel (%p357) target = $region16
    $region15: #{_lambda_.1} parent=5 // pred_region
      // Predicated region
      $region17: #{_lambda_.1} parent=15 // pred_check
        %p360 = pneg %p49
      $region18: #{_lambda_.1} parent=15 // pred_check_branch
        %362 = sbr.rel (%p360) target = $region20
      $region19: #{_lambda_.1} parent=15 // pred_region
        %p363 = scmp.lt.s32.totalorder %s24, 1
        %s364 = scalar_select %p363, %s24, 1
        %s365 = smul.addr %s364, 32
        %s366 = smul.addr %s365, 8
        %s367 = scalar_lea.vmem %s0, %s366
      $region20: #{_lambda_.1} parent=15 // pred_fallthru
        _
      // Predicated region
      $region21: #{_lambda_.1} parent=15 // pred_check
        %p368 = pneg %p75
      $region22: #{_lambda_.1} parent=15 // pred_check_branch
        %370 = sbr.rel (%p368) target = $region24
      $region23: #{_lambda_.1} parent=15 // pred_region
        %p371 = scmp.lt.s32.totalorder %s25, 1
        %s372 = scalar_select %p371, %s25, 1
        %s373 = scalar_lea.vmem %s1, %s372
      $region24: #{_lambda_.1} parent=15 // pred_fallthru
        _
      // Predicated region
      $region25: #{_lambda_.1} parent=15 // pred_check
        %p374 = pneg %p101
      $region26: #{_lambda_.1} parent=15 // pred_check_branch
        %376 = sbr.rel (%p374) target = $region28
      $region27: #{_lambda_.1} parent=15 // pred_region
        %p377 = scmp.lt.s32.totalorder %s25, 1
        %s378 = scalar_select %p377, %s25, 1
        %s379 = smul.addr %s378, 32
        %s380 = smul.addr %s379, 4
        %s381 = scalar_lea.vmem %s2, %s380
      $region28: #{_lambda_.1} parent=15 // pred_fallthru
        _
      // Predicated region
      $region29: #{_lambda_.1} parent=15 // pred_check
        %p382 = pneg %p127
      $region30: #{_lambda_.1} parent=15 // pred_check_branch
        %384 = sbr.rel (%p382) target = $region32
      $region31: #{_lambda_.1} parent=15 // pred_region
        %p385 = scmp.lt.s32.totalorder %s25, 1
        %s386 = scalar_select %p385, %s25, 1
        %s387 = smul.addr %s386, 32
        %s388 = smul.addr %s387, 4
        %s389 = scalar_lea.vmem %s3, %s388
      $region32: #{_lambda_.1} parent=15 // pred_fallthru
        _
      // Predicated region
      $region33: #{_lambda_.1} parent=15 // pred_check
        %p390 = pneg %p153
      $region34: #{_lambda_.1} parent=15 // pred_check_branch
        %392 = sbr.rel (%p390) target = $region36
      $region35: #{_lambda_.1} parent=15 // pred_region
        %p393 = scmp.lt.s32.totalorder %s25, 1
        %s394 = scalar_select %p393, %s25, 1
        %s395 = smul.addr %s394, 2
        %s396 = scalar_lea.vmem %s4, %s395
      $region36: #{_lambda_.1} parent=15 // pred_fallthru
        _
      // Predicated region
      $region37: #{_lambda_.1} parent=15 // pred_check
        %p397 = pneg %p179
      $region38: #{_lambda_.1} parent=15 // pred_check_branch
        %399 = sbr.rel (%p397) target = $region40
      $region39: #{_lambda_.1} parent=15 // pred_region
        %p400 = scmp.lt.s32.totalorder %s25, 1
        %s401 = scalar_select %p400, %s25, 1
        %s402 = smul.addr %s401, 2
        %s403 = scalar_lea.vmem %s5, %s402
      $region40: #{_lambda_.1} parent=15 // pred_fallthru
        _
      // Predicated region
      $region41: #{_lambda_.1} parent=15 // pred_check
        %p404 = pneg %p205
      $region42: #{_lambda_.1} parent=15 // pred_check_branch
        %406 = sbr.rel (%p404) target = $region44
      $region43: #{_lambda_.1} parent=15 // pred_region
        %p407 = scmp.lt.s32.totalorder %s25, 1
        %s408 = scalar_select %p407, %s25, 1
        %s409 = smul.addr %s408, 7
        %s410 = smul.addr %s409, 8
        %s411 = scalar_lea.vmem %s6, %s410
      $region44: #{_lambda_.1} parent=15 // pred_fallthru
        _
      // Predicated region
      $region45: #{_lambda_.1} parent=15 // pred_check
        %p412 = pneg %p231
      $region46: #{_lambda_.1} parent=15 // pred_check_branch
        %414 = sbr.rel (%p412) target = $region48
      $region47: #{_lambda_.1} parent=15 // pred_region
        %p415 = scmp.lt.s32.totalorder %s25, 1
        %s416 = scalar_select %p415, %s25, 1
        %s417 = scalar_lea.vmem %s7, %s416
      $region48: #{_lambda_.1} parent=15 // pred_fallthru
        _
      // Predicated region
      $region49: #{_lambda_.1} parent=15 // pred_check
        %p418 = pneg %p257
      $region50: #{_lambda_.1} parent=15 // pred_check_branch
        %420 = sbr.rel (%p418) target = $region52
      $region51: #{_lambda_.1} parent=15 // pred_region
        %p421 = scmp.lt.s32.totalorder %s25, 1
        %s422 = scalar_select %p421, %s25, 1
        %s423 = smul.addr %s422, 16
        %s424 = smul.addr %s423, 4
        %s425 = scalar_lea.vmem %s8, %s424
      $region52: #{_lambda_.1} parent=15 // pred_fallthru
        _
      // Predicated region
      $region53: #{_lambda_.1} parent=15 // pred_check
        %p426 = pneg %p283
      $region54: #{_lambda_.1} parent=15 // pred_check_branch
        %428 = sbr.rel (%p426) target = $region56
      $region55: #{_lambda_.1} parent=15 // pred_region
        %p429 = scmp.lt.s32.totalorder %s25, 1
        %s430 = scalar_select %p429, %s25, 1
        %s431 = smul.addr %s430, 16
        %s432 = smul.addr %s431, 4
        %s433 = scalar_lea.vmem %s9, %s432
      $region56: #{_lambda_.1} parent=15 // pred_fallthru
        _
      // Predicated region
      $region57: #{_lambda_.1} parent=15 // pred_check
        %p434 = pneg %p309
      $region58: #{_lambda_.1} parent=15 // pred_check_branch
        %436 = sbr.rel (%p434) target = $region60
      $region59: #{_lambda_.1} parent=15 // pred_region
        %p437 = scmp.lt.s32.totalorder %s25, 1
        %s438 = scalar_select %p437, %s25, 1
        %s439 = scalar_lea.vmem %s10, %s438
      $region60: #{_lambda_.1} parent=15 // pred_fallthru
        _
    $region16: #{_lambda_.1} parent=5 // pred_fallthru
      _
    %p440 = scmp.le.s32.totalorder 1, %s17
    %p441 = scmp.lt.s32.totalorder %s17, 5
    %p442 = pnand %p440, %p441
    %p443 = pneg %p442
    // Predicated region
    $region61: #{_lambda_.1} parent=5 // pred_check
      _
    $region62: #{_lambda_.1} parent=5 // pred_check_branch
      %445 = sbr.rel (%p442) target = $region64
    $region63: #{_lambda_.1} parent=5 // pred_region
      %s446 = ssub.s32 %s17, 1
      %p447 = scmp.lt.s32.totalorder %s26, 1
      %s448 = scalar_select %p447, %s26, 1
      %s449 = smul.addr %s448, 32
      %s450 = smul.addr %s449, 8
      %s451 = scalar_lea.vmem %s0, %s450
      %p452 = pneg %p55
      %p453 = pneg %p52
      %p454 = scmp.lt.s32.totalorder %s27, 1
      %s455 = scalar_select %p454, %s27, 1
      %s456 = scalar_lea.vmem %s1, %s455
      %p457 = pneg %p81
      %p458 = pneg %p78
      %p459 = scmp.lt.s32.totalorder %s27, 1
      %s460 = scalar_select %p459, %s27, 1
      %s461 = smul.addr %s460, 32
      %s462 = smul.addr %s461, 4
      %s463 = scalar_lea.vmem %s2, %s462
      %p464 = pneg %p107
      %p465 = pneg %p104
      %p466 = scmp.lt.s32.totalorder %s27, 1
      %s467 = scalar_select %p466, %s27, 1
      %s468 = smul.addr %s467, 32
      %s469 = smul.addr %s468, 4
      %s470 = scalar_lea.vmem %s3, %s469
      %p471 = pneg %p133
      %p472 = pneg %p130
      %p473 = scmp.lt.s32.totalorder %s27, 1
      %s474 = scalar_select %p473, %s27, 1
      %s475 = smul.addr %s474, 2
      %s476 = scalar_lea.vmem %s4, %s475
      %p477 = pneg %p159
      %p478 = pneg %p156
      %p479 = scmp.lt.s32.totalorder %s27, 1
      %s480 = scalar_select %p479, %s27, 1
      %s481 = smul.addr %s480, 2
      %s482 = scalar_lea.vmem %s5, %s481
      %p483 = pneg %p185
      %p484 = pneg %p182
      %p485 = scmp.lt.s32.totalorder %s27, 1
      %s486 = scalar_select %p485, %s27, 1
      %s487 = smul.addr %s486, 7
      %s488 = smul.addr %s487, 8
      %s489 = scalar_lea.vmem %s6, %s488
      %p490 = pneg %p211
      %p491 = pneg %p208
      %p492 = scmp.lt.s32.totalorder %s27, 1
      %s493 = scalar_select %p492, %s27, 1
      %s494 = scalar_lea.vmem %s7, %s493
      %p495 = pneg %p237
      %p496 = pneg %p234
      %p497 = scmp.lt.s32.totalorder %s27, 1
      %s498 = scalar_select %p497, %s27, 1
      %s499 = smul.addr %s498, 16
      %s500 = smul.addr %s499, 4
      %s501 = scalar_lea.vmem %s8, %s500
      %p502 = pneg %p263
      %p503 = pneg %p260
      %p504 = scmp.lt.s32.totalorder %s27, 1
      %s505 = scalar_select %p504, %s27, 1
      %s506 = smul.addr %s505, 16
      %s507 = smul.addr %s506, 4
      %s508 = scalar_lea.vmem %s9, %s507
      %p509 = pneg %p289
      %p510 = pneg %p286
      %p511 = scmp.lt.s32.totalorder %s27, 1
      %s512 = scalar_select %p511, %s27, 1
      %s513 = scalar_lea.vmem %s10, %s512
      %p514 = pneg %p315
      %p515 = pneg %p312
      %p516 = pneg %p341
      %p517 = pneg %p338
      %p518 = scmp.lt.s32.totalorder %s26, 1
      %s519 = scalar_select %p518, %s26, 1
      %s520 = smul.addr %s519, 32
      %s521 = smul.addr %s520, 8
      %s522 = scalar_lea.vmem %s11, %s521
      %p523 = scmp.lt.s32.totalorder %s26, 1
      %s524 = scalar_select %p523, %s26, 1
      %s525 = smul.addr %s524, 32
      %s526 = smul.addr %s525, 8
      %s527 = scalar_lea.vmem %s0, %s526
      %p528 = scmp.lt.s32.totalorder %s27, 1
      %s529 = scalar_select %p528, %s27, 1
      %s530 = scalar_lea.vmem %s1, %s529
      %p531 = scmp.lt.s32.totalorder %s27, 1
      %s532 = scalar_select %p531, %s27, 1
      %s533 = smul.addr %s532, 32
      %s534 = smul.addr %s533, 4
      %s535 = scalar_lea.vmem %s2, %s534
      %p536 = scmp.lt.s32.totalorder %s27, 1
      %s537 = scalar_select %p536, %s27, 1
      %s538 = smul.addr %s537, 32
      %s539 = smul.addr %s538, 4
      %s540 = scalar_lea.vmem %s3, %s539
      %p541 = scmp.lt.s32.totalorder %s27, 1
      %s542 = scalar_select %p541, %s27, 1
      %s543 = smul.addr %s542, 2
      %s544 = scalar_lea.vmem %s4, %s543
      %p545 = scmp.lt.s32.totalorder %s27, 1
      %s546 = scalar_select %p545, %s27, 1
      %s547 = smul.addr %s546, 2
      %s548 = scalar_lea.vmem %s5, %s547
      %p549 = scmp.lt.s32.totalorder %s27, 1
      %s550 = scalar_select %p549, %s27, 1
      %s551 = smul.addr %s550, 7
      %s552 = smul.addr %s551, 8
      %s553 = scalar_lea.vmem %s6, %s552
      %p554 = scmp.lt.s32.totalorder %s27, 1
      %s555 = scalar_select %p554, %s27, 1
      %s556 = scalar_lea.vmem %s7, %s555
      %p557 = scmp.lt.s32.totalorder %s27, 1
      %s558 = scalar_select %p557, %s27, 1
      %s559 = smul.addr %s558, 16
      %s560 = smul.addr %s559, 4
      %s561 = scalar_lea.vmem %s8, %s560
      %p562 = scmp.lt.s32.totalorder %s27, 1
      %s563 = scalar_select %p562, %s27, 1
      %s564 = smul.addr %s563, 16
      %s565 = smul.addr %s564, 4
      %s566 = scalar_lea.vmem %s9, %s565
      %p567 = scmp.lt.s32.totalorder %s27, 1
      %s568 = scalar_select %p567, %s27, 1
      %s569 = scalar_lea.vmem %s10, %s568
      %p570 = scmp.lt.s32.totalorder %s26, 1
      %s571 = scalar_select %p570, %s26, 1
      %s572 = smul.addr %s571, 32
      %s573 = smul.addr %s572, 8
      %s574 = scalar_lea.vmem %s11, %s573
      %p576 = scmp.eq.s32.totalorder %s27, 0
      // Predicated region
      $region65: #{_lambda_.1} parent=63 // pred_check
        %p577 = pneg %p576
      $region66: #{_lambda_.1} parent=63 // pred_check_branch
        %579 = sbr.rel (%p577) target = $region68
      $region67: #{_lambda_.1} parent=63 // pred_region
        %v580 = vld [vmem:[%s527] sm:$0xff]
        %v581 = vld [vmem:[%s527 + $0x8] sm:$0xff]
        %v582 = vld [vmem:[%s527 + $0x10] sm:$0xff]
        %v583 = vld [vmem:[%s527 + $0x18] sm:$0xff]
        %v584 = vld [vmem:[%s527 + $0x20] sm:$0xff]
        %v585 = vld [vmem:[%s527 + $0x28] sm:$0xff]
        %v586 = vld [vmem:[%s527 + $0x30] sm:$0xff]
        %v587 = vld [vmem:[%s527 + $0x38] sm:$0xff]
        %v588 = vld [vmem:[%s527 + $0x40] sm:$0xff]
        %v589 = vld [vmem:[%s527 + $0x48] sm:$0xff]
        %v590 = vld [vmem:[%s527 + $0x50] sm:$0xff]
        %v591 = vld [vmem:[%s527 + $0x58] sm:$0xff]
        %v592 = vld [vmem:[%s527 + $0x60] sm:$0xff]
        %v593 = vld [vmem:[%s527 + $0x68] sm:$0xff]
        %v594 = vld [vmem:[%s527 + $0x70] sm:$0xff]
        %v595 = vld [vmem:[%s527 + $0x78] sm:$0xff]
        %v596 = vld [vmem:[%s527 + $0x80] sm:$0xff]
        %v597 = vld [vmem:[%s527 + $0x88] sm:$0xff]
        %v598 = vld [vmem:[%s527 + $0x90] sm:$0xff]
        %v599 = vld [vmem:[%s527 + $0x98] sm:$0xff]
        %v600 = vld [vmem:[%s527 + $0xa0] sm:$0xff]
        %v601 = vld [vmem:[%s527 + $0xa8] sm:$0xff]
        %v602 = vld [vmem:[%s527 + $0xb0] sm:$0xff]
        %v603 = vld [vmem:[%s527 + $0xb8] sm:$0xff]
        %v604 = vld [vmem:[%s527 + $0xc0] sm:$0xff]
        %v605 = vld [vmem:[%s527 + $0xc8] sm:$0xff]
        %v606 = vld [vmem:[%s527 + $0xd0] sm:$0xff]
        %v607 = vld [vmem:[%s527 + $0xd8] sm:$0xff]
        %v608 = vld [vmem:[%s527 + $0xe0] sm:$0xff]
        %v609 = vld [vmem:[%s527 + $0xe8] sm:$0xff]
        %v610 = vld [vmem:[%s527 + $0xf0] sm:$0xff]
        %v611 = vld [vmem:[%s527 + $0xf8] sm:$0xff]
        %612 = vst [vmem:[%s574] sm:$0xff] %v580
        %613 = vst [vmem:[%s574 + $0x8] sm:$0xff] %v581
        %614 = vst [vmem:[%s574 + $0x10] sm:$0xff] %v582
        %615 = vst [vmem:[%s574 + $0x18] sm:$0xff] %v583
        %616 = vst [vmem:[%s574 + $0x20] sm:$0xff] %v584
        %617 = vst [vmem:[%s574 + $0x28] sm:$0xff] %v585
        %618 = vst [vmem:[%s574 + $0x30] sm:$0xff] %v586
        %619 = vst [vmem:[%s574 + $0x38] sm:$0xff] %v587
        %620 = vst [vmem:[%s574 + $0x40] sm:$0xff] %v588
        %621 = vst [vmem:[%s574 + $0x48] sm:$0xff] %v589
        %622 = vst [vmem:[%s574 + $0x50] sm:$0xff] %v590
        %623 = vst [vmem:[%s574 + $0x58] sm:$0xff] %v591
        %624 = vst [vmem:[%s574 + $0x60] sm:$0xff] %v592
        %625 = vst [vmem:[%s574 + $0x68] sm:$0xff] %v593
        %626 = vst [vmem:[%s574 + $0x70] sm:$0xff] %v594
        %627 = vst [vmem:[%s574 + $0x78] sm:$0xff] %v595
        %628 = vst [vmem:[%s574 + $0x80] sm:$0xff] %v596
        %629 = vst [vmem:[%s574 + $0x88] sm:$0xff] %v597
        %630 = vst [vmem:[%s574 + $0x90] sm:$0xff] %v598
        %631 = vst [vmem:[%s574 + $0x98] sm:$0xff] %v599
        %632 = vst [vmem:[%s574 + $0xa0] sm:$0xff] %v600
        %633 = vst [vmem:[%s574 + $0xa8] sm:$0xff] %v601
        %634 = vst [vmem:[%s574 + $0xb0] sm:$0xff] %v602
        %635 = vst [vmem:[%s574 + $0xb8] sm:$0xff] %v603
        %636 = vst [vmem:[%s574 + $0xc0] sm:$0xff] %v604
        %637 = vst [vmem:[%s574 + $0xc8] sm:$0xff] %v605
        %638 = vst [vmem:[%s574 + $0xd0] sm:$0xff] %v606
        %639 = vst [vmem:[%s574 + $0xd8] sm:$0xff] %v607
        %640 = vst [vmem:[%s574 + $0xe0] sm:$0xff] %v608
        %641 = vst [vmem:[%s574 + $0xe8] sm:$0xff] %v609
        %642 = vst [vmem:[%s574 + $0xf0] sm:$0xff] %v610
        %643 = vst [vmem:[%s574 + $0xf8] sm:$0xff] %v611
      $region68: #{_lambda_.1} parent=63 // pred_fallthru
        _
      %v644 = vld [vmem:[%s574] sm:$0xff]
      %v645 = vld [vmem:[%s574 + $0x8] sm:$0xff]
      %v646 = vld [vmem:[%s574 + $0x10] sm:$0xff]
      %v647 = vld [vmem:[%s574 + $0x18] sm:$0xff]
      %v648 = vld [vmem:[%s574 + $0x20] sm:$0xff]
      %v649 = vld [vmem:[%s574 + $0x28] sm:$0xff]
      %v650 = vld [vmem:[%s574 + $0x30] sm:$0xff]
      %v651 = vld [vmem:[%s574 + $0x38] sm:$0xff]
      %v652 = vld [vmem:[%s574 + $0x40] sm:$0xff]
      %v653 = vld [vmem:[%s574 + $0x48] sm:$0xff]
      %v654 = vld [vmem:[%s574 + $0x50] sm:$0xff]
      %v655 = vld [vmem:[%s574 + $0x58] sm:$0xff]
      %v656 = vld [vmem:[%s574 + $0x60] sm:$0xff]
      %v657 = vld [vmem:[%s574 + $0x68] sm:$0xff]
      %v658 = vld [vmem:[%s574 + $0x70] sm:$0xff]
      %v659 = vld [vmem:[%s574 + $0x78] sm:$0xff]
      %v660 = vld [vmem:[%s574 + $0x80] sm:$0xff]
      %v661 = vld [vmem:[%s574 + $0x88] sm:$0xff]
      %v662 = vld [vmem:[%s574 + $0x90] sm:$0xff]
      %v663 = vld [vmem:[%s574 + $0x98] sm:$0xff]
      %v664 = vld [vmem:[%s574 + $0xa0] sm:$0xff]
      %v665 = vld [vmem:[%s574 + $0xa8] sm:$0xff]
      %v666 = vld [vmem:[%s574 + $0xb0] sm:$0xff]
      %v667 = vld [vmem:[%s574 + $0xb8] sm:$0xff]
      %v668 = vld [vmem:[%s574 + $0xc0] sm:$0xff]
      %v669 = vld [vmem:[%s574 + $0xc8] sm:$0xff]
      %v670 = vld [vmem:[%s574 + $0xd0] sm:$0xff]
      %v671 = vld [vmem:[%s574 + $0xd8] sm:$0xff]
      %v672 = vld [vmem:[%s574 + $0xe0] sm:$0xff]
      %v673 = vld [vmem:[%s574 + $0xe8] sm:$0xff]
      %v674 = vld [vmem:[%s574 + $0xf0] sm:$0xff]
      %v675 = vld [vmem:[%s574 + $0xf8] sm:$0xff]
      %v676 = vmul.f32 %v644, %v644
      %v677 = vmul.f32 %v645, %v645
      %v678 = vmul.f32 %v646, %v646
      %v679 = vmul.f32 %v647, %v647
      %v680 = vmul.f32 %v648, %v648
      %v681 = vmul.f32 %v649, %v649
      %v682 = vmul.f32 %v650, %v650
      %v683 = vmul.f32 %v651, %v651
      %v684 = vmul.f32 %v652, %v652
      %v685 = vmul.f32 %v653, %v653
      %v686 = vmul.f32 %v654, %v654
      %v687 = vmul.f32 %v655, %v655
      %v688 = vmul.f32 %v656, %v656
      %v689 = vmul.f32 %v657, %v657
      %v690 = vmul.f32 %v658, %v658
      %v691 = vmul.f32 %v659, %v659
      %v692 = vmul.f32 %v660, %v660
      %v693 = vmul.f32 %v661, %v661
      %v694 = vmul.f32 %v662, %v662
      %v695 = vmul.f32 %v663, %v663
      %v696 = vmul.f32 %v664, %v664
      %v697 = vmul.f32 %v665, %v665
      %v698 = vmul.f32 %v666, %v666
      %v699 = vmul.f32 %v667, %v667
      %v700 = vmul.f32 %v668, %v668
      %v701 = vmul.f32 %v669, %v669
      %v702 = vmul.f32 %v670, %v670
      %v703 = vmul.f32 %v671, %v671
      %v704 = vmul.f32 %v672, %v672
      %v705 = vmul.f32 %v673, %v673
      %v706 = vmul.f32 %v674, %v674
      %v707 = vmul.f32 %v675, %v675
      %708 = vadd.xlane.f32.xlu0 %v676
      %v709 = vpop.xlane.xlu0 %708
      %710 = vadd.xlane.f32.xlu0 %v677
      %v711 = vpop.xlane.xlu0 %710
      %712 = vadd.xlane.f32.xlu0 %v678
      %v713 = vpop.xlane.xlu0 %712
      %714 = vadd.xlane.f32.xlu0 %v679
      %v715 = vpop.xlane.xlu0 %714
      %716 = vadd.xlane.f32.xlu0 %v680
      %v717 = vpop.xlane.xlu0 %716
      %718 = vadd.xlane.f32.xlu0 %v681
      %v719 = vpop.xlane.xlu0 %718
      %720 = vadd.xlane.f32.xlu0 %v682
      %v721 = vpop.xlane.xlu0 %720
      %722 = vadd.xlane.f32.xlu0 %v683
      %v723 = vpop.xlane.xlu0 %722
      %724 = vadd.xlane.f32.xlu0 %v684
      %v725 = vpop.xlane.xlu0 %724
      %726 = vadd.xlane.f32.xlu0 %v685
      %v727 = vpop.xlane.xlu0 %726
      %728 = vadd.xlane.f32.xlu0 %v686
      %v729 = vpop.xlane.xlu0 %728
      %730 = vadd.xlane.f32.xlu0 %v687
      %v731 = vpop.xlane.xlu0 %730
      %732 = vadd.xlane.f32.xlu0 %v688
      %v733 = vpop.xlane.xlu0 %732
      %734 = vadd.xlane.f32.xlu0 %v689
      %v735 = vpop.xlane.xlu0 %734
      %736 = vadd.xlane.f32.xlu0 %v690
      %v737 = vpop.xlane.xlu0 %736
      %738 = vadd.xlane.f32.xlu0 %v691
      %v739 = vpop.xlane.xlu0 %738
      %740 = vadd.xlane.f32.xlu0 %v692
      %v741 = vpop.xlane.xlu0 %740
      %742 = vadd.xlane.f32.xlu0 %v693
      %v743 = vpop.xlane.xlu0 %742
      %744 = vadd.xlane.f32.xlu0 %v694
      %v745 = vpop.xlane.xlu0 %744
      %746 = vadd.xlane.f32.xlu0 %v695
      %v747 = vpop.xlane.xlu0 %746
      %748 = vadd.xlane.f32.xlu0 %v696
      %v749 = vpop.xlane.xlu0 %748
      %750 = vadd.xlane.f32.xlu0 %v697
      %v751 = vpop.xlane.xlu0 %750
      %752 = vadd.xlane.f32.xlu0 %v698
      %v753 = vpop.xlane.xlu0 %752
      %754 = vadd.xlane.f32.xlu0 %v699
      %v755 = vpop.xlane.xlu0 %754
      %756 = vadd.xlane.f32.xlu0 %v700
      %v757 = vpop.xlane.xlu0 %756
      %758 = vadd.xlane.f32.xlu0 %v701
      %v759 = vpop.xlane.xlu0 %758
      %760 = vadd.xlane.f32.xlu0 %v702
      %v761 = vpop.xlane.xlu0 %760
      %762 = vadd.xlane.f32.xlu0 %v703
      %v763 = vpop.xlane.xlu0 %762
      %764 = vadd.xlane.f32.xlu0 %v704
      %v765 = vpop.xlane.xlu0 %764
      %766 = vadd.xlane.f32.xlu0 %v705
      %v767 = vpop.xlane.xlu0 %766
      %768 = vadd.xlane.f32.xlu0 %v706
      %v769 = vpop.xlane.xlu0 %768
      %770 = vadd.xlane.f32.xlu0 %v707
      %v771 = vpop.xlane.xlu0 %770
      %v772 = vmul.f32 %v709, 0.03125
      %v773 = vmul.f32 %v711, 0.03125
      %v774 = vmul.f32 %v713, 0.03125
      %v775 = vmul.f32 %v715, 0.03125
      %v776 = vmul.f32 %v717, 0.03125
      %v777 = vmul.f32 %v719, 0.03125
      %v778 = vmul.f32 %v721, 0.03125
      %v779 = vmul.f32 %v723, 0.03125
      %v780 = vmul.f32 %v725, 0.03125
      %v781 = vmul.f32 %v727, 0.03125
      %v782 = vmul.f32 %v729, 0.03125
      %v783 = vmul.f32 %v731, 0.03125
      %v784 = vmul.f32 %v733, 0.03125
      %v785 = vmul.f32 %v735, 0.03125
      %v786 = vmul.f32 %v737, 0.03125
      %v787 = vmul.f32 %v739, 0.03125
      %v788 = vmul.f32 %v741, 0.03125
      %v789 = vmul.f32 %v743, 0.03125
      %v790 = vmul.f32 %v745, 0.03125
      %v791 = vmul.f32 %v747, 0.03125
      %v792 = vmul.f32 %v749, 0.03125
      %v793 = vmul.f32 %v751, 0.03125
      %v794 = vmul.f32 %v753, 0.03125
      %v795 = vmul.f32 %v755, 0.03125
      %v796 = vmul.f32 %v757, 0.03125
      %v797 = vmul.f32 %v759, 0.03125
      %v798 = vmul.f32 %v761, 0.03125
      %v799 = vmul.f32 %v763, 0.03125
      %v800 = vmul.f32 %v765, 0.03125
      %v801 = vmul.f32 %v767, 0.03125
      %v802 = vmul.f32 %v769, 0.03125
      %v803 = vmul.f32 %v771, 0.03125
      %v804 = vadd.f32 %v772, 1e-06
      %v805 = vadd.f32 %v773, 1e-06
      %v806 = vadd.f32 %v774, 1e-06
      %v807 = vadd.f32 %v775, 1e-06
      %v808 = vadd.f32 %v776, 1e-06
      %v809 = vadd.f32 %v777, 1e-06
      %v810 = vadd.f32 %v778, 1e-06
      %v811 = vadd.f32 %v779, 1e-06
      %v812 = vadd.f32 %v780, 1e-06
      %v813 = vadd.f32 %v781, 1e-06
      %v814 = vadd.f32 %v782, 1e-06
      %v815 = vadd.f32 %v783, 1e-06
      %v816 = vadd.f32 %v784, 1e-06
      %v817 = vadd.f32 %v785, 1e-06
      %v818 = vadd.f32 %v786, 1e-06
      %v819 = vadd.f32 %v787, 1e-06
      %v820 = vadd.f32 %v788, 1e-06
      %v821 = vadd.f32 %v789, 1e-06
      %v822 = vadd.f32 %v790, 1e-06
      %v823 = vadd.f32 %v791, 1e-06
      %v824 = vadd.f32 %v792, 1e-06
      %v825 = vadd.f32 %v793, 1e-06
      %v826 = vadd.f32 %v794, 1e-06
      %v827 = vadd.f32 %v795, 1e-06
      %v828 = vadd.f32 %v796, 1e-06
      %v829 = vadd.f32 %v797, 1e-06
      %v830 = vadd.f32 %v798, 1e-06
      %v831 = vadd.f32 %v799, 1e-06
      %v832 = vadd.f32 %v800, 1e-06
      %v833 = vadd.f32 %v801, 1e-06
      %v834 = vadd.f32 %v802, 1e-06
      %v835 = vadd.f32 %v803, 1e-06
      %v836 = vrsqrt.pop %v804
      %v837 = vrsqrt.pop %v805
      %v838 = vrsqrt.pop %v806
      %v839 = vrsqrt.pop %v807
      %v840 = vrsqrt.pop %v808
      %v841 = vrsqrt.pop %v809
      %v842 = vrsqrt.pop %v810
      %v843 = vrsqrt.pop %v811
      %v844 = vrsqrt.pop %v812
      %v845 = vrsqrt.pop %v813
      %v846 = vrsqrt.pop %v814
      %v847 = vrsqrt.pop %v815
      %v848 = vrsqrt.pop %v816
      %v849 = vrsqrt.pop %v817
      %v850 = vrsqrt.pop %v818
      %v851 = vrsqrt.pop %v819
      %v852 = vrsqrt.pop %v820
      %v853 = vrsqrt.pop %v821
      %v854 = vrsqrt.pop %v822
      %v855 = vrsqrt.pop %v823
      %v856 = vrsqrt.pop %v824
      %v857 = vrsqrt.pop %v825
      %v858 = vrsqrt.pop %v826
      %v859 = vrsqrt.pop %v827
      %v860 = vrsqrt.pop %v828
      %v861 = vrsqrt.pop %v829
      %v862 = vrsqrt.pop %v830
      %v863 = vrsqrt.pop %v831
      %v864 = vrsqrt.pop %v832
      %v865 = vrsqrt.pop %v833
      %v866 = vrsqrt.pop %v834
      %v867 = vrsqrt.pop %v835
      %v868 = vmul.f32 %v644, %v836
      %v869 = vmul.f32 %v645, %v837
      %v870 = vmul.f32 %v646, %v838
      %v871 = vmul.f32 %v647, %v839
      %v872 = vmul.f32 %v648, %v840
      %v873 = vmul.f32 %v649, %v841
      %v874 = vmul.f32 %v650, %v842
      %v875 = vmul.f32 %v651, %v843
      %v876 = vmul.f32 %v652, %v844
      %v877 = vmul.f32 %v653, %v845
      %v878 = vmul.f32 %v654, %v846
      %v879 = vmul.f32 %v655, %v847
      %v880 = vmul.f32 %v656, %v848
      %v881 = vmul.f32 %v657, %v849
      %v882 = vmul.f32 %v658, %v850
      %v883 = vmul.f32 %v659, %v851
      %v884 = vmul.f32 %v660, %v852
      %v885 = vmul.f32 %v661, %v853
      %v886 = vmul.f32 %v662, %v854
      %v887 = vmul.f32 %v663, %v855
      %v888 = vmul.f32 %v664, %v856
      %v889 = vmul.f32 %v665, %v857
      %v890 = vmul.f32 %v666, %v858
      %v891 = vmul.f32 %v667, %v859
      %v892 = vmul.f32 %v668, %v860
      %v893 = vmul.f32 %v669, %v861
      %v894 = vmul.f32 %v670, %v862
      %v895 = vmul.f32 %v671, %v863
      %v896 = vmul.f32 %v672, %v864
      %v897 = vmul.f32 %v673, %v865
      %v898 = vmul.f32 %v674, %v866
      %v899 = vmul.f32 %v675, %v867
      %v900 = vld [vmem:[%s530] sm:$0x1]
      %v902 = vlaneseq
      %v903 = vshrl.u32 %v902, 7
      %v904 = vsub.s32 0, %v903
      %v905 = vrot.slane %v900, %v904
      %v907 = vmul.f32 %v868, %v905
      %v908 = vmul.f32 %v869, %v905
      %v909 = vmul.f32 %v870, %v905
      %v910 = vmul.f32 %v871, %v905
      %v911 = vmul.f32 %v872, %v905
      %v912 = vmul.f32 %v873, %v905
      %v913 = vmul.f32 %v874, %v905
      %v914 = vmul.f32 %v875, %v905
      %v915 = vmul.f32 %v876, %v905
      %v916 = vmul.f32 %v877, %v905
      %v917 = vmul.f32 %v878, %v905
      %v918 = vmul.f32 %v879, %v905
      %v919 = vmul.f32 %v880, %v905
      %v920 = vmul.f32 %v881, %v905
      %v921 = vmul.f32 %v882, %v905
      %v922 = vmul.f32 %v883, %v905
      %v923 = vmul.f32 %v884, %v905
      %v924 = vmul.f32 %v885, %v905
      %v925 = vmul.f32 %v886, %v905
      %v926 = vmul.f32 %v887, %v905
      %v927 = vmul.f32 %v888, %v905
      %v928 = vmul.f32 %v889, %v905
      %v929 = vmul.f32 %v890, %v905
      %v930 = vmul.f32 %v891, %v905
      %v931 = vmul.f32 %v892, %v905
      %v932 = vmul.f32 %v893, %v905
      %v933 = vmul.f32 %v894, %v905
      %v934 = vmul.f32 %v895, %v905
      %v935 = vmul.f32 %v896, %v905
      %v936 = vmul.f32 %v897, %v905
      %v937 = vmul.f32 %v898, %v905
      %v938 = vmul.f32 %v899, %v905
      %v939 = vpack.c.bf16 %v908, %v907
      %v940 = vpack.c.bf16 %v910, %v909
      %v941 = vpack.c.bf16 %v912, %v911
      %v942 = vpack.c.bf16 %v914, %v913
      %v943 = vpack.c.bf16 %v916, %v915
      %v944 = vpack.c.bf16 %v918, %v917
      %v945 = vpack.c.bf16 %v920, %v919
      %v946 = vpack.c.bf16 %v922, %v921
      %v947 = vpack.c.bf16 %v924, %v923
      %v948 = vpack.c.bf16 %v926, %v925
      %v949 = vpack.c.bf16 %v928, %v927
      %v950 = vpack.c.bf16 %v930, %v929
      %v951 = vpack.c.bf16 %v932, %v931
      %v952 = vpack.c.bf16 %v934, %v933
      %v953 = vpack.c.bf16 %v936, %v935
      %v954 = vpack.c.bf16 %v938, %v937
      %v955 = vld [vmem:[%s535] sm:$0xff]
      %v956 = vld [vmem:[%s535 + $0x8] sm:$0xff]
      %v957 = vld [vmem:[%s535 + $0x10] sm:$0xff]
      %v958 = vld [vmem:[%s535 + $0x18] sm:$0xff]
      %v959 = vld [vmem:[%s535 + $0x20] sm:$0xff]
      %v960 = vld [vmem:[%s535 + $0x28] sm:$0xff]
      %v961 = vld [vmem:[%s535 + $0x30] sm:$0xff]
      %v962 = vld [vmem:[%s535 + $0x38] sm:$0xff]
      %v963 = vld [vmem:[%s535 + $0x40] sm:$0xff]
      %v964 = vld [vmem:[%s535 + $0x48] sm:$0xff]
      %v965 = vld [vmem:[%s535 + $0x50] sm:$0xff]
      %v966 = vld [vmem:[%s535 + $0x58] sm:$0xff]
      %v967 = vld [vmem:[%s535 + $0x60] sm:$0xff]
      %v968 = vld [vmem:[%s535 + $0x68] sm:$0xff]
      %v969 = vld [vmem:[%s535 + $0x70] sm:$0xff]
      %v970 = vld [vmem:[%s535 + $0x78] sm:$0xff]
      %v971 = vld [vmem:[%s544] sm:$0x3]
      %v973 = vlaneseq
      %v974 = vshrl.u32 %v973, 7
      %v975 = vsub.s32 0, %v974
      %v976 = vrot.slane %v971, %v975
      %v977 = vlaneseq
      %v978 = vshrl.u32 %v977, 7
      %v979 = vsub.s32 1, %v978
      %v980 = vrot.slane %v971, %v979
      %v999 = vunpack.c.l.b16 %v955
      %v1000 = vunpack.c.h.b16 %v955
      %v1001 = vunpack.c.l.b16 %v956
      %v1002 = vunpack.c.h.b16 %v956
      %v1003 = vunpack.c.l.b16 %v957
      %v1004 = vunpack.c.h.b16 %v957
      %v1005 = vunpack.c.l.b16 %v958
      %v1006 = vunpack.c.h.b16 %v958
      %v1007 = vunpack.c.l.b16 %v959
      %v1008 = vunpack.c.h.b16 %v959
      %v1009 = vunpack.c.l.b16 %v960
      %v1010 = vunpack.c.h.b16 %v960
      %v1011 = vunpack.c.l.b16 %v961
      %v1012 = vunpack.c.h.b16 %v961
      %v1013 = vunpack.c.l.b16 %v962
      %v1014 = vunpack.c.h.b16 %v962
      %v1015 = vunpack.c.l.b16 %v963
      %v1016 = vunpack.c.h.b16 %v963
      %v1017 = vunpack.c.l.b16 %v964
      %v1018 = vunpack.c.h.b16 %v964
      %v1019 = vunpack.c.l.b16 %v965
      %v1020 = vunpack.c.h.b16 %v965
      %v1021 = vunpack.c.l.b16 %v966
      %v1022 = vunpack.c.h.b16 %v966
      %v1023 = vunpack.c.l.b16 %v967
      %v1024 = vunpack.c.h.b16 %v967
      %v1025 = vunpack.c.l.b16 %v968
      %v1026 = vunpack.c.h.b16 %v968
      %v1027 = vunpack.c.l.b16 %v969
      %v1028 = vunpack.c.h.b16 %v969
      %v1029 = vunpack.c.l.b16 %v970
      %v1030 = vunpack.c.h.b16 %v970
      %v1031 = vpack.c.b16 %v1001, %v999
      %v1032 = vpack.c.b16 %v1002, %v1000
      %v1033 = vpack.c.b16 %v1005, %v1003
      %v1034 = vpack.c.b16 %v1006, %v1004
      %v1035 = vpack.c.b16 %v1009, %v1007
      %v1036 = vpack.c.b16 %v1010, %v1008
      %v1037 = vpack.c.b16 %v1013, %v1011
      %v1038 = vpack.c.b16 %v1014, %v1012
      %v1039 = vpack.c.b16 %v1017, %v1015
      %v1040 = vpack.c.b16 %v1018, %v1016
      %v1041 = vpack.c.b16 %v1021, %v1019
      %v1042 = vpack.c.b16 %v1022, %v1020
      %v1043 = vpack.c.b16 %v1025, %v1023
      %v1044 = vpack.c.b16 %v1026, %v1024
      %v1045 = vpack.c.b16 %v1029, %v1027
      %v1046 = vpack.c.b16 %v1030, %v1028
      %1063 = vmatprep.subr.bf16.mxu0 %v1046
      %1064 = vmatpush1.bf16.msra.mxu0 %v1045
      %1065 = vmatprep.subr.bf16.mxu0 %v1044
      %1066 = vmatpush1.bf16.msra.mxu0 %v1043
      %1067 = vmatprep.subr.bf16.mxu0 %v1042
      %1068 = vmatpush1.bf16.msra.mxu0 %v1041
      %1069 = vmatprep.subr.bf16.mxu0 %v1040
      %1070 = vmatpush1.bf16.msra.mxu0 %v1039
      %1071 = vmatprep.subr.bf16.mxu0 %v1038
      %1072 = vmatpush1.bf16.msra.mxu0 %v1037
      %1073 = vmatprep.subr.bf16.mxu0 %v1036
      %1074 = vmatpush1.bf16.msra.mxu0 %v1035
      %1075 = vmatprep.subr.bf16.mxu0 %v1034
      %1076 = vmatpush1.bf16.msra.mxu0 %v1033
      %1077 = vmatprep.subr.bf16.mxu0 %v1032
      %1078 = vmatpush1.bf16.msra.mxu0 %v1031
      %1079 = vmatprep.subr.bf16.mxu0 0
      %1080 = vmatpush2.bf16.msra.mxu0 0
      %1081 = vmatprep.subr.bf16.mxu0 0
      %1082 = vmatpush2.bf16.msra.mxu0 0
      %1083 = vmatprep.subr.bf16.mxu0 0
      %1084 = vmatpush2.bf16.msra.mxu0 0
      %1085 = vmatprep.subr.bf16.mxu0 0
      %1086 = vmatpush2.bf16.msra.mxu0 0
      %1087 = vmatprep.subr.bf16.mxu0 0
      %1088 = vmatpush2.bf16.msra.mxu0 0
      %1089 = vmatprep.subr.bf16.mxu0 0
      %1090 = vmatpush2.bf16.msra.mxu0 0
      %1091 = vmatprep.subr.bf16.mxu0 0
      %1092 = vmatpush2.bf16.msra.mxu0 0
      %1093 = vmatprep.subr.bf16.mxu0 0
      %1094 = vmatpush2.bf16.msra.mxu0 0
      %1095 = vmatprep.mubr.bf16.mxu0 0
      %1096 = vmatmul.mubr.bf16.gmra.mxu0 %v939
      %v1097 = vpop.f32.mrf.mxu0
      %v1098 = vadd.f32 %v976, %v1097
      %v1099 = vpop.f32.mrf.mxu0
      %v1100 = vadd.f32 %v980, %v1099
      %v1101 = vpop.f32.mrf.mxu0
      %v1102 = vadd.f32 %v976, %v1101
      %v1103 = vpop.f32.mrf.mxu0
      %v1104 = vadd.f32 %v980, %v1103
      %1105 = vmatprep.mubr.bf16.mxu0 0
      %1106 = vmatmul.mubr.bf16.gmra.mxu0 %v940
      %v1107 = vpop.f32.mrf.mxu0
      %v1108 = vadd.f32 %v976, %v1107
      %v1109 = vpop.f32.mrf.mxu0
      %v1110 = vadd.f32 %v980, %v1109
      %v1111 = vpop.f32.mrf.mxu0
      %v1112 = vadd.f32 %v976, %v1111
      %v1113 = vpop.f32.mrf.mxu0
      %v1114 = vadd.f32 %v980, %v1113
      %1115 = vmatprep.mubr.bf16.mxu0 0
      %1116 = vmatmul.mubr.bf16.gmra.mxu0 %v941
      %v1117 = vpop.f32.mrf.mxu0
      %v1118 = vadd.f32 %v976, %v1117
      %v1119 = vpop.f32.mrf.mxu0
      %v1120 = vadd.f32 %v980, %v1119
      %v1121 = vpop.f32.mrf.mxu0
      %v1122 = vadd.f32 %v976, %v1121
      %v1123 = vpop.f32.mrf.mxu0
      %v1124 = vadd.f32 %v980, %v1123
      %1125 = vmatprep.mubr.bf16.mxu0 0
      %1126 = vmatmul.mubr.bf16.gmra.mxu0 %v942
      %v1127 = vpop.f32.mrf.mxu0
      %v1128 = vadd.f32 %v976, %v1127
      %v1129 = vpop.f32.mrf.mxu0
      %v1130 = vadd.f32 %v980, %v1129
      %v1131 = vpop.f32.mrf.mxu0
      %v1132 = vadd.f32 %v976, %v1131
      %v1133 = vpop.f32.mrf.mxu0
      %v1134 = vadd.f32 %v980, %v1133
      %1135 = vmatprep.mubr.bf16.mxu0 0
      %1136 = vmatmul.mubr.bf16.gmra.mxu0 %v943
      %v1137 = vpop.f32.mrf.mxu0
      %v1138 = vadd.f32 %v976, %v1137
      %v1139 = vpop.f32.mrf.mxu0
      %v1140 = vadd.f32 %v980, %v1139
      %v1141 = vpop.f32.mrf.mxu0
      %v1142 = vadd.f32 %v976, %v1141
      %v1143 = vpop.f32.mrf.mxu0
      %v1144 = vadd.f32 %v980, %v1143
      %1145 = vmatprep.mubr.bf16.mxu0 0
      %1146 = vmatmul.mubr.bf16.gmra.mxu0 %v944
      %v1147 = vpop.f32.mrf.mxu0
      %v1148 = vadd.f32 %v976, %v1147
      %v1149 = vpop.f32.mrf.mxu0
      %v1150 = vadd.f32 %v980, %v1149
      %v1151 = vpop.f32.mrf.mxu0
      %v1152 = vadd.f32 %v976, %v1151
      %v1153 = vpop.f32.mrf.mxu0
      %v1154 = vadd.f32 %v980, %v1153
      %1155 = vmatprep.mubr.bf16.mxu0 0
      %1156 = vmatmul.mubr.bf16.gmra.mxu0 %v945
      %v1157 = vpop.f32.mrf.mxu0
      %v1158 = vadd.f32 %v976, %v1157
      %v1159 = vpop.f32.mrf.mxu0
      %v1160 = vadd.f32 %v980, %v1159
      %v1161 = vpop.f32.mrf.mxu0
      %v1162 = vadd.f32 %v976, %v1161
      %v1163 = vpop.f32.mrf.mxu0
      %v1164 = vadd.f32 %v980, %v1163
      %1165 = vmatprep.mubr.bf16.mxu0 0
      %1166 = vmatmul.mubr.bf16.gmra.mxu0 %v946
      %v1167 = vpop.f32.mrf.mxu0
      %v1168 = vadd.f32 %v976, %v1167
      %v1169 = vpop.f32.mrf.mxu0
      %v1170 = vadd.f32 %v980, %v1169
      %v1171 = vpop.f32.mrf.mxu0
      %v1172 = vadd.f32 %v976, %v1171
      %v1173 = vpop.f32.mrf.mxu0
      %v1174 = vadd.f32 %v980, %v1173
      %1175 = vmatprep.mubr.bf16.mxu0 0
      %1176 = vmatmul.mubr.bf16.gmra.mxu0 %v947
      %v1177 = vpop.f32.mrf.mxu0
      %v1178 = vadd.f32 %v976, %v1177
      %v1179 = vpop.f32.mrf.mxu0
      %v1180 = vadd.f32 %v980, %v1179
      %v1181 = vpop.f32.mrf.mxu0
      %v1182 = vadd.f32 %v976, %v1181
      %v1183 = vpop.f32.mrf.mxu0
      %v1184 = vadd.f32 %v980, %v1183
      %1185 = vmatprep.mubr.bf16.mxu0 0
      %1186 = vmatmul.mubr.bf16.gmra.mxu0 %v948
      %v1187 = vpop.f32.mrf.mxu0
      %v1188 = vadd.f32 %v976, %v1187
      %v1189 = vpop.f32.mrf.mxu0
      %v1190 = vadd.f32 %v980, %v1189
      %v1191 = vpop.f32.mrf.mxu0
      %v1192 = vadd.f32 %v976, %v1191
      %v1193 = vpop.f32.mrf.mxu0
      %v1194 = vadd.f32 %v980, %v1193
      %1195 = vmatprep.mubr.bf16.mxu0 0
      %1196 = vmatmul.mubr.bf16.gmra.mxu0 %v949
      %v1197 = vpop.f32.mrf.mxu0
      %v1198 = vadd.f32 %v976, %v1197
      %v1199 = vpop.f32.mrf.mxu0
      %v1200 = vadd.f32 %v980, %v1199
      %v1201 = vpop.f32.mrf.mxu0
      %v1202 = vadd.f32 %v976, %v1201
      %v1203 = vpop.f32.mrf.mxu0
      %v1204 = vadd.f32 %v980, %v1203
      %1205 = vmatprep.mubr.bf16.mxu0 0
      %1206 = vmatmul.mubr.bf16.gmra.mxu0 %v950
      %v1207 = vpop.f32.mrf.mxu0
      %v1208 = vadd.f32 %v976, %v1207
      %v1209 = vpop.f32.mrf.mxu0
      %v1210 = vadd.f32 %v980, %v1209
      %v1211 = vpop.f32.mrf.mxu0
      %v1212 = vadd.f32 %v976, %v1211
      %v1213 = vpop.f32.mrf.mxu0
      %v1214 = vadd.f32 %v980, %v1213
      %1215 = vmatprep.mubr.bf16.mxu0 0
      %1216 = vmatmul.mubr.bf16.gmra.mxu0 %v951
      %v1217 = vpop.f32.mrf.mxu0
      %v1218 = vadd.f32 %v976, %v1217
      %v1219 = vpop.f32.mrf.mxu0
      %v1220 = vadd.f32 %v980, %v1219
      %v1221 = vpop.f32.mrf.mxu0
      %v1222 = vadd.f32 %v976, %v1221
      %v1223 = vpop.f32.mrf.mxu0
      %v1224 = vadd.f32 %v980, %v1223
      %1225 = vmatprep.mubr.bf16.mxu0 0
      %1226 = vmatmul.mubr.bf16.gmra.mxu0 %v952
      %v1227 = vpop.f32.mrf.mxu0
      %v1228 = vadd.f32 %v976, %v1227
      %v1229 = vpop.f32.mrf.mxu0
      %v1230 = vadd.f32 %v980, %v1229
      %v1231 = vpop.f32.mrf.mxu0
      %v1232 = vadd.f32 %v976, %v1231
      %v1233 = vpop.f32.mrf.mxu0
      %v1234 = vadd.f32 %v980, %v1233
      %1235 = vmatprep.mubr.bf16.mxu0 0
      %1236 = vmatmul.mubr.bf16.gmra.mxu0 %v953
      %v1237 = vpop.f32.mrf.mxu0
      %v1238 = vadd.f32 %v976, %v1237
      %v1239 = vpop.f32.mrf.mxu0
      %v1240 = vadd.f32 %v980, %v1239
      %v1241 = vpop.f32.mrf.mxu0
      %v1242 = vadd.f32 %v976, %v1241
      %v1243 = vpop.f32.mrf.mxu0
      %v1244 = vadd.f32 %v980, %v1243
      %1245 = vmatprep.mubr.bf16.mxu0 0
      %1246 = vmatmul.mubr.bf16.gmra.mxu0 %v954
      %v1247 = vpop.f32.mrf.mxu0
      %v1248 = vadd.f32 %v976, %v1247
      %v1249 = vpop.f32.mrf.mxu0
      %v1250 = vadd.f32 %v980, %v1249
      %v1251 = vpop.f32.mrf.mxu0
      %v1252 = vadd.f32 %v976, %v1251
      %v1253 = vpop.f32.mrf.mxu0
      %v1254 = vadd.f32 %v980, %v1253
      %1255 = vdwg.mxu0
      %v1256 = vld [vmem:[%s540] sm:$0xff]
      %v1257 = vld [vmem:[%s540 + $0x8] sm:$0xff]
      %v1258 = vld [vmem:[%s540 + $0x10] sm:$0xff]
      %v1259 = vld [vmem:[%s540 + $0x18] sm:$0xff]
      %v1260 = vld [vmem:[%s540 + $0x20] sm:$0xff]
      %v1261 = vld [vmem:[%s540 + $0x28] sm:$0xff]
      %v1262 = vld [vmem:[%s540 + $0x30] sm:$0xff]
      %v1263 = vld [vmem:[%s540 + $0x38] sm:$0xff]
      %v1264 = vld [vmem:[%s540 + $0x40] sm:$0xff]
      %v1265 = vld [vmem:[%s540 + $0x48] sm:$0xff]
      %v1266 = vld [vmem:[%s540 + $0x50] sm:$0xff]
      %v1267 = vld [vmem:[%s540 + $0x58] sm:$0xff]
      %v1268 = vld [vmem:[%s540 + $0x60] sm:$0xff]
      %v1269 = vld [vmem:[%s540 + $0x68] sm:$0xff]
      %v1270 = vld [vmem:[%s540 + $0x70] sm:$0xff]
      %v1271 = vld [vmem:[%s540 + $0x78] sm:$0xff]
      %v1272 = vld [vmem:[%s548] sm:$0x3]
      %v1274 = vlaneseq
      %v1275 = vshrl.u32 %v1274, 7
      %v1276 = vsub.s32 0, %v1275
      %v1277 = vrot.slane %v1272, %v1276
      %v1278 = vlaneseq
      %v1279 = vshrl.u32 %v1278, 7
      %v1280 = vsub.s32 1, %v1279
      %v1281 = vrot.slane %v1272, %v1280
      %v1300 = vunpack.c.l.b16 %v1256
      %v1301 = vunpack.c.h.b16 %v1256
      %v1302 = vunpack.c.l.b16 %v1257
      %v1303 = vunpack.c.h.b16 %v1257
      %v1304 = vunpack.c.l.b16 %v1258
      %v1305 = vunpack.c.h.b16 %v1258
      %v1306 = vunpack.c.l.b16 %v1259
      %v1307 = vunpack.c.h.b16 %v1259
      %v1308 = vunpack.c.l.b16 %v1260
      %v1309 = vunpack.c.h.b16 %v1260
      %v1310 = vunpack.c.l.b16 %v1261
      %v1311 = vunpack.c.h.b16 %v1261
      %v1312 = vunpack.c.l.b16 %v1262
      %v1313 = vunpack.c.h.b16 %v1262
      %v1314 = vunpack.c.l.b16 %v1263
      %v1315 = vunpack.c.h.b16 %v1263
      %v1316 = vunpack.c.l.b16 %v1264
      %v1317 = vunpack.c.h.b16 %v1264
      %v1318 = vunpack.c.l.b16 %v1265
      %v1319 = vunpack.c.h.b16 %v1265
      %v1320 = vunpack.c.l.b16 %v1266
      %v1321 = vunpack.c.h.b16 %v1266
      %v1322 = vunpack.c.l.b16 %v1267
      %v1323 = vunpack.c.h.b16 %v1267
      %v1324 = vunpack.c.l.b16 %v1268
      %v1325 = vunpack.c.h.b16 %v1268
      %v1326 = vunpack.c.l.b16 %v1269
      %v1327 = vunpack.c.h.b16 %v1269
      %v1328 = vunpack.c.l.b16 %v1270
      %v1329 = vunpack.c.h.b16 %v1270
      %v1330 = vunpack.c.l.b16 %v1271
      %v1331 = vunpack.c.h.b16 %v1271
      %v1332 = vpack.c.b16 %v1302, %v1300
      %v1333 = vpack.c.b16 %v1303, %v1301
      %v1334 = vpack.c.b16 %v1306, %v1304
      %v1335 = vpack.c.b16 %v1307, %v1305
      %v1336 = vpack.c.b16 %v1310, %v1308
      %v1337 = vpack.c.b16 %v1311, %v1309
      %v1338 = vpack.c.b16 %v1314, %v1312
      %v1339 = vpack.c.b16 %v1315, %v1313
      %v1340 = vpack.c.b16 %v1318, %v1316
      %v1341 = vpack.c.b16 %v1319, %v1317
      %v1342 = vpack.c.b16 %v1322, %v1320
      %v1343 = vpack.c.b16 %v1323, %v1321
      %v1344 = vpack.c.b16 %v1326, %v1324
      %v1345 = vpack.c.b16 %v1327, %v1325
      %v1346 = vpack.c.b16 %v1330, %v1328
      %v1347 = vpack.c.b16 %v1331, %v1329
      %1364 = vmatprep.subr.bf16.mxu0 %v1347
      %1365 = vmatpush1.bf16.msra.mxu0 %v1346
      %1366 = vmatprep.subr.bf16.mxu0 %v1345
      %1367 = vmatpush1.bf16.msra.mxu0 %v1344
      %1368 = vmatprep.subr.bf16.mxu0 %v1343
      %1369 = vmatpush1.bf16.msra.mxu0 %v1342
      %1370 = vmatprep.subr.bf16.mxu0 %v1341
      %1371 = vmatpush1.bf16.msra.mxu0 %v1340
      %1372 = vmatprep.subr.bf16.mxu0 %v1339
      %1373 = vmatpush1.bf16.msra.mxu0 %v1338
      %1374 = vmatprep.subr.bf16.mxu0 %v1337
      %1375 = vmatpush1.bf16.msra.mxu0 %v1336
      %1376 = vmatprep.subr.bf16.mxu0 %v1335
      %1377 = vmatpush1.bf16.msra.mxu0 %v1334
      %1378 = vmatprep.subr.bf16.mxu0 %v1333
      %1379 = vmatpush1.bf16.msra.mxu0 %v1332
      %1380 = vmatprep.subr.bf16.mxu0 0
      %1381 = vmatpush2.bf16.msra.mxu0 0
      %1382 = vmatprep.subr.bf16.mxu0 0
      %1383 = vmatpush2.bf16.msra.mxu0 0
      %1384 = vmatprep.subr.bf16.mxu0 0
      %1385 = vmatpush2.bf16.msra.mxu0 0
      %1386 = vmatprep.subr.bf16.mxu0 0
      %1387 = vmatpush2.bf16.msra.mxu0 0
      %1388 = vmatprep.subr.bf16.mxu0 0
      %1389 = vmatpush2.bf16.msra.mxu0 0
      %1390 = vmatprep.subr.bf16.mxu0 0
      %1391 = vmatpush2.bf16.msra.mxu0 0
      %1392 = vmatprep.subr.bf16.mxu0 0
      %1393 = vmatpush2.bf16.msra.mxu0 0
      %1394 = vmatprep.subr.bf16.mxu0 0
      %1395 = vmatpush2.bf16.msra.mxu0 0
      %1396 = vmatprep.mubr.bf16.mxu0 0
      %1397 = vmatmul.mubr.bf16.gmra.mxu0 %v939
      %v1398 = vpop.f32.mrf.mxu0
      %v1399 = vadd.f32 %v1277, %v1398
      %v1400 = vpop.f32.mrf.mxu0
      %v1401 = vadd.f32 %v1281, %v1400
      %v1402 = vpop.f32.mrf.mxu0
      %v1403 = vadd.f32 %v1277, %v1402
      %v1404 = vpop.f32.mrf.mxu0
      %v1405 = vadd.f32 %v1281, %v1404
      %1406 = vmatprep.mubr.bf16.mxu0 0
      %1407 = vmatmul.mubr.bf16.gmra.mxu0 %v940
      %v1408 = vpop.f32.mrf.mxu0
      %v1409 = vadd.f32 %v1277, %v1408
      %v1410 = vpop.f32.mrf.mxu0
      %v1411 = vadd.f32 %v1281, %v1410
      %v1412 = vpop.f32.mrf.mxu0
      %v1413 = vadd.f32 %v1277, %v1412
      %v1414 = vpop.f32.mrf.mxu0
      %v1415 = vadd.f32 %v1281, %v1414
      %1416 = vmatprep.mubr.bf16.mxu0 0
      %1417 = vmatmul.mubr.bf16.gmra.mxu0 %v941
      %v1418 = vpop.f32.mrf.mxu0
      %v1419 = vadd.f32 %v1277, %v1418
      %v1420 = vpop.f32.mrf.mxu0
      %v1421 = vadd.f32 %v1281, %v1420
      %v1422 = vpop.f32.mrf.mxu0
      %v1423 = vadd.f32 %v1277, %v1422
      %v1424 = vpop.f32.mrf.mxu0
      %v1425 = vadd.f32 %v1281, %v1424
      %1426 = vmatprep.mubr.bf16.mxu0 0
      %1427 = vmatmul.mubr.bf16.gmra.mxu0 %v942
      %v1428 = vpop.f32.mrf.mxu0
      %v1429 = vadd.f32 %v1277, %v1428
      %v1430 = vpop.f32.mrf.mxu0
      %v1431 = vadd.f32 %v1281, %v1430
      %v1432 = vpop.f32.mrf.mxu0
      %v1433 = vadd.f32 %v1277, %v1432
      %v1434 = vpop.f32.mrf.mxu0
      %v1435 = vadd.f32 %v1281, %v1434
      %1436 = vmatprep.mubr.bf16.mxu0 0
      %1437 = vmatmul.mubr.bf16.gmra.mxu0 %v943
      %v1438 = vpop.f32.mrf.mxu0
      %v1439 = vadd.f32 %v1277, %v1438
      %v1440 = vpop.f32.mrf.mxu0
      %v1441 = vadd.f32 %v1281, %v1440
      %v1442 = vpop.f32.mrf.mxu0
      %v1443 = vadd.f32 %v1277, %v1442
      %v1444 = vpop.f32.mrf.mxu0
      %v1445 = vadd.f32 %v1281, %v1444
      %1446 = vmatprep.mubr.bf16.mxu0 0
      %1447 = vmatmul.mubr.bf16.gmra.mxu0 %v944
      %v1448 = vpop.f32.mrf.mxu0
      %v1449 = vadd.f32 %v1277, %v1448
      %v1450 = vpop.f32.mrf.mxu0
      %v1451 = vadd.f32 %v1281, %v1450
      %v1452 = vpop.f32.mrf.mxu0
      %v1453 = vadd.f32 %v1277, %v1452
      %v1454 = vpop.f32.mrf.mxu0
      %v1455 = vadd.f32 %v1281, %v1454
      %1456 = vmatprep.mubr.bf16.mxu0 0
      %1457 = vmatmul.mubr.bf16.gmra.mxu0 %v945
      %v1458 = vpop.f32.mrf.mxu0
      %v1459 = vadd.f32 %v1277, %v1458
      %v1460 = vpop.f32.mrf.mxu0
      %v1461 = vadd.f32 %v1281, %v1460
      %v1462 = vpop.f32.mrf.mxu0
      %v1463 = vadd.f32 %v1277, %v1462
      %v1464 = vpop.f32.mrf.mxu0
      %v1465 = vadd.f32 %v1281, %v1464
      %1466 = vmatprep.mubr.bf16.mxu0 0
      %1467 = vmatmul.mubr.bf16.gmra.mxu0 %v946
      %v1468 = vpop.f32.mrf.mxu0
      %v1469 = vadd.f32 %v1277, %v1468
      %v1470 = vpop.f32.mrf.mxu0
      %v1471 = vadd.f32 %v1281, %v1470
      %v1472 = vpop.f32.mrf.mxu0
      %v1473 = vadd.f32 %v1277, %v1472
      %v1474 = vpop.f32.mrf.mxu0
      %v1475 = vadd.f32 %v1281, %v1474
      %1476 = vmatprep.mubr.bf16.mxu0 0
      %1477 = vmatmul.mubr.bf16.gmra.mxu0 %v947
      %v1478 = vpop.f32.mrf.mxu0
      %v1479 = vadd.f32 %v1277, %v1478
      %v1480 = vpop.f32.mrf.mxu0
      %v1481 = vadd.f32 %v1281, %v1480
      %v1482 = vpop.f32.mrf.mxu0
      %v1483 = vadd.f32 %v1277, %v1482
      %v1484 = vpop.f32.mrf.mxu0
      %v1485 = vadd.f32 %v1281, %v1484
      %1486 = vmatprep.mubr.bf16.mxu0 0
      %1487 = vmatmul.mubr.bf16.gmra.mxu0 %v948
      %v1488 = vpop.f32.mrf.mxu0
      %v1489 = vadd.f32 %v1277, %v1488
      %v1490 = vpop.f32.mrf.mxu0
      %v1491 = vadd.f32 %v1281, %v1490
      %v1492 = vpop.f32.mrf.mxu0
      %v1493 = vadd.f32 %v1277, %v1492
      %v1494 = vpop.f32.mrf.mxu0
      %v1495 = vadd.f32 %v1281, %v1494
      %1496 = vmatprep.mubr.bf16.mxu0 0
      %1497 = vmatmul.mubr.bf16.gmra.mxu0 %v949
      %v1498 = vpop.f32.mrf.mxu0
      %v1499 = vadd.f32 %v1277, %v1498
      %v1500 = vpop.f32.mrf.mxu0
      %v1501 = vadd.f32 %v1281, %v1500
      %v1502 = vpop.f32.mrf.mxu0
      %v1503 = vadd.f32 %v1277, %v1502
      %v1504 = vpop.f32.mrf.mxu0
      %v1505 = vadd.f32 %v1281, %v1504
      %1506 = vmatprep.mubr.bf16.mxu0 0
      %1507 = vmatmul.mubr.bf16.gmra.mxu0 %v950
      %v1508 = vpop.f32.mrf.mxu0
      %v1509 = vadd.f32 %v1277, %v1508
      %v1510 = vpop.f32.mrf.mxu0
      %v1511 = vadd.f32 %v1281, %v1510
      %v1512 = vpop.f32.mrf.mxu0
      %v1513 = vadd.f32 %v1277, %v1512
      %v1514 = vpop.f32.mrf.mxu0
      %v1515 = vadd.f32 %v1281, %v1514
      %1516 = vmatprep.mubr.bf16.mxu0 0
      %1517 = vmatmul.mubr.bf16.gmra.mxu0 %v951
      %v1518 = vpop.f32.mrf.mxu0
      %v1519 = vadd.f32 %v1277, %v1518
      %v1520 = vpop.f32.mrf.mxu0
      %v1521 = vadd.f32 %v1281, %v1520
      %v1522 = vpop.f32.mrf.mxu0
      %v1523 = vadd.f32 %v1277, %v1522
      %v1524 = vpop.f32.mrf.mxu0
      %v1525 = vadd.f32 %v1281, %v1524
      %1526 = vmatprep.mubr.bf16.mxu0 0
      %1527 = vmatmul.mubr.bf16.gmra.mxu0 %v952
      %v1528 = vpop.f32.mrf.mxu0
      %v1529 = vadd.f32 %v1277, %v1528
      %v1530 = vpop.f32.mrf.mxu0
      %v1531 = vadd.f32 %v1281, %v1530
      %v1532 = vpop.f32.mrf.mxu0
      %v1533 = vadd.f32 %v1277, %v1532
      %v1534 = vpop.f32.mrf.mxu0
      %v1535 = vadd.f32 %v1281, %v1534
      %1536 = vmatprep.mubr.bf16.mxu0 0
      %1537 = vmatmul.mubr.bf16.gmra.mxu0 %v953
      %v1538 = vpop.f32.mrf.mxu0
      %v1539 = vadd.f32 %v1277, %v1538
      %v1540 = vpop.f32.mrf.mxu0
      %v1541 = vadd.f32 %v1281, %v1540
      %v1542 = vpop.f32.mrf.mxu0
      %v1543 = vadd.f32 %v1277, %v1542
      %v1544 = vpop.f32.mrf.mxu0
      %v1545 = vadd.f32 %v1281, %v1544
      %1546 = vmatprep.mubr.bf16.mxu0 0
      %1547 = vmatmul.mubr.bf16.gmra.mxu0 %v954
      %v1548 = vpop.f32.mrf.mxu0
      %v1549 = vadd.f32 %v1277, %v1548
      %v1550 = vpop.f32.mrf.mxu0
      %v1551 = vadd.f32 %v1281, %v1550
      %v1552 = vpop.f32.mrf.mxu0
      %v1553 = vadd.f32 %v1277, %v1552
      %v1554 = vpop.f32.mrf.mxu0
      %v1555 = vadd.f32 %v1281, %v1554
      %1556 = vdwg.mxu0
      %v1557 = vld [vmem:[%s553] sm:$0xff]
      %v1558 = vld [vmem:[%s553 + $0x8] sm:$0xff]
      %v1559 = vld [vmem:[%s553 + $0x10] sm:$0xff]
      %v1560 = vld [vmem:[%s553 + $0x18] sm:$0xff]
      %v1561 = vld [vmem:[%s553 + $0x20] sm:$0xff]
      %v1562 = vld [vmem:[%s553 + $0x28] sm:$0xff]
      %v1563 = vld [vmem:[%s553 + $0x30] sm:$0x1]
      %v1564 = vlaneseq
      %v1565 = vshrl.u32 %v1564, 7
      %v1566 = vadd.s32 %v1565, 8
      %v1567 = vrot.slane %v1401, 5
      %v1568 = vrot.slane %v1405, 5
      %v1569 = vrot.slane %v1411, 5
      %v1570 = vrot.slane %v1415, 5
      %v1571 = vrot.slane %v1421, 5
      %v1572 = vrot.slane %v1425, 5
      %v1573 = vrot.slane %v1431, 5
      %v1574 = vrot.slane %v1435, 5
      %v1575 = vrot.slane %v1441, 5
      %v1576 = vrot.slane %v1445, 5
      %v1577 = vrot.slane %v1451, 5
      %v1578 = vrot.slane %v1455, 5
      %v1579 = vrot.slane %v1461, 5
      %v1580 = vrot.slane %v1465, 5
      %v1581 = vrot.slane %v1471, 5
      %v1582 = vrot.slane %v1475, 5
      %v1583 = vrot.slane %v1481, 5
      %v1584 = vrot.slane %v1485, 5
      %v1585 = vrot.slane %v1491, 5
      %v1586 = vrot.slane %v1495, 5
      %v1587 = vrot.slane %v1501, 5
      %v1588 = vrot.slane %v1505, 5
      %v1589 = vrot.slane %v1511, 5
      %v1590 = vrot.slane %v1515, 5
      %v1591 = vrot.slane %v1521, 5
      %v1592 = vrot.slane %v1525, 5
      %v1593 = vrot.slane %v1531, 5
      %v1594 = vrot.slane %v1535, 5
      %v1595 = vrot.slane %v1541, 5
      %v1596 = vrot.slane %v1545, 5
      %v1597 = vrot.slane %v1551, 5
      %v1598 = vrot.slane %v1555, 5
      %vm1599 = vcmp.lt.s32.totalorder %v1565, 3
      %v1600 = vsel %vm1599, %v1598, 0.0
      %v1601 = vsel %vm1599, %v1597, %v1598
      %v1602 = vsel %vm1599, %v1596, %v1597
      %v1603 = vsel %vm1599, %v1595, %v1596
      %v1604 = vsel %vm1599, %v1594, %v1595
      %v1605 = vsel %vm1599, %v1593, %v1594
      %v1606 = vsel %vm1599, %v1592, %v1593
      %v1607 = vsel %vm1599, %v1591, %v1592
      %v1608 = vsel %vm1599, %v1590, %v1591
      %v1609 = vsel %vm1599, %v1589, %v1590
      %v1610 = vsel %vm1599, %v1588, %v1589
      %v1611 = vsel %vm1599, %v1587, %v1588
      %v1612 = vsel %vm1599, %v1586, %v1587
      %v1613 = vsel %vm1599, %v1585, %v1586
      %v1614 = vsel %vm1599, %v1584, %v1585
      %v1615 = vsel %vm1599, %v1583, %v1584
      %v1616 = vsel %vm1599, %v1582, %v1583
      %v1617 = vsel %vm1599, %v1581, %v1582
      %v1618 = vsel %vm1599, %v1580, %v1581
      %v1619 = vsel %vm1599, %v1579, %v1580
      %v1620 = vsel %vm1599, %v1578, %v1579
      %v1621 = vsel %vm1599, %v1577, %v1578
      %v1622 = vsel %vm1599, %v1576, %v1577
      %v1623 = vsel %vm1599, %v1575, %v1576
      %v1624 = vsel %vm1599, %v1574, %v1575
      %v1625 = vsel %vm1599, %v1573, %v1574
      %v1626 = vsel %vm1599, %v1572, %v1573
      %v1627 = vsel %vm1599, %v1571, %v1572
      %v1628 = vsel %vm1599, %v1570, %v1571
      %v1629 = vsel %vm1599, %v1569, %v1570
      %v1630 = vsel %vm1599, %v1568, %v1569
      %v1631 = vsel %vm1599, %v1567, %v1568
      %v1632 = vsel %vm1599, 0.0, %v1567
      %v1633 = vadd.s32 %v1565, 4294967293
      %v1634 = vadd.s32 %v1566, 4294967293
      %vm1635 = vcmp.ge.s32.totalorder %v1633, 0
      %vm1636 = vcmp.ge.s32.totalorder %v1634, 0
      %vm1637 = vcmp.lt.s32.totalorder %v1633, 16
      %vm1638 = vcmp.lt.s32.totalorder %v1634, 16
      %vm1639 = vmand %vm1635, %vm1637
      %vm1640 = vmand %vm1636, %vm1638
      %v1641 = vsel %vm1639, 1, 0
      %v1642 = vsel %vm1640, 1, 0
      %v1643 = vcvt.s32.f32 %v1641
      %v1644 = vcvt.s32.f32 %v1642
      %v1645 = vlaneseq
      %v1646 = vshrl.u32 %v1645, 7
      %v1647 = vsub.s32 0, %v1646
      %v1648 = vrot.slane %v1557, %v1647
      %v1649 = vmul.f32 %v1648, %v1643
      %v1650 = vmul.f32 %v1648, %v1644
      %v1651 = vmul.f32 0.0, %v1649
      %v1652 = vmul.f32 0.0, %v1650
      %v1653 = vmul.f32 %v1632, %v1649
      %v1654 = vmul.f32 %v1631, %v1650
      %v1655 = vmul.f32 %v1630, %v1649
      %v1656 = vmul.f32 %v1629, %v1650
      %v1657 = vmul.f32 %v1628, %v1649
      %v1658 = vmul.f32 %v1627, %v1650
      %v1659 = vmul.f32 %v1626, %v1649
      %v1660 = vmul.f32 %v1625, %v1650
      %v1661 = vmul.f32 %v1624, %v1649
      %v1662 = vmul.f32 %v1623, %v1650
      %v1663 = vmul.f32 %v1622, %v1649
      %v1664 = vmul.f32 %v1621, %v1650
      %v1665 = vmul.f32 %v1620, %v1649
      %v1666 = vmul.f32 %v1619, %v1650
      %v1667 = vmul.f32 %v1618, %v1649
      %v1668 = vmul.f32 %v1617, %v1650
      %v1669 = vmul.f32 %v1616, %v1649
      %v1670 = vmul.f32 %v1615, %v1650
      %v1671 = vmul.f32 %v1614, %v1649
      %v1672 = vmul.f32 %v1613, %v1650
      %v1673 = vmul.f32 %v1612, %v1649
      %v1674 = vmul.f32 %v1611, %v1650
      %v1675 = vmul.f32 %v1610, %v1649
      %v1676 = vmul.f32 %v1609, %v1650
      %v1677 = vmul.f32 %v1608, %v1649
      %v1678 = vmul.f32 %v1607, %v1650
      %v1679 = vlaneseq
      %v1680 = vshrl.u32 %v1679, 7
      %v1681 = vsub.s32 7, %v1680
      %v1682 = vrot.slane %v1557, %v1681
      %v1683 = vmul.f32 %v1682, %v1643
      %v1684 = vmul.f32 %v1682, %v1644
      %v1685 = vmul.f32 0.0, %v1683
      %v1686 = vmul.f32 0.0, %v1684
      %v1687 = vmul.f32 %v1632, %v1683
      %v1688 = vmul.f32 %v1631, %v1684
      %v1689 = vmul.f32 %v1630, %v1683
      %v1690 = vmul.f32 %v1629, %v1684
      %v1691 = vmul.f32 %v1628, %v1683
      %v1692 = vmul.f32 %v1627, %v1684
      %v1693 = vmul.f32 %v1626, %v1683
      %v1694 = vmul.f32 %v1625, %v1684
      %v1695 = vmul.f32 %v1624, %v1683
      %v1696 = vmul.f32 %v1623, %v1684
      %v1697 = vmul.f32 %v1622, %v1683
      %v1698 = vmul.f32 %v1621, %v1684
      %v1699 = vmul.f32 %v1620, %v1683
      %v1700 = vmul.f32 %v1619, %v1684
      %v1701 = vmul.f32 %v1618, %v1683
      %v1702 = vmul.f32 %v1617, %v1684
      %v1703 = vmul.f32 %v1616, %v1683
      %v1704 = vmul.f32 %v1615, %v1684
      %v1705 = vmul.f32 %v1614, %v1683
      %v1706 = vmul.f32 %v1613, %v1684
      %v1707 = vmul.f32 %v1612, %v1683
      %v1708 = vmul.f32 %v1611, %v1684
      %v1709 = vmul.f32 %v1610, %v1683
      %v1710 = vmul.f32 %v1609, %v1684
      %v1711 = vmul.f32 %v1608, %v1683
      %v1712 = vmul.f32 %v1607, %v1684
      %v1713 = vmul.f32 %v1606, %v1683
      %v1714 = vmul.f32 %v1605, %v1684
      %v1715 = vadd.f32 %v1651, %v1685
      %v1716 = vadd.f32 %v1652, %v1686
      %v1717 = vadd.f32 %v1651, %v1687
      %v1718 = vadd.f32 %v1652, %v1688
      %v1719 = vadd.f32 %v1653, %v1689
      %v1720 = vadd.f32 %v1654, %v1690
      %v1721 = vadd.f32 %v1655, %v1691
      %v1722 = vadd.f32 %v1656, %v1692
      %v1723 = vadd.f32 %v1657, %v1693
      %v1724 = vadd.f32 %v1658, %v1694
      %v1725 = vadd.f32 %v1659, %v1695
      %v1726 = vadd.f32 %v1660, %v1696
      %v1727 = vadd.f32 %v1661, %v1697
      %v1728 = vadd.f32 %v1662, %v1698
      %v1729 = vadd.f32 %v1663, %v1699
      %v1730 = vadd.f32 %v1664, %v1700
      %v1731 = vadd.f32 %v1665, %v1701
      %v1732 = vadd.f32 %v1666, %v1702
      %v1733 = vadd.f32 %v1667, %v1703
      %v1734 = vadd.f32 %v1668, %v1704
      %v1735 = vadd.f32 %v1669, %v1705
      %v1736 = vadd.f32 %v1670, %v1706
      %v1737 = vadd.f32 %v1671, %v1707
      %v1738 = vadd.f32 %v1672, %v1708
      %v1739 = vadd.f32 %v1673, %v1709
      %v1740 = vadd.f32 %v1674, %v1710
      %v1741 = vadd.f32 %v1675, %v1711
      %v1742 = vadd.f32 %v1676, %v1712
      %v1743 = vadd.f32 %v1677, %v1713
      %v1744 = vadd.f32 %v1678, %v1714
      %v1745 = vlaneseq
      %v1746 = vshrl.u32 %v1745, 7
      %v1747 = vsub.s32 6, %v1746
      %v1748 = vrot.slane %v1558, %v1747
      %v1749 = vmul.f32 %v1748, %v1643
      %v1750 = vmul.f32 %v1748, %v1644
      %v1751 = vmul.f32 0.0, %v1749
      %v1752 = vmul.f32 0.0, %v1750
      %v1753 = vmul.f32 %v1632, %v1749
      %v1754 = vmul.f32 %v1631, %v1750
      %v1755 = vmul.f32 %v1630, %v1749
      %v1756 = vmul.f32 %v1629, %v1750
      %v1757 = vmul.f32 %v1628, %v1749
      %v1758 = vmul.f32 %v1627, %v1750
      %v1759 = vmul.f32 %v1626, %v1749
      %v1760 = vmul.f32 %v1625, %v1750
      %v1761 = vmul.f32 %v1624, %v1749
      %v1762 = vmul.f32 %v1623, %v1750
      %v1763 = vmul.f32 %v1622, %v1749
      %v1764 = vmul.f32 %v1621, %v1750
      %v1765 = vmul.f32 %v1620, %v1749
      %v1766 = vmul.f32 %v1619, %v1750
      %v1767 = vmul.f32 %v1618, %v1749
      %v1768 = vmul.f32 %v1617, %v1750
      %v1769 = vmul.f32 %v1616, %v1749
      %v1770 = vmul.f32 %v1615, %v1750
      %v1771 = vmul.f32 %v1614, %v1749
      %v1772 = vmul.f32 %v1613, %v1750
      %v1773 = vmul.f32 %v1612, %v1749
      %v1774 = vmul.f32 %v1611, %v1750
      %v1775 = vmul.f32 %v1610, %v1749
      %v1776 = vmul.f32 %v1609, %v1750
      %v1777 = vmul.f32 %v1608, %v1749
      %v1778 = vmul.f32 %v1607, %v1750
      %v1779 = vmul.f32 %v1606, %v1749
      %v1780 = vmul.f32 %v1605, %v1750
      %v1781 = vmul.f32 %v1604, %v1749
      %v1782 = vmul.f32 %v1603, %v1750
      %v1783 = vadd.f32 %v1715, %v1751
      %v1784 = vadd.f32 %v1716, %v1752
      %v1785 = vadd.f32 %v1715, %v1753
      %v1786 = vadd.f32 %v1716, %v1754
      %v1787 = vadd.f32 %v1717, %v1755
      %v1788 = vadd.f32 %v1718, %v1756
      %v1789 = vadd.f32 %v1719, %v1757
      %v1790 = vadd.f32 %v1720, %v1758
      %v1791 = vadd.f32 %v1721, %v1759
      %v1792 = vadd.f32 %v1722, %v1760
      %v1793 = vadd.f32 %v1723, %v1761
      %v1794 = vadd.f32 %v1724, %v1762
      %v1795 = vadd.f32 %v1725, %v1763
      %v1796 = vadd.f32 %v1726, %v1764
      %v1797 = vadd.f32 %v1727, %v1765
      %v1798 = vadd.f32 %v1728, %v1766
      %v1799 = vadd.f32 %v1729, %v1767
      %v1800 = vadd.f32 %v1730, %v1768
      %v1801 = vadd.f32 %v1731, %v1769
      %v1802 = vadd.f32 %v1732, %v1770
      %v1803 = vadd.f32 %v1733, %v1771
      %v1804 = vadd.f32 %v1734, %v1772
      %v1805 = vadd.f32 %v1735, %v1773
      %v1806 = vadd.f32 %v1736, %v1774
      %v1807 = vadd.f32 %v1737, %v1775
      %v1808 = vadd.f32 %v1738, %v1776
      %v1809 = vadd.f32 %v1739, %v1777
      %v1810 = vadd.f32 %v1740, %v1778
      %v1811 = vadd.f32 %v1741, %v1779
      %v1812 = vadd.f32 %v1742, %v1780
      %v1813 = vadd.f32 %v1743, %v1781
      %v1814 = vadd.f32 %v1744, %v1782
      %v1815 = vlaneseq
      %v1816 = vshrl.u32 %v1815, 7
      %v1817 = vsub.s32 5, %v1816
      %v1818 = vrot.slane %v1559, %v1817
      %v1819 = vmul.f32 %v1818, %v1643
      %v1820 = vmul.f32 %v1818, %v1644
      %v1821 = vmul.f32 %v1632, %v1819
      %v1822 = vmul.f32 %v1631, %v1820
      %v1823 = vmul.f32 %v1630, %v1819
      %v1824 = vmul.f32 %v1629, %v1820
      %v1825 = vmul.f32 %v1628, %v1819
      %v1826 = vmul.f32 %v1627, %v1820
      %v1827 = vmul.f32 %v1626, %v1819
      %v1828 = vmul.f32 %v1625, %v1820
      %v1829 = vmul.f32 %v1624, %v1819
      %v1830 = vmul.f32 %v1623, %v1820
      %v1831 = vmul.f32 %v1622, %v1819
      %v1832 = vmul.f32 %v1621, %v1820
      %v1833 = vmul.f32 %v1620, %v1819
      %v1834 = vmul.f32 %v1619, %v1820
      %v1835 = vmul.f32 %v1618, %v1819
      %v1836 = vmul.f32 %v1617, %v1820
      %v1837 = vmul.f32 %v1616, %v1819
      %v1838 = vmul.f32 %v1615, %v1820
      %v1839 = vmul.f32 %v1614, %v1819
      %v1840 = vmul.f32 %v1613, %v1820
      %v1841 = vmul.f32 %v1612, %v1819
      %v1842 = vmul.f32 %v1611, %v1820
      %v1843 = vmul.f32 %v1610, %v1819
      %v1844 = vmul.f32 %v1609, %v1820
      %v1845 = vmul.f32 %v1608, %v1819
      %v1846 = vmul.f32 %v1607, %v1820
      %v1847 = vmul.f32 %v1606, %v1819
      %v1848 = vmul.f32 %v1605, %v1820
      %v1849 = vmul.f32 %v1604, %v1819
      %v1850 = vmul.f32 %v1603, %v1820
      %v1851 = vmul.f32 %v1602, %v1819
      %v1852 = vmul.f32 %v1601, %v1820
      %v1853 = vadd.f32 %v1783, %v1821
      %v1854 = vadd.f32 %v1784, %v1822
      %v1855 = vadd.f32 %v1785, %v1823
      %v1856 = vadd.f32 %v1786, %v1824
      %v1857 = vadd.f32 %v1787, %v1825
      %v1858 = vadd.f32 %v1788, %v1826
      %v1859 = vadd.f32 %v1789, %v1827
      %v1860 = vadd.f32 %v1790, %v1828
      %v1861 = vadd.f32 %v1791, %v1829
      %v1862 = vadd.f32 %v1792, %v1830
      %v1863 = vadd.f32 %v1793, %v1831
      %v1864 = vadd.f32 %v1794, %v1832
      %v1865 = vadd.f32 %v1795, %v1833
      %v1866 = vadd.f32 %v1796, %v1834
      %v1867 = vadd.f32 %v1797, %v1835
      %v1868 = vadd.f32 %v1798, %v1836
      %v1869 = vadd.f32 %v1799, %v1837
      %v1870 = vadd.f32 %v1800, %v1838
      %v1871 = vadd.f32 %v1801, %v1839
      %v1872 = vadd.f32 %v1802, %v1840
      %v1873 = vadd.f32 %v1803, %v1841
      %v1874 = vadd.f32 %v1804, %v1842
      %v1875 = vadd.f32 %v1805, %v1843
      %v1876 = vadd.f32 %v1806, %v1844
      %v1877 = vadd.f32 %v1807, %v1845
      %v1878 = vadd.f32 %v1808, %v1846
      %v1879 = vadd.f32 %v1809, %v1847
      %v1880 = vadd.f32 %v1810, %v1848
      %v1881 = vadd.f32 %v1811, %v1849
      %v1882 = vadd.f32 %v1812, %v1850
      %v1883 = vadd.f32 %v1813, %v1851
      %v1884 = vadd.f32 %v1814, %v1852
      %v1885 = vlaneseq
      %v1886 = vshrl.u32 %v1885, 7
      %v1887 = vsub.s32 4, %v1886
      %v1888 = vrot.slane %v1560, %v1887
      %v1889 = vmul.f32 %v1888, %v1643
      %v1890 = vmul.f32 %v1888, %v1644
      %v1891 = vmul.f32 %v1630, %v1889
      %v1892 = vmul.f32 %v1629, %v1890
      %v1893 = vmul.f32 %v1628, %v1889
      %v1894 = vmul.f32 %v1627, %v1890
      %v1895 = vmul.f32 %v1626, %v1889
      %v1896 = vmul.f32 %v1625, %v1890
      %v1897 = vmul.f32 %v1624, %v1889
      %v1898 = vmul.f32 %v1623, %v1890
      %v1899 = vmul.f32 %v1622, %v1889
      %v1900 = vmul.f32 %v1621, %v1890
      %v1901 = vmul.f32 %v1620, %v1889
      %v1902 = vmul.f32 %v1619, %v1890
      %v1903 = vmul.f32 %v1618, %v1889
      %v1904 = vmul.f32 %v1617, %v1890
      %v1905 = vmul.f32 %v1616, %v1889
      %v1906 = vmul.f32 %v1615, %v1890
      %v1907 = vmul.f32 %v1614, %v1889
      %v1908 = vmul.f32 %v1613, %v1890
      %v1909 = vmul.f32 %v1612, %v1889
      %v1910 = vmul.f32 %v1611, %v1890
      %v1911 = vmul.f32 %v1610, %v1889
      %v1912 = vmul.f32 %v1609, %v1890
      %v1913 = vmul.f32 %v1608, %v1889
      %v1914 = vmul.f32 %v1607, %v1890
      %v1915 = vmul.f32 %v1606, %v1889
      %v1916 = vmul.f32 %v1605, %v1890
      %v1917 = vmul.f32 %v1604, %v1889
      %v1918 = vmul.f32 %v1603, %v1890
      %v1919 = vmul.f32 %v1602, %v1889
      %v1920 = vmul.f32 %v1601, %v1890
      %v1921 = vmul.f32 %v1600, %v1889
      %v1922 = vmul.f32 0.0, %v1890
      %v1923 = vadd.f32 %v1853, %v1891
      %v1924 = vadd.f32 %v1854, %v1892
      %v1925 = vadd.f32 %v1855, %v1893
      %v1926 = vadd.f32 %v1856, %v1894
      %v1927 = vadd.f32 %v1857, %v1895
      %v1928 = vadd.f32 %v1858, %v1896
      %v1929 = vadd.f32 %v1859, %v1897
      %v1930 = vadd.f32 %v1860, %v1898
      %v1931 = vadd.f32 %v1861, %v1899
      %v1932 = vadd.f32 %v1862, %v1900
      %v1933 = vadd.f32 %v1863, %v1901
      %v1934 = vadd.f32 %v1864, %v1902
      %v1935 = vadd.f32 %v1865, %v1903
      %v1936 = vadd.f32 %v1866, %v1904
      %v1937 = vadd.f32 %v1867, %v1905
      %v1938 = vadd.f32 %v1868, %v1906
      %v1939 = vadd.f32 %v1869, %v1907
      %v1940 = vadd.f32 %v1870, %v1908
      %v1941 = vadd.f32 %v1871, %v1909
      %v1942 = vadd.f32 %v1872, %v1910
      %v1943 = vadd.f32 %v1873, %v1911
      %v1944 = vadd.f32 %v1874, %v1912
      %v1945 = vadd.f32 %v1875, %v1913
      %v1946 = vadd.f32 %v1876, %v1914
      %v1947 = vadd.f32 %v1877, %v1915
      %v1948 = vadd.f32 %v1878, %v1916
      %v1949 = vadd.f32 %v1879, %v1917
      %v1950 = vadd.f32 %v1880, %v1918
      %v1951 = vadd.f32 %v1881, %v1919
      %v1952 = vadd.f32 %v1882, %v1920
      %v1953 = vadd.f32 %v1883, %v1921
      %v1954 = vadd.f32 %v1884, %v1922
      %v1955 = vlaneseq
      %v1956 = vshrl.u32 %v1955, 7
      %v1957 = vsub.s32 3, %v1956
      %v1958 = vrot.slane %v1561, %v1957
      %v1959 = vmul.f32 %v1958, %v1643
      %v1960 = vmul.f32 %v1958, %v1644
      %v1961 = vmul.f32 %v1628, %v1959
      %v1962 = vmul.f32 %v1627, %v1960
      %v1963 = vmul.f32 %v1626, %v1959
      %v1964 = vmul.f32 %v1625, %v1960
      %v1965 = vmul.f32 %v1624, %v1959
      %v1966 = vmul.f32 %v1623, %v1960
      %v1967 = vmul.f32 %v1622, %v1959
      %v1968 = vmul.f32 %v1621, %v1960
      %v1969 = vmul.f32 %v1620, %v1959
      %v1970 = vmul.f32 %v1619, %v1960
      %v1971 = vmul.f32 %v1618, %v1959
      %v1972 = vmul.f32 %v1617, %v1960
      %v1973 = vmul.f32 %v1616, %v1959
      %v1974 = vmul.f32 %v1615, %v1960
      %v1975 = vmul.f32 %v1614, %v1959
      %v1976 = vmul.f32 %v1613, %v1960
      %v1977 = vmul.f32 %v1612, %v1959
      %v1978 = vmul.f32 %v1611, %v1960
      %v1979 = vmul.f32 %v1610, %v1959
      %v1980 = vmul.f32 %v1609, %v1960
      %v1981 = vmul.f32 %v1608, %v1959
      %v1982 = vmul.f32 %v1607, %v1960
      %v1983 = vmul.f32 %v1606, %v1959
      %v1984 = vmul.f32 %v1605, %v1960
      %v1985 = vmul.f32 %v1604, %v1959
      %v1986 = vmul.f32 %v1603, %v1960
      %v1987 = vmul.f32 %v1602, %v1959
      %v1988 = vmul.f32 %v1601, %v1960
      %v1989 = vmul.f32 %v1600, %v1959
      %v1990 = vmul.f32 0.0, %v1960
      %v1991 = vmul.f32 0.0, %v1959
      %v1992 = vadd.f32 %v1923, %v1961
      %v1993 = vadd.f32 %v1924, %v1962
      %v1994 = vadd.f32 %v1925, %v1963
      %v1995 = vadd.f32 %v1926, %v1964
      %v1996 = vadd.f32 %v1927, %v1965
      %v1997 = vadd.f32 %v1928, %v1966
      %v1998 = vadd.f32 %v1929, %v1967
      %v1999 = vadd.f32 %v1930, %v1968
      %v2000 = vadd.f32 %v1931, %v1969
      %v2001 = vadd.f32 %v1932, %v1970
      %v2002 = vadd.f32 %v1933, %v1971
      %v2003 = vadd.f32 %v1934, %v1972
      %v2004 = vadd.f32 %v1935, %v1973
      %v2005 = vadd.f32 %v1936, %v1974
      %v2006 = vadd.f32 %v1937, %v1975
      %v2007 = vadd.f32 %v1938, %v1976
      %v2008 = vadd.f32 %v1939, %v1977
      %v2009 = vadd.f32 %v1940, %v1978
      %v2010 = vadd.f32 %v1941, %v1979
      %v2011 = vadd.f32 %v1942, %v1980
      %v2012 = vadd.f32 %v1943, %v1981
      %v2013 = vadd.f32 %v1944, %v1982
      %v2014 = vadd.f32 %v1945, %v1983
      %v2015 = vadd.f32 %v1946, %v1984
      %v2016 = vadd.f32 %v1947, %v1985
      %v2017 = vadd.f32 %v1948, %v1986
      %v2018 = vadd.f32 %v1949, %v1987
      %v2019 = vadd.f32 %v1950, %v1988
      %v2020 = vadd.f32 %v1951, %v1989
      %v2021 = vadd.f32 %v1952, %v1990
      %v2022 = vadd.f32 %v1953, %v1991
      %v2023 = vadd.f32 %v1954, %v1990
      %v2024 = vlaneseq
      %v2025 = vshrl.u32 %v2024, 7
      %v2026 = vsub.s32 2, %v2025
      %v2027 = vrot.slane %v1562, %v2026
      %v2028 = vmul.f32 %v2027, %v1643
      %v2029 = vmul.f32 %v2027, %v1644
      %v2030 = vmul.f32 %v1626, %v2028
      %v2031 = vmul.f32 %v1625, %v2029
      %v2032 = vmul.f32 %v1624, %v2028
      %v2033 = vmul.f32 %v1623, %v2029
      %v2034 = vmul.f32 %v1622, %v2028
      %v2035 = vmul.f32 %v1621, %v2029
      %v2036 = vmul.f32 %v1620, %v2028
      %v2037 = vmul.f32 %v1619, %v2029
      %v2038 = vmul.f32 %v1618, %v2028
      %v2039 = vmul.f32 %v1617, %v2029
      %v2040 = vmul.f32 %v1616, %v2028
      %v2041 = vmul.f32 %v1615, %v2029
      %v2042 = vmul.f32 %v1614, %v2028
      %v2043 = vmul.f32 %v1613, %v2029
      %v2044 = vmul.f32 %v1612, %v2028
      %v2045 = vmul.f32 %v1611, %v2029
      %v2046 = vmul.f32 %v1610, %v2028
      %v2047 = vmul.f32 %v1609, %v2029
      %v2048 = vmul.f32 %v1608, %v2028
      %v2049 = vmul.f32 %v1607, %v2029
      %v2050 = vmul.f32 %v1606, %v2028
      %v2051 = vmul.f32 %v1605, %v2029
      %v2052 = vmul.f32 %v1604, %v2028
      %v2053 = vmul.f32 %v1603, %v2029
      %v2054 = vmul.f32 %v1602, %v2028
      %v2055 = vmul.f32 %v1601, %v2029
      %v2056 = vmul.f32 %v1600, %v2028
      %v2057 = vmul.f32 0.0, %v2029
      %v2058 = vmul.f32 0.0, %v2028
      %v2059 = vadd.f32 %v1992, %v2030
      %v2060 = vadd.f32 %v1993, %v2031
      %v2061 = vadd.f32 %v1994, %v2032
      %v2062 = vadd.f32 %v1995, %v2033
      %v2063 = vadd.f32 %v1996, %v2034
      %v2064 = vadd.f32 %v1997, %v2035
      %v2065 = vadd.f32 %v1998, %v2036
      %v2066 = vadd.f32 %v1999, %v2037
      %v2067 = vadd.f32 %v2000, %v2038
      %v2068 = vadd.f32 %v2001, %v2039
      %v2069 = vadd.f32 %v2002, %v2040
      %v2070 = vadd.f32 %v2003, %v2041
      %v2071 = vadd.f32 %v2004, %v2042
      %v2072 = vadd.f32 %v2005, %v2043
      %v2073 = vadd.f32 %v2006, %v2044
      %v2074 = vadd.f32 %v2007, %v2045
      %v2075 = vadd.f32 %v2008, %v2046
      %v2076 = vadd.f32 %v2009, %v2047
      %v2077 = vadd.f32 %v2010, %v2048
      %v2078 = vadd.f32 %v2011, %v2049
      %v2079 = vadd.f32 %v2012, %v2050
      %v2080 = vadd.f32 %v2013, %v2051
      %v2081 = vadd.f32 %v2014, %v2052
      %v2082 = vadd.f32 %v2015, %v2053
      %v2083 = vadd.f32 %v2016, %v2054
      %v2084 = vadd.f32 %v2017, %v2055
      %v2085 = vadd.f32 %v2018, %v2056
      %v2086 = vadd.f32 %v2019, %v2057
      %v2087 = vadd.f32 %v2020, %v2058
      %v2088 = vadd.f32 %v2021, %v2057
      %v2089 = vadd.f32 %v2022, %v2058
      %v2090 = vadd.f32 %v2023, %v2057
      %v2091 = vrot.slane %v1401, 6
      %v2092 = vrot.slane %v1405, 6
      %v2093 = vrot.slane %v1411, 6
      %v2094 = vrot.slane %v1415, 6
      %v2095 = vrot.slane %v1421, 6
      %v2096 = vrot.slane %v1425, 6
      %v2097 = vrot.slane %v1431, 6
      %v2098 = vrot.slane %v1435, 6
      %v2099 = vrot.slane %v1441, 6
      %v2100 = vrot.slane %v1445, 6
      %v2101 = vrot.slane %v1451, 6
      %v2102 = vrot.slane %v1455, 6
      %v2103 = vrot.slane %v1461, 6
      %v2104 = vrot.slane %v1465, 6
      %v2105 = vrot.slane %v1471, 6
      %v2106 = vrot.slane %v1475, 6
      %v2107 = vrot.slane %v1481, 6
      %v2108 = vrot.slane %v1485, 6
      %v2109 = vrot.slane %v1491, 6
      %v2110 = vrot.slane %v1495, 6
      %v2111 = vrot.slane %v1501, 6
      %v2112 = vrot.slane %v1505, 6
      %v2113 = vrot.slane %v1511, 6
      %v2114 = vrot.slane %v1515, 6
      %v2115 = vrot.slane %v1521, 6
      %v2116 = vrot.slane %v1525, 6
      %v2117 = vrot.slane %v1531, 6
      %v2118 = vrot.slane %v1535, 6
      %v2119 = vrot.slane %v1541, 6
      %v2120 = vrot.slane %v1545, 6
      %v2121 = vrot.slane %v1551, 6
      %v2122 = vrot.slane %v1555, 6
      %vm2123 = vcmp.lt.s32.totalorder %v1565, 2
      %v2124 = vsel %vm2123, %v2122, 0.0
      %v2125 = vsel %vm2123, %v2121, %v2122
      %v2126 = vsel %vm2123, %v2120, %v2121
      %v2127 = vsel %vm2123, %v2119, %v2120
      %v2128 = vsel %vm2123, %v2118, %v2119
      %v2129 = vsel %vm2123, %v2117, %v2118
      %v2130 = vsel %vm2123, %v2116, %v2117
      %v2131 = vsel %vm2123, %v2115, %v2116
      %v2132 = vsel %vm2123, %v2114, %v2115
      %v2133 = vsel %vm2123, %v2113, %v2114
      %v2134 = vsel %vm2123, %v2112, %v2113
      %v2135 = vsel %vm2123, %v2111, %v2112
      %v2136 = vsel %vm2123, %v2110, %v2111
      %v2137 = vsel %vm2123, %v2109, %v2110
      %v2138 = vsel %vm2123, %v2108, %v2109
      %v2139 = vsel %vm2123, %v2107, %v2108
      %v2140 = vsel %vm2123, %v2106, %v2107
      %v2141 = vsel %vm2123, %v2105, %v2106
      %v2142 = vsel %vm2123, %v2104, %v2105
      %v2143 = vsel %vm2123, %v2103, %v2104
      %v2144 = vsel %vm2123, %v2102, %v2103
      %v2145 = vsel %vm2123, %v2101, %v2102
      %v2146 = vsel %vm2123, %v2100, %v2101
      %v2147 = vsel %vm2123, %v2099, %v2100
      %v2148 = vsel %vm2123, %v2098, %v2099
      %v2149 = vsel %vm2123, %v2097, %v2098
      %v2150 = vsel %vm2123, %v2096, %v2097
      %v2151 = vsel %vm2123, %v2095, %v2096
      %v2152 = vsel %vm2123, %v2094, %v2095
      %v2153 = vsel %vm2123, %v2093, %v2094
      %v2154 = vsel %vm2123, %v2092, %v2093
      %v2155 = vsel %vm2123, %v2091, %v2092
      %v2156 = vsel %vm2123, 0.0, %v2091
      %v2157 = vadd.s32 %v1565, 4294967294
      %v2158 = vadd.s32 %v1566, 4294967294
      %vm2159 = vcmp.ge.s32.totalorder %v2157, 0
      %vm2160 = vcmp.ge.s32.totalorder %v2158, 0
      %vm2161 = vcmp.lt.s32.totalorder %v2157, 16
      %vm2162 = vcmp.lt.s32.totalorder %v2158, 16
      %vm2163 = vmand %vm2159, %vm2161
      %vm2164 = vmand %vm2160, %vm2162
      %v2165 = vsel %vm2163, 1, 0
      %v2166 = vsel %vm2164, 1, 0
      %v2167 = vcvt.s32.f32 %v2165
      %v2168 = vcvt.s32.f32 %v2166
      %v2169 = vlaneseq
      %v2170 = vshrl.u32 %v2169, 7
      %v2171 = vsub.s32 1, %v2170
      %v2172 = vrot.slane %v1557, %v2171
      %v2173 = vmul.f32 %v2172, %v2167
      %v2174 = vmul.f32 %v2172, %v2168
      %v2175 = vmul.f32 0.0, %v2173
      %v2176 = vmul.f32 0.0, %v2174
      %v2177 = vmul.f32 %v2156, %v2173
      %v2178 = vmul.f32 %v2155, %v2174
      %v2179 = vmul.f32 %v2154, %v2173
      %v2180 = vmul.f32 %v2153, %v2174
      %v2181 = vmul.f32 %v2152, %v2173
      %v2182 = vmul.f32 %v2151, %v2174
      %v2183 = vmul.f32 %v2150, %v2173
      %v2184 = vmul.f32 %v2149, %v2174
      %v2185 = vmul.f32 %v2148, %v2173
      %v2186 = vmul.f32 %v2147, %v2174
      %v2187 = vmul.f32 %v2146, %v2173
      %v2188 = vmul.f32 %v2145, %v2174
      %v2189 = vmul.f32 %v2144, %v2173
      %v2190 = vmul.f32 %v2143, %v2174
      %v2191 = vmul.f32 %v2142, %v2173
      %v2192 = vmul.f32 %v2141, %v2174
      %v2193 = vmul.f32 %v2140, %v2173
      %v2194 = vmul.f32 %v2139, %v2174
      %v2195 = vmul.f32 %v2138, %v2173
      %v2196 = vmul.f32 %v2137, %v2174
      %v2197 = vmul.f32 %v2136, %v2173
      %v2198 = vmul.f32 %v2135, %v2174
      %v2199 = vmul.f32 %v2134, %v2173
      %v2200 = vmul.f32 %v2133, %v2174
      %v2201 = vmul.f32 %v2132, %v2173
      %v2202 = vmul.f32 %v2131, %v2174
      %v2203 = vadd.f32 %v2059, %v2175
      %v2204 = vadd.f32 %v2060, %v2176
      %v2205 = vadd.f32 %v2061, %v2175
      %v2206 = vadd.f32 %v2062, %v2176
      %v2207 = vadd.f32 %v2063, %v2175
      %v2208 = vadd.f32 %v2064, %v2176
      %v2209 = vadd.f32 %v2065, %v2177
      %v2210 = vadd.f32 %v2066, %v2178
      %v2211 = vadd.f32 %v2067, %v2179
      %v2212 = vadd.f32 %v2068, %v2180
      %v2213 = vadd.f32 %v2069, %v2181
      %v2214 = vadd.f32 %v2070, %v2182
      %v2215 = vadd.f32 %v2071, %v2183
      %v2216 = vadd.f32 %v2072, %v2184
      %v2217 = vadd.f32 %v2073, %v2185
      %v2218 = vadd.f32 %v2074, %v2186
      %v2219 = vadd.f32 %v2075, %v2187
      %v2220 = vadd.f32 %v2076, %v2188
      %v2221 = vadd.f32 %v2077, %v2189
      %v2222 = vadd.f32 %v2078, %v2190
      %v2223 = vadd.f32 %v2079, %v2191
      %v2224 = vadd.f32 %v2080, %v2192
      %v2225 = vadd.f32 %v2081, %v2193
      %v2226 = vadd.f32 %v2082, %v2194
      %v2227 = vadd.f32 %v2083, %v2195
      %v2228 = vadd.f32 %v2084, %v2196
      %v2229 = vadd.f32 %v2085, %v2197
      %v2230 = vadd.f32 %v2086, %v2198
      %v2231 = vadd.f32 %v2087, %v2199
      %v2232 = vadd.f32 %v2088, %v2200
      %v2233 = vadd.f32 %v2089, %v2201
      %v2234 = vadd.f32 %v2090, %v2202
      %v2235 = vlaneseq
      %v2236 = vshrl.u32 %v2235, 7
      %v2237 = vsub.s32 0, %v2236
      %v2238 = vrot.slane %v1558, %v2237
      %v2239 = vmul.f32 %v2238, %v2167
      %v2240 = vmul.f32 %v2238, %v2168
      %v2241 = vmul.f32 0.0, %v2239
      %v2242 = vmul.f32 0.0, %v2240
      %v2243 = vmul.f32 %v2156, %v2239
      %v2244 = vmul.f32 %v2155, %v2240
      %v2245 = vmul.f32 %v2154, %v2239
      %v2246 = vmul.f32 %v2153, %v2240
      %v2247 = vmul.f32 %v2152, %v2239
      %v2248 = vmul.f32 %v2151, %v2240
      %v2249 = vmul.f32 %v2150, %v2239
      %v2250 = vmul.f32 %v2149, %v2240
      %v2251 = vmul.f32 %v2148, %v2239
      %v2252 = vmul.f32 %v2147, %v2240
      %v2253 = vmul.f32 %v2146, %v2239
      %v2254 = vmul.f32 %v2145, %v2240
      %v2255 = vmul.f32 %v2144, %v2239
      %v2256 = vmul.f32 %v2143, %v2240
      %v2257 = vmul.f32 %v2142, %v2239
      %v2258 = vmul.f32 %v2141, %v2240
      %v2259 = vmul.f32 %v2140, %v2239
      %v2260 = vmul.f32 %v2139, %v2240
      %v2261 = vmul.f32 %v2138, %v2239
      %v2262 = vmul.f32 %v2137, %v2240
      %v2263 = vmul.f32 %v2136, %v2239
      %v2264 = vmul.f32 %v2135, %v2240
      %v2265 = vmul.f32 %v2134, %v2239
      %v2266 = vmul.f32 %v2133, %v2240
      %v2267 = vmul.f32 %v2132, %v2239
      %v2268 = vmul.f32 %v2131, %v2240
      %v2269 = vmul.f32 %v2130, %v2239
      %v2270 = vmul.f32 %v2129, %v2240
      %v2271 = vadd.f32 %v2203, %v2241
      %v2272 = vadd.f32 %v2204, %v2242
      %v2273 = vadd.f32 %v2205, %v2241
      %v2274 = vadd.f32 %v2206, %v2242
      %v2275 = vadd.f32 %v2207, %v2243
      %v2276 = vadd.f32 %v2208, %v2244
      %v2277 = vadd.f32 %v2209, %v2245
      %v2278 = vadd.f32 %v2210, %v2246
      %v2279 = vadd.f32 %v2211, %v2247
      %v2280 = vadd.f32 %v2212, %v2248
      %v2281 = vadd.f32 %v2213, %v2249
      %v2282 = vadd.f32 %v2214, %v2250
      %v2283 = vadd.f32 %v2215, %v2251
      %v2284 = vadd.f32 %v2216, %v2252
      %v2285 = vadd.f32 %v2217, %v2253
      %v2286 = vadd.f32 %v2218, %v2254
      %v2287 = vadd.f32 %v2219, %v2255
      %v2288 = vadd.f32 %v2220, %v2256
      %v2289 = vadd.f32 %v2221, %v2257
      %v2290 = vadd.f32 %v2222, %v2258
      %v2291 = vadd.f32 %v2223, %v2259
      %v2292 = vadd.f32 %v2224, %v2260
      %v2293 = vadd.f32 %v2225, %v2261
      %v2294 = vadd.f32 %v2226, %v2262
      %v2295 = vadd.f32 %v2227, %v2263
      %v2296 = vadd.f32 %v2228, %v2264
      %v2297 = vadd.f32 %v2229, %v2265
      %v2298 = vadd.f32 %v2230, %v2266
      %v2299 = vadd.f32 %v2231, %v2267
      %v2300 = vadd.f32 %v2232, %v2268
      %v2301 = vadd.f32 %v2233, %v2269
      %v2302 = vadd.f32 %v2234, %v2270
      %v2303 = vlaneseq
      %v2304 = vshrl.u32 %v2303, 7
      %v2305 = vsub.s32 7, %v2304
      %v2306 = vrot.slane %v1558, %v2305
      %v2307 = vmul.f32 %v2306, %v2167
      %v2308 = vmul.f32 %v2306, %v2168
      %v2309 = vmul.f32 0.0, %v2307
      %v2310 = vmul.f32 0.0, %v2308
      %v2311 = vmul.f32 %v2156, %v2307
      %v2312 = vmul.f32 %v2155, %v2308
      %v2313 = vmul.f32 %v2154, %v2307
      %v2314 = vmul.f32 %v2153, %v2308
      %v2315 = vmul.f32 %v2152, %v2307
      %v2316 = vmul.f32 %v2151, %v2308
      %v2317 = vmul.f32 %v2150, %v2307
      %v2318 = vmul.f32 %v2149, %v2308
      %v2319 = vmul.f32 %v2148, %v2307
      %v2320 = vmul.f32 %v2147, %v2308
      %v2321 = vmul.f32 %v2146, %v2307
      %v2322 = vmul.f32 %v2145, %v2308
      %v2323 = vmul.f32 %v2144, %v2307
      %v2324 = vmul.f32 %v2143, %v2308
      %v2325 = vmul.f32 %v2142, %v2307
      %v2326 = vmul.f32 %v2141, %v2308
      %v2327 = vmul.f32 %v2140, %v2307
      %v2328 = vmul.f32 %v2139, %v2308
      %v2329 = vmul.f32 %v2138, %v2307
      %v2330 = vmul.f32 %v2137, %v2308
      %v2331 = vmul.f32 %v2136, %v2307
      %v2332 = vmul.f32 %v2135, %v2308
      %v2333 = vmul.f32 %v2134, %v2307
      %v2334 = vmul.f32 %v2133, %v2308
      %v2335 = vmul.f32 %v2132, %v2307
      %v2336 = vmul.f32 %v2131, %v2308
      %v2337 = vmul.f32 %v2130, %v2307
      %v2338 = vmul.f32 %v2129, %v2308
      %v2339 = vmul.f32 %v2128, %v2307
      %v2340 = vmul.f32 %v2127, %v2308
      %v2341 = vadd.f32 %v2271, %v2309
      %v2342 = vadd.f32 %v2272, %v2310
      %v2343 = vadd.f32 %v2273, %v2311
      %v2344 = vadd.f32 %v2274, %v2312
      %v2345 = vadd.f32 %v2275, %v2313
      %v2346 = vadd.f32 %v2276, %v2314
      %v2347 = vadd.f32 %v2277, %v2315
      %v2348 = vadd.f32 %v2278, %v2316
      %v2349 = vadd.f32 %v2279, %v2317
      %v2350 = vadd.f32 %v2280, %v2318
      %v2351 = vadd.f32 %v2281, %v2319
      %v2352 = vadd.f32 %v2282, %v2320
      %v2353 = vadd.f32 %v2283, %v2321
      %v2354 = vadd.f32 %v2284, %v2322
      %v2355 = vadd.f32 %v2285, %v2323
      %v2356 = vadd.f32 %v2286, %v2324
      %v2357 = vadd.f32 %v2287, %v2325
      %v2358 = vadd.f32 %v2288, %v2326
      %v2359 = vadd.f32 %v2289, %v2327
      %v2360 = vadd.f32 %v2290, %v2328
      %v2361 = vadd.f32 %v2291, %v2329
      %v2362 = vadd.f32 %v2292, %v2330
      %v2363 = vadd.f32 %v2293, %v2331
      %v2364 = vadd.f32 %v2294, %v2332
      %v2365 = vadd.f32 %v2295, %v2333
      %v2366 = vadd.f32 %v2296, %v2334
      %v2367 = vadd.f32 %v2297, %v2335
      %v2368 = vadd.f32 %v2298, %v2336
      %v2369 = vadd.f32 %v2299, %v2337
      %v2370 = vadd.f32 %v2300, %v2338
      %v2371 = vadd.f32 %v2301, %v2339
      %v2372 = vadd.f32 %v2302, %v2340
      %v2373 = vlaneseq
      %v2374 = vshrl.u32 %v2373, 7
      %v2375 = vsub.s32 6, %v2374
      %v2376 = vrot.slane %v1559, %v2375
      %v2377 = vmul.f32 %v2376, %v2167
      %v2378 = vmul.f32 %v2376, %v2168
      %v2379 = vmul.f32 %v2156, %v2377
      %v2380 = vmul.f32 %v2155, %v2378
      %v2381 = vmul.f32 %v2154, %v2377
      %v2382 = vmul.f32 %v2153, %v2378
      %v2383 = vmul.f32 %v2152, %v2377
      %v2384 = vmul.f32 %v2151, %v2378
      %v2385 = vmul.f32 %v2150, %v2377
      %v2386 = vmul.f32 %v2149, %v2378
      %v2387 = vmul.f32 %v2148, %v2377
      %v2388 = vmul.f32 %v2147, %v2378
      %v2389 = vmul.f32 %v2146, %v2377
      %v2390 = vmul.f32 %v2145, %v2378
      %v2391 = vmul.f32 %v2144, %v2377
      %v2392 = vmul.f32 %v2143, %v2378
      %v2393 = vmul.f32 %v2142, %v2377
      %v2394 = vmul.f32 %v2141, %v2378
      %v2395 = vmul.f32 %v2140, %v2377
      %v2396 = vmul.f32 %v2139, %v2378
      %v2397 = vmul.f32 %v2138, %v2377
      %v2398 = vmul.f32 %v2137, %v2378
      %v2399 = vmul.f32 %v2136, %v2377
      %v2400 = vmul.f32 %v2135, %v2378
      %v2401 = vmul.f32 %v2134, %v2377
      %v2402 = vmul.f32 %v2133, %v2378
      %v2403 = vmul.f32 %v2132, %v2377
      %v2404 = vmul.f32 %v2131, %v2378
      %v2405 = vmul.f32 %v2130, %v2377
      %v2406 = vmul.f32 %v2129, %v2378
      %v2407 = vmul.f32 %v2128, %v2377
      %v2408 = vmul.f32 %v2127, %v2378
      %v2409 = vmul.f32 %v2126, %v2377
      %v2410 = vmul.f32 %v2125, %v2378
      %v2411 = vadd.f32 %v2341, %v2379
      %v2412 = vadd.f32 %v2342, %v2380
      %v2413 = vadd.f32 %v2343, %v2381
      %v2414 = vadd.f32 %v2344, %v2382
      %v2415 = vadd.f32 %v2345, %v2383
      %v2416 = vadd.f32 %v2346, %v2384
      %v2417 = vadd.f32 %v2347, %v2385
      %v2418 = vadd.f32 %v2348, %v2386
      %v2419 = vadd.f32 %v2349, %v2387
      %v2420 = vadd.f32 %v2350, %v2388
      %v2421 = vadd.f32 %v2351, %v2389
      %v2422 = vadd.f32 %v2352, %v2390
      %v2423 = vadd.f32 %v2353, %v2391
      %v2424 = vadd.f32 %v2354, %v2392
      %v2425 = vadd.f32 %v2355, %v2393
      %v2426 = vadd.f32 %v2356, %v2394
      %v2427 = vadd.f32 %v2357, %v2395
      %v2428 = vadd.f32 %v2358, %v2396
      %v2429 = vadd.f32 %v2359, %v2397
      %v2430 = vadd.f32 %v2360, %v2398
      %v2431 = vadd.f32 %v2361, %v2399
      %v2432 = vadd.f32 %v2362, %v2400
      %v2433 = vadd.f32 %v2363, %v2401
      %v2434 = vadd.f32 %v2364, %v2402
      %v2435 = vadd.f32 %v2365, %v2403
      %v2436 = vadd.f32 %v2366, %v2404
      %v2437 = vadd.f32 %v2367, %v2405
      %v2438 = vadd.f32 %v2368, %v2406
      %v2439 = vadd.f32 %v2369, %v2407
      %v2440 = vadd.f32 %v2370, %v2408
      %v2441 = vadd.f32 %v2371, %v2409
      %v2442 = vadd.f32 %v2372, %v2410
      %v2443 = vlaneseq
      %v2444 = vshrl.u32 %v2443, 7
      %v2445 = vsub.s32 5, %v2444
      %v2446 = vrot.slane %v1560, %v2445
      %v2447 = vmul.f32 %v2446, %v2167
      %v2448 = vmul.f32 %v2446, %v2168
      %v2449 = vmul.f32 %v2154, %v2447
      %v2450 = vmul.f32 %v2153, %v2448
      %v2451 = vmul.f32 %v2152, %v2447
      %v2452 = vmul.f32 %v2151, %v2448
      %v2453 = vmul.f32 %v2150, %v2447
      %v2454 = vmul.f32 %v2149, %v2448
      %v2455 = vmul.f32 %v2148, %v2447
      %v2456 = vmul.f32 %v2147, %v2448
      %v2457 = vmul.f32 %v2146, %v2447
      %v2458 = vmul.f32 %v2145, %v2448
      %v2459 = vmul.f32 %v2144, %v2447
      %v2460 = vmul.f32 %v2143, %v2448
      %v2461 = vmul.f32 %v2142, %v2447
      %v2462 = vmul.f32 %v2141, %v2448
      %v2463 = vmul.f32 %v2140, %v2447
      %v2464 = vmul.f32 %v2139, %v2448
      %v2465 = vmul.f32 %v2138, %v2447
      %v2466 = vmul.f32 %v2137, %v2448
      %v2467 = vmul.f32 %v2136, %v2447
      %v2468 = vmul.f32 %v2135, %v2448
      %v2469 = vmul.f32 %v2134, %v2447
      %v2470 = vmul.f32 %v2133, %v2448
      %v2471 = vmul.f32 %v2132, %v2447
      %v2472 = vmul.f32 %v2131, %v2448
      %v2473 = vmul.f32 %v2130, %v2447
      %v2474 = vmul.f32 %v2129, %v2448
      %v2475 = vmul.f32 %v2128, %v2447
      %v2476 = vmul.f32 %v2127, %v2448
      %v2477 = vmul.f32 %v2126, %v2447
      %v2478 = vmul.f32 %v2125, %v2448
      %v2479 = vmul.f32 %v2124, %v2447
      %v2480 = vmul.f32 0.0, %v2448
      %v2481 = vadd.f32 %v2411, %v2449
      %v2482 = vadd.f32 %v2412, %v2450
      %v2483 = vadd.f32 %v2413, %v2451
      %v2484 = vadd.f32 %v2414, %v2452
      %v2485 = vadd.f32 %v2415, %v2453
      %v2486 = vadd.f32 %v2416, %v2454
      %v2487 = vadd.f32 %v2417, %v2455
      %v2488 = vadd.f32 %v2418, %v2456
      %v2489 = vadd.f32 %v2419, %v2457
      %v2490 = vadd.f32 %v2420, %v2458
      %v2491 = vadd.f32 %v2421, %v2459
      %v2492 = vadd.f32 %v2422, %v2460
      %v2493 = vadd.f32 %v2423, %v2461
      %v2494 = vadd.f32 %v2424, %v2462
      %v2495 = vadd.f32 %v2425, %v2463
      %v2496 = vadd.f32 %v2426, %v2464
      %v2497 = vadd.f32 %v2427, %v2465
      %v2498 = vadd.f32 %v2428, %v2466
      %v2499 = vadd.f32 %v2429, %v2467
      %v2500 = vadd.f32 %v2430, %v2468
      %v2501 = vadd.f32 %v2431, %v2469
      %v2502 = vadd.f32 %v2432, %v2470
      %v2503 = vadd.f32 %v2433, %v2471
      %v2504 = vadd.f32 %v2434, %v2472
      %v2505 = vadd.f32 %v2435, %v2473
      %v2506 = vadd.f32 %v2436, %v2474
      %v2507 = vadd.f32 %v2437, %v2475
      %v2508 = vadd.f32 %v2438, %v2476
      %v2509 = vadd.f32 %v2439, %v2477
      %v2510 = vadd.f32 %v2440, %v2478
      %v2511 = vadd.f32 %v2441, %v2479
      %v2512 = vadd.f32 %v2442, %v2480
      %v2513 = vlaneseq
      %v2514 = vshrl.u32 %v2513, 7
      %v2515 = vsub.s32 4, %v2514
      %v2516 = vrot.slane %v1561, %v2515
      %v2517 = vmul.f32 %v2516, %v2167
      %v2518 = vmul.f32 %v2516, %v2168
      %v2519 = vmul.f32 %v2152, %v2517
      %v2520 = vmul.f32 %v2151, %v2518
      %v2521 = vmul.f32 %v2150, %v2517
      %v2522 = vmul.f32 %v2149, %v2518
      %v2523 = vmul.f32 %v2148, %v2517
      %v2524 = vmul.f32 %v2147, %v2518
      %v2525 = vmul.f32 %v2146, %v2517
      %v2526 = vmul.f32 %v2145, %v2518
      %v2527 = vmul.f32 %v2144, %v2517
      %v2528 = vmul.f32 %v2143, %v2518
      %v2529 = vmul.f32 %v2142, %v2517
      %v2530 = vmul.f32 %v2141, %v2518
      %v2531 = vmul.f32 %v2140, %v2517
      %v2532 = vmul.f32 %v2139, %v2518
      %v2533 = vmul.f32 %v2138, %v2517
      %v2534 = vmul.f32 %v2137, %v2518
      %v2535 = vmul.f32 %v2136, %v2517
      %v2536 = vmul.f32 %v2135, %v2518
      %v2537 = vmul.f32 %v2134, %v2517
      %v2538 = vmul.f32 %v2133, %v2518
      %v2539 = vmul.f32 %v2132, %v2517
      %v2540 = vmul.f32 %v2131, %v2518
      %v2541 = vmul.f32 %v2130, %v2517
      %v2542 = vmul.f32 %v2129, %v2518
      %v2543 = vmul.f32 %v2128, %v2517
      %v2544 = vmul.f32 %v2127, %v2518
      %v2545 = vmul.f32 %v2126, %v2517
      %v2546 = vmul.f32 %v2125, %v2518
      %v2547 = vmul.f32 %v2124, %v2517
      %v2548 = vmul.f32 0.0, %v2518
      %v2549 = vmul.f32 0.0, %v2517
      %v2550 = vadd.f32 %v2481, %v2519
      %v2551 = vadd.f32 %v2482, %v2520
      %v2552 = vadd.f32 %v2483, %v2521
      %v2553 = vadd.f32 %v2484, %v2522
      %v2554 = vadd.f32 %v2485, %v2523
      %v2555 = vadd.f32 %v2486, %v2524
      %v2556 = vadd.f32 %v2487, %v2525
      %v2557 = vadd.f32 %v2488, %v2526
      %v2558 = vadd.f32 %v2489, %v2527
      %v2559 = vadd.f32 %v2490, %v2528
      %v2560 = vadd.f32 %v2491, %v2529
      %v2561 = vadd.f32 %v2492, %v2530
      %v2562 = vadd.f32 %v2493, %v2531
      %v2563 = vadd.f32 %v2494, %v2532
      %v2564 = vadd.f32 %v2495, %v2533
      %v2565 = vadd.f32 %v2496, %v2534
      %v2566 = vadd.f32 %v2497, %v2535
      %v2567 = vadd.f32 %v2498, %v2536
      %v2568 = vadd.f32 %v2499, %v2537
      %v2569 = vadd.f32 %v2500, %v2538
      %v2570 = vadd.f32 %v2501, %v2539
      %v2571 = vadd.f32 %v2502, %v2540
      %v2572 = vadd.f32 %v2503, %v2541
      %v2573 = vadd.f32 %v2504, %v2542
      %v2574 = vadd.f32 %v2505, %v2543
      %v2575 = vadd.f32 %v2506, %v2544
      %v2576 = vadd.f32 %v2507, %v2545
      %v2577 = vadd.f32 %v2508, %v2546
      %v2578 = vadd.f32 %v2509, %v2547
      %v2579 = vadd.f32 %v2510, %v2548
      %v2580 = vadd.f32 %v2511, %v2549
      %v2581 = vadd.f32 %v2512, %v2548
      %v2582 = vlaneseq
      %v2583 = vshrl.u32 %v2582, 7
      %v2584 = vsub.s32 3, %v2583
      %v2585 = vrot.slane %v1562, %v2584
      %v2586 = vmul.f32 %v2585, %v2167
      %v2587 = vmul.f32 %v2585, %v2168
      %v2588 = vmul.f32 %v2150, %v2586
      %v2589 = vmul.f32 %v2149, %v2587
      %v2590 = vmul.f32 %v2148, %v2586
      %v2591 = vmul.f32 %v2147, %v2587
      %v2592 = vmul.f32 %v2146, %v2586
      %v2593 = vmul.f32 %v2145, %v2587
      %v2594 = vmul.f32 %v2144, %v2586
      %v2595 = vmul.f32 %v2143, %v2587
      %v2596 = vmul.f32 %v2142, %v2586
      %v2597 = vmul.f32 %v2141, %v2587
      %v2598 = vmul.f32 %v2140, %v2586
      %v2599 = vmul.f32 %v2139, %v2587
      %v2600 = vmul.f32 %v2138, %v2586
      %v2601 = vmul.f32 %v2137, %v2587
      %v2602 = vmul.f32 %v2136, %v2586
      %v2603 = vmul.f32 %v2135, %v2587
      %v2604 = vmul.f32 %v2134, %v2586
      %v2605 = vmul.f32 %v2133, %v2587
      %v2606 = vmul.f32 %v2132, %v2586
      %v2607 = vmul.f32 %v2131, %v2587
      %v2608 = vmul.f32 %v2130, %v2586
      %v2609 = vmul.f32 %v2129, %v2587
      %v2610 = vmul.f32 %v2128, %v2586
      %v2611 = vmul.f32 %v2127, %v2587
      %v2612 = vmul.f32 %v2126, %v2586
      %v2613 = vmul.f32 %v2125, %v2587
      %v2614 = vmul.f32 %v2124, %v2586
      %v2615 = vmul.f32 0.0, %v2587
      %v2616 = vmul.f32 0.0, %v2586
      %v2617 = vadd.f32 %v2550, %v2588
      %v2618 = vadd.f32 %v2551, %v2589
      %v2619 = vadd.f32 %v2552, %v2590
      %v2620 = vadd.f32 %v2553, %v2591
      %v2621 = vadd.f32 %v2554, %v2592
      %v2622 = vadd.f32 %v2555, %v2593
      %v2623 = vadd.f32 %v2556, %v2594
      %v2624 = vadd.f32 %v2557, %v2595
      %v2625 = vadd.f32 %v2558, %v2596
      %v2626 = vadd.f32 %v2559, %v2597
      %v2627 = vadd.f32 %v2560, %v2598
      %v2628 = vadd.f32 %v2561, %v2599
      %v2629 = vadd.f32 %v2562, %v2600
      %v2630 = vadd.f32 %v2563, %v2601
      %v2631 = vadd.f32 %v2564, %v2602
      %v2632 = vadd.f32 %v2565, %v2603
      %v2633 = vadd.f32 %v2566, %v2604
      %v2634 = vadd.f32 %v2567, %v2605
      %v2635 = vadd.f32 %v2568, %v2606
      %v2636 = vadd.f32 %v2569, %v2607
      %v2637 = vadd.f32 %v2570, %v2608
      %v2638 = vadd.f32 %v2571, %v2609
      %v2639 = vadd.f32 %v2572, %v2610
      %v2640 = vadd.f32 %v2573, %v2611
      %v2641 = vadd.f32 %v2574, %v2612
      %v2642 = vadd.f32 %v2575, %v2613
      %v2643 = vadd.f32 %v2576, %v2614
      %v2644 = vadd.f32 %v2577, %v2615
      %v2645 = vadd.f32 %v2578, %v2616
      %v2646 = vadd.f32 %v2579, %v2615
      %v2647 = vadd.f32 %v2580, %v2616
      %v2648 = vadd.f32 %v2581, %v2615
      %v2649 = vrot.slane %v1401, 7
      %v2650 = vrot.slane %v1405, 7
      %v2651 = vrot.slane %v1411, 7
      %v2652 = vrot.slane %v1415, 7
      %v2653 = vrot.slane %v1421, 7
      %v2654 = vrot.slane %v1425, 7
      %v2655 = vrot.slane %v1431, 7
      %v2656 = vrot.slane %v1435, 7
      %v2657 = vrot.slane %v1441, 7
      %v2658 = vrot.slane %v1445, 7
      %v2659 = vrot.slane %v1451, 7
      %v2660 = vrot.slane %v1455, 7
      %v2661 = vrot.slane %v1461, 7
      %v2662 = vrot.slane %v1465, 7
      %v2663 = vrot.slane %v1471, 7
      %v2664 = vrot.slane %v1475, 7
      %v2665 = vrot.slane %v1481, 7
      %v2666 = vrot.slane %v1485, 7
      %v2667 = vrot.slane %v1491, 7
      %v2668 = vrot.slane %v1495, 7
      %v2669 = vrot.slane %v1501, 7
      %v2670 = vrot.slane %v1505, 7
      %v2671 = vrot.slane %v1511, 7
      %v2672 = vrot.slane %v1515, 7
      %v2673 = vrot.slane %v1521, 7
      %v2674 = vrot.slane %v1525, 7
      %v2675 = vrot.slane %v1531, 7
      %v2676 = vrot.slane %v1535, 7
      %v2677 = vrot.slane %v1541, 7
      %v2678 = vrot.slane %v1545, 7
      %v2679 = vrot.slane %v1551, 7
      %v2680 = vrot.slane %v1555, 7
      %vm2681 = vcmp.lt.s32.totalorder %v1565, 1
      %v2682 = vsel %vm2681, %v2680, 0.0
      %v2683 = vsel %vm2681, %v2679, %v2680
      %v2684 = vsel %vm2681, %v2678, %v2679
      %v2685 = vsel %vm2681, %v2677, %v2678
      %v2686 = vsel %vm2681, %v2676, %v2677
      %v2687 = vsel %vm2681, %v2675, %v2676
      %v2688 = vsel %vm2681, %v2674, %v2675
      %v2689 = vsel %vm2681, %v2673, %v2674
      %v2690 = vsel %vm2681, %v2672, %v2673
      %v2691 = vsel %vm2681, %v2671, %v2672
      %v2692 = vsel %vm2681, %v2670, %v2671
      %v2693 = vsel %vm2681, %v2669, %v2670
      %v2694 = vsel %vm2681, %v2668, %v2669
      %v2695 = vsel %vm2681, %v2667, %v2668
      %v2696 = vsel %vm2681, %v2666, %v2667
      %v2697 = vsel %vm2681, %v2665, %v2666
      %v2698 = vsel %vm2681, %v2664, %v2665
      %v2699 = vsel %vm2681, %v2663, %v2664
      %v2700 = vsel %vm2681, %v2662, %v2663
      %v2701 = vsel %vm2681, %v2661, %v2662
      %v2702 = vsel %vm2681, %v2660, %v2661
      %v2703 = vsel %vm2681, %v2659, %v2660
      %v2704 = vsel %vm2681, %v2658, %v2659
      %v2705 = vsel %vm2681, %v2657, %v2658
      %v2706 = vsel %vm2681, %v2656, %v2657
      %v2707 = vsel %vm2681, %v2655, %v2656
      %v2708 = vsel %vm2681, %v2654, %v2655
      %v2709 = vsel %vm2681, %v2653, %v2654
      %v2710 = vsel %vm2681, %v2652, %v2653
      %v2711 = vsel %vm2681, %v2651, %v2652
      %v2712 = vsel %vm2681, %v2650, %v2651
      %v2713 = vsel %vm2681, %v2649, %v2650
      %v2714 = vsel %vm2681, 0.0, %v2649
      %v2715 = vadd.s32 %v1565, 4294967295
      %v2716 = vadd.s32 %v1566, 4294967295
      %vm2717 = vcmp.ge.s32.totalorder %v2715, 0
      %vm2718 = vcmp.ge.s32.totalorder %v2716, 0
      %vm2719 = vcmp.lt.s32.totalorder %v2715, 16
      %vm2720 = vcmp.lt.s32.totalorder %v2716, 16
      %vm2721 = vmand %vm2717, %vm2719
      %vm2722 = vmand %vm2718, %vm2720
      %v2723 = vsel %vm2721, 1, 0
      %v2724 = vsel %vm2722, 1, 0
      %v2725 = vcvt.s32.f32 %v2723
      %v2726 = vcvt.s32.f32 %v2724
      %v2727 = vlaneseq
      %v2728 = vshrl.u32 %v2727, 7
      %v2729 = vsub.s32 2, %v2728
      %v2730 = vrot.slane %v1557, %v2729
      %v2731 = vmul.f32 %v2730, %v2725
      %v2732 = vmul.f32 %v2730, %v2726
      %v2733 = vmul.f32 0.0, %v2731
      %v2734 = vmul.f32 0.0, %v2732
      %v2735 = vmul.f32 %v2714, %v2731
      %v2736 = vmul.f32 %v2713, %v2732
      %v2737 = vmul.f32 %v2712, %v2731
      %v2738 = vmul.f32 %v2711, %v2732
      %v2739 = vmul.f32 %v2710, %v2731
      %v2740 = vmul.f32 %v2709, %v2732
      %v2741 = vmul.f32 %v2708, %v2731
      %v2742 = vmul.f32 %v2707, %v2732
      %v2743 = vmul.f32 %v2706, %v2731
      %v2744 = vmul.f32 %v2705, %v2732
      %v2745 = vmul.f32 %v2704, %v2731
      %v2746 = vmul.f32 %v2703, %v2732
      %v2747 = vmul.f32 %v2702, %v2731
      %v2748 = vmul.f32 %v2701, %v2732
      %v2749 = vmul.f32 %v2700, %v2731
      %v2750 = vmul.f32 %v2699, %v2732
      %v2751 = vmul.f32 %v2698, %v2731
      %v2752 = vmul.f32 %v2697, %v2732
      %v2753 = vmul.f32 %v2696, %v2731
      %v2754 = vmul.f32 %v2695, %v2732
      %v2755 = vmul.f32 %v2694, %v2731
      %v2756 = vmul.f32 %v2693, %v2732
      %v2757 = vmul.f32 %v2692, %v2731
      %v2758 = vmul.f32 %v2691, %v2732
      %v2759 = vmul.f32 %v2690, %v2731
      %v2760 = vmul.f32 %v2689, %v2732
      %v2761 = vadd.f32 %v2617, %v2733
      %v2762 = vadd.f32 %v2618, %v2734
      %v2763 = vadd.f32 %v2619, %v2733
      %v2764 = vadd.f32 %v2620, %v2734
      %v2765 = vadd.f32 %v2621, %v2733
      %v2766 = vadd.f32 %v2622, %v2734
      %v2767 = vadd.f32 %v2623, %v2735
      %v2768 = vadd.f32 %v2624, %v2736
      %v2769 = vadd.f32 %v2625, %v2737
      %v2770 = vadd.f32 %v2626, %v2738
      %v2771 = vadd.f32 %v2627, %v2739
      %v2772 = vadd.f32 %v2628, %v2740
      %v2773 = vadd.f32 %v2629, %v2741
      %v2774 = vadd.f32 %v2630, %v2742
      %v2775 = vadd.f32 %v2631, %v2743
      %v2776 = vadd.f32 %v2632, %v2744
      %v2777 = vadd.f32 %v2633, %v2745
      %v2778 = vadd.f32 %v2634, %v2746
      %v2779 = vadd.f32 %v2635, %v2747
      %v2780 = vadd.f32 %v2636, %v2748
      %v2781 = vadd.f32 %v2637, %v2749
      %v2782 = vadd.f32 %v2638, %v2750
      %v2783 = vadd.f32 %v2639, %v2751
      %v2784 = vadd.f32 %v2640, %v2752
      %v2785 = vadd.f32 %v2641, %v2753
      %v2786 = vadd.f32 %v2642, %v2754
      %v2787 = vadd.f32 %v2643, %v2755
      %v2788 = vadd.f32 %v2644, %v2756
      %v2789 = vadd.f32 %v2645, %v2757
      %v2790 = vadd.f32 %v2646, %v2758
      %v2791 = vadd.f32 %v2647, %v2759
      %v2792 = vadd.f32 %v2648, %v2760
      %v2793 = vlaneseq
      %v2794 = vshrl.u32 %v2793, 7
      %v2795 = vsub.s32 1, %v2794
      %v2796 = vrot.slane %v1558, %v2795
      %v2797 = vmul.f32 %v2796, %v2725
      %v2798 = vmul.f32 %v2796, %v2726
      %v2799 = vmul.f32 0.0, %v2797
      %v2800 = vmul.f32 0.0, %v2798
      %v2801 = vmul.f32 %v2714, %v2797
      %v2802 = vmul.f32 %v2713, %v2798
      %v2803 = vmul.f32 %v2712, %v2797
      %v2804 = vmul.f32 %v2711, %v2798
      %v2805 = vmul.f32 %v2710, %v2797
      %v2806 = vmul.f32 %v2709, %v2798
      %v2807 = vmul.f32 %v2708, %v2797
      %v2808 = vmul.f32 %v2707, %v2798
      %v2809 = vmul.f32 %v2706, %v2797
      %v2810 = vmul.f32 %v2705, %v2798
      %v2811 = vmul.f32 %v2704, %v2797
      %v2812 = vmul.f32 %v2703, %v2798
      %v2813 = vmul.f32 %v2702, %v2797
      %v2814 = vmul.f32 %v2701, %v2798
      %v2815 = vmul.f32 %v2700, %v2797
      %v2816 = vmul.f32 %v2699, %v2798
      %v2817 = vmul.f32 %v2698, %v2797
      %v2818 = vmul.f32 %v2697, %v2798
      %v2819 = vmul.f32 %v2696, %v2797
      %v2820 = vmul.f32 %v2695, %v2798
      %v2821 = vmul.f32 %v2694, %v2797
      %v2822 = vmul.f32 %v2693, %v2798
      %v2823 = vmul.f32 %v2692, %v2797
      %v2824 = vmul.f32 %v2691, %v2798
      %v2825 = vmul.f32 %v2690, %v2797
      %v2826 = vmul.f32 %v2689, %v2798
      %v2827 = vmul.f32 %v2688, %v2797
      %v2828 = vmul.f32 %v2687, %v2798
      %v2829 = vadd.f32 %v2761, %v2799
      %v2830 = vadd.f32 %v2762, %v2800
      %v2831 = vadd.f32 %v2763, %v2799
      %v2832 = vadd.f32 %v2764, %v2800
      %v2833 = vadd.f32 %v2765, %v2801
      %v2834 = vadd.f32 %v2766, %v2802
      %v2835 = vadd.f32 %v2767, %v2803
      %v2836 = vadd.f32 %v2768, %v2804
      %v2837 = vadd.f32 %v2769, %v2805
      %v2838 = vadd.f32 %v2770, %v2806
      %v2839 = vadd.f32 %v2771, %v2807
      %v2840 = vadd.f32 %v2772, %v2808
      %v2841 = vadd.f32 %v2773, %v2809
      %v2842 = vadd.f32 %v2774, %v2810
      %v2843 = vadd.f32 %v2775, %v2811
      %v2844 = vadd.f32 %v2776, %v2812
      %v2845 = vadd.f32 %v2777, %v2813
      %v2846 = vadd.f32 %v2778, %v2814
      %v2847 = vadd.f32 %v2779, %v2815
      %v2848 = vadd.f32 %v2780, %v2816
      %v2849 = vadd.f32 %v2781, %v2817
      %v2850 = vadd.f32 %v2782, %v2818
      %v2851 = vadd.f32 %v2783, %v2819
      %v2852 = vadd.f32 %v2784, %v2820
      %v2853 = vadd.f32 %v2785, %v2821
      %v2854 = vadd.f32 %v2786, %v2822
      %v2855 = vadd.f32 %v2787, %v2823
      %v2856 = vadd.f32 %v2788, %v2824
      %v2857 = vadd.f32 %v2789, %v2825
      %v2858 = vadd.f32 %v2790, %v2826
      %v2859 = vadd.f32 %v2791, %v2827
      %v2860 = vadd.f32 %v2792, %v2828
      %v2861 = vlaneseq
      %v2862 = vshrl.u32 %v2861, 7
      %v2863 = vsub.s32 0, %v2862
      %v2864 = vrot.slane %v1559, %v2863
      %v2865 = vmul.f32 %v2864, %v2725
      %v2866 = vmul.f32 %v2864, %v2726
      %v2867 = vmul.f32 0.0, %v2865
      %v2868 = vmul.f32 0.0, %v2866
      %v2869 = vmul.f32 %v2714, %v2865
      %v2870 = vmul.f32 %v2713, %v2866
      %v2871 = vmul.f32 %v2712, %v2865
      %v2872 = vmul.f32 %v2711, %v2866
      %v2873 = vmul.f32 %v2710, %v2865
      %v2874 = vmul.f32 %v2709, %v2866
      %v2875 = vmul.f32 %v2708, %v2865
      %v2876 = vmul.f32 %v2707, %v2866
      %v2877 = vmul.f32 %v2706, %v2865
      %v2878 = vmul.f32 %v2705, %v2866
      %v2879 = vmul.f32 %v2704, %v2865
      %v2880 = vmul.f32 %v2703, %v2866
      %v2881 = vmul.f32 %v2702, %v2865
      %v2882 = vmul.f32 %v2701, %v2866
      %v2883 = vmul.f32 %v2700, %v2865
      %v2884 = vmul.f32 %v2699, %v2866
      %v2885 = vmul.f32 %v2698, %v2865
      %v2886 = vmul.f32 %v2697, %v2866
      %v2887 = vmul.f32 %v2696, %v2865
      %v2888 = vmul.f32 %v2695, %v2866
      %v2889 = vmul.f32 %v2694, %v2865
      %v2890 = vmul.f32 %v2693, %v2866
      %v2891 = vmul.f32 %v2692, %v2865
      %v2892 = vmul.f32 %v2691, %v2866
      %v2893 = vmul.f32 %v2690, %v2865
      %v2894 = vmul.f32 %v2689, %v2866
      %v2895 = vmul.f32 %v2688, %v2865
      %v2896 = vmul.f32 %v2687, %v2866
      %v2897 = vmul.f32 %v2686, %v2865
      %v2898 = vmul.f32 %v2685, %v2866
      %v2899 = vadd.f32 %v2829, %v2867
      %v2900 = vadd.f32 %v2830, %v2868
      %v2901 = vadd.f32 %v2831, %v2869
      %v2902 = vadd.f32 %v2832, %v2870
      %v2903 = vadd.f32 %v2833, %v2871
      %v2904 = vadd.f32 %v2834, %v2872
      %v2905 = vadd.f32 %v2835, %v2873
      %v2906 = vadd.f32 %v2836, %v2874
      %v2907 = vadd.f32 %v2837, %v2875
      %v2908 = vadd.f32 %v2838, %v2876
      %v2909 = vadd.f32 %v2839, %v2877
      %v2910 = vadd.f32 %v2840, %v2878
      %v2911 = vadd.f32 %v2841, %v2879
      %v2912 = vadd.f32 %v2842, %v2880
      %v2913 = vadd.f32 %v2843, %v2881
      %v2914 = vadd.f32 %v2844, %v2882
      %v2915 = vadd.f32 %v2845, %v2883
      %v2916 = vadd.f32 %v2846, %v2884
      %v2917 = vadd.f32 %v2847, %v2885
      %v2918 = vadd.f32 %v2848, %v2886
      %v2919 = vadd.f32 %v2849, %v2887
      %v2920 = vadd.f32 %v2850, %v2888
      %v2921 = vadd.f32 %v2851, %v2889
      %v2922 = vadd.f32 %v2852, %v2890
      %v2923 = vadd.f32 %v2853, %v2891
      %v2924 = vadd.f32 %v2854, %v2892
      %v2925 = vadd.f32 %v2855, %v2893
      %v2926 = vadd.f32 %v2856, %v2894
      %v2927 = vadd.f32 %v2857, %v2895
      %v2928 = vadd.f32 %v2858, %v2896
      %v2929 = vadd.f32 %v2859, %v2897
      %v2930 = vadd.f32 %v2860, %v2898
      %v2931 = vlaneseq
      %v2932 = vshrl.u32 %v2931, 7
      %v2933 = vsub.s32 7, %v2932
      %v2934 = vrot.slane %v1559, %v2933
      %v2935 = vmul.f32 %v2934, %v2725
      %v2936 = vmul.f32 %v2934, %v2726
      %v2937 = vmul.f32 %v2714, %v2935
      %v2938 = vmul.f32 %v2713, %v2936
      %v2939 = vmul.f32 %v2712, %v2935
      %v2940 = vmul.f32 %v2711, %v2936
      %v2941 = vmul.f32 %v2710, %v2935
      %v2942 = vmul.f32 %v2709, %v2936
      %v2943 = vmul.f32 %v2708, %v2935
      %v2944 = vmul.f32 %v2707, %v2936
      %v2945 = vmul.f32 %v2706, %v2935
      %v2946 = vmul.f32 %v2705, %v2936
      %v2947 = vmul.f32 %v2704, %v2935
      %v2948 = vmul.f32 %v2703, %v2936
      %v2949 = vmul.f32 %v2702, %v2935
      %v2950 = vmul.f32 %v2701, %v2936
      %v2951 = vmul.f32 %v2700, %v2935
      %v2952 = vmul.f32 %v2699, %v2936
      %v2953 = vmul.f32 %v2698, %v2935
      %v2954 = vmul.f32 %v2697, %v2936
      %v2955 = vmul.f32 %v2696, %v2935
      %v2956 = vmul.f32 %v2695, %v2936
      %v2957 = vmul.f32 %v2694, %v2935
      %v2958 = vmul.f32 %v2693, %v2936
      %v2959 = vmul.f32 %v2692, %v2935
      %v2960 = vmul.f32 %v2691, %v2936
      %v2961 = vmul.f32 %v2690, %v2935
      %v2962 = vmul.f32 %v2689, %v2936
      %v2963 = vmul.f32 %v2688, %v2935
      %v2964 = vmul.f32 %v2687, %v2936
      %v2965 = vmul.f32 %v2686, %v2935
      %v2966 = vmul.f32 %v2685, %v2936
      %v2967 = vmul.f32 %v2684, %v2935
      %v2968 = vmul.f32 %v2683, %v2936
      %v2969 = vadd.f32 %v2899, %v2937
      %v2970 = vadd.f32 %v2900, %v2938
      %v2971 = vadd.f32 %v2901, %v2939
      %v2972 = vadd.f32 %v2902, %v2940
      %v2973 = vadd.f32 %v2903, %v2941
      %v2974 = vadd.f32 %v2904, %v2942
      %v2975 = vadd.f32 %v2905, %v2943
      %v2976 = vadd.f32 %v2906, %v2944
      %v2977 = vadd.f32 %v2907, %v2945
      %v2978 = vadd.f32 %v2908, %v2946
      %v2979 = vadd.f32 %v2909, %v2947
      %v2980 = vadd.f32 %v2910, %v2948
      %v2981 = vadd.f32 %v2911, %v2949
      %v2982 = vadd.f32 %v2912, %v2950
      %v2983 = vadd.f32 %v2913, %v2951
      %v2984 = vadd.f32 %v2914, %v2952
      %v2985 = vadd.f32 %v2915, %v2953
      %v2986 = vadd.f32 %v2916, %v2954
      %v2987 = vadd.f32 %v2917, %v2955
      %v2988 = vadd.f32 %v2918, %v2956
      %v2989 = vadd.f32 %v2919, %v2957
      %v2990 = vadd.f32 %v2920, %v2958
      %v2991 = vadd.f32 %v2921, %v2959
      %v2992 = vadd.f32 %v2922, %v2960
      %v2993 = vadd.f32 %v2923, %v2961
      %v2994 = vadd.f32 %v2924, %v2962
      %v2995 = vadd.f32 %v2925, %v2963
      %v2996 = vadd.f32 %v2926, %v2964
      %v2997 = vadd.f32 %v2927, %v2965
      %v2998 = vadd.f32 %v2928, %v2966
      %v2999 = vadd.f32 %v2929, %v2967
      %v3000 = vadd.f32 %v2930, %v2968
      %v3001 = vlaneseq
      %v3002 = vshrl.u32 %v3001, 7
      %v3003 = vsub.s32 6, %v3002
      %v3004 = vrot.slane %v1560, %v3003
      %v3005 = vmul.f32 %v3004, %v2725
      %v3006 = vmul.f32 %v3004, %v2726
      %v3007 = vmul.f32 %v2712, %v3005
      %v3008 = vmul.f32 %v2711, %v3006
      %v3009 = vmul.f32 %v2710, %v3005
      %v3010 = vmul.f32 %v2709, %v3006
      %v3011 = vmul.f32 %v2708, %v3005
      %v3012 = vmul.f32 %v2707, %v3006
      %v3013 = vmul.f32 %v2706, %v3005
      %v3014 = vmul.f32 %v2705, %v3006
      %v3015 = vmul.f32 %v2704, %v3005
      %v3016 = vmul.f32 %v2703, %v3006
      %v3017 = vmul.f32 %v2702, %v3005
      %v3018 = vmul.f32 %v2701, %v3006
      %v3019 = vmul.f32 %v2700, %v3005
      %v3020 = vmul.f32 %v2699, %v3006
      %v3021 = vmul.f32 %v2698, %v3005
      %v3022 = vmul.f32 %v2697, %v3006
      %v3023 = vmul.f32 %v2696, %v3005
      %v3024 = vmul.f32 %v2695, %v3006
      %v3025 = vmul.f32 %v2694, %v3005
      %v3026 = vmul.f32 %v2693, %v3006
      %v3027 = vmul.f32 %v2692, %v3005
      %v3028 = vmul.f32 %v2691, %v3006
      %v3029 = vmul.f32 %v2690, %v3005
      %v3030 = vmul.f32 %v2689, %v3006
      %v3031 = vmul.f32 %v2688, %v3005
      %v3032 = vmul.f32 %v2687, %v3006
      %v3033 = vmul.f32 %v2686, %v3005
      %v3034 = vmul.f32 %v2685, %v3006
      %v3035 = vmul.f32 %v2684, %v3005
      %v3036 = vmul.f32 %v2683, %v3006
      %v3037 = vmul.f32 %v2682, %v3005
      %v3038 = vmul.f32 0.0, %v3006
      %v3039 = vadd.f32 %v2969, %v3007
      %v3040 = vadd.f32 %v2970, %v3008
      %v3041 = vadd.f32 %v2971, %v3009
      %v3042 = vadd.f32 %v2972, %v3010
      %v3043 = vadd.f32 %v2973, %v3011
      %v3044 = vadd.f32 %v2974, %v3012
      %v3045 = vadd.f32 %v2975, %v3013
      %v3046 = vadd.f32 %v2976, %v3014
      %v3047 = vadd.f32 %v2977, %v3015
      %v3048 = vadd.f32 %v2978, %v3016
      %v3049 = vadd.f32 %v2979, %v3017
      %v3050 = vadd.f32 %v2980, %v3018
      %v3051 = vadd.f32 %v2981, %v3019
      %v3052 = vadd.f32 %v2982, %v3020
      %v3053 = vadd.f32 %v2983, %v3021
      %v3054 = vadd.f32 %v2984, %v3022
      %v3055 = vadd.f32 %v2985, %v3023
      %v3056 = vadd.f32 %v2986, %v3024
      %v3057 = vadd.f32 %v2987, %v3025
      %v3058 = vadd.f32 %v2988, %v3026
      %v3059 = vadd.f32 %v2989, %v3027
      %v3060 = vadd.f32 %v2990, %v3028
      %v3061 = vadd.f32 %v2991, %v3029
      %v3062 = vadd.f32 %v2992, %v3030
      %v3063 = vadd.f32 %v2993, %v3031
      %v3064 = vadd.f32 %v2994, %v3032
      %v3065 = vadd.f32 %v2995, %v3033
      %v3066 = vadd.f32 %v2996, %v3034
      %v3067 = vadd.f32 %v2997, %v3035
      %v3068 = vadd.f32 %v2998, %v3036
      %v3069 = vadd.f32 %v2999, %v3037
      %v3070 = vadd.f32 %v3000, %v3038
      %v3071 = vlaneseq
      %v3072 = vshrl.u32 %v3071, 7
      %v3073 = vsub.s32 5, %v3072
      %v3074 = vrot.slane %v1561, %v3073
      %v3075 = vmul.f32 %v3074, %v2725
      %v3076 = vmul.f32 %v3074, %v2726
      %v3077 = vmul.f32 %v2710, %v3075
      %v3078 = vmul.f32 %v2709, %v3076
      %v3079 = vmul.f32 %v2708, %v3075
      %v3080 = vmul.f32 %v2707, %v3076
      %v3081 = vmul.f32 %v2706, %v3075
      %v3082 = vmul.f32 %v2705, %v3076
      %v3083 = vmul.f32 %v2704, %v3075
      %v3084 = vmul.f32 %v2703, %v3076
      %v3085 = vmul.f32 %v2702, %v3075
      %v3086 = vmul.f32 %v2701, %v3076
      %v3087 = vmul.f32 %v2700, %v3075
      %v3088 = vmul.f32 %v2699, %v3076
      %v3089 = vmul.f32 %v2698, %v3075
      %v3090 = vmul.f32 %v2697, %v3076
      %v3091 = vmul.f32 %v2696, %v3075
      %v3092 = vmul.f32 %v2695, %v3076
      %v3093 = vmul.f32 %v2694, %v3075
      %v3094 = vmul.f32 %v2693, %v3076
      %v3095 = vmul.f32 %v2692, %v3075
      %v3096 = vmul.f32 %v2691, %v3076
      %v3097 = vmul.f32 %v2690, %v3075
      %v3098 = vmul.f32 %v2689, %v3076
      %v3099 = vmul.f32 %v2688, %v3075
      %v3100 = vmul.f32 %v2687, %v3076
      %v3101 = vmul.f32 %v2686, %v3075
      %v3102 = vmul.f32 %v2685, %v3076
      %v3103 = vmul.f32 %v2684, %v3075
      %v3104 = vmul.f32 %v2683, %v3076
      %v3105 = vmul.f32 %v2682, %v3075
      %v3106 = vmul.f32 0.0, %v3076
      %v3107 = vmul.f32 0.0, %v3075
      %v3108 = vadd.f32 %v3039, %v3077
      %v3109 = vadd.f32 %v3040, %v3078
      %v3110 = vadd.f32 %v3041, %v3079
      %v3111 = vadd.f32 %v3042, %v3080
      %v3112 = vadd.f32 %v3043, %v3081
      %v3113 = vadd.f32 %v3044, %v3082
      %v3114 = vadd.f32 %v3045, %v3083
      %v3115 = vadd.f32 %v3046, %v3084
      %v3116 = vadd.f32 %v3047, %v3085
      %v3117 = vadd.f32 %v3048, %v3086
      %v3118 = vadd.f32 %v3049, %v3087
      %v3119 = vadd.f32 %v3050, %v3088
      %v3120 = vadd.f32 %v3051, %v3089
      %v3121 = vadd.f32 %v3052, %v3090
      %v3122 = vadd.f32 %v3053, %v3091
      %v3123 = vadd.f32 %v3054, %v3092
      %v3124 = vadd.f32 %v3055, %v3093
      %v3125 = vadd.f32 %v3056, %v3094
      %v3126 = vadd.f32 %v3057, %v3095
      %v3127 = vadd.f32 %v3058, %v3096
      %v3128 = vadd.f32 %v3059, %v3097
      %v3129 = vadd.f32 %v3060, %v3098
      %v3130 = vadd.f32 %v3061, %v3099
      %v3131 = vadd.f32 %v3062, %v3100
      %v3132 = vadd.f32 %v3063, %v3101
      %v3133 = vadd.f32 %v3064, %v3102
      %v3134 = vadd.f32 %v3065, %v3103
      %v3135 = vadd.f32 %v3066, %v3104
      %v3136 = vadd.f32 %v3067, %v3105
      %v3137 = vadd.f32 %v3068, %v3106
      %v3138 = vadd.f32 %v3069, %v3107
      %v3139 = vadd.f32 %v3070, %v3106
      %v3140 = vlaneseq
      %v3141 = vshrl.u32 %v3140, 7
      %v3142 = vsub.s32 4, %v3141
      %v3143 = vrot.slane %v1562, %v3142
      %v3144 = vmul.f32 %v3143, %v2725
      %v3145 = vmul.f32 %v3143, %v2726
      %v3146 = vmul.f32 %v2708, %v3144
      %v3147 = vmul.f32 %v2707, %v3145
      %v3148 = vmul.f32 %v2706, %v3144
      %v3149 = vmul.f32 %v2705, %v3145
      %v3150 = vmul.f32 %v2704, %v3144
      %v3151 = vmul.f32 %v2703, %v3145
      %v3152 = vmul.f32 %v2702, %v3144
      %v3153 = vmul.f32 %v2701, %v3145
      %v3154 = vmul.f32 %v2700, %v3144
      %v3155 = vmul.f32 %v2699, %v3145
      %v3156 = vmul.f32 %v2698, %v3144
      %v3157 = vmul.f32 %v2697, %v3145
      %v3158 = vmul.f32 %v2696, %v3144
      %v3159 = vmul.f32 %v2695, %v3145
      %v3160 = vmul.f32 %v2694, %v3144
      %v3161 = vmul.f32 %v2693, %v3145
      %v3162 = vmul.f32 %v2692, %v3144
      %v3163 = vmul.f32 %v2691, %v3145
      %v3164 = vmul.f32 %v2690, %v3144
      %v3165 = vmul.f32 %v2689, %v3145
      %v3166 = vmul.f32 %v2688, %v3144
      %v3167 = vmul.f32 %v2687, %v3145
      %v3168 = vmul.f32 %v2686, %v3144
      %v3169 = vmul.f32 %v2685, %v3145
      %v3170 = vmul.f32 %v2684, %v3144
      %v3171 = vmul.f32 %v2683, %v3145
      %v3172 = vmul.f32 %v2682, %v3144
      %v3173 = vmul.f32 0.0, %v3145
      %v3174 = vmul.f32 0.0, %v3144
      %v3175 = vadd.f32 %v3108, %v3146
      %v3176 = vadd.f32 %v3109, %v3147
      %v3177 = vadd.f32 %v3110, %v3148
      %v3178 = vadd.f32 %v3111, %v3149
      %v3179 = vadd.f32 %v3112, %v3150
      %v3180 = vadd.f32 %v3113, %v3151
      %v3181 = vadd.f32 %v3114, %v3152
      %v3182 = vadd.f32 %v3115, %v3153
      %v3183 = vadd.f32 %v3116, %v3154
      %v3184 = vadd.f32 %v3117, %v3155
      %v3185 = vadd.f32 %v3118, %v3156
      %v3186 = vadd.f32 %v3119, %v3157
      %v3187 = vadd.f32 %v3120, %v3158
      %v3188 = vadd.f32 %v3121, %v3159
      %v3189 = vadd.f32 %v3122, %v3160
      %v3190 = vadd.f32 %v3123, %v3161
      %v3191 = vadd.f32 %v3124, %v3162
      %v3192 = vadd.f32 %v3125, %v3163
      %v3193 = vadd.f32 %v3126, %v3164
      %v3194 = vadd.f32 %v3127, %v3165
      %v3195 = vadd.f32 %v3128, %v3166
      %v3196 = vadd.f32 %v3129, %v3167
      %v3197 = vadd.f32 %v3130, %v3168
      %v3198 = vadd.f32 %v3131, %v3169
      %v3199 = vadd.f32 %v3132, %v3170
      %v3200 = vadd.f32 %v3133, %v3171
      %v3201 = vadd.f32 %v3134, %v3172
      %v3202 = vadd.f32 %v3135, %v3173
      %v3203 = vadd.f32 %v3136, %v3174
      %v3204 = vadd.f32 %v3137, %v3173
      %v3205 = vadd.f32 %v3138, %v3174
      %v3206 = vadd.f32 %v3139, %v3173
      %vm3207 = vcmp.ge.s32.totalorder %v1565, 0
      %vm3208 = vcmp.ge.s32.totalorder %v1566, 0
      %vm3209 = vcmp.lt.s32.totalorder %v1565, 16
      %vm3210 = vcmp.lt.s32.totalorder %v1566, 16
      %vm3211 = vmand %vm3207, %vm3209
      %vm3212 = vmand %vm3208, %vm3210
      %v3213 = vsel %vm3211, 1, 0
      %v3214 = vsel %vm3212, 1, 0
      %v3215 = vcvt.s32.f32 %v3213
      %v3216 = vcvt.s32.f32 %v3214
      %v3217 = vlaneseq
      %v3218 = vshrl.u32 %v3217, 7
      %v3219 = vsub.s32 3, %v3218
      %v3220 = vrot.slane %v1557, %v3219
      %v3221 = vmul.f32 %v3220, %v3215
      %v3222 = vmul.f32 %v3220, %v3216
      %v3223 = vmul.f32 %v3221, 0.0
      %v3224 = vmul.f32 %v3222, 0.0
      %v3225 = vmul.f32 %v1401, %v3221
      %v3226 = vmul.f32 %v1405, %v3222
      %v3227 = vmul.f32 %v1411, %v3221
      %v3228 = vmul.f32 %v1415, %v3222
      %v3229 = vmul.f32 %v1421, %v3221
      %v3230 = vmul.f32 %v1425, %v3222
      %v3231 = vmul.f32 %v1431, %v3221
      %v3232 = vmul.f32 %v1435, %v3222
      %v3233 = vmul.f32 %v1441, %v3221
      %v3234 = vmul.f32 %v1445, %v3222
      %v3235 = vmul.f32 %v1451, %v3221
      %v3236 = vmul.f32 %v1455, %v3222
      %v3237 = vmul.f32 %v1461, %v3221
      %v3238 = vmul.f32 %v1465, %v3222
      %v3239 = vmul.f32 %v1471, %v3221
      %v3240 = vmul.f32 %v1475, %v3222
      %v3241 = vmul.f32 %v1481, %v3221
      %v3242 = vmul.f32 %v1485, %v3222
      %v3243 = vmul.f32 %v1491, %v3221
      %v3244 = vmul.f32 %v1495, %v3222
      %v3245 = vmul.f32 %v1501, %v3221
      %v3246 = vmul.f32 %v1505, %v3222
      %v3247 = vmul.f32 %v1511, %v3221
      %v3248 = vmul.f32 %v1515, %v3222
      %v3249 = vmul.f32 %v1521, %v3221
      %v3250 = vmul.f32 %v1525, %v3222
      %v3251 = vadd.f32 %v3175, %v3223
      %v3252 = vadd.f32 %v3176, %v3224
      %v3253 = vadd.f32 %v3177, %v3223
      %v3254 = vadd.f32 %v3178, %v3224
      %v3255 = vadd.f32 %v3179, %v3223
      %v3256 = vadd.f32 %v3180, %v3224
      %v3257 = vadd.f32 %v3181, %v3225
      %v3258 = vadd.f32 %v3182, %v3226
      %v3259 = vadd.f32 %v3183, %v3227
      %v3260 = vadd.f32 %v3184, %v3228
      %v3261 = vadd.f32 %v3185, %v3229
      %v3262 = vadd.f32 %v3186, %v3230
      %v3263 = vadd.f32 %v3187, %v3231
      %v3264 = vadd.f32 %v3188, %v3232
      %v3265 = vadd.f32 %v3189, %v3233
      %v3266 = vadd.f32 %v3190, %v3234
      %v3267 = vadd.f32 %v3191, %v3235
      %v3268 = vadd.f32 %v3192, %v3236
      %v3269 = vadd.f32 %v3193, %v3237
      %v3270 = vadd.f32 %v3194, %v3238
      %v3271 = vadd.f32 %v3195, %v3239
      %v3272 = vadd.f32 %v3196, %v3240
      %v3273 = vadd.f32 %v3197, %v3241
      %v3274 = vadd.f32 %v3198, %v3242
      %v3275 = vadd.f32 %v3199, %v3243
      %v3276 = vadd.f32 %v3200, %v3244
      %v3277 = vadd.f32 %v3201, %v3245
      %v3278 = vadd.f32 %v3202, %v3246
      %v3279 = vadd.f32 %v3203, %v3247
      %v3280 = vadd.f32 %v3204, %v3248
      %v3281 = vadd.f32 %v3205, %v3249
      %v3282 = vadd.f32 %v3206, %v3250
      %v3283 = vlaneseq
      %v3284 = vshrl.u32 %v3283, 7
      %v3285 = vsub.s32 2, %v3284
      %v3286 = vrot.slane %v1558, %v3285
      %v3287 = vmul.f32 %v3286, %v3215
      %v3288 = vmul.f32 %v3286, %v3216
      %v3289 = vmul.f32 %v3287, 0.0
      %v3290 = vmul.f32 %v3288, 0.0
      %v3291 = vmul.f32 %v1401, %v3287
      %v3292 = vmul.f32 %v1405, %v3288
      %v3293 = vmul.f32 %v1411, %v3287
      %v3294 = vmul.f32 %v1415, %v3288
      %v3295 = vmul.f32 %v1421, %v3287
      %v3296 = vmul.f32 %v1425, %v3288
      %v3297 = vmul.f32 %v1431, %v3287
      %v3298 = vmul.f32 %v1435, %v3288
      %v3299 = vmul.f32 %v1441, %v3287
      %v3300 = vmul.f32 %v1445, %v3288
      %v3301 = vmul.f32 %v1451, %v3287
      %v3302 = vmul.f32 %v1455, %v3288
      %v3303 = vmul.f32 %v1461, %v3287
      %v3304 = vmul.f32 %v1465, %v3288
      %v3305 = vmul.f32 %v1471, %v3287
      %v3306 = vmul.f32 %v1475, %v3288
      %v3307 = vmul.f32 %v1481, %v3287
      %v3308 = vmul.f32 %v1485, %v3288
      %v3309 = vmul.f32 %v1491, %v3287
      %v3310 = vmul.f32 %v1495, %v3288
      %v3311 = vmul.f32 %v1501, %v3287
      %v3312 = vmul.f32 %v1505, %v3288
      %v3313 = vmul.f32 %v1511, %v3287
      %v3314 = vmul.f32 %v1515, %v3288
      %v3315 = vmul.f32 %v1521, %v3287
      %v3316 = vmul.f32 %v1525, %v3288
      %v3317 = vmul.f32 %v1531, %v3287
      %v3318 = vmul.f32 %v1535, %v3288
      %v3319 = vadd.f32 %v3251, %v3289
      %v3320 = vadd.f32 %v3252, %v3290
      %v3321 = vadd.f32 %v3253, %v3289
      %v3322 = vadd.f32 %v3254, %v3290
      %v3323 = vadd.f32 %v3255, %v3291
      %v3324 = vadd.f32 %v3256, %v3292
      %v3325 = vadd.f32 %v3257, %v3293
      %v3326 = vadd.f32 %v3258, %v3294
      %v3327 = vadd.f32 %v3259, %v3295
      %v3328 = vadd.f32 %v3260, %v3296
      %v3329 = vadd.f32 %v3261, %v3297
      %v3330 = vadd.f32 %v3262, %v3298
      %v3331 = vadd.f32 %v3263, %v3299
      %v3332 = vadd.f32 %v3264, %v3300
      %v3333 = vadd.f32 %v3265, %v3301
      %v3334 = vadd.f32 %v3266, %v3302
      %v3335 = vadd.f32 %v3267, %v3303
      %v3336 = vadd.f32 %v3268, %v3304
      %v3337 = vadd.f32 %v3269, %v3305
      %v3338 = vadd.f32 %v3270, %v3306
      %v3339 = vadd.f32 %v3271, %v3307
      %v3340 = vadd.f32 %v3272, %v3308
      %v3341 = vadd.f32 %v3273, %v3309
      %v3342 = vadd.f32 %v3274, %v3310
      %v3343 = vadd.f32 %v3275, %v3311
      %v3344 = vadd.f32 %v3276, %v3312
      %v3345 = vadd.f32 %v3277, %v3313
      %v3346 = vadd.f32 %v3278, %v3314
      %v3347 = vadd.f32 %v3279, %v3315
      %v3348 = vadd.f32 %v3280, %v3316
      %v3349 = vadd.f32 %v3281, %v3317
      %v3350 = vadd.f32 %v3282, %v3318
      %v3351 = vlaneseq
      %v3352 = vshrl.u32 %v3351, 7
      %v3353 = vsub.s32 1, %v3352
      %v3354 = vrot.slane %v1559, %v3353
      %v3355 = vmul.f32 %v3354, %v3215
      %v3356 = vmul.f32 %v3354, %v3216
      %v3357 = vmul.f32 %v3355, 0.0
      %v3358 = vmul.f32 %v3356, 0.0
      %v3359 = vmul.f32 %v1401, %v3355
      %v3360 = vmul.f32 %v1405, %v3356
      %v3361 = vmul.f32 %v1411, %v3355
      %v3362 = vmul.f32 %v1415, %v3356
      %v3363 = vmul.f32 %v1421, %v3355
      %v3364 = vmul.f32 %v1425, %v3356
      %v3365 = vmul.f32 %v1431, %v3355
      %v3366 = vmul.f32 %v1435, %v3356
      %v3367 = vmul.f32 %v1441, %v3355
      %v3368 = vmul.f32 %v1445, %v3356
      %v3369 = vmul.f32 %v1451, %v3355
      %v3370 = vmul.f32 %v1455, %v3356
      %v3371 = vmul.f32 %v1461, %v3355
      %v3372 = vmul.f32 %v1465, %v3356
      %v3373 = vmul.f32 %v1471, %v3355
      %v3374 = vmul.f32 %v1475, %v3356
      %v3375 = vmul.f32 %v1481, %v3355
      %v3376 = vmul.f32 %v1485, %v3356
      %v3377 = vmul.f32 %v1491, %v3355
      %v3378 = vmul.f32 %v1495, %v3356
      %v3379 = vmul.f32 %v1501, %v3355
      %v3380 = vmul.f32 %v1505, %v3356
      %v3381 = vmul.f32 %v1511, %v3355
      %v3382 = vmul.f32 %v1515, %v3356
      %v3383 = vmul.f32 %v1521, %v3355
      %v3384 = vmul.f32 %v1525, %v3356
      %v3385 = vmul.f32 %v1531, %v3355
      %v3386 = vmul.f32 %v1535, %v3356
      %v3387 = vmul.f32 %v1541, %v3355
      %v3388 = vmul.f32 %v1545, %v3356
      %v3389 = vadd.f32 %v3319, %v3357
      %v3390 = vadd.f32 %v3320, %v3358
      %v3391 = vadd.f32 %v3321, %v3359
      %v3392 = vadd.f32 %v3322, %v3360
      %v3393 = vadd.f32 %v3323, %v3361
      %v3394 = vadd.f32 %v3324, %v3362
      %v3395 = vadd.f32 %v3325, %v3363
      %v3396 = vadd.f32 %v3326, %v3364
      %v3397 = vadd.f32 %v3327, %v3365
      %v3398 = vadd.f32 %v3328, %v3366
      %v3399 = vadd.f32 %v3329, %v3367
      %v3400 = vadd.f32 %v3330, %v3368
      %v3401 = vadd.f32 %v3331, %v3369
      %v3402 = vadd.f32 %v3332, %v3370
      %v3403 = vadd.f32 %v3333, %v3371
      %v3404 = vadd.f32 %v3334, %v3372
      %v3405 = vadd.f32 %v3335, %v3373
      %v3406 = vadd.f32 %v3336, %v3374
      %v3407 = vadd.f32 %v3337, %v3375
      %v3408 = vadd.f32 %v3338, %v3376
      %v3409 = vadd.f32 %v3339, %v3377
      %v3410 = vadd.f32 %v3340, %v3378
      %v3411 = vadd.f32 %v3341, %v3379
      %v3412 = vadd.f32 %v3342, %v3380
      %v3413 = vadd.f32 %v3343, %v3381
      %v3414 = vadd.f32 %v3344, %v3382
      %v3415 = vadd.f32 %v3345, %v3383
      %v3416 = vadd.f32 %v3346, %v3384
      %v3417 = vadd.f32 %v3347, %v3385
      %v3418 = vadd.f32 %v3348, %v3386
      %v3419 = vadd.f32 %v3349, %v3387
      %v3420 = vadd.f32 %v3350, %v3388
      %v3421 = vlaneseq
      %v3422 = vshrl.u32 %v3421, 7
      %v3423 = vsub.s32 0, %v3422
      %v3424 = vrot.slane %v1560, %v3423
      %v3425 = vmul.f32 %v3424, %v3215
      %v3426 = vmul.f32 %v3424, %v3216
      %v3427 = vmul.f32 %v1401, %v3425
      %v3428 = vmul.f32 %v1405, %v3426
      %v3429 = vmul.f32 %v1411, %v3425
      %v3430 = vmul.f32 %v1415, %v3426
      %v3431 = vmul.f32 %v1421, %v3425
      %v3432 = vmul.f32 %v1425, %v3426
      %v3433 = vmul.f32 %v1431, %v3425
      %v3434 = vmul.f32 %v1435, %v3426
      %v3435 = vmul.f32 %v1441, %v3425
      %v3436 = vmul.f32 %v1445, %v3426
      %v3437 = vmul.f32 %v1451, %v3425
      %v3438 = vmul.f32 %v1455, %v3426
      %v3439 = vmul.f32 %v1461, %v3425
      %v3440 = vmul.f32 %v1465, %v3426
      %v3441 = vmul.f32 %v1471, %v3425
      %v3442 = vmul.f32 %v1475, %v3426
      %v3443 = vmul.f32 %v1481, %v3425
      %v3444 = vmul.f32 %v1485, %v3426
      %v3445 = vmul.f32 %v1491, %v3425
      %v3446 = vmul.f32 %v1495, %v3426
      %v3447 = vmul.f32 %v1501, %v3425
      %v3448 = vmul.f32 %v1505, %v3426
      %v3449 = vmul.f32 %v1511, %v3425
      %v3450 = vmul.f32 %v1515, %v3426
      %v3451 = vmul.f32 %v1521, %v3425
      %v3452 = vmul.f32 %v1525, %v3426
      %v3453 = vmul.f32 %v1531, %v3425
      %v3454 = vmul.f32 %v1535, %v3426
      %v3455 = vmul.f32 %v1541, %v3425
      %v3456 = vmul.f32 %v1545, %v3426
      %v3457 = vmul.f32 %v1551, %v3425
      %v3458 = vmul.f32 %v1555, %v3426
      %v3459 = vadd.f32 %v3389, %v3427
      %v3460 = vadd.f32 %v3390, %v3428
      %v3461 = vadd.f32 %v3391, %v3429
      %v3462 = vadd.f32 %v3392, %v3430
      %v3463 = vadd.f32 %v3393, %v3431
      %v3464 = vadd.f32 %v3394, %v3432
      %v3465 = vadd.f32 %v3395, %v3433
      %v3466 = vadd.f32 %v3396, %v3434
      %v3467 = vadd.f32 %v3397, %v3435
      %v3468 = vadd.f32 %v3398, %v3436
      %v3469 = vadd.f32 %v3399, %v3437
      %v3470 = vadd.f32 %v3400, %v3438
      %v3471 = vadd.f32 %v3401, %v3439
      %v3472 = vadd.f32 %v3402, %v3440
      %v3473 = vadd.f32 %v3403, %v3441
      %v3474 = vadd.f32 %v3404, %v3442
      %v3475 = vadd.f32 %v3405, %v3443
      %v3476 = vadd.f32 %v3406, %v3444
      %v3477 = vadd.f32 %v3407, %v3445
      %v3478 = vadd.f32 %v3408, %v3446
      %v3479 = vadd.f32 %v3409, %v3447
      %v3480 = vadd.f32 %v3410, %v3448
      %v3481 = vadd.f32 %v3411, %v3449
      %v3482 = vadd.f32 %v3412, %v3450
      %v3483 = vadd.f32 %v3413, %v3451
      %v3484 = vadd.f32 %v3414, %v3452
      %v3485 = vadd.f32 %v3415, %v3453
      %v3486 = vadd.f32 %v3416, %v3454
      %v3487 = vadd.f32 %v3417, %v3455
      %v3488 = vadd.f32 %v3418, %v3456
      %v3489 = vadd.f32 %v3419, %v3457
      %v3490 = vadd.f32 %v3420, %v3458
      %v3491 = vlaneseq
      %v3492 = vshrl.u32 %v3491, 7
      %v3493 = vsub.s32 7, %v3492
      %v3494 = vrot.slane %v1560, %v3493
      %v3495 = vmul.f32 %v3494, %v3215
      %v3496 = vmul.f32 %v3494, %v3216
      %v3497 = vmul.f32 %v1411, %v3495
      %v3498 = vmul.f32 %v1415, %v3496
      %v3499 = vmul.f32 %v1421, %v3495
      %v3500 = vmul.f32 %v1425, %v3496
      %v3501 = vmul.f32 %v1431, %v3495
      %v3502 = vmul.f32 %v1435, %v3496
      %v3503 = vmul.f32 %v1441, %v3495
      %v3504 = vmul.f32 %v1445, %v3496
      %v3505 = vmul.f32 %v1451, %v3495
      %v3506 = vmul.f32 %v1455, %v3496
      %v3507 = vmul.f32 %v1461, %v3495
      %v3508 = vmul.f32 %v1465, %v3496
      %v3509 = vmul.f32 %v1471, %v3495
      %v3510 = vmul.f32 %v1475, %v3496
      %v3511 = vmul.f32 %v1481, %v3495
      %v3512 = vmul.f32 %v1485, %v3496
      %v3513 = vmul.f32 %v1491, %v3495
      %v3514 = vmul.f32 %v1495, %v3496
      %v3515 = vmul.f32 %v1501, %v3495
      %v3516 = vmul.f32 %v1505, %v3496
      %v3517 = vmul.f32 %v1511, %v3495
      %v3518 = vmul.f32 %v1515, %v3496
      %v3519 = vmul.f32 %v1521, %v3495
      %v3520 = vmul.f32 %v1525, %v3496
      %v3521 = vmul.f32 %v1531, %v3495
      %v3522 = vmul.f32 %v1535, %v3496
      %v3523 = vmul.f32 %v1541, %v3495
      %v3524 = vmul.f32 %v1545, %v3496
      %v3525 = vmul.f32 %v1551, %v3495
      %v3526 = vmul.f32 %v1555, %v3496
      %v3527 = vmul.f32 %v3495, 0.0
      %v3528 = vmul.f32 %v3496, 0.0
      %v3529 = vadd.f32 %v3459, %v3497
      %v3530 = vadd.f32 %v3460, %v3498
      %v3531 = vadd.f32 %v3461, %v3499
      %v3532 = vadd.f32 %v3462, %v3500
      %v3533 = vadd.f32 %v3463, %v3501
      %v3534 = vadd.f32 %v3464, %v3502
      %v3535 = vadd.f32 %v3465, %v3503
      %v3536 = vadd.f32 %v3466, %v3504
      %v3537 = vadd.f32 %v3467, %v3505
      %v3538 = vadd.f32 %v3468, %v3506
      %v3539 = vadd.f32 %v3469, %v3507
      %v3540 = vadd.f32 %v3470, %v3508
      %v3541 = vadd.f32 %v3471, %v3509
      %v3542 = vadd.f32 %v3472, %v3510
      %v3543 = vadd.f32 %v3473, %v3511
      %v3544 = vadd.f32 %v3474, %v3512
      %v3545 = vadd.f32 %v3475, %v3513
      %v3546 = vadd.f32 %v3476, %v3514
      %v3547 = vadd.f32 %v3477, %v3515
      %v3548 = vadd.f32 %v3478, %v3516
      %v3549 = vadd.f32 %v3479, %v3517
      %v3550 = vadd.f32 %v3480, %v3518
      %v3551 = vadd.f32 %v3481, %v3519
      %v3552 = vadd.f32 %v3482, %v3520
      %v3553 = vadd.f32 %v3483, %v3521
      %v3554 = vadd.f32 %v3484, %v3522
      %v3555 = vadd.f32 %v3485, %v3523
      %v3556 = vadd.f32 %v3486, %v3524
      %v3557 = vadd.f32 %v3487, %v3525
      %v3558 = vadd.f32 %v3488, %v3526
      %v3559 = vadd.f32 %v3489, %v3527
      %v3560 = vadd.f32 %v3490, %v3528
      %v3561 = vlaneseq
      %v3562 = vshrl.u32 %v3561, 7
      %v3563 = vsub.s32 6, %v3562
      %v3564 = vrot.slane %v1561, %v3563
      %v3565 = vmul.f32 %v3564, %v3215
      %v3566 = vmul.f32 %v3564, %v3216
      %v3567 = vmul.f32 %v1421, %v3565
      %v3568 = vmul.f32 %v1425, %v3566
      %v3569 = vmul.f32 %v1431, %v3565
      %v3570 = vmul.f32 %v1435, %v3566
      %v3571 = vmul.f32 %v1441, %v3565
      %v3572 = vmul.f32 %v1445, %v3566
      %v3573 = vmul.f32 %v1451, %v3565
      %v3574 = vmul.f32 %v1455, %v3566
      %v3575 = vmul.f32 %v1461, %v3565
      %v3576 = vmul.f32 %v1465, %v3566
      %v3577 = vmul.f32 %v1471, %v3565
      %v3578 = vmul.f32 %v1475, %v3566
      %v3579 = vmul.f32 %v1481, %v3565
      %v3580 = vmul.f32 %v1485, %v3566
      %v3581 = vmul.f32 %v1491, %v3565
      %v3582 = vmul.f32 %v1495, %v3566
      %v3583 = vmul.f32 %v1501, %v3565
      %v3584 = vmul.f32 %v1505, %v3566
      %v3585 = vmul.f32 %v1511, %v3565
      %v3586 = vmul.f32 %v1515, %v3566
      %v3587 = vmul.f32 %v1521, %v3565
      %v3588 = vmul.f32 %v1525, %v3566
      %v3589 = vmul.f32 %v1531, %v3565
      %v3590 = vmul.f32 %v1535, %v3566
      %v3591 = vmul.f32 %v1541, %v3565
      %v3592 = vmul.f32 %v1545, %v3566
      %v3593 = vmul.f32 %v1551, %v3565
      %v3594 = vmul.f32 %v1555, %v3566
      %v3595 = vmul.f32 %v3565, 0.0
      %v3596 = vmul.f32 %v3566, 0.0
      %v3597 = vadd.f32 %v3529, %v3567
      %v3598 = vadd.f32 %v3530, %v3568
      %v3599 = vadd.f32 %v3531, %v3569
      %v3600 = vadd.f32 %v3532, %v3570
      %v3601 = vadd.f32 %v3533, %v3571
      %v3602 = vadd.f32 %v3534, %v3572
      %v3603 = vadd.f32 %v3535, %v3573
      %v3604 = vadd.f32 %v3536, %v3574
      %v3605 = vadd.f32 %v3537, %v3575
      %v3606 = vadd.f32 %v3538, %v3576
      %v3607 = vadd.f32 %v3539, %v3577
      %v3608 = vadd.f32 %v3540, %v3578
      %v3609 = vadd.f32 %v3541, %v3579
      %v3610 = vadd.f32 %v3542, %v3580
      %v3611 = vadd.f32 %v3543, %v3581
      %v3612 = vadd.f32 %v3544, %v3582
      %v3613 = vadd.f32 %v3545, %v3583
      %v3614 = vadd.f32 %v3546, %v3584
      %v3615 = vadd.f32 %v3547, %v3585
      %v3616 = vadd.f32 %v3548, %v3586
      %v3617 = vadd.f32 %v3549, %v3587
      %v3618 = vadd.f32 %v3550, %v3588
      %v3619 = vadd.f32 %v3551, %v3589
      %v3620 = vadd.f32 %v3552, %v3590
      %v3621 = vadd.f32 %v3553, %v3591
      %v3622 = vadd.f32 %v3554, %v3592
      %v3623 = vadd.f32 %v3555, %v3593
      %v3624 = vadd.f32 %v3556, %v3594
      %v3625 = vadd.f32 %v3557, %v3595
      %v3626 = vadd.f32 %v3558, %v3596
      %v3627 = vadd.f32 %v3559, %v3595
      %v3628 = vadd.f32 %v3560, %v3596
      %v3629 = vlaneseq
      %v3630 = vshrl.u32 %v3629, 7
      %v3631 = vsub.s32 5, %v3630
      %v3632 = vrot.slane %v1562, %v3631
      %v3633 = vmul.f32 %v3632, %v3215
      %v3634 = vmul.f32 %v3632, %v3216
      %v3635 = vmul.f32 %v1431, %v3633
      %v3636 = vmul.f32 %v1435, %v3634
      %v3637 = vmul.f32 %v1441, %v3633
      %v3638 = vmul.f32 %v1445, %v3634
      %v3639 = vmul.f32 %v1451, %v3633
      %v3640 = vmul.f32 %v1455, %v3634
      %v3641 = vmul.f32 %v1461, %v3633
      %v3642 = vmul.f32 %v1465, %v3634
      %v3643 = vmul.f32 %v1471, %v3633
      %v3644 = vmul.f32 %v1475, %v3634
      %v3645 = vmul.f32 %v1481, %v3633
      %v3646 = vmul.f32 %v1485, %v3634
      %v3647 = vmul.f32 %v1491, %v3633
      %v3648 = vmul.f32 %v1495, %v3634
      %v3649 = vmul.f32 %v1501, %v3633
      %v3650 = vmul.f32 %v1505, %v3634
      %v3651 = vmul.f32 %v1511, %v3633
      %v3652 = vmul.f32 %v1515, %v3634
      %v3653 = vmul.f32 %v1521, %v3633
      %v3654 = vmul.f32 %v1525, %v3634
      %v3655 = vmul.f32 %v1531, %v3633
      %v3656 = vmul.f32 %v1535, %v3634
      %v3657 = vmul.f32 %v1541, %v3633
      %v3658 = vmul.f32 %v1545, %v3634
      %v3659 = vmul.f32 %v1551, %v3633
      %v3660 = vmul.f32 %v1555, %v3634
      %v3661 = vmul.f32 %v3633, 0.0
      %v3662 = vmul.f32 %v3634, 0.0
      %v3663 = vadd.f32 %v3597, %v3635
      %v3664 = vadd.f32 %v3598, %v3636
      %v3665 = vadd.f32 %v3599, %v3637
      %v3666 = vadd.f32 %v3600, %v3638
      %v3667 = vadd.f32 %v3601, %v3639
      %v3668 = vadd.f32 %v3602, %v3640
      %v3669 = vadd.f32 %v3603, %v3641
      %v3670 = vadd.f32 %v3604, %v3642
      %v3671 = vadd.f32 %v3605, %v3643
      %v3672 = vadd.f32 %v3606, %v3644
      %v3673 = vadd.f32 %v3607, %v3645
      %v3674 = vadd.f32 %v3608, %v3646
      %v3675 = vadd.f32 %v3609, %v3647
      %v3676 = vadd.f32 %v3610, %v3648
      %v3677 = vadd.f32 %v3611, %v3649
      %v3678 = vadd.f32 %v3612, %v3650
      %v3679 = vadd.f32 %v3613, %v3651
      %v3680 = vadd.f32 %v3614, %v3652
      %v3681 = vadd.f32 %v3615, %v3653
      %v3682 = vadd.f32 %v3616, %v3654
      %v3683 = vadd.f32 %v3617, %v3655
      %v3684 = vadd.f32 %v3618, %v3656
      %v3685 = vadd.f32 %v3619, %v3657
      %v3686 = vadd.f32 %v3620, %v3658
      %v3687 = vadd.f32 %v3621, %v3659
      %v3688 = vadd.f32 %v3622, %v3660
      %v3689 = vadd.f32 %v3623, %v3661
      %v3690 = vadd.f32 %v3624, %v3662
      %v3691 = vadd.f32 %v3625, %v3661
      %v3692 = vadd.f32 %v3626, %v3662
      %v3693 = vadd.f32 %v3627, %v3661
      %v3694 = vadd.f32 %v3628, %v3662
      %v3695 = vrot.slane %v1401, 1
      %v3696 = vrot.slane %v1405, 1
      %v3697 = vrot.slane %v1411, 1
      %v3698 = vrot.slane %v1415, 1
      %v3699 = vrot.slane %v1421, 1
      %v3700 = vrot.slane %v1425, 1
      %v3701 = vrot.slane %v1431, 1
      %v3702 = vrot.slane %v1435, 1
      %v3703 = vrot.slane %v1441, 1
      %v3704 = vrot.slane %v1445, 1
      %v3705 = vrot.slane %v1451, 1
      %v3706 = vrot.slane %v1455, 1
      %v3707 = vrot.slane %v1461, 1
      %v3708 = vrot.slane %v1465, 1
      %v3709 = vrot.slane %v1471, 1
      %v3710 = vrot.slane %v1475, 1
      %v3711 = vrot.slane %v1481, 1
      %v3712 = vrot.slane %v1485, 1
      %v3713 = vrot.slane %v1491, 1
      %v3714 = vrot.slane %v1495, 1
      %v3715 = vrot.slane %v1501, 1
      %v3716 = vrot.slane %v1505, 1
      %v3717 = vrot.slane %v1511, 1
      %v3718 = vrot.slane %v1515, 1
      %v3719 = vrot.slane %v1521, 1
      %v3720 = vrot.slane %v1525, 1
      %v3721 = vrot.slane %v1531, 1
      %v3722 = vrot.slane %v1535, 1
      %v3723 = vrot.slane %v1541, 1
      %v3724 = vrot.slane %v1545, 1
      %v3725 = vrot.slane %v1551, 1
      %v3726 = vrot.slane %v1555, 1
      %vm3727 = vcmp.lt.s32.totalorder %v1565, 7
      %v3728 = vsel %vm3727, %v3726, 0.0
      %v3729 = vsel %vm3727, %v3725, %v3726
      %v3730 = vsel %vm3727, %v3724, %v3725
      %v3731 = vsel %vm3727, %v3723, %v3724
      %v3732 = vsel %vm3727, %v3722, %v3723
      %v3733 = vsel %vm3727, %v3721, %v3722
      %v3734 = vsel %vm3727, %v3720, %v3721
      %v3735 = vsel %vm3727, %v3719, %v3720
      %v3736 = vsel %vm3727, %v3718, %v3719
      %v3737 = vsel %vm3727, %v3717, %v3718
      %v3738 = vsel %vm3727, %v3716, %v3717
      %v3739 = vsel %vm3727, %v3715, %v3716
      %v3740 = vsel %vm3727, %v3714, %v3715
      %v3741 = vsel %vm3727, %v3713, %v3714
      %v3742 = vsel %vm3727, %v3712, %v3713
      %v3743 = vsel %vm3727, %v3711, %v3712
      %v3744 = vsel %vm3727, %v3710, %v3711
      %v3745 = vsel %vm3727, %v3709, %v3710
      %v3746 = vsel %vm3727, %v3708, %v3709
      %v3747 = vsel %vm3727, %v3707, %v3708
      %v3748 = vsel %vm3727, %v3706, %v3707
      %v3749 = vsel %vm3727, %v3705, %v3706
      %v3750 = vsel %vm3727, %v3704, %v3705
      %v3751 = vsel %vm3727, %v3703, %v3704
      %v3752 = vsel %vm3727, %v3702, %v3703
      %v3753 = vsel %vm3727, %v3701, %v3702
      %v3754 = vsel %vm3727, %v3700, %v3701
      %v3755 = vsel %vm3727, %v3699, %v3700
      %v3756 = vsel %vm3727, %v3698, %v3699
      %v3757 = vsel %vm3727, %v3697, %v3698
      %v3758 = vsel %vm3727, %v3696, %v3697
      %v3759 = vsel %vm3727, %v3695, %v3696
      %v3760 = vsel %vm3727, 0.0, %v3695
      %v3761 = vadd.s32 %v1565, 1
      %v3762 = vadd.s32 %v1566, 1
      %vm3763 = vcmp.ge.s32.totalorder %v3761, 0
      %vm3764 = vcmp.ge.s32.totalorder %v3762, 0
      %vm3765 = vcmp.lt.s32.totalorder %v3761, 16
      %vm3766 = vcmp.lt.s32.totalorder %v3762, 16
      %vm3767 = vmand %vm3763, %vm3765
      %vm3768 = vmand %vm3764, %vm3766
      %v3769 = vsel %vm3767, 1, 0
      %v3770 = vsel %vm3768, 1, 0
      %v3771 = vcvt.s32.f32 %v3769
      %v3772 = vcvt.s32.f32 %v3770
      %v3773 = vlaneseq
      %v3774 = vshrl.u32 %v3773, 7
      %v3775 = vsub.s32 4, %v3774
      %v3776 = vrot.slane %v1557, %v3775
      %v3777 = vmul.f32 %v3776, %v3771
      %v3778 = vmul.f32 %v3776, %v3772
      %v3779 = vmul.f32 0.0, %v3777
      %v3780 = vmul.f32 0.0, %v3778
      %v3781 = vmul.f32 %v3760, %v3778
      %v3782 = vmul.f32 %v3759, %v3777
      %v3783 = vmul.f32 %v3758, %v3778
      %v3784 = vmul.f32 %v3757, %v3777
      %v3785 = vmul.f32 %v3756, %v3778
      %v3786 = vmul.f32 %v3755, %v3777
      %v3787 = vmul.f32 %v3754, %v3778
      %v3788 = vmul.f32 %v3753, %v3777
      %v3789 = vmul.f32 %v3752, %v3778
      %v3790 = vmul.f32 %v3751, %v3777
      %v3791 = vmul.f32 %v3750, %v3778
      %v3792 = vmul.f32 %v3749, %v3777
      %v3793 = vmul.f32 %v3748, %v3778
      %v3794 = vmul.f32 %v3747, %v3777
      %v3795 = vmul.f32 %v3746, %v3778
      %v3796 = vmul.f32 %v3745, %v3777
      %v3797 = vmul.f32 %v3744, %v3778
      %v3798 = vmul.f32 %v3743, %v3777
      %v3799 = vmul.f32 %v3742, %v3778
      %v3800 = vmul.f32 %v3741, %v3777
      %v3801 = vmul.f32 %v3740, %v3778
      %v3802 = vmul.f32 %v3739, %v3777
      %v3803 = vmul.f32 %v3738, %v3778
      %v3804 = vmul.f32 %v3737, %v3777
      %v3805 = vmul.f32 %v3736, %v3778
      %v3806 = vmul.f32 %v3735, %v3777
      %v3807 = vmul.f32 %v3734, %v3778
      %v3808 = vadd.f32 %v3663, %v3779
      %v3809 = vadd.f32 %v3664, %v3780
      %v3810 = vadd.f32 %v3665, %v3779
      %v3811 = vadd.f32 %v3666, %v3780
      %v3812 = vadd.f32 %v3667, %v3779
      %v3813 = vadd.f32 %v3668, %v3781
      %v3814 = vadd.f32 %v3669, %v3782
      %v3815 = vadd.f32 %v3670, %v3783
      %v3816 = vadd.f32 %v3671, %v3784
      %v3817 = vadd.f32 %v3672, %v3785
      %v3818 = vadd.f32 %v3673, %v3786
      %v3819 = vadd.f32 %v3674, %v3787
      %v3820 = vadd.f32 %v3675, %v3788
      %v3821 = vadd.f32 %v3676, %v3789
      %v3822 = vadd.f32 %v3677, %v3790
      %v3823 = vadd.f32 %v3678, %v3791
      %v3824 = vadd.f32 %v3679, %v3792
      %v3825 = vadd.f32 %v3680, %v3793
      %v3826 = vadd.f32 %v3681, %v3794
      %v3827 = vadd.f32 %v3682, %v3795
      %v3828 = vadd.f32 %v3683, %v3796
      %v3829 = vadd.f32 %v3684, %v3797
      %v3830 = vadd.f32 %v3685, %v3798
      %v3831 = vadd.f32 %v3686, %v3799
      %v3832 = vadd.f32 %v3687, %v3800
      %v3833 = vadd.f32 %v3688, %v3801
      %v3834 = vadd.f32 %v3689, %v3802
      %v3835 = vadd.f32 %v3690, %v3803
      %v3836 = vadd.f32 %v3691, %v3804
      %v3837 = vadd.f32 %v3692, %v3805
      %v3838 = vadd.f32 %v3693, %v3806
      %v3839 = vadd.f32 %v3694, %v3807
      %v3840 = vlaneseq
      %v3841 = vshrl.u32 %v3840, 7
      %v3842 = vsub.s32 3, %v3841
      %v3843 = vrot.slane %v1558, %v3842
      %v3844 = vmul.f32 %v3843, %v3771
      %v3845 = vmul.f32 %v3843, %v3772
      %v3846 = vmul.f32 0.0, %v3844
      %v3847 = vmul.f32 0.0, %v3845
      %v3848 = vmul.f32 %v3760, %v3845
      %v3849 = vmul.f32 %v3759, %v3844
      %v3850 = vmul.f32 %v3758, %v3845
      %v3851 = vmul.f32 %v3757, %v3844
      %v3852 = vmul.f32 %v3756, %v3845
      %v3853 = vmul.f32 %v3755, %v3844
      %v3854 = vmul.f32 %v3754, %v3845
      %v3855 = vmul.f32 %v3753, %v3844
      %v3856 = vmul.f32 %v3752, %v3845
      %v3857 = vmul.f32 %v3751, %v3844
      %v3858 = vmul.f32 %v3750, %v3845
      %v3859 = vmul.f32 %v3749, %v3844
      %v3860 = vmul.f32 %v3748, %v3845
      %v3861 = vmul.f32 %v3747, %v3844
      %v3862 = vmul.f32 %v3746, %v3845
      %v3863 = vmul.f32 %v3745, %v3844
      %v3864 = vmul.f32 %v3744, %v3845
      %v3865 = vmul.f32 %v3743, %v3844
      %v3866 = vmul.f32 %v3742, %v3845
      %v3867 = vmul.f32 %v3741, %v3844
      %v3868 = vmul.f32 %v3740, %v3845
      %v3869 = vmul.f32 %v3739, %v3844
      %v3870 = vmul.f32 %v3738, %v3845
      %v3871 = vmul.f32 %v3737, %v3844
      %v3872 = vmul.f32 %v3736, %v3845
      %v3873 = vmul.f32 %v3735, %v3844
      %v3874 = vmul.f32 %v3734, %v3845
      %v3875 = vmul.f32 %v3733, %v3844
      %v3876 = vmul.f32 %v3732, %v3845
      %v3877 = vadd.f32 %v3808, %v3846
      %v3878 = vadd.f32 %v3809, %v3847
      %v3879 = vadd.f32 %v3810, %v3846
      %v3880 = vadd.f32 %v3811, %v3848
      %v3881 = vadd.f32 %v3812, %v3849
      %v3882 = vadd.f32 %v3813, %v3850
      %v3883 = vadd.f32 %v3814, %v3851
      %v3884 = vadd.f32 %v3815, %v3852
      %v3885 = vadd.f32 %v3816, %v3853
      %v3886 = vadd.f32 %v3817, %v3854
      %v3887 = vadd.f32 %v3818, %v3855
      %v3888 = vadd.f32 %v3819, %v3856
      %v3889 = vadd.f32 %v3820, %v3857
      %v3890 = vadd.f32 %v3821, %v3858
      %v3891 = vadd.f32 %v3822, %v3859
      %v3892 = vadd.f32 %v3823, %v3860
      %v3893 = vadd.f32 %v3824, %v3861
      %v3894 = vadd.f32 %v3825, %v3862
      %v3895 = vadd.f32 %v3826, %v3863
      %v3896 = vadd.f32 %v3827, %v3864
      %v3897 = vadd.f32 %v3828, %v3865
      %v3898 = vadd.f32 %v3829, %v3866
      %v3899 = vadd.f32 %v3830, %v3867
      %v3900 = vadd.f32 %v3831, %v3868
      %v3901 = vadd.f32 %v3832, %v3869
      %v3902 = vadd.f32 %v3833, %v3870
      %v3903 = vadd.f32 %v3834, %v3871
      %v3904 = vadd.f32 %v3835, %v3872
      %v3905 = vadd.f32 %v3836, %v3873
      %v3906 = vadd.f32 %v3837, %v3874
      %v3907 = vadd.f32 %v3838, %v3875
      %v3908 = vadd.f32 %v3839, %v3876
      %v3909 = vlaneseq
      %v3910 = vshrl.u32 %v3909, 7
      %v3911 = vsub.s32 2, %v3910
      %v3912 = vrot.slane %v1559, %v3911
      %v3913 = vmul.f32 %v3912, %v3771
      %v3914 = vmul.f32 %v3912, %v3772
      %v3915 = vmul.f32 0.0, %v3913
      %v3916 = vmul.f32 %v3760, %v3914
      %v3917 = vmul.f32 %v3759, %v3913
      %v3918 = vmul.f32 %v3758, %v3914
      %v3919 = vmul.f32 %v3757, %v3913
      %v3920 = vmul.f32 %v3756, %v3914
      %v3921 = vmul.f32 %v3755, %v3913
      %v3922 = vmul.f32 %v3754, %v3914
      %v3923 = vmul.f32 %v3753, %v3913
      %v3924 = vmul.f32 %v3752, %v3914
      %v3925 = vmul.f32 %v3751, %v3913
      %v3926 = vmul.f32 %v3750, %v3914
      %v3927 = vmul.f32 %v3749, %v3913
      %v3928 = vmul.f32 %v3748, %v3914
      %v3929 = vmul.f32 %v3747, %v3913
      %v3930 = vmul.f32 %v3746, %v3914
      %v3931 = vmul.f32 %v3745, %v3913
      %v3932 = vmul.f32 %v3744, %v3914
      %v3933 = vmul.f32 %v3743, %v3913
      %v3934 = vmul.f32 %v3742, %v3914
      %v3935 = vmul.f32 %v3741, %v3913
      %v3936 = vmul.f32 %v3740, %v3914
      %v3937 = vmul.f32 %v3739, %v3913
      %v3938 = vmul.f32 %v3738, %v3914
      %v3939 = vmul.f32 %v3737, %v3913
      %v3940 = vmul.f32 %v3736, %v3914
      %v3941 = vmul.f32 %v3735, %v3913
      %v3942 = vmul.f32 %v3734, %v3914
      %v3943 = vmul.f32 %v3733, %v3913
      %v3944 = vmul.f32 %v3732, %v3914
      %v3945 = vmul.f32 %v3731, %v3913
      %v3946 = vmul.f32 %v3730, %v3914
      %v3947 = vadd.f32 %v3877, %v3915
      %v3948 = vadd.f32 %v3878, %v3916
      %v3949 = vadd.f32 %v3879, %v3917
      %v3950 = vadd.f32 %v3880, %v3918
      %v3951 = vadd.f32 %v3881, %v3919
      %v3952 = vadd.f32 %v3882, %v3920
      %v3953 = vadd.f32 %v3883, %v3921
      %v3954 = vadd.f32 %v3884, %v3922
      %v3955 = vadd.f32 %v3885, %v3923
      %v3956 = vadd.f32 %v3886, %v3924
      %v3957 = vadd.f32 %v3887, %v3925
      %v3958 = vadd.f32 %v3888, %v3926
      %v3959 = vadd.f32 %v3889, %v3927
      %v3960 = vadd.f32 %v3890, %v3928
      %v3961 = vadd.f32 %v3891, %v3929
      %v3962 = vadd.f32 %v3892, %v3930
      %v3963 = vadd.f32 %v3893, %v3931
      %v3964 = vadd.f32 %v3894, %v3932
      %v3965 = vadd.f32 %v3895, %v3933
      %v3966 = vadd.f32 %v3896, %v3934
      %v3967 = vadd.f32 %v3897, %v3935
      %v3968 = vadd.f32 %v3898, %v3936
      %v3969 = vadd.f32 %v3899, %v3937
      %v3970 = vadd.f32 %v3900, %v3938
      %v3971 = vadd.f32 %v3901, %v3939
      %v3972 = vadd.f32 %v3902, %v3940
      %v3973 = vadd.f32 %v3903, %v3941
      %v3974 = vadd.f32 %v3904, %v3942
      %v3975 = vadd.f32 %v3905, %v3943
      %v3976 = vadd.f32 %v3906, %v3944
      %v3977 = vadd.f32 %v3907, %v3945
      %v3978 = vadd.f32 %v3908, %v3946
      %v3979 = vlaneseq
      %v3980 = vshrl.u32 %v3979, 7
      %v3981 = vsub.s32 1, %v3980
      %v3982 = vrot.slane %v1560, %v3981
      %v3983 = vmul.f32 %v3982, %v3771
      %v3984 = vmul.f32 %v3982, %v3772
      %v3985 = vmul.f32 %v3759, %v3983
      %v3986 = vmul.f32 %v3758, %v3984
      %v3987 = vmul.f32 %v3757, %v3983
      %v3988 = vmul.f32 %v3756, %v3984
      %v3989 = vmul.f32 %v3755, %v3983
      %v3990 = vmul.f32 %v3754, %v3984
      %v3991 = vmul.f32 %v3753, %v3983
      %v3992 = vmul.f32 %v3752, %v3984
      %v3993 = vmul.f32 %v3751, %v3983
      %v3994 = vmul.f32 %v3750, %v3984
      %v3995 = vmul.f32 %v3749, %v3983
      %v3996 = vmul.f32 %v3748, %v3984
      %v3997 = vmul.f32 %v3747, %v3983
      %v3998 = vmul.f32 %v3746, %v3984
      %v3999 = vmul.f32 %v3745, %v3983
      %v4000 = vmul.f32 %v3744, %v3984
      %v4001 = vmul.f32 %v3743, %v3983
      %v4002 = vmul.f32 %v3742, %v3984
      %v4003 = vmul.f32 %v3741, %v3983
      %v4004 = vmul.f32 %v3740, %v3984
      %v4005 = vmul.f32 %v3739, %v3983
      %v4006 = vmul.f32 %v3738, %v3984
      %v4007 = vmul.f32 %v3737, %v3983
      %v4008 = vmul.f32 %v3736, %v3984
      %v4009 = vmul.f32 %v3735, %v3983
      %v4010 = vmul.f32 %v3734, %v3984
      %v4011 = vmul.f32 %v3733, %v3983
      %v4012 = vmul.f32 %v3732, %v3984
      %v4013 = vmul.f32 %v3731, %v3983
      %v4014 = vmul.f32 %v3730, %v3984
      %v4015 = vmul.f32 %v3729, %v3983
      %v4016 = vmul.f32 %v3728, %v3984
      %v4017 = vadd.f32 %v3947, %v3985
      %v4018 = vadd.f32 %v3948, %v3986
      %v4019 = vadd.f32 %v3949, %v3987
      %v4020 = vadd.f32 %v3950, %v3988
      %v4021 = vadd.f32 %v3951, %v3989
      %v4022 = vadd.f32 %v3952, %v3990
      %v4023 = vadd.f32 %v3953, %v3991
      %v4024 = vadd.f32 %v3954, %v3992
      %v4025 = vadd.f32 %v3955, %v3993
      %v4026 = vadd.f32 %v3956, %v3994
      %v4027 = vadd.f32 %v3957, %v3995
      %v4028 = vadd.f32 %v3958, %v3996
      %v4029 = vadd.f32 %v3959, %v3997
      %v4030 = vadd.f32 %v3960, %v3998
      %v4031 = vadd.f32 %v3961, %v3999
      %v4032 = vadd.f32 %v3962, %v4000
      %v4033 = vadd.f32 %v3963, %v4001
      %v4034 = vadd.f32 %v3964, %v4002
      %v4035 = vadd.f32 %v3965, %v4003
      %v4036 = vadd.f32 %v3966, %v4004
      %v4037 = vadd.f32 %v3967, %v4005
      %v4038 = vadd.f32 %v3968, %v4006
      %v4039 = vadd.f32 %v3969, %v4007
      %v4040 = vadd.f32 %v3970, %v4008
      %v4041 = vadd.f32 %v3971, %v4009
      %v4042 = vadd.f32 %v3972, %v4010
      %v4043 = vadd.f32 %v3973, %v4011
      %v4044 = vadd.f32 %v3974, %v4012
      %v4045 = vadd.f32 %v3975, %v4013
      %v4046 = vadd.f32 %v3976, %v4014
      %v4047 = vadd.f32 %v3977, %v4015
      %v4048 = vadd.f32 %v3978, %v4016
      %v4049 = vlaneseq
      %v4050 = vshrl.u32 %v4049, 7
      %v4051 = vsub.s32 0, %v4050
      %v4052 = vrot.slane %v1561, %v4051
      %v4053 = vmul.f32 %v4052, %v3771
      %v4054 = vmul.f32 %v4052, %v3772
      %v4055 = vmul.f32 %v3757, %v4053
      %v4056 = vmul.f32 %v3756, %v4054
      %v4057 = vmul.f32 %v3755, %v4053
      %v4058 = vmul.f32 %v3754, %v4054
      %v4059 = vmul.f32 %v3753, %v4053
      %v4060 = vmul.f32 %v3752, %v4054
      %v4061 = vmul.f32 %v3751, %v4053
      %v4062 = vmul.f32 %v3750, %v4054
      %v4063 = vmul.f32 %v3749, %v4053
      %v4064 = vmul.f32 %v3748, %v4054
      %v4065 = vmul.f32 %v3747, %v4053
      %v4066 = vmul.f32 %v3746, %v4054
      %v4067 = vmul.f32 %v3745, %v4053
      %v4068 = vmul.f32 %v3744, %v4054
      %v4069 = vmul.f32 %v3743, %v4053
      %v4070 = vmul.f32 %v3742, %v4054
      %v4071 = vmul.f32 %v3741, %v4053
      %v4072 = vmul.f32 %v3740, %v4054
      %v4073 = vmul.f32 %v3739, %v4053
      %v4074 = vmul.f32 %v3738, %v4054
      %v4075 = vmul.f32 %v3737, %v4053
      %v4076 = vmul.f32 %v3736, %v4054
      %v4077 = vmul.f32 %v3735, %v4053
      %v4078 = vmul.f32 %v3734, %v4054
      %v4079 = vmul.f32 %v3733, %v4053
      %v4080 = vmul.f32 %v3732, %v4054
      %v4081 = vmul.f32 %v3731, %v4053
      %v4082 = vmul.f32 %v3730, %v4054
      %v4083 = vmul.f32 %v3729, %v4053
      %v4084 = vmul.f32 %v3728, %v4054
      %v4085 = vmul.f32 0.0, %v4053
      %v4086 = vmul.f32 0.0, %v4054
      %v4087 = vadd.f32 %v4017, %v4055
      %v4088 = vadd.f32 %v4018, %v4056
      %v4089 = vadd.f32 %v4019, %v4057
      %v4090 = vadd.f32 %v4020, %v4058
      %v4091 = vadd.f32 %v4021, %v4059
      %v4092 = vadd.f32 %v4022, %v4060
      %v4093 = vadd.f32 %v4023, %v4061
      %v4094 = vadd.f32 %v4024, %v4062
      %v4095 = vadd.f32 %v4025, %v4063
      %v4096 = vadd.f32 %v4026, %v4064
      %v4097 = vadd.f32 %v4027, %v4065
      %v4098 = vadd.f32 %v4028, %v4066
      %v4099 = vadd.f32 %v4029, %v4067
      %v4100 = vadd.f32 %v4030, %v4068
      %v4101 = vadd.f32 %v4031, %v4069
      %v4102 = vadd.f32 %v4032, %v4070
      %v4103 = vadd.f32 %v4033, %v4071
      %v4104 = vadd.f32 %v4034, %v4072
      %v4105 = vadd.f32 %v4035, %v4073
      %v4106 = vadd.f32 %v4036, %v4074
      %v4107 = vadd.f32 %v4037, %v4075
      %v4108 = vadd.f32 %v4038, %v4076
      %v4109 = vadd.f32 %v4039, %v4077
      %v4110 = vadd.f32 %v4040, %v4078
      %v4111 = vadd.f32 %v4041, %v4079
      %v4112 = vadd.f32 %v4042, %v4080
      %v4113 = vadd.f32 %v4043, %v4081
      %v4114 = vadd.f32 %v4044, %v4082
      %v4115 = vadd.f32 %v4045, %v4083
      %v4116 = vadd.f32 %v4046, %v4084
      %v4117 = vadd.f32 %v4047, %v4085
      %v4118 = vadd.f32 %v4048, %v4086
      %v4119 = vlaneseq
      %v4120 = vshrl.u32 %v4119, 7
      %v4121 = vsub.s32 7, %v4120
      %v4122 = vrot.slane %v1561, %v4121
      %v4123 = vmul.f32 %v4122, %v3771
      %v4124 = vmul.f32 %v4122, %v3772
      %v4125 = vmul.f32 %v3755, %v4123
      %v4126 = vmul.f32 %v3754, %v4124
      %v4127 = vmul.f32 %v3753, %v4123
      %v4128 = vmul.f32 %v3752, %v4124
      %v4129 = vmul.f32 %v3751, %v4123
      %v4130 = vmul.f32 %v3750, %v4124
      %v4131 = vmul.f32 %v3749, %v4123
      %v4132 = vmul.f32 %v3748, %v4124
      %v4133 = vmul.f32 %v3747, %v4123
      %v4134 = vmul.f32 %v3746, %v4124
      %v4135 = vmul.f32 %v3745, %v4123
      %v4136 = vmul.f32 %v3744, %v4124
      %v4137 = vmul.f32 %v3743, %v4123
      %v4138 = vmul.f32 %v3742, %v4124
      %v4139 = vmul.f32 %v3741, %v4123
      %v4140 = vmul.f32 %v3740, %v4124
      %v4141 = vmul.f32 %v3739, %v4123
      %v4142 = vmul.f32 %v3738, %v4124
      %v4143 = vmul.f32 %v3737, %v4123
      %v4144 = vmul.f32 %v3736, %v4124
      %v4145 = vmul.f32 %v3735, %v4123
      %v4146 = vmul.f32 %v3734, %v4124
      %v4147 = vmul.f32 %v3733, %v4123
      %v4148 = vmul.f32 %v3732, %v4124
      %v4149 = vmul.f32 %v3731, %v4123
      %v4150 = vmul.f32 %v3730, %v4124
      %v4151 = vmul.f32 %v3729, %v4123
      %v4152 = vmul.f32 %v3728, %v4124
      %v4153 = vmul.f32 0.0, %v4123
      %v4154 = vmul.f32 0.0, %v4124
      %v4155 = vadd.f32 %v4087, %v4125
      %v4156 = vadd.f32 %v4088, %v4126
      %v4157 = vadd.f32 %v4089, %v4127
      %v4158 = vadd.f32 %v4090, %v4128
      %v4159 = vadd.f32 %v4091, %v4129
      %v4160 = vadd.f32 %v4092, %v4130
      %v4161 = vadd.f32 %v4093, %v4131
      %v4162 = vadd.f32 %v4094, %v4132
      %v4163 = vadd.f32 %v4095, %v4133
      %v4164 = vadd.f32 %v4096, %v4134
      %v4165 = vadd.f32 %v4097, %v4135
      %v4166 = vadd.f32 %v4098, %v4136
      %v4167 = vadd.f32 %v4099, %v4137
      %v4168 = vadd.f32 %v4100, %v4138
      %v4169 = vadd.f32 %v4101, %v4139
      %v4170 = vadd.f32 %v4102, %v4140
      %v4171 = vadd.f32 %v4103, %v4141
      %v4172 = vadd.f32 %v4104, %v4142
      %v4173 = vadd.f32 %v4105, %v4143
      %v4174 = vadd.f32 %v4106, %v4144
      %v4175 = vadd.f32 %v4107, %v4145
      %v4176 = vadd.f32 %v4108, %v4146
      %v4177 = vadd.f32 %v4109, %v4147
      %v4178 = vadd.f32 %v4110, %v4148
      %v4179 = vadd.f32 %v4111, %v4149
      %v4180 = vadd.f32 %v4112, %v4150
      %v4181 = vadd.f32 %v4113, %v4151
      %v4182 = vadd.f32 %v4114, %v4152
      %v4183 = vadd.f32 %v4115, %v4153
      %v4184 = vadd.f32 %v4116, %v4154
      %v4185 = vadd.f32 %v4117, %v4153
      %v4186 = vadd.f32 %v4118, %v4154
      %v4187 = vlaneseq
      %v4188 = vshrl.u32 %v4187, 7
      %v4189 = vsub.s32 6, %v4188
      %v4190 = vrot.slane %v1562, %v4189
      %v4191 = vmul.f32 %v4190, %v3771
      %v4192 = vmul.f32 %v4190, %v3772
      %v4193 = vmul.f32 %v3753, %v4191
      %v4194 = vmul.f32 %v3752, %v4192
      %v4195 = vmul.f32 %v3751, %v4191
      %v4196 = vmul.f32 %v3750, %v4192
      %v4197 = vmul.f32 %v3749, %v4191
      %v4198 = vmul.f32 %v3748, %v4192
      %v4199 = vmul.f32 %v3747, %v4191
      %v4200 = vmul.f32 %v3746, %v4192
      %v4201 = vmul.f32 %v3745, %v4191
      %v4202 = vmul.f32 %v3744, %v4192
      %v4203 = vmul.f32 %v3743, %v4191
      %v4204 = vmul.f32 %v3742, %v4192
      %v4205 = vmul.f32 %v3741, %v4191
      %v4206 = vmul.f32 %v3740, %v4192
      %v4207 = vmul.f32 %v3739, %v4191
      %v4208 = vmul.f32 %v3738, %v4192
      %v4209 = vmul.f32 %v3737, %v4191
      %v4210 = vmul.f32 %v3736, %v4192
      %v4211 = vmul.f32 %v3735, %v4191
      %v4212 = vmul.f32 %v3734, %v4192
      %v4213 = vmul.f32 %v3733, %v4191
      %v4214 = vmul.f32 %v3732, %v4192
      %v4215 = vmul.f32 %v3731, %v4191
      %v4216 = vmul.f32 %v3730, %v4192
      %v4217 = vmul.f32 %v3729, %v4191
      %v4218 = vmul.f32 %v3728, %v4192
      %v4219 = vmul.f32 0.0, %v4191
      %v4220 = vmul.f32 0.0, %v4192
      %v4221 = vadd.f32 %v4155, %v4193
      %v4222 = vadd.f32 %v4156, %v4194
      %v4223 = vadd.f32 %v4157, %v4195
      %v4224 = vadd.f32 %v4158, %v4196
      %v4225 = vadd.f32 %v4159, %v4197
      %v4226 = vadd.f32 %v4160, %v4198
      %v4227 = vadd.f32 %v4161, %v4199
      %v4228 = vadd.f32 %v4162, %v4200
      %v4229 = vadd.f32 %v4163, %v4201
      %v4230 = vadd.f32 %v4164, %v4202
      %v4231 = vadd.f32 %v4165, %v4203
      %v4232 = vadd.f32 %v4166, %v4204
      %v4233 = vadd.f32 %v4167, %v4205
      %v4234 = vadd.f32 %v4168, %v4206
      %v4235 = vadd.f32 %v4169, %v4207
      %v4236 = vadd.f32 %v4170, %v4208
      %v4237 = vadd.f32 %v4171, %v4209
      %v4238 = vadd.f32 %v4172, %v4210
      %v4239 = vadd.f32 %v4173, %v4211
      %v4240 = vadd.f32 %v4174, %v4212
      %v4241 = vadd.f32 %v4175, %v4213
      %v4242 = vadd.f32 %v4176, %v4214
      %v4243 = vadd.f32 %v4177, %v4215
      %v4244 = vadd.f32 %v4178, %v4216
      %v4245 = vadd.f32 %v4179, %v4217
      %v4246 = vadd.f32 %v4180, %v4218
      %v4247 = vadd.f32 %v4181, %v4219
      %v4248 = vadd.f32 %v4182, %v4220
      %v4249 = vadd.f32 %v4183, %v4219
      %v4250 = vadd.f32 %v4184, %v4220
      %v4251 = vadd.f32 %v4185, %v4219
      %v4252 = vadd.f32 %v4186, %v4220
      %v4253 = vrot.slane %v1401, 2
      %v4254 = vrot.slane %v1405, 2
      %v4255 = vrot.slane %v1411, 2
      %v4256 = vrot.slane %v1415, 2
      %v4257 = vrot.slane %v1421, 2
      %v4258 = vrot.slane %v1425, 2
      %v4259 = vrot.slane %v1431, 2
      %v4260 = vrot.slane %v1435, 2
      %v4261 = vrot.slane %v1441, 2
      %v4262 = vrot.slane %v1445, 2
      %v4263 = vrot.slane %v1451, 2
      %v4264 = vrot.slane %v1455, 2
      %v4265 = vrot.slane %v1461, 2
      %v4266 = vrot.slane %v1465, 2
      %v4267 = vrot.slane %v1471, 2
      %v4268 = vrot.slane %v1475, 2
      %v4269 = vrot.slane %v1481, 2
      %v4270 = vrot.slane %v1485, 2
      %v4271 = vrot.slane %v1491, 2
      %v4272 = vrot.slane %v1495, 2
      %v4273 = vrot.slane %v1501, 2
      %v4274 = vrot.slane %v1505, 2
      %v4275 = vrot.slane %v1511, 2
      %v4276 = vrot.slane %v1515, 2
      %v4277 = vrot.slane %v1521, 2
      %v4278 = vrot.slane %v1525, 2
      %v4279 = vrot.slane %v1531, 2
      %v4280 = vrot.slane %v1535, 2
      %v4281 = vrot.slane %v1541, 2
      %v4282 = vrot.slane %v1545, 2
      %v4283 = vrot.slane %v1551, 2
      %v4284 = vrot.slane %v1555, 2
      %vm4285 = vcmp.lt.s32.totalorder %v1565, 6
      %v4286 = vsel %vm4285, %v4284, 0.0
      %v4287 = vsel %vm4285, %v4283, %v4284
      %v4288 = vsel %vm4285, %v4282, %v4283
      %v4289 = vsel %vm4285, %v4281, %v4282
      %v4290 = vsel %vm4285, %v4280, %v4281
      %v4291 = vsel %vm4285, %v4279, %v4280
      %v4292 = vsel %vm4285, %v4278, %v4279
      %v4293 = vsel %vm4285, %v4277, %v4278
      %v4294 = vsel %vm4285, %v4276, %v4277
      %v4295 = vsel %vm4285, %v4275, %v4276
      %v4296 = vsel %vm4285, %v4274, %v4275
      %v4297 = vsel %vm4285, %v4273, %v4274
      %v4298 = vsel %vm4285, %v4272, %v4273
      %v4299 = vsel %vm4285, %v4271, %v4272
      %v4300 = vsel %vm4285, %v4270, %v4271
      %v4301 = vsel %vm4285, %v4269, %v4270
      %v4302 = vsel %vm4285, %v4268, %v4269
      %v4303 = vsel %vm4285, %v4267, %v4268
      %v4304 = vsel %vm4285, %v4266, %v4267
      %v4305 = vsel %vm4285, %v4265, %v4266
      %v4306 = vsel %vm4285, %v4264, %v4265
      %v4307 = vsel %vm4285, %v4263, %v4264
      %v4308 = vsel %vm4285, %v4262, %v4263
      %v4309 = vsel %vm4285, %v4261, %v4262
      %v4310 = vsel %vm4285, %v4260, %v4261
      %v4311 = vsel %vm4285, %v4259, %v4260
      %v4312 = vsel %vm4285, %v4258, %v4259
      %v4313 = vsel %vm4285, %v4257, %v4258
      %v4314 = vsel %vm4285, %v4256, %v4257
      %v4315 = vsel %vm4285, %v4255, %v4256
      %v4316 = vsel %vm4285, %v4254, %v4255
      %v4317 = vsel %vm4285, %v4253, %v4254
      %v4318 = vsel %vm4285, 0.0, %v4253
      %v4319 = vadd.s32 %v1565, 2
      %v4320 = vadd.s32 %v1566, 2
      %vm4321 = vcmp.ge.s32.totalorder %v4319, 0
      %vm4322 = vcmp.ge.s32.totalorder %v4320, 0
      %vm4323 = vcmp.lt.s32.totalorder %v4319, 16
      %vm4324 = vcmp.lt.s32.totalorder %v4320, 16
      %vm4325 = vmand %vm4321, %vm4323
      %vm4326 = vmand %vm4322, %vm4324
      %v4327 = vsel %vm4325, 1, 0
      %v4328 = vsel %vm4326, 1, 0
      %v4329 = vcvt.s32.f32 %v4327
      %v4330 = vcvt.s32.f32 %v4328
      %v4331 = vlaneseq
      %v4332 = vshrl.u32 %v4331, 7
      %v4333 = vsub.s32 5, %v4332
      %v4334 = vrot.slane %v1557, %v4333
      %v4335 = vmul.f32 %v4334, %v4329
      %v4336 = vmul.f32 %v4334, %v4330
      %v4337 = vmul.f32 0.0, %v4335
      %v4338 = vmul.f32 0.0, %v4336
      %v4339 = vmul.f32 %v4318, %v4336
      %v4340 = vmul.f32 %v4317, %v4335
      %v4341 = vmul.f32 %v4316, %v4336
      %v4342 = vmul.f32 %v4315, %v4335
      %v4343 = vmul.f32 %v4314, %v4336
      %v4344 = vmul.f32 %v4313, %v4335
      %v4345 = vmul.f32 %v4312, %v4336
      %v4346 = vmul.f32 %v4311, %v4335
      %v4347 = vmul.f32 %v4310, %v4336
      %v4348 = vmul.f32 %v4309, %v4335
      %v4349 = vmul.f32 %v4308, %v4336
      %v4350 = vmul.f32 %v4307, %v4335
      %v4351 = vmul.f32 %v4306, %v4336
      %v4352 = vmul.f32 %v4305, %v4335
      %v4353 = vmul.f32 %v4304, %v4336
      %v4354 = vmul.f32 %v4303, %v4335
      %v4355 = vmul.f32 %v4302, %v4336
      %v4356 = vmul.f32 %v4301, %v4335
      %v4357 = vmul.f32 %v4300, %v4336
      %v4358 = vmul.f32 %v4299, %v4335
      %v4359 = vmul.f32 %v4298, %v4336
      %v4360 = vmul.f32 %v4297, %v4335
      %v4361 = vmul.f32 %v4296, %v4336
      %v4362 = vmul.f32 %v4295, %v4335
      %v4363 = vmul.f32 %v4294, %v4336
      %v4364 = vmul.f32 %v4293, %v4335
      %v4365 = vmul.f32 %v4292, %v4336
      %v4366 = vadd.f32 %v4221, %v4337
      %v4367 = vadd.f32 %v4222, %v4338
      %v4368 = vadd.f32 %v4223, %v4337
      %v4369 = vadd.f32 %v4224, %v4338
      %v4370 = vadd.f32 %v4225, %v4337
      %v4371 = vadd.f32 %v4226, %v4339
      %v4372 = vadd.f32 %v4227, %v4340
      %v4373 = vadd.f32 %v4228, %v4341
      %v4374 = vadd.f32 %v4229, %v4342
      %v4375 = vadd.f32 %v4230, %v4343
      %v4376 = vadd.f32 %v4231, %v4344
      %v4377 = vadd.f32 %v4232, %v4345
      %v4378 = vadd.f32 %v4233, %v4346
      %v4379 = vadd.f32 %v4234, %v4347
      %v4380 = vadd.f32 %v4235, %v4348
      %v4381 = vadd.f32 %v4236, %v4349
      %v4382 = vadd.f32 %v4237, %v4350
      %v4383 = vadd.f32 %v4238, %v4351
      %v4384 = vadd.f32 %v4239, %v4352
      %v4385 = vadd.f32 %v4240, %v4353
      %v4386 = vadd.f32 %v4241, %v4354
      %v4387 = vadd.f32 %v4242, %v4355
      %v4388 = vadd.f32 %v4243, %v4356
      %v4389 = vadd.f32 %v4244, %v4357
      %v4390 = vadd.f32 %v4245, %v4358
      %v4391 = vadd.f32 %v4246, %v4359
      %v4392 = vadd.f32 %v4247, %v4360
      %v4393 = vadd.f32 %v4248, %v4361
      %v4394 = vadd.f32 %v4249, %v4362
      %v4395 = vadd.f32 %v4250, %v4363
      %v4396 = vadd.f32 %v4251, %v4364
      %v4397 = vadd.f32 %v4252, %v4365
      %v4398 = vlaneseq
      %v4399 = vshrl.u32 %v4398, 7
      %v4400 = vsub.s32 4, %v4399
      %v4401 = vrot.slane %v1558, %v4400
      %v4402 = vmul.f32 %v4401, %v4329
      %v4403 = vmul.f32 %v4401, %v4330
      %v4404 = vmul.f32 0.0, %v4402
      %v4405 = vmul.f32 0.0, %v4403
      %v4406 = vmul.f32 %v4318, %v4403
      %v4407 = vmul.f32 %v4317, %v4402
      %v4408 = vmul.f32 %v4316, %v4403
      %v4409 = vmul.f32 %v4315, %v4402
      %v4410 = vmul.f32 %v4314, %v4403
      %v4411 = vmul.f32 %v4313, %v4402
      %v4412 = vmul.f32 %v4312, %v4403
      %v4413 = vmul.f32 %v4311, %v4402
      %v4414 = vmul.f32 %v4310, %v4403
      %v4415 = vmul.f32 %v4309, %v4402
      %v4416 = vmul.f32 %v4308, %v4403
      %v4417 = vmul.f32 %v4307, %v4402
      %v4418 = vmul.f32 %v4306, %v4403
      %v4419 = vmul.f32 %v4305, %v4402
      %v4420 = vmul.f32 %v4304, %v4403
      %v4421 = vmul.f32 %v4303, %v4402
      %v4422 = vmul.f32 %v4302, %v4403
      %v4423 = vmul.f32 %v4301, %v4402
      %v4424 = vmul.f32 %v4300, %v4403
      %v4425 = vmul.f32 %v4299, %v4402
      %v4426 = vmul.f32 %v4298, %v4403
      %v4427 = vmul.f32 %v4297, %v4402
      %v4428 = vmul.f32 %v4296, %v4403
      %v4429 = vmul.f32 %v4295, %v4402
      %v4430 = vmul.f32 %v4294, %v4403
      %v4431 = vmul.f32 %v4293, %v4402
      %v4432 = vmul.f32 %v4292, %v4403
      %v4433 = vmul.f32 %v4291, %v4402
      %v4434 = vmul.f32 %v4290, %v4403
      %v4435 = vadd.f32 %v4366, %v4404
      %v4436 = vadd.f32 %v4367, %v4405
      %v4437 = vadd.f32 %v4368, %v4404
      %v4438 = vadd.f32 %v4369, %v4406
      %v4439 = vadd.f32 %v4370, %v4407
      %v4440 = vadd.f32 %v4371, %v4408
      %v4441 = vadd.f32 %v4372, %v4409
      %v4442 = vadd.f32 %v4373, %v4410
      %v4443 = vadd.f32 %v4374, %v4411
      %v4444 = vadd.f32 %v4375, %v4412
      %v4445 = vadd.f32 %v4376, %v4413
      %v4446 = vadd.f32 %v4377, %v4414
      %v4447 = vadd.f32 %v4378, %v4415
      %v4448 = vadd.f32 %v4379, %v4416
      %v4449 = vadd.f32 %v4380, %v4417
      %v4450 = vadd.f32 %v4381, %v4418
      %v4451 = vadd.f32 %v4382, %v4419
      %v4452 = vadd.f32 %v4383, %v4420
      %v4453 = vadd.f32 %v4384, %v4421
      %v4454 = vadd.f32 %v4385, %v4422
      %v4455 = vadd.f32 %v4386, %v4423
      %v4456 = vadd.f32 %v4387, %v4424
      %v4457 = vadd.f32 %v4388, %v4425
      %v4458 = vadd.f32 %v4389, %v4426
      %v4459 = vadd.f32 %v4390, %v4427
      %v4460 = vadd.f32 %v4391, %v4428
      %v4461 = vadd.f32 %v4392, %v4429
      %v4462 = vadd.f32 %v4393, %v4430
      %v4463 = vadd.f32 %v4394, %v4431
      %v4464 = vadd.f32 %v4395, %v4432
      %v4465 = vadd.f32 %v4396, %v4433
      %v4466 = vadd.f32 %v4397, %v4434
      %v4467 = vlaneseq
      %v4468 = vshrl.u32 %v4467, 7
      %v4469 = vsub.s32 3, %v4468
      %v4470 = vrot.slane %v1559, %v4469
      %v4471 = vmul.f32 %v4470, %v4329
      %v4472 = vmul.f32 %v4470, %v4330
      %v4473 = vmul.f32 0.0, %v4471
      %v4474 = vmul.f32 %v4318, %v4472
      %v4475 = vmul.f32 %v4317, %v4471
      %v4476 = vmul.f32 %v4316, %v4472
      %v4477 = vmul.f32 %v4315, %v4471
      %v4478 = vmul.f32 %v4314, %v4472
      %v4479 = vmul.f32 %v4313, %v4471
      %v4480 = vmul.f32 %v4312, %v4472
      %v4481 = vmul.f32 %v4311, %v4471
      %v4482 = vmul.f32 %v4310, %v4472
      %v4483 = vmul.f32 %v4309, %v4471
      %v4484 = vmul.f32 %v4308, %v4472
      %v4485 = vmul.f32 %v4307, %v4471
      %v4486 = vmul.f32 %v4306, %v4472
      %v4487 = vmul.f32 %v4305, %v4471
      %v4488 = vmul.f32 %v4304, %v4472
      %v4489 = vmul.f32 %v4303, %v4471
      %v4490 = vmul.f32 %v4302, %v4472
      %v4491 = vmul.f32 %v4301, %v4471
      %v4492 = vmul.f32 %v4300, %v4472
      %v4493 = vmul.f32 %v4299, %v4471
      %v4494 = vmul.f32 %v4298, %v4472
      %v4495 = vmul.f32 %v4297, %v4471
      %v4496 = vmul.f32 %v4296, %v4472
      %v4497 = vmul.f32 %v4295, %v4471
      %v4498 = vmul.f32 %v4294, %v4472
      %v4499 = vmul.f32 %v4293, %v4471
      %v4500 = vmul.f32 %v4292, %v4472
      %v4501 = vmul.f32 %v4291, %v4471
      %v4502 = vmul.f32 %v4290, %v4472
      %v4503 = vmul.f32 %v4289, %v4471
      %v4504 = vmul.f32 %v4288, %v4472
      %v4505 = vadd.f32 %v4435, %v4473
      %v4506 = vadd.f32 %v4436, %v4474
      %v4507 = vadd.f32 %v4437, %v4475
      %v4508 = vadd.f32 %v4438, %v4476
      %v4509 = vadd.f32 %v4439, %v4477
      %v4510 = vadd.f32 %v4440, %v4478
      %v4511 = vadd.f32 %v4441, %v4479
      %v4512 = vadd.f32 %v4442, %v4480
      %v4513 = vadd.f32 %v4443, %v4481
      %v4514 = vadd.f32 %v4444, %v4482
      %v4515 = vadd.f32 %v4445, %v4483
      %v4516 = vadd.f32 %v4446, %v4484
      %v4517 = vadd.f32 %v4447, %v4485
      %v4518 = vadd.f32 %v4448, %v4486
      %v4519 = vadd.f32 %v4449, %v4487
      %v4520 = vadd.f32 %v4450, %v4488
      %v4521 = vadd.f32 %v4451, %v4489
      %v4522 = vadd.f32 %v4452, %v4490
      %v4523 = vadd.f32 %v4453, %v4491
      %v4524 = vadd.f32 %v4454, %v4492
      %v4525 = vadd.f32 %v4455, %v4493
      %v4526 = vadd.f32 %v4456, %v4494
      %v4527 = vadd.f32 %v4457, %v4495
      %v4528 = vadd.f32 %v4458, %v4496
      %v4529 = vadd.f32 %v4459, %v4497
      %v4530 = vadd.f32 %v4460, %v4498
      %v4531 = vadd.f32 %v4461, %v4499
      %v4532 = vadd.f32 %v4462, %v4500
      %v4533 = vadd.f32 %v4463, %v4501
      %v4534 = vadd.f32 %v4464, %v4502
      %v4535 = vadd.f32 %v4465, %v4503
      %v4536 = vadd.f32 %v4466, %v4504
      %v4537 = vlaneseq
      %v4538 = vshrl.u32 %v4537, 7
      %v4539 = vsub.s32 2, %v4538
      %v4540 = vrot.slane %v1560, %v4539
      %v4541 = vmul.f32 %v4540, %v4329
      %v4542 = vmul.f32 %v4540, %v4330
      %v4543 = vmul.f32 %v4317, %v4541
      %v4544 = vmul.f32 %v4316, %v4542
      %v4545 = vmul.f32 %v4315, %v4541
      %v4546 = vmul.f32 %v4314, %v4542
      %v4547 = vmul.f32 %v4313, %v4541
      %v4548 = vmul.f32 %v4312, %v4542
      %v4549 = vmul.f32 %v4311, %v4541
      %v4550 = vmul.f32 %v4310, %v4542
      %v4551 = vmul.f32 %v4309, %v4541
      %v4552 = vmul.f32 %v4308, %v4542
      %v4553 = vmul.f32 %v4307, %v4541
      %v4554 = vmul.f32 %v4306, %v4542
      %v4555 = vmul.f32 %v4305, %v4541
      %v4556 = vmul.f32 %v4304, %v4542
      %v4557 = vmul.f32 %v4303, %v4541
      %v4558 = vmul.f32 %v4302, %v4542
      %v4559 = vmul.f32 %v4301, %v4541
      %v4560 = vmul.f32 %v4300, %v4542
      %v4561 = vmul.f32 %v4299, %v4541
      %v4562 = vmul.f32 %v4298, %v4542
      %v4563 = vmul.f32 %v4297, %v4541
      %v4564 = vmul.f32 %v4296, %v4542
      %v4565 = vmul.f32 %v4295, %v4541
      %v4566 = vmul.f32 %v4294, %v4542
      %v4567 = vmul.f32 %v4293, %v4541
      %v4568 = vmul.f32 %v4292, %v4542
      %v4569 = vmul.f32 %v4291, %v4541
      %v4570 = vmul.f32 %v4290, %v4542
      %v4571 = vmul.f32 %v4289, %v4541
      %v4572 = vmul.f32 %v4288, %v4542
      %v4573 = vmul.f32 %v4287, %v4541
      %v4574 = vmul.f32 %v4286, %v4542
      %v4575 = vadd.f32 %v4505, %v4543
      %v4576 = vadd.f32 %v4506, %v4544
      %v4577 = vadd.f32 %v4507, %v4545
      %v4578 = vadd.f32 %v4508, %v4546
      %v4579 = vadd.f32 %v4509, %v4547
      %v4580 = vadd.f32 %v4510, %v4548
      %v4581 = vadd.f32 %v4511, %v4549
      %v4582 = vadd.f32 %v4512, %v4550
      %v4583 = vadd.f32 %v4513, %v4551
      %v4584 = vadd.f32 %v4514, %v4552
      %v4585 = vadd.f32 %v4515, %v4553
      %v4586 = vadd.f32 %v4516, %v4554
      %v4587 = vadd.f32 %v4517, %v4555
      %v4588 = vadd.f32 %v4518, %v4556
      %v4589 = vadd.f32 %v4519, %v4557
      %v4590 = vadd.f32 %v4520, %v4558
      %v4591 = vadd.f32 %v4521, %v4559
      %v4592 = vadd.f32 %v4522, %v4560
      %v4593 = vadd.f32 %v4523, %v4561
      %v4594 = vadd.f32 %v4524, %v4562
      %v4595 = vadd.f32 %v4525, %v4563
      %v4596 = vadd.f32 %v4526, %v4564
      %v4597 = vadd.f32 %v4527, %v4565
      %v4598 = vadd.f32 %v4528, %v4566
      %v4599 = vadd.f32 %v4529, %v4567
      %v4600 = vadd.f32 %v4530, %v4568
      %v4601 = vadd.f32 %v4531, %v4569
      %v4602 = vadd.f32 %v4532, %v4570
      %v4603 = vadd.f32 %v4533, %v4571
      %v4604 = vadd.f32 %v4534, %v4572
      %v4605 = vadd.f32 %v4535, %v4573
      %v4606 = vadd.f32 %v4536, %v4574
      %v4607 = vlaneseq
      %v4608 = vshrl.u32 %v4607, 7
      %v4609 = vsub.s32 1, %v4608
      %v4610 = vrot.slane %v1561, %v4609
      %v4611 = vmul.f32 %v4610, %v4329
      %v4612 = vmul.f32 %v4610, %v4330
      %v4613 = vmul.f32 %v4315, %v4611
      %v4614 = vmul.f32 %v4314, %v4612
      %v4615 = vmul.f32 %v4313, %v4611
      %v4616 = vmul.f32 %v4312, %v4612
      %v4617 = vmul.f32 %v4311, %v4611
      %v4618 = vmul.f32 %v4310, %v4612
      %v4619 = vmul.f32 %v4309, %v4611
      %v4620 = vmul.f32 %v4308, %v4612
      %v4621 = vmul.f32 %v4307, %v4611
      %v4622 = vmul.f32 %v4306, %v4612
      %v4623 = vmul.f32 %v4305, %v4611
      %v4624 = vmul.f32 %v4304, %v4612
      %v4625 = vmul.f32 %v4303, %v4611
      %v4626 = vmul.f32 %v4302, %v4612
      %v4627 = vmul.f32 %v4301, %v4611
      %v4628 = vmul.f32 %v4300, %v4612
      %v4629 = vmul.f32 %v4299, %v4611
      %v4630 = vmul.f32 %v4298, %v4612
      %v4631 = vmul.f32 %v4297, %v4611
      %v4632 = vmul.f32 %v4296, %v4612
      %v4633 = vmul.f32 %v4295, %v4611
      %v4634 = vmul.f32 %v4294, %v4612
      %v4635 = vmul.f32 %v4293, %v4611
      %v4636 = vmul.f32 %v4292, %v4612
      %v4637 = vmul.f32 %v4291, %v4611
      %v4638 = vmul.f32 %v4290, %v4612
      %v4639 = vmul.f32 %v4289, %v4611
      %v4640 = vmul.f32 %v4288, %v4612
      %v4641 = vmul.f32 %v4287, %v4611
      %v4642 = vmul.f32 %v4286, %v4612
      %v4643 = vmul.f32 0.0, %v4611
      %v4644 = vmul.f32 0.0, %v4612
      %v4645 = vadd.f32 %v4575, %v4613
      %v4646 = vadd.f32 %v4576, %v4614
      %v4647 = vadd.f32 %v4577, %v4615
      %v4648 = vadd.f32 %v4578, %v4616
      %v4649 = vadd.f32 %v4579, %v4617
      %v4650 = vadd.f32 %v4580, %v4618
      %v4651 = vadd.f32 %v4581, %v4619
      %v4652 = vadd.f32 %v4582, %v4620
      %v4653 = vadd.f32 %v4583, %v4621
      %v4654 = vadd.f32 %v4584, %v4622
      %v4655 = vadd.f32 %v4585, %v4623
      %v4656 = vadd.f32 %v4586, %v4624
      %v4657 = vadd.f32 %v4587, %v4625
      %v4658 = vadd.f32 %v4588, %v4626
      %v4659 = vadd.f32 %v4589, %v4627
      %v4660 = vadd.f32 %v4590, %v4628
      %v4661 = vadd.f32 %v4591, %v4629
      %v4662 = vadd.f32 %v4592, %v4630
      %v4663 = vadd.f32 %v4593, %v4631
      %v4664 = vadd.f32 %v4594, %v4632
      %v4665 = vadd.f32 %v4595, %v4633
      %v4666 = vadd.f32 %v4596, %v4634
      %v4667 = vadd.f32 %v4597, %v4635
      %v4668 = vadd.f32 %v4598, %v4636
      %v4669 = vadd.f32 %v4599, %v4637
      %v4670 = vadd.f32 %v4600, %v4638
      %v4671 = vadd.f32 %v4601, %v4639
      %v4672 = vadd.f32 %v4602, %v4640
      %v4673 = vadd.f32 %v4603, %v4641
      %v4674 = vadd.f32 %v4604, %v4642
      %v4675 = vadd.f32 %v4605, %v4643
      %v4676 = vadd.f32 %v4606, %v4644
      %v4677 = vlaneseq
      %v4678 = vshrl.u32 %v4677, 7
      %v4679 = vsub.s32 0, %v4678
      %v4680 = vrot.slane %v1562, %v4679
      %v4681 = vmul.f32 %v4680, %v4329
      %v4682 = vmul.f32 %v4680, %v4330
      %v4683 = vmul.f32 %v4313, %v4681
      %v4684 = vmul.f32 %v4312, %v4682
      %v4685 = vmul.f32 %v4311, %v4681
      %v4686 = vmul.f32 %v4310, %v4682
      %v4687 = vmul.f32 %v4309, %v4681
      %v4688 = vmul.f32 %v4308, %v4682
      %v4689 = vmul.f32 %v4307, %v4681
      %v4690 = vmul.f32 %v4306, %v4682
      %v4691 = vmul.f32 %v4305, %v4681
      %v4692 = vmul.f32 %v4304, %v4682
      %v4693 = vmul.f32 %v4303, %v4681
      %v4694 = vmul.f32 %v4302, %v4682
      %v4695 = vmul.f32 %v4301, %v4681
      %v4696 = vmul.f32 %v4300, %v4682
      %v4697 = vmul.f32 %v4299, %v4681
      %v4698 = vmul.f32 %v4298, %v4682
      %v4699 = vmul.f32 %v4297, %v4681
      %v4700 = vmul.f32 %v4296, %v4682
      %v4701 = vmul.f32 %v4295, %v4681
      %v4702 = vmul.f32 %v4294, %v4682
      %v4703 = vmul.f32 %v4293, %v4681
      %v4704 = vmul.f32 %v4292, %v4682
      %v4705 = vmul.f32 %v4291, %v4681
      %v4706 = vmul.f32 %v4290, %v4682
      %v4707 = vmul.f32 %v4289, %v4681
      %v4708 = vmul.f32 %v4288, %v4682
      %v4709 = vmul.f32 %v4287, %v4681
      %v4710 = vmul.f32 %v4286, %v4682
      %v4711 = vmul.f32 0.0, %v4681
      %v4712 = vmul.f32 0.0, %v4682
      %v4713 = vadd.f32 %v4645, %v4683
      %v4714 = vadd.f32 %v4646, %v4684
      %v4715 = vadd.f32 %v4647, %v4685
      %v4716 = vadd.f32 %v4648, %v4686
      %v4717 = vadd.f32 %v4649, %v4687
      %v4718 = vadd.f32 %v4650, %v4688
      %v4719 = vadd.f32 %v4651, %v4689
      %v4720 = vadd.f32 %v4652, %v4690
      %v4721 = vadd.f32 %v4653, %v4691
      %v4722 = vadd.f32 %v4654, %v4692
      %v4723 = vadd.f32 %v4655, %v4693
      %v4724 = vadd.f32 %v4656, %v4694
      %v4725 = vadd.f32 %v4657, %v4695
      %v4726 = vadd.f32 %v4658, %v4696
      %v4727 = vadd.f32 %v4659, %v4697
      %v4728 = vadd.f32 %v4660, %v4698
      %v4729 = vadd.f32 %v4661, %v4699
      %v4730 = vadd.f32 %v4662, %v4700
      %v4731 = vadd.f32 %v4663, %v4701
      %v4732 = vadd.f32 %v4664, %v4702
      %v4733 = vadd.f32 %v4665, %v4703
      %v4734 = vadd.f32 %v4666, %v4704
      %v4735 = vadd.f32 %v4667, %v4705
      %v4736 = vadd.f32 %v4668, %v4706
      %v4737 = vadd.f32 %v4669, %v4707
      %v4738 = vadd.f32 %v4670, %v4708
      %v4739 = vadd.f32 %v4671, %v4709
      %v4740 = vadd.f32 %v4672, %v4710
      %v4741 = vadd.f32 %v4673, %v4711
      %v4742 = vadd.f32 %v4674, %v4712
      %v4743 = vadd.f32 %v4675, %v4711
      %v4744 = vadd.f32 %v4676, %v4712
      %v4745 = vlaneseq
      %v4746 = vshrl.u32 %v4745, 7
      %v4747 = vsub.s32 7, %v4746
      %v4748 = vrot.slane %v1562, %v4747
      %v4749 = vmul.f32 %v4748, %v4329
      %v4750 = vmul.f32 %v4748, %v4330
      %v4751 = vmul.f32 %v4311, %v4749
      %v4752 = vmul.f32 %v4310, %v4750
      %v4753 = vmul.f32 %v4309, %v4749
      %v4754 = vmul.f32 %v4308, %v4750
      %v4755 = vmul.f32 %v4307, %v4749
      %v4756 = vmul.f32 %v4306, %v4750
      %v4757 = vmul.f32 %v4305, %v4749
      %v4758 = vmul.f32 %v4304, %v4750
      %v4759 = vmul.f32 %v4303, %v4749
      %v4760 = vmul.f32 %v4302, %v4750
      %v4761 = vmul.f32 %v4301, %v4749
      %v4762 = vmul.f32 %v4300, %v4750
      %v4763 = vmul.f32 %v4299, %v4749
      %v4764 = vmul.f32 %v4298, %v4750
      %v4765 = vmul.f32 %v4297, %v4749
      %v4766 = vmul.f32 %v4296, %v4750
      %v4767 = vmul.f32 %v4295, %v4749
      %v4768 = vmul.f32 %v4294, %v4750
      %v4769 = vmul.f32 %v4293, %v4749
      %v4770 = vmul.f32 %v4292, %v4750
      %v4771 = vmul.f32 %v4291, %v4749
      %v4772 = vmul.f32 %v4290, %v4750
      %v4773 = vmul.f32 %v4289, %v4749
      %v4774 = vmul.f32 %v4288, %v4750
      %v4775 = vmul.f32 %v4287, %v4749
      %v4776 = vmul.f32 %v4286, %v4750
      %v4777 = vmul.f32 0.0, %v4749
      %v4778 = vmul.f32 0.0, %v4750
      %v4779 = vadd.f32 %v4713, %v4751
      %v4780 = vadd.f32 %v4714, %v4752
      %v4781 = vadd.f32 %v4715, %v4753
      %v4782 = vadd.f32 %v4716, %v4754
      %v4783 = vadd.f32 %v4717, %v4755
      %v4784 = vadd.f32 %v4718, %v4756
      %v4785 = vadd.f32 %v4719, %v4757
      %v4786 = vadd.f32 %v4720, %v4758
      %v4787 = vadd.f32 %v4721, %v4759
      %v4788 = vadd.f32 %v4722, %v4760
      %v4789 = vadd.f32 %v4723, %v4761
      %v4790 = vadd.f32 %v4724, %v4762
      %v4791 = vadd.f32 %v4725, %v4763
      %v4792 = vadd.f32 %v4726, %v4764
      %v4793 = vadd.f32 %v4727, %v4765
      %v4794 = vadd.f32 %v4728, %v4766
      %v4795 = vadd.f32 %v4729, %v4767
      %v4796 = vadd.f32 %v4730, %v4768
      %v4797 = vadd.f32 %v4731, %v4769
      %v4798 = vadd.f32 %v4732, %v4770
      %v4799 = vadd.f32 %v4733, %v4771
      %v4800 = vadd.f32 %v4734, %v4772
      %v4801 = vadd.f32 %v4735, %v4773
      %v4802 = vadd.f32 %v4736, %v4774
      %v4803 = vadd.f32 %v4737, %v4775
      %v4804 = vadd.f32 %v4738, %v4776
      %v4805 = vadd.f32 %v4739, %v4777
      %v4806 = vadd.f32 %v4740, %v4778
      %v4807 = vadd.f32 %v4741, %v4777
      %v4808 = vadd.f32 %v4742, %v4778
      %v4809 = vadd.f32 %v4743, %v4777
      %v4810 = vadd.f32 %v4744, %v4778
      %v4811 = vrot.slane %v1401, 3
      %v4812 = vrot.slane %v1405, 3
      %v4813 = vrot.slane %v1411, 3
      %v4814 = vrot.slane %v1415, 3
      %v4815 = vrot.slane %v1421, 3
      %v4816 = vrot.slane %v1425, 3
      %v4817 = vrot.slane %v1431, 3
      %v4818 = vrot.slane %v1435, 3
      %v4819 = vrot.slane %v1441, 3
      %v4820 = vrot.slane %v1445, 3
      %v4821 = vrot.slane %v1451, 3
      %v4822 = vrot.slane %v1455, 3
      %v4823 = vrot.slane %v1461, 3
      %v4824 = vrot.slane %v1465, 3
      %v4825 = vrot.slane %v1471, 3
      %v4826 = vrot.slane %v1475, 3
      %v4827 = vrot.slane %v1481, 3
      %v4828 = vrot.slane %v1485, 3
      %v4829 = vrot.slane %v1491, 3
      %v4830 = vrot.slane %v1495, 3
      %v4831 = vrot.slane %v1501, 3
      %v4832 = vrot.slane %v1505, 3
      %v4833 = vrot.slane %v1511, 3
      %v4834 = vrot.slane %v1515, 3
      %v4835 = vrot.slane %v1521, 3
      %v4836 = vrot.slane %v1525, 3
      %v4837 = vrot.slane %v1531, 3
      %v4838 = vrot.slane %v1535, 3
      %v4839 = vrot.slane %v1541, 3
      %v4840 = vrot.slane %v1545, 3
      %v4841 = vrot.slane %v1551, 3
      %v4842 = vrot.slane %v1555, 3
      %vm4843 = vcmp.lt.s32.totalorder %v1565, 5
      %v4844 = vsel %vm4843, %v4842, 0.0
      %v4845 = vsel %vm4843, %v4841, %v4842
      %v4846 = vsel %vm4843, %v4840, %v4841
      %v4847 = vsel %vm4843, %v4839, %v4840
      %v4848 = vsel %vm4843, %v4838, %v4839
      %v4849 = vsel %vm4843, %v4837, %v4838
      %v4850 = vsel %vm4843, %v4836, %v4837
      %v4851 = vsel %vm4843, %v4835, %v4836
      %v4852 = vsel %vm4843, %v4834, %v4835
      %v4853 = vsel %vm4843, %v4833, %v4834
      %v4854 = vsel %vm4843, %v4832, %v4833
      %v4855 = vsel %vm4843, %v4831, %v4832
      %v4856 = vsel %vm4843, %v4830, %v4831
      %v4857 = vsel %vm4843, %v4829, %v4830
      %v4858 = vsel %vm4843, %v4828, %v4829
      %v4859 = vsel %vm4843, %v4827, %v4828
      %v4860 = vsel %vm4843, %v4826, %v4827
      %v4861 = vsel %vm4843, %v4825, %v4826
      %v4862 = vsel %vm4843, %v4824, %v4825
      %v4863 = vsel %vm4843, %v4823, %v4824
      %v4864 = vsel %vm4843, %v4822, %v4823
      %v4865 = vsel %vm4843, %v4821, %v4822
      %v4866 = vsel %vm4843, %v4820, %v4821
      %v4867 = vsel %vm4843, %v4819, %v4820
      %v4868 = vsel %vm4843, %v4818, %v4819
      %v4869 = vsel %vm4843, %v4817, %v4818
      %v4870 = vsel %vm4843, %v4816, %v4817
      %v4871 = vsel %vm4843, %v4815, %v4816
      %v4872 = vsel %vm4843, %v4814, %v4815
      %v4873 = vsel %vm4843, %v4813, %v4814
      %v4874 = vsel %vm4843, %v4812, %v4813
      %v4875 = vsel %vm4843, %v4811, %v4812
      %v4876 = vsel %vm4843, 0.0, %v4811
      %v4877 = vadd.s32 %v1565, 3
      %v4878 = vadd.s32 %v1566, 3
      %vm4879 = vcmp.ge.s32.totalorder %v4877, 0
      %vm4880 = vcmp.ge.s32.totalorder %v4878, 0
      %vm4881 = vcmp.lt.s32.totalorder %v4877, 16
      %vm4882 = vcmp.lt.s32.totalorder %v4878, 16
      %vm4883 = vmand %vm4879, %vm4881
      %vm4884 = vmand %vm4880, %vm4882
      %v4885 = vsel %vm4883, 1, 0
      %v4886 = vsel %vm4884, 1, 0
      %v4887 = vcvt.s32.f32 %v4885
      %v4888 = vcvt.s32.f32 %v4886
      %v4889 = vlaneseq
      %v4890 = vshrl.u32 %v4889, 7
      %v4891 = vsub.s32 6, %v4890
      %v4892 = vrot.slane %v1557, %v4891
      %v4893 = vmul.f32 %v4892, %v4887
      %v4894 = vmul.f32 %v4892, %v4888
      %v4895 = vmul.f32 0.0, %v4893
      %v4896 = vmul.f32 0.0, %v4894
      %v4897 = vmul.f32 %v4876, %v4894
      %v4898 = vmul.f32 %v4875, %v4893
      %v4899 = vmul.f32 %v4874, %v4894
      %v4900 = vmul.f32 %v4873, %v4893
      %v4901 = vmul.f32 %v4872, %v4894
      %v4902 = vmul.f32 %v4871, %v4893
      %v4903 = vmul.f32 %v4870, %v4894
      %v4904 = vmul.f32 %v4869, %v4893
      %v4905 = vmul.f32 %v4868, %v4894
      %v4906 = vmul.f32 %v4867, %v4893
      %v4907 = vmul.f32 %v4866, %v4894
      %v4908 = vmul.f32 %v4865, %v4893
      %v4909 = vmul.f32 %v4864, %v4894
      %v4910 = vmul.f32 %v4863, %v4893
      %v4911 = vmul.f32 %v4862, %v4894
      %v4912 = vmul.f32 %v4861, %v4893
      %v4913 = vmul.f32 %v4860, %v4894
      %v4914 = vmul.f32 %v4859, %v4893
      %v4915 = vmul.f32 %v4858, %v4894
      %v4916 = vmul.f32 %v4857, %v4893
      %v4917 = vmul.f32 %v4856, %v4894
      %v4918 = vmul.f32 %v4855, %v4893
      %v4919 = vmul.f32 %v4854, %v4894
      %v4920 = vmul.f32 %v4853, %v4893
      %v4921 = vmul.f32 %v4852, %v4894
      %v4922 = vmul.f32 %v4851, %v4893
      %v4923 = vmul.f32 %v4850, %v4894
      %v4924 = vadd.f32 %v4779, %v4895
      %v4925 = vadd.f32 %v4780, %v4896
      %v4926 = vadd.f32 %v4781, %v4895
      %v4927 = vadd.f32 %v4782, %v4896
      %v4928 = vadd.f32 %v4783, %v4895
      %v4929 = vadd.f32 %v4784, %v4897
      %v4930 = vadd.f32 %v4785, %v4898
      %v4931 = vadd.f32 %v4786, %v4899
      %v4932 = vadd.f32 %v4787, %v4900
      %v4933 = vadd.f32 %v4788, %v4901
      %v4934 = vadd.f32 %v4789, %v4902
      %v4935 = vadd.f32 %v4790, %v4903
      %v4936 = vadd.f32 %v4791, %v4904
      %v4937 = vadd.f32 %v4792, %v4905
      %v4938 = vadd.f32 %v4793, %v4906
      %v4939 = vadd.f32 %v4794, %v4907
      %v4940 = vadd.f32 %v4795, %v4908
      %v4941 = vadd.f32 %v4796, %v4909
      %v4942 = vadd.f32 %v4797, %v4910
      %v4943 = vadd.f32 %v4798, %v4911
      %v4944 = vadd.f32 %v4799, %v4912
      %v4945 = vadd.f32 %v4800, %v4913
      %v4946 = vadd.f32 %v4801, %v4914
      %v4947 = vadd.f32 %v4802, %v4915
      %v4948 = vadd.f32 %v4803, %v4916
      %v4949 = vadd.f32 %v4804, %v4917
      %v4950 = vadd.f32 %v4805, %v4918
      %v4951 = vadd.f32 %v4806, %v4919
      %v4952 = vadd.f32 %v4807, %v4920
      %v4953 = vadd.f32 %v4808, %v4921
      %v4954 = vadd.f32 %v4809, %v4922
      %v4955 = vadd.f32 %v4810, %v4923
      %v4956 = vlaneseq
      %v4957 = vshrl.u32 %v4956, 7
      %v4958 = vsub.s32 5, %v4957
      %v4959 = vrot.slane %v1558, %v4958
      %v4960 = vmul.f32 %v4959, %v4887
      %v4961 = vmul.f32 %v4959, %v4888
      %v4962 = vmul.f32 0.0, %v4960
      %v4963 = vmul.f32 0.0, %v4961
      %v4964 = vmul.f32 %v4876, %v4961
      %v4965 = vmul.f32 %v4875, %v4960
      %v4966 = vmul.f32 %v4874, %v4961
      %v4967 = vmul.f32 %v4873, %v4960
      %v4968 = vmul.f32 %v4872, %v4961
      %v4969 = vmul.f32 %v4871, %v4960
      %v4970 = vmul.f32 %v4870, %v4961
      %v4971 = vmul.f32 %v4869, %v4960
      %v4972 = vmul.f32 %v4868, %v4961
      %v4973 = vmul.f32 %v4867, %v4960
      %v4974 = vmul.f32 %v4866, %v4961
      %v4975 = vmul.f32 %v4865, %v4960
      %v4976 = vmul.f32 %v4864, %v4961
      %v4977 = vmul.f32 %v4863, %v4960
      %v4978 = vmul.f32 %v4862, %v4961
      %v4979 = vmul.f32 %v4861, %v4960
      %v4980 = vmul.f32 %v4860, %v4961
      %v4981 = vmul.f32 %v4859, %v4960
      %v4982 = vmul.f32 %v4858, %v4961
      %v4983 = vmul.f32 %v4857, %v4960
      %v4984 = vmul.f32 %v4856, %v4961
      %v4985 = vmul.f32 %v4855, %v4960
      %v4986 = vmul.f32 %v4854, %v4961
      %v4987 = vmul.f32 %v4853, %v4960
      %v4988 = vmul.f32 %v4852, %v4961
      %v4989 = vmul.f32 %v4851, %v4960
      %v4990 = vmul.f32 %v4850, %v4961
      %v4991 = vmul.f32 %v4849, %v4960
      %v4992 = vmul.f32 %v4848, %v4961
      %v4993 = vadd.f32 %v4924, %v4962
      %v4994 = vadd.f32 %v4925, %v4963
      %v4995 = vadd.f32 %v4926, %v4962
      %v4996 = vadd.f32 %v4927, %v4964
      %v4997 = vadd.f32 %v4928, %v4965
      %v4998 = vadd.f32 %v4929, %v4966
      %v4999 = vadd.f32 %v4930, %v4967
      %v5000 = vadd.f32 %v4931, %v4968
      %v5001 = vadd.f32 %v4932, %v4969
      %v5002 = vadd.f32 %v4933, %v4970
      %v5003 = vadd.f32 %v4934, %v4971
      %v5004 = vadd.f32 %v4935, %v4972
      %v5005 = vadd.f32 %v4936, %v4973
      %v5006 = vadd.f32 %v4937, %v4974
      %v5007 = vadd.f32 %v4938, %v4975
      %v5008 = vadd.f32 %v4939, %v4976
      %v5009 = vadd.f32 %v4940, %v4977
      %v5010 = vadd.f32 %v4941, %v4978
      %v5011 = vadd.f32 %v4942, %v4979
      %v5012 = vadd.f32 %v4943, %v4980
      %v5013 = vadd.f32 %v4944, %v4981
      %v5014 = vadd.f32 %v4945, %v4982
      %v5015 = vadd.f32 %v4946, %v4983
      %v5016 = vadd.f32 %v4947, %v4984
      %v5017 = vadd.f32 %v4948, %v4985
      %v5018 = vadd.f32 %v4949, %v4986
      %v5019 = vadd.f32 %v4950, %v4987
      %v5020 = vadd.f32 %v4951, %v4988
      %v5021 = vadd.f32 %v4952, %v4989
      %v5022 = vadd.f32 %v4953, %v4990
      %v5023 = vadd.f32 %v4954, %v4991
      %v5024 = vadd.f32 %v4955, %v4992
      %v5025 = vlaneseq
      %v5026 = vshrl.u32 %v5025, 7
      %v5027 = vsub.s32 4, %v5026
      %v5028 = vrot.slane %v1559, %v5027
      %v5029 = vmul.f32 %v5028, %v4887
      %v5030 = vmul.f32 %v5028, %v4888
      %v5031 = vmul.f32 0.0, %v5029
      %v5032 = vmul.f32 %v4876, %v5030
      %v5033 = vmul.f32 %v4875, %v5029
      %v5034 = vmul.f32 %v4874, %v5030
      %v5035 = vmul.f32 %v4873, %v5029
      %v5036 = vmul.f32 %v4872, %v5030
      %v5037 = vmul.f32 %v4871, %v5029
      %v5038 = vmul.f32 %v4870, %v5030
      %v5039 = vmul.f32 %v4869, %v5029
      %v5040 = vmul.f32 %v4868, %v5030
      %v5041 = vmul.f32 %v4867, %v5029
      %v5042 = vmul.f32 %v4866, %v5030
      %v5043 = vmul.f32 %v4865, %v5029
      %v5044 = vmul.f32 %v4864, %v5030
      %v5045 = vmul.f32 %v4863, %v5029
      %v5046 = vmul.f32 %v4862, %v5030
      %v5047 = vmul.f32 %v4861, %v5029
      %v5048 = vmul.f32 %v4860, %v5030
      %v5049 = vmul.f32 %v4859, %v5029
      %v5050 = vmul.f32 %v4858, %v5030
      %v5051 = vmul.f32 %v4857, %v5029
      %v5052 = vmul.f32 %v4856, %v5030
      %v5053 = vmul.f32 %v4855, %v5029
      %v5054 = vmul.f32 %v4854, %v5030
      %v5055 = vmul.f32 %v4853, %v5029
      %v5056 = vmul.f32 %v4852, %v5030
      %v5057 = vmul.f32 %v4851, %v5029
      %v5058 = vmul.f32 %v4850, %v5030
      %v5059 = vmul.f32 %v4849, %v5029
      %v5060 = vmul.f32 %v4848, %v5030
      %v5061 = vmul.f32 %v4847, %v5029
      %v5062 = vmul.f32 %v4846, %v5030
      %v5063 = vadd.f32 %v4993, %v5031
      %v5064 = vadd.f32 %v4994, %v5032
      %v5065 = vadd.f32 %v4995, %v5033
      %v5066 = vadd.f32 %v4996, %v5034
      %v5067 = vadd.f32 %v4997, %v5035
      %v5068 = vadd.f32 %v4998, %v5036
      %v5069 = vadd.f32 %v4999, %v5037
      %v5070 = vadd.f32 %v5000, %v5038
      %v5071 = vadd.f32 %v5001, %v5039
      %v5072 = vadd.f32 %v5002, %v5040
      %v5073 = vadd.f32 %v5003, %v5041
      %v5074 = vadd.f32 %v5004, %v5042
      %v5075 = vadd.f32 %v5005, %v5043
      %v5076 = vadd.f32 %v5006, %v5044
      %v5077 = vadd.f32 %v5007, %v5045
      %v5078 = vadd.f32 %v5008, %v5046
      %v5079 = vadd.f32 %v5009, %v5047
      %v5080 = vadd.f32 %v5010, %v5048
      %v5081 = vadd.f32 %v5011, %v5049
      %v5082 = vadd.f32 %v5012, %v5050
      %v5083 = vadd.f32 %v5013, %v5051
      %v5084 = vadd.f32 %v5014, %v5052
      %v5085 = vadd.f32 %v5015, %v5053
      %v5086 = vadd.f32 %v5016, %v5054
      %v5087 = vadd.f32 %v5017, %v5055
      %v5088 = vadd.f32 %v5018, %v5056
      %v5089 = vadd.f32 %v5019, %v5057
      %v5090 = vadd.f32 %v5020, %v5058
      %v5091 = vadd.f32 %v5021, %v5059
      %v5092 = vadd.f32 %v5022, %v5060
      %v5093 = vadd.f32 %v5023, %v5061
      %v5094 = vadd.f32 %v5024, %v5062
      %v5095 = vlaneseq
      %v5096 = vshrl.u32 %v5095, 7
      %v5097 = vsub.s32 3, %v5096
      %v5098 = vrot.slane %v1560, %v5097
      %v5099 = vmul.f32 %v5098, %v4887
      %v5100 = vmul.f32 %v5098, %v4888
      %v5101 = vmul.f32 %v4875, %v5099
      %v5102 = vmul.f32 %v4874, %v5100
      %v5103 = vmul.f32 %v4873, %v5099
      %v5104 = vmul.f32 %v4872, %v5100
      %v5105 = vmul.f32 %v4871, %v5099
      %v5106 = vmul.f32 %v4870, %v5100
      %v5107 = vmul.f32 %v4869, %v5099
      %v5108 = vmul.f32 %v4868, %v5100
      %v5109 = vmul.f32 %v4867, %v5099
      %v5110 = vmul.f32 %v4866, %v5100
      %v5111 = vmul.f32 %v4865, %v5099
      %v5112 = vmul.f32 %v4864, %v5100
      %v5113 = vmul.f32 %v4863, %v5099
      %v5114 = vmul.f32 %v4862, %v5100
      %v5115 = vmul.f32 %v4861, %v5099
      %v5116 = vmul.f32 %v4860, %v5100
      %v5117 = vmul.f32 %v4859, %v5099
      %v5118 = vmul.f32 %v4858, %v5100
      %v5119 = vmul.f32 %v4857, %v5099
      %v5120 = vmul.f32 %v4856, %v5100
      %v5121 = vmul.f32 %v4855, %v5099
      %v5122 = vmul.f32 %v4854, %v5100
      %v5123 = vmul.f32 %v4853, %v5099
      %v5124 = vmul.f32 %v4852, %v5100
      %v5125 = vmul.f32 %v4851, %v5099
      %v5126 = vmul.f32 %v4850, %v5100
      %v5127 = vmul.f32 %v4849, %v5099
      %v5128 = vmul.f32 %v4848, %v5100
      %v5129 = vmul.f32 %v4847, %v5099
      %v5130 = vmul.f32 %v4846, %v5100
      %v5131 = vmul.f32 %v4845, %v5099
      %v5132 = vmul.f32 %v4844, %v5100
      %v5133 = vadd.f32 %v5063, %v5101
      %v5134 = vadd.f32 %v5064, %v5102
      %v5135 = vadd.f32 %v5065, %v5103
      %v5136 = vadd.f32 %v5066, %v5104
      %v5137 = vadd.f32 %v5067, %v5105
      %v5138 = vadd.f32 %v5068, %v5106
      %v5139 = vadd.f32 %v5069, %v5107
      %v5140 = vadd.f32 %v5070, %v5108
      %v5141 = vadd.f32 %v5071, %v5109
      %v5142 = vadd.f32 %v5072, %v5110
      %v5143 = vadd.f32 %v5073, %v5111
      %v5144 = vadd.f32 %v5074, %v5112
      %v5145 = vadd.f32 %v5075, %v5113
      %v5146 = vadd.f32 %v5076, %v5114
      %v5147 = vadd.f32 %v5077, %v5115
      %v5148 = vadd.f32 %v5078, %v5116
      %v5149 = vadd.f32 %v5079, %v5117
      %v5150 = vadd.f32 %v5080, %v5118
      %v5151 = vadd.f32 %v5081, %v5119
      %v5152 = vadd.f32 %v5082, %v5120
      %v5153 = vadd.f32 %v5083, %v5121
      %v5154 = vadd.f32 %v5084, %v5122
      %v5155 = vadd.f32 %v5085, %v5123
      %v5156 = vadd.f32 %v5086, %v5124
      %v5157 = vadd.f32 %v5087, %v5125
      %v5158 = vadd.f32 %v5088, %v5126
      %v5159 = vadd.f32 %v5089, %v5127
      %v5160 = vadd.f32 %v5090, %v5128
      %v5161 = vadd.f32 %v5091, %v5129
      %v5162 = vadd.f32 %v5092, %v5130
      %v5163 = vadd.f32 %v5093, %v5131
      %v5164 = vadd.f32 %v5094, %v5132
      %v5165 = vlaneseq
      %v5166 = vshrl.u32 %v5165, 7
      %v5167 = vsub.s32 2, %v5166
      %v5168 = vrot.slane %v1561, %v5167
      %v5169 = vmul.f32 %v5168, %v4887
      %v5170 = vmul.f32 %v5168, %v4888
      %v5171 = vmul.f32 %v4873, %v5169
      %v5172 = vmul.f32 %v4872, %v5170
      %v5173 = vmul.f32 %v4871, %v5169
      %v5174 = vmul.f32 %v4870, %v5170
      %v5175 = vmul.f32 %v4869, %v5169
      %v5176 = vmul.f32 %v4868, %v5170
      %v5177 = vmul.f32 %v4867, %v5169
      %v5178 = vmul.f32 %v4866, %v5170
      %v5179 = vmul.f32 %v4865, %v5169
      %v5180 = vmul.f32 %v4864, %v5170
      %v5181 = vmul.f32 %v4863, %v5169
      %v5182 = vmul.f32 %v4862, %v5170
      %v5183 = vmul.f32 %v4861, %v5169
      %v5184 = vmul.f32 %v4860, %v5170
      %v5185 = vmul.f32 %v4859, %v5169
      %v5186 = vmul.f32 %v4858, %v5170
      %v5187 = vmul.f32 %v4857, %v5169
      %v5188 = vmul.f32 %v4856, %v5170
      %v5189 = vmul.f32 %v4855, %v5169
      %v5190 = vmul.f32 %v4854, %v5170
      %v5191 = vmul.f32 %v4853, %v5169
      %v5192 = vmul.f32 %v4852, %v5170
      %v5193 = vmul.f32 %v4851, %v5169
      %v5194 = vmul.f32 %v4850, %v5170
      %v5195 = vmul.f32 %v4849, %v5169
      %v5196 = vmul.f32 %v4848, %v5170
      %v5197 = vmul.f32 %v4847, %v5169
      %v5198 = vmul.f32 %v4846, %v5170
      %v5199 = vmul.f32 %v4845, %v5169
      %v5200 = vmul.f32 %v4844, %v5170
      %v5201 = vmul.f32 0.0, %v5169
      %v5202 = vmul.f32 0.0, %v5170
      %v5203 = vadd.f32 %v5133, %v5171
      %v5204 = vadd.f32 %v5134, %v5172
      %v5205 = vadd.f32 %v5135, %v5173
      %v5206 = vadd.f32 %v5136, %v5174
      %v5207 = vadd.f32 %v5137, %v5175
      %v5208 = vadd.f32 %v5138, %v5176
      %v5209 = vadd.f32 %v5139, %v5177
      %v5210 = vadd.f32 %v5140, %v5178
      %v5211 = vadd.f32 %v5141, %v5179
      %v5212 = vadd.f32 %v5142, %v5180
      %v5213 = vadd.f32 %v5143, %v5181
      %v5214 = vadd.f32 %v5144, %v5182
      %v5215 = vadd.f32 %v5145, %v5183
      %v5216 = vadd.f32 %v5146, %v5184
      %v5217 = vadd.f32 %v5147, %v5185
      %v5218 = vadd.f32 %v5148, %v5186
      %v5219 = vadd.f32 %v5149, %v5187
      %v5220 = vadd.f32 %v5150, %v5188
      %v5221 = vadd.f32 %v5151, %v5189
      %v5222 = vadd.f32 %v5152, %v5190
      %v5223 = vadd.f32 %v5153, %v5191
      %v5224 = vadd.f32 %v5154, %v5192
      %v5225 = vadd.f32 %v5155, %v5193
      %v5226 = vadd.f32 %v5156, %v5194
      %v5227 = vadd.f32 %v5157, %v5195
      %v5228 = vadd.f32 %v5158, %v5196
      %v5229 = vadd.f32 %v5159, %v5197
      %v5230 = vadd.f32 %v5160, %v5198
      %v5231 = vadd.f32 %v5161, %v5199
      %v5232 = vadd.f32 %v5162, %v5200
      %v5233 = vadd.f32 %v5163, %v5201
      %v5234 = vadd.f32 %v5164, %v5202
      %v5235 = vlaneseq
      %v5236 = vshrl.u32 %v5235, 7
      %v5237 = vsub.s32 1, %v5236
      %v5238 = vrot.slane %v1562, %v5237
      %v5239 = vmul.f32 %v5238, %v4887
      %v5240 = vmul.f32 %v5238, %v4888
      %v5241 = vmul.f32 %v4871, %v5239
      %v5242 = vmul.f32 %v4870, %v5240
      %v5243 = vmul.f32 %v4869, %v5239
      %v5244 = vmul.f32 %v4868, %v5240
      %v5245 = vmul.f32 %v4867, %v5239
      %v5246 = vmul.f32 %v4866, %v5240
      %v5247 = vmul.f32 %v4865, %v5239
      %v5248 = vmul.f32 %v4864, %v5240
      %v5249 = vmul.f32 %v4863, %v5239
      %v5250 = vmul.f32 %v4862, %v5240
      %v5251 = vmul.f32 %v4861, %v5239
      %v5252 = vmul.f32 %v4860, %v5240
      %v5253 = vmul.f32 %v4859, %v5239
      %v5254 = vmul.f32 %v4858, %v5240
      %v5255 = vmul.f32 %v4857, %v5239
      %v5256 = vmul.f32 %v4856, %v5240
      %v5257 = vmul.f32 %v4855, %v5239
      %v5258 = vmul.f32 %v4854, %v5240
      %v5259 = vmul.f32 %v4853, %v5239
      %v5260 = vmul.f32 %v4852, %v5240
      %v5261 = vmul.f32 %v4851, %v5239
      %v5262 = vmul.f32 %v4850, %v5240
      %v5263 = vmul.f32 %v4849, %v5239
      %v5264 = vmul.f32 %v4848, %v5240
      %v5265 = vmul.f32 %v4847, %v5239
      %v5266 = vmul.f32 %v4846, %v5240
      %v5267 = vmul.f32 %v4845, %v5239
      %v5268 = vmul.f32 %v4844, %v5240
      %v5269 = vmul.f32 0.0, %v5239
      %v5270 = vmul.f32 0.0, %v5240
      %v5271 = vadd.f32 %v5203, %v5241
      %v5272 = vadd.f32 %v5204, %v5242
      %v5273 = vadd.f32 %v5205, %v5243
      %v5274 = vadd.f32 %v5206, %v5244
      %v5275 = vadd.f32 %v5207, %v5245
      %v5276 = vadd.f32 %v5208, %v5246
      %v5277 = vadd.f32 %v5209, %v5247
      %v5278 = vadd.f32 %v5210, %v5248
      %v5279 = vadd.f32 %v5211, %v5249
      %v5280 = vadd.f32 %v5212, %v5250
      %v5281 = vadd.f32 %v5213, %v5251
      %v5282 = vadd.f32 %v5214, %v5252
      %v5283 = vadd.f32 %v5215, %v5253
      %v5284 = vadd.f32 %v5216, %v5254
      %v5285 = vadd.f32 %v5217, %v5255
      %v5286 = vadd.f32 %v5218, %v5256
      %v5287 = vadd.f32 %v5219, %v5257
      %v5288 = vadd.f32 %v5220, %v5258
      %v5289 = vadd.f32 %v5221, %v5259
      %v5290 = vadd.f32 %v5222, %v5260
      %v5291 = vadd.f32 %v5223, %v5261
      %v5292 = vadd.f32 %v5224, %v5262
      %v5293 = vadd.f32 %v5225, %v5263
      %v5294 = vadd.f32 %v5226, %v5264
      %v5295 = vadd.f32 %v5227, %v5265
      %v5296 = vadd.f32 %v5228, %v5266
      %v5297 = vadd.f32 %v5229, %v5267
      %v5298 = vadd.f32 %v5230, %v5268
      %v5299 = vadd.f32 %v5231, %v5269
      %v5300 = vadd.f32 %v5232, %v5270
      %v5301 = vadd.f32 %v5233, %v5269
      %v5302 = vadd.f32 %v5234, %v5270
      %v5303 = vlaneseq
      %v5304 = vshrl.u32 %v5303, 7
      %v5305 = vsub.s32 0, %v5304
      %v5306 = vrot.slane %v1563, %v5305
      %v5307 = vmul.f32 %v5306, %v4887
      %v5308 = vmul.f32 %v5306, %v4888
      %v5309 = vmul.f32 %v4869, %v5307
      %v5310 = vmul.f32 %v4868, %v5308
      %v5311 = vmul.f32 %v4867, %v5307
      %v5312 = vmul.f32 %v4866, %v5308
      %v5313 = vmul.f32 %v4865, %v5307
      %v5314 = vmul.f32 %v4864, %v5308
      %v5315 = vmul.f32 %v4863, %v5307
      %v5316 = vmul.f32 %v4862, %v5308
      %v5317 = vmul.f32 %v4861, %v5307
      %v5318 = vmul.f32 %v4860, %v5308
      %v5319 = vmul.f32 %v4859, %v5307
      %v5320 = vmul.f32 %v4858, %v5308
      %v5321 = vmul.f32 %v4857, %v5307
      %v5322 = vmul.f32 %v4856, %v5308
      %v5323 = vmul.f32 %v4855, %v5307
      %v5324 = vmul.f32 %v4854, %v5308
      %v5325 = vmul.f32 %v4853, %v5307
      %v5326 = vmul.f32 %v4852, %v5308
      %v5327 = vmul.f32 %v4851, %v5307
      %v5328 = vmul.f32 %v4850, %v5308
      %v5329 = vmul.f32 %v4849, %v5307
      %v5330 = vmul.f32 %v4848, %v5308
      %v5331 = vmul.f32 %v4847, %v5307
      %v5332 = vmul.f32 %v4846, %v5308
      %v5333 = vmul.f32 %v4845, %v5307
      %v5334 = vmul.f32 %v4844, %v5308
      %v5335 = vmul.f32 0.0, %v5307
      %v5336 = vmul.f32 0.0, %v5308
      %v5337 = vadd.f32 %v5271, %v5309
      %v5338 = vadd.f32 %v5272, %v5310
      %v5339 = vadd.f32 %v5273, %v5311
      %v5340 = vadd.f32 %v5274, %v5312
      %v5341 = vadd.f32 %v5275, %v5313
      %v5342 = vadd.f32 %v5276, %v5314
      %v5343 = vadd.f32 %v5277, %v5315
      %v5344 = vadd.f32 %v5278, %v5316
      %v5345 = vadd.f32 %v5279, %v5317
      %v5346 = vadd.f32 %v5280, %v5318
      %v5347 = vadd.f32 %v5281, %v5319
      %v5348 = vadd.f32 %v5282, %v5320
      %v5349 = vadd.f32 %v5283, %v5321
      %v5350 = vadd.f32 %v5284, %v5322
      %v5351 = vadd.f32 %v5285, %v5323
      %v5352 = vadd.f32 %v5286, %v5324
      %v5353 = vadd.f32 %v5287, %v5325
      %v5354 = vadd.f32 %v5288, %v5326
      %v5355 = vadd.f32 %v5289, %v5327
      %v5356 = vadd.f32 %v5290, %v5328
      %v5357 = vadd.f32 %v5291, %v5329
      %v5358 = vadd.f32 %v5292, %v5330
      %v5359 = vadd.f32 %v5293, %v5331
      %v5360 = vadd.f32 %v5294, %v5332
      %v5361 = vadd.f32 %v5295, %v5333
      %v5362 = vadd.f32 %v5296, %v5334
      %v5363 = vadd.f32 %v5297, %v5335
      %v5364 = vadd.f32 %v5298, %v5336
      %v5365 = vadd.f32 %v5299, %v5335
      %v5366 = vadd.f32 %v5300, %v5336
      %v5367 = vadd.f32 %v5301, %v5335
      %v5368 = vadd.f32 %v5302, %v5336
      %v5369 = vld [vmem:[%s556] sm:$0x1]
      %v5371 = vlaneseq
      %v5372 = vshrl.u32 %v5371, 7
      %v5373 = vsub.s32 0, %v5372
      %v5374 = vrot.slane %v5369, %v5373
      %v5376 = vadd.f32 %v5337, %v5374
      %v5377 = vadd.f32 %v5338, %v5374
      %v5378 = vadd.f32 %v5339, %v5374
      %v5379 = vadd.f32 %v5340, %v5374
      %v5380 = vadd.f32 %v5341, %v5374
      %v5381 = vadd.f32 %v5342, %v5374
      %v5382 = vadd.f32 %v5343, %v5374
      %v5383 = vadd.f32 %v5344, %v5374
      %v5384 = vadd.f32 %v5345, %v5374
      %v5385 = vadd.f32 %v5346, %v5374
      %v5386 = vadd.f32 %v5347, %v5374
      %v5387 = vadd.f32 %v5348, %v5374
      %v5388 = vadd.f32 %v5349, %v5374
      %v5389 = vadd.f32 %v5350, %v5374
      %v5390 = vadd.f32 %v5351, %v5374
      %v5391 = vadd.f32 %v5352, %v5374
      %v5392 = vadd.f32 %v5353, %v5374
      %v5393 = vadd.f32 %v5354, %v5374
      %v5394 = vadd.f32 %v5355, %v5374
      %v5395 = vadd.f32 %v5356, %v5374
      %v5396 = vadd.f32 %v5357, %v5374
      %v5397 = vadd.f32 %v5358, %v5374
      %v5398 = vadd.f32 %v5359, %v5374
      %v5399 = vadd.f32 %v5360, %v5374
      %v5400 = vadd.f32 %v5361, %v5374
      %v5401 = vadd.f32 %v5362, %v5374
      %v5402 = vadd.f32 %v5363, %v5374
      %v5403 = vadd.f32 %v5364, %v5374
      %v5404 = vadd.f32 %v5365, %v5374
      %v5405 = vadd.f32 %v5366, %v5374
      %v5406 = vadd.f32 %v5367, %v5374
      %v5407 = vadd.f32 %v5368, %v5374
      %v5408 = vmin.f32 %v1098, 20.0
      %v5409 = vmin.f32 %v1100, 20.0
      %v5410 = vmin.f32 %v1102, 20.0
      %v5411 = vmin.f32 %v1104, 20.0
      %v5412 = vmin.f32 %v1108, 20.0
      %v5413 = vmin.f32 %v1110, 20.0
      %v5414 = vmin.f32 %v1112, 20.0
      %v5415 = vmin.f32 %v1114, 20.0
      %v5416 = vmin.f32 %v1118, 20.0
      %v5417 = vmin.f32 %v1120, 20.0
      %v5418 = vmin.f32 %v1122, 20.0
      %v5419 = vmin.f32 %v1124, 20.0
      %v5420 = vmin.f32 %v1128, 20.0
      %v5421 = vmin.f32 %v1130, 20.0
      %v5422 = vmin.f32 %v1132, 20.0
      %v5423 = vmin.f32 %v1134, 20.0
      %v5424 = vmin.f32 %v1138, 20.0
      %v5425 = vmin.f32 %v1140, 20.0
      %v5426 = vmin.f32 %v1142, 20.0
      %v5427 = vmin.f32 %v1144, 20.0
      %v5428 = vmin.f32 %v1148, 20.0
      %v5429 = vmin.f32 %v1150, 20.0
      %v5430 = vmin.f32 %v1152, 20.0
      %v5431 = vmin.f32 %v1154, 20.0
      %v5432 = vmin.f32 %v1158, 20.0
      %v5433 = vmin.f32 %v1160, 20.0
      %v5434 = vmin.f32 %v1162, 20.0
      %v5435 = vmin.f32 %v1164, 20.0
      %v5436 = vmin.f32 %v1168, 20.0
      %v5437 = vmin.f32 %v1170, 20.0
      %v5438 = vmin.f32 %v1172, 20.0
      %v5439 = vmin.f32 %v1174, 20.0
      %v5440 = vmin.f32 %v1178, 20.0
      %v5441 = vmin.f32 %v1180, 20.0
      %v5442 = vmin.f32 %v1182, 20.0
      %v5443 = vmin.f32 %v1184, 20.0
      %v5444 = vmin.f32 %v1188, 20.0
      %v5445 = vmin.f32 %v1190, 20.0
      %v5446 = vmin.f32 %v1192, 20.0
      %v5447 = vmin.f32 %v1194, 20.0
      %v5448 = vmin.f32 %v1198, 20.0
      %v5449 = vmin.f32 %v1200, 20.0
      %v5450 = vmin.f32 %v1202, 20.0
      %v5451 = vmin.f32 %v1204, 20.0
      %v5452 = vmin.f32 %v1208, 20.0
      %v5453 = vmin.f32 %v1210, 20.0
      %v5454 = vmin.f32 %v1212, 20.0
      %v5455 = vmin.f32 %v1214, 20.0
      %v5456 = vmin.f32 %v1218, 20.0
      %v5457 = vmin.f32 %v1220, 20.0
      %v5458 = vmin.f32 %v1222, 20.0
      %v5459 = vmin.f32 %v1224, 20.0
      %v5460 = vmin.f32 %v1228, 20.0
      %v5461 = vmin.f32 %v1230, 20.0
      %v5462 = vmin.f32 %v1232, 20.0
      %v5463 = vmin.f32 %v1234, 20.0
      %v5464 = vmin.f32 %v1238, 20.0
      %v5465 = vmin.f32 %v1240, 20.0
      %v5466 = vmin.f32 %v1242, 20.0
      %v5467 = vmin.f32 %v1244, 20.0
      %v5468 = vmin.f32 %v1248, 20.0
      %v5469 = vmin.f32 %v1250, 20.0
      %v5470 = vmin.f32 %v1252, 20.0
      %v5471 = vmin.f32 %v1254, 20.0
      %v5472 = vmul.f32 %v5408, 1.442695
      %v5473 = vpow.pop %v5472
      %v5474 = vmul.f32 %v5409, 1.442695
      %v5475 = vpow.pop %v5474
      %v5476 = vmul.f32 %v5410, 1.442695
      %v5477 = vpow.pop %v5476
      %v5478 = vmul.f32 %v5411, 1.442695
      %v5479 = vpow.pop %v5478
      %v5480 = vmul.f32 %v5412, 1.442695
      %v5481 = vpow.pop %v5480
      %v5482 = vmul.f32 %v5413, 1.442695
      %v5483 = vpow.pop %v5482
      %v5484 = vmul.f32 %v5414, 1.442695
      %v5485 = vpow.pop %v5484
      %v5486 = vmul.f32 %v5415, 1.442695
      %v5487 = vpow.pop %v5486
      %v5488 = vmul.f32 %v5416, 1.442695
      %v5489 = vpow.pop %v5488
      %v5490 = vmul.f32 %v5417, 1.442695
      %v5491 = vpow.pop %v5490
      %v5492 = vmul.f32 %v5418, 1.442695
      %v5493 = vpow.pop %v5492
      %v5494 = vmul.f32 %v5419, 1.442695
      %v5495 = vpow.pop %v5494
      %v5496 = vmul.f32 %v5420, 1.442695
      %v5497 = vpow.pop %v5496
      %v5498 = vmul.f32 %v5421, 1.442695
      %v5499 = vpow.pop %v5498
      %v5500 = vmul.f32 %v5422, 1.442695
      %v5501 = vpow.pop %v5500
      %v5502 = vmul.f32 %v5423, 1.442695
      %v5503 = vpow.pop %v5502
      %v5504 = vmul.f32 %v5424, 1.442695
      %v5505 = vpow.pop %v5504
      %v5506 = vmul.f32 %v5425, 1.442695
      %v5507 = vpow.pop %v5506
      %v5508 = vmul.f32 %v5426, 1.442695
      %v5509 = vpow.pop %v5508
      %v5510 = vmul.f32 %v5427, 1.442695
      %v5511 = vpow.pop %v5510
      %v5512 = vmul.f32 %v5428, 1.442695
      %v5513 = vpow.pop %v5512
      %v5514 = vmul.f32 %v5429, 1.442695
      %v5515 = vpow.pop %v5514
      %v5516 = vmul.f32 %v5430, 1.442695
      %v5517 = vpow.pop %v5516
      %v5518 = vmul.f32 %v5431, 1.442695
      %v5519 = vpow.pop %v5518
      %v5520 = vmul.f32 %v5432, 1.442695
      %v5521 = vpow.pop %v5520
      %v5522 = vmul.f32 %v5433, 1.442695
      %v5523 = vpow.pop %v5522
      %v5524 = vmul.f32 %v5434, 1.442695
      %v5525 = vpow.pop %v5524
      %v5526 = vmul.f32 %v5435, 1.442695
      %v5527 = vpow.pop %v5526
      %v5528 = vmul.f32 %v5436, 1.442695
      %v5529 = vpow.pop %v5528
      %v5530 = vmul.f32 %v5437, 1.442695
      %v5531 = vpow.pop %v5530
      %v5532 = vmul.f32 %v5438, 1.442695
      %v5533 = vpow.pop %v5532
      %v5534 = vmul.f32 %v5439, 1.442695
      %v5535 = vpow.pop %v5534
      %v5536 = vmul.f32 %v5440, 1.442695
      %v5537 = vpow.pop %v5536
      %v5538 = vmul.f32 %v5441, 1.442695
      %v5539 = vpow.pop %v5538
      %v5540 = vmul.f32 %v5442, 1.442695
      %v5541 = vpow.pop %v5540
      %v5542 = vmul.f32 %v5443, 1.442695
      %v5543 = vpow.pop %v5542
      %v5544 = vmul.f32 %v5444, 1.442695
      %v5545 = vpow.pop %v5544
      %v5546 = vmul.f32 %v5445, 1.442695
      %v5547 = vpow.pop %v5546
      %v5548 = vmul.f32 %v5446, 1.442695
      %v5549 = vpow.pop %v5548
      %v5550 = vmul.f32 %v5447, 1.442695
      %v5551 = vpow.pop %v5550
      %v5552 = vmul.f32 %v5448, 1.442695
      %v5553 = vpow.pop %v5552
      %v5554 = vmul.f32 %v5449, 1.442695
      %v5555 = vpow.pop %v5554
      %v5556 = vmul.f32 %v5450, 1.442695
      %v5557 = vpow.pop %v5556
      %v5558 = vmul.f32 %v5451, 1.442695
      %v5559 = vpow.pop %v5558
      %v5560 = vmul.f32 %v5452, 1.442695
      %v5561 = vpow.pop %v5560
      %v5562 = vmul.f32 %v5453, 1.442695
      %v5563 = vpow.pop %v5562
      %v5564 = vmul.f32 %v5454, 1.442695
      %v5565 = vpow.pop %v5564
      %v5566 = vmul.f32 %v5455, 1.442695
      %v5567 = vpow.pop %v5566
      %v5568 = vmul.f32 %v5456, 1.442695
      %v5569 = vpow.pop %v5568
      %v5570 = vmul.f32 %v5457, 1.442695
      %v5571 = vpow.pop %v5570
      %v5572 = vmul.f32 %v5458, 1.442695
      %v5573 = vpow.pop %v5572
      %v5574 = vmul.f32 %v5459, 1.442695
      %v5575 = vpow.pop %v5574
      %v5576 = vmul.f32 %v5460, 1.442695
      %v5577 = vpow.pop %v5576
      %v5578 = vmul.f32 %v5461, 1.442695
      %v5579 = vpow.pop %v5578
      %v5580 = vmul.f32 %v5462, 1.442695
      %v5581 = vpow.pop %v5580
      %v5582 = vmul.f32 %v5463, 1.442695
      %v5583 = vpow.pop %v5582
      %v5584 = vmul.f32 %v5464, 1.442695
      %v5585 = vpow.pop %v5584
      %v5586 = vmul.f32 %v5465, 1.442695
      %v5587 = vpow.pop %v5586
      %v5588 = vmul.f32 %v5466, 1.442695
      %v5589 = vpow.pop %v5588
      %v5590 = vmul.f32 %v5467, 1.442695
      %v5591 = vpow.pop %v5590
      %v5592 = vmul.f32 %v5468, 1.442695
      %v5593 = vpow.pop %v5592
      %v5594 = vmul.f32 %v5469, 1.442695
      %v5595 = vpow.pop %v5594
      %v5596 = vmul.f32 %v5470, 1.442695
      %v5597 = vpow.pop %v5596
      %v5598 = vmul.f32 %v5471, 1.442695
      %v5599 = vpow.pop %v5598
      %v5600 = vadd.f32 %v5473, 1.0
      %v5601 = vadd.f32 %v5475, 1.0
      %v5602 = vadd.f32 %v5477, 1.0
      %v5603 = vadd.f32 %v5479, 1.0
      %v5604 = vadd.f32 %v5481, 1.0
      %v5605 = vadd.f32 %v5483, 1.0
      %v5606 = vadd.f32 %v5485, 1.0
      %v5607 = vadd.f32 %v5487, 1.0
      %v5608 = vadd.f32 %v5489, 1.0
      %v5609 = vadd.f32 %v5491, 1.0
      %v5610 = vadd.f32 %v5493, 1.0
      %v5611 = vadd.f32 %v5495, 1.0
      %v5612 = vadd.f32 %v5497, 1.0
      %v5613 = vadd.f32 %v5499, 1.0
      %v5614 = vadd.f32 %v5501, 1.0
      %v5615 = vadd.f32 %v5503, 1.0
      %v5616 = vadd.f32 %v5505, 1.0
      %v5617 = vadd.f32 %v5507, 1.0
      %v5618 = vadd.f32 %v5509, 1.0
      %v5619 = vadd.f32 %v5511, 1.0
      %v5620 = vadd.f32 %v5513, 1.0
      %v5621 = vadd.f32 %v5515, 1.0
      %v5622 = vadd.f32 %v5517, 1.0
      %v5623 = vadd.f32 %v5519, 1.0
      %v5624 = vadd.f32 %v5521, 1.0
      %v5625 = vadd.f32 %v5523, 1.0
      %v5626 = vadd.f32 %v5525, 1.0
      %v5627 = vadd.f32 %v5527, 1.0
      %v5628 = vadd.f32 %v5529, 1.0
      %v5629 = vadd.f32 %v5531, 1.0
      %v5630 = vadd.f32 %v5533, 1.0
      %v5631 = vadd.f32 %v5535, 1.0
      %v5632 = vadd.f32 %v5537, 1.0
      %v5633 = vadd.f32 %v5539, 1.0
      %v5634 = vadd.f32 %v5541, 1.0
      %v5635 = vadd.f32 %v5543, 1.0
      %v5636 = vadd.f32 %v5545, 1.0
      %v5637 = vadd.f32 %v5547, 1.0
      %v5638 = vadd.f32 %v5549, 1.0
      %v5639 = vadd.f32 %v5551, 1.0
      %v5640 = vadd.f32 %v5553, 1.0
      %v5641 = vadd.f32 %v5555, 1.0
      %v5642 = vadd.f32 %v5557, 1.0
      %v5643 = vadd.f32 %v5559, 1.0
      %v5644 = vadd.f32 %v5561, 1.0
      %v5645 = vadd.f32 %v5563, 1.0
      %v5646 = vadd.f32 %v5565, 1.0
      %v5647 = vadd.f32 %v5567, 1.0
      %v5648 = vadd.f32 %v5569, 1.0
      %v5649 = vadd.f32 %v5571, 1.0
      %v5650 = vadd.f32 %v5573, 1.0
      %v5651 = vadd.f32 %v5575, 1.0
      %v5652 = vadd.f32 %v5577, 1.0
      %v5653 = vadd.f32 %v5579, 1.0
      %v5654 = vadd.f32 %v5581, 1.0
      %v5655 = vadd.f32 %v5583, 1.0
      %v5656 = vadd.f32 %v5585, 1.0
      %v5657 = vadd.f32 %v5587, 1.0
      %v5658 = vadd.f32 %v5589, 1.0
      %v5659 = vadd.f32 %v5591, 1.0
      %v5660 = vadd.f32 %v5593, 1.0
      %v5661 = vadd.f32 %v5595, 1.0
      %v5662 = vadd.f32 %v5597, 1.0
      %v5663 = vadd.f32 %v5599, 1.0
      %v5664 = vmul.f32 %v5600, %v5600
      %v5665 = vmul.f32 %v5601, %v5601
      %v5666 = vmul.f32 %v5602, %v5602
      %v5667 = vmul.f32 %v5603, %v5603
      %v5668 = vmul.f32 %v5604, %v5604
      %v5669 = vmul.f32 %v5605, %v5605
      %v5670 = vmul.f32 %v5606, %v5606
      %v5671 = vmul.f32 %v5607, %v5607
      %v5672 = vmul.f32 %v5608, %v5608
      %v5673 = vmul.f32 %v5609, %v5609
      %v5674 = vmul.f32 %v5610, %v5610
      %v5675 = vmul.f32 %v5611, %v5611
      %v5676 = vmul.f32 %v5612, %v5612
      %v5677 = vmul.f32 %v5613, %v5613
      %v5678 = vmul.f32 %v5614, %v5614
      %v5679 = vmul.f32 %v5615, %v5615
      %v5680 = vmul.f32 %v5616, %v5616
      %v5681 = vmul.f32 %v5617, %v5617
      %v5682 = vmul.f32 %v5618, %v5618
      %v5683 = vmul.f32 %v5619, %v5619
      %v5684 = vmul.f32 %v5620, %v5620
      %v5685 = vmul.f32 %v5621, %v5621
      %v5686 = vmul.f32 %v5622, %v5622
      %v5687 = vmul.f32 %v5623, %v5623
      %v5688 = vmul.f32 %v5624, %v5624
      %v5689 = vmul.f32 %v5625, %v5625
      %v5690 = vmul.f32 %v5626, %v5626
      %v5691 = vmul.f32 %v5627, %v5627
      %v5692 = vmul.f32 %v5628, %v5628
      %v5693 = vmul.f32 %v5629, %v5629
      %v5694 = vmul.f32 %v5630, %v5630
      %v5695 = vmul.f32 %v5631, %v5631
      %v5696 = vmul.f32 %v5632, %v5632
      %v5697 = vmul.f32 %v5633, %v5633
      %v5698 = vmul.f32 %v5634, %v5634
      %v5699 = vmul.f32 %v5635, %v5635
      %v5700 = vmul.f32 %v5636, %v5636
      %v5701 = vmul.f32 %v5637, %v5637
      %v5702 = vmul.f32 %v5638, %v5638
      %v5703 = vmul.f32 %v5639, %v5639
      %v5704 = vmul.f32 %v5640, %v5640
      %v5705 = vmul.f32 %v5641, %v5641
      %v5706 = vmul.f32 %v5642, %v5642
      %v5707 = vmul.f32 %v5643, %v5643
      %v5708 = vmul.f32 %v5644, %v5644
      %v5709 = vmul.f32 %v5645, %v5645
      %v5710 = vmul.f32 %v5646, %v5646
      %v5711 = vmul.f32 %v5647, %v5647
      %v5712 = vmul.f32 %v5648, %v5648
      %v5713 = vmul.f32 %v5649, %v5649
      %v5714 = vmul.f32 %v5650, %v5650
      %v5715 = vmul.f32 %v5651, %v5651
      %v5716 = vmul.f32 %v5652, %v5652
      %v5717 = vmul.f32 %v5653, %v5653
      %v5718 = vmul.f32 %v5654, %v5654
      %v5719 = vmul.f32 %v5655, %v5655
      %v5720 = vmul.f32 %v5656, %v5656
      %v5721 = vmul.f32 %v5657, %v5657
      %v5722 = vmul.f32 %v5658, %v5658
      %v5723 = vmul.f32 %v5659, %v5659
      %v5724 = vmul.f32 %v5660, %v5660
      %v5725 = vmul.f32 %v5661, %v5661
      %v5726 = vmul.f32 %v5662, %v5662
      %v5727 = vmul.f32 %v5663, %v5663
      %v5728 = vsub.f32 %v5664, 1.0
      %v5729 = vsub.f32 %v5665, 1.0
      %v5730 = vsub.f32 %v5666, 1.0
      %v5731 = vsub.f32 %v5667, 1.0
      %v5732 = vsub.f32 %v5668, 1.0
      %v5733 = vsub.f32 %v5669, 1.0
      %v5734 = vsub.f32 %v5670, 1.0
      %v5735 = vsub.f32 %v5671, 1.0
      %v5736 = vsub.f32 %v5672, 1.0
      %v5737 = vsub.f32 %v5673, 1.0
      %v5738 = vsub.f32 %v5674, 1.0
      %v5739 = vsub.f32 %v5675, 1.0
      %v5740 = vsub.f32 %v5676, 1.0
      %v5741 = vsub.f32 %v5677, 1.0
      %v5742 = vsub.f32 %v5678, 1.0
      %v5743 = vsub.f32 %v5679, 1.0
      %v5744 = vsub.f32 %v5680, 1.0
      %v5745 = vsub.f32 %v5681, 1.0
      %v5746 = vsub.f32 %v5682, 1.0
      %v5747 = vsub.f32 %v5683, 1.0
      %v5748 = vsub.f32 %v5684, 1.0
      %v5749 = vsub.f32 %v5685, 1.0
      %v5750 = vsub.f32 %v5686, 1.0
      %v5751 = vsub.f32 %v5687, 1.0
      %v5752 = vsub.f32 %v5688, 1.0
      %v5753 = vsub.f32 %v5689, 1.0
      %v5754 = vsub.f32 %v5690, 1.0
      %v5755 = vsub.f32 %v5691, 1.0
      %v5756 = vsub.f32 %v5692, 1.0
      %v5757 = vsub.f32 %v5693, 1.0
      %v5758 = vsub.f32 %v5694, 1.0
      %v5759 = vsub.f32 %v5695, 1.0
      %v5760 = vsub.f32 %v5696, 1.0
      %v5761 = vsub.f32 %v5697, 1.0
      %v5762 = vsub.f32 %v5698, 1.0
      %v5763 = vsub.f32 %v5699, 1.0
      %v5764 = vsub.f32 %v5700, 1.0
      %v5765 = vsub.f32 %v5701, 1.0
      %v5766 = vsub.f32 %v5702, 1.0
      %v5767 = vsub.f32 %v5703, 1.0
      %v5768 = vsub.f32 %v5704, 1.0
      %v5769 = vsub.f32 %v5705, 1.0
      %v5770 = vsub.f32 %v5706, 1.0
      %v5771 = vsub.f32 %v5707, 1.0
      %v5772 = vsub.f32 %v5708, 1.0
      %v5773 = vsub.f32 %v5709, 1.0
      %v5774 = vsub.f32 %v5710, 1.0
      %v5775 = vsub.f32 %v5711, 1.0
      %v5776 = vsub.f32 %v5712, 1.0
      %v5777 = vsub.f32 %v5713, 1.0
      %v5778 = vsub.f32 %v5714, 1.0
      %v5779 = vsub.f32 %v5715, 1.0
      %v5780 = vsub.f32 %v5716, 1.0
      %v5781 = vsub.f32 %v5717, 1.0
      %v5782 = vsub.f32 %v5718, 1.0
      %v5783 = vsub.f32 %v5719, 1.0
      %v5784 = vsub.f32 %v5720, 1.0
      %v5785 = vsub.f32 %v5721, 1.0
      %v5786 = vsub.f32 %v5722, 1.0
      %v5787 = vsub.f32 %v5723, 1.0
      %v5788 = vsub.f32 %v5724, 1.0
      %v5789 = vsub.f32 %v5725, 1.0
      %v5790 = vsub.f32 %v5726, 1.0
      %v5791 = vsub.f32 %v5727, 1.0
      %v5792 = vmul.f32 %v1098, %v5728
      %v5793 = vmul.f32 %v1100, %v5729
      %v5794 = vmul.f32 %v1102, %v5730
      %v5795 = vmul.f32 %v1104, %v5731
      %v5796 = vmul.f32 %v1108, %v5732
      %v5797 = vmul.f32 %v1110, %v5733
      %v5798 = vmul.f32 %v1112, %v5734
      %v5799 = vmul.f32 %v1114, %v5735
      %v5800 = vmul.f32 %v1118, %v5736
      %v5801 = vmul.f32 %v1120, %v5737
      %v5802 = vmul.f32 %v1122, %v5738
      %v5803 = vmul.f32 %v1124, %v5739
      %v5804 = vmul.f32 %v1128, %v5740
      %v5805 = vmul.f32 %v1130, %v5741
      %v5806 = vmul.f32 %v1132, %v5742
      %v5807 = vmul.f32 %v1134, %v5743
      %v5808 = vmul.f32 %v1138, %v5744
      %v5809 = vmul.f32 %v1140, %v5745
      %v5810 = vmul.f32 %v1142, %v5746
      %v5811 = vmul.f32 %v1144, %v5747
      %v5812 = vmul.f32 %v1148, %v5748
      %v5813 = vmul.f32 %v1150, %v5749
      %v5814 = vmul.f32 %v1152, %v5750
      %v5815 = vmul.f32 %v1154, %v5751
      %v5816 = vmul.f32 %v1158, %v5752
      %v5817 = vmul.f32 %v1160, %v5753
      %v5818 = vmul.f32 %v1162, %v5754
      %v5819 = vmul.f32 %v1164, %v5755
      %v5820 = vmul.f32 %v1168, %v5756
      %v5821 = vmul.f32 %v1170, %v5757
      %v5822 = vmul.f32 %v1172, %v5758
      %v5823 = vmul.f32 %v1174, %v5759
      %v5824 = vmul.f32 %v1178, %v5760
      %v5825 = vmul.f32 %v1180, %v5761
      %v5826 = vmul.f32 %v1182, %v5762
      %v5827 = vmul.f32 %v1184, %v5763
      %v5828 = vmul.f32 %v1188, %v5764
      %v5829 = vmul.f32 %v1190, %v5765
      %v5830 = vmul.f32 %v1192, %v5766
      %v5831 = vmul.f32 %v1194, %v5767
      %v5832 = vmul.f32 %v1198, %v5768
      %v5833 = vmul.f32 %v1200, %v5769
      %v5834 = vmul.f32 %v1202, %v5770
      %v5835 = vmul.f32 %v1204, %v5771
      %v5836 = vmul.f32 %v1208, %v5772
      %v5837 = vmul.f32 %v1210, %v5773
      %v5838 = vmul.f32 %v1212, %v5774
      %v5839 = vmul.f32 %v1214, %v5775
      %v5840 = vmul.f32 %v1218, %v5776
      %v5841 = vmul.f32 %v1220, %v5777
      %v5842 = vmul.f32 %v1222, %v5778
      %v5843 = vmul.f32 %v1224, %v5779
      %v5844 = vmul.f32 %v1228, %v5780
      %v5845 = vmul.f32 %v1230, %v5781
      %v5846 = vmul.f32 %v1232, %v5782
      %v5847 = vmul.f32 %v1234, %v5783
      %v5848 = vmul.f32 %v1238, %v5784
      %v5849 = vmul.f32 %v1240, %v5785
      %v5850 = vmul.f32 %v1242, %v5786
      %v5851 = vmul.f32 %v1244, %v5787
      %v5852 = vmul.f32 %v1248, %v5788
      %v5853 = vmul.f32 %v1250, %v5789
      %v5854 = vmul.f32 %v1252, %v5790
      %v5855 = vmul.f32 %v1254, %v5791
      %v5856 = vadd.f32 %v5664, 1.0
      %v5857 = vadd.f32 %v5665, 1.0
      %v5858 = vadd.f32 %v5666, 1.0
      %v5859 = vadd.f32 %v5667, 1.0
      %v5860 = vadd.f32 %v5668, 1.0
      %v5861 = vadd.f32 %v5669, 1.0
      %v5862 = vadd.f32 %v5670, 1.0
      %v5863 = vadd.f32 %v5671, 1.0
      %v5864 = vadd.f32 %v5672, 1.0
      %v5865 = vadd.f32 %v5673, 1.0
      %v5866 = vadd.f32 %v5674, 1.0
      %v5867 = vadd.f32 %v5675, 1.0
      %v5868 = vadd.f32 %v5676, 1.0
      %v5869 = vadd.f32 %v5677, 1.0
      %v5870 = vadd.f32 %v5678, 1.0
      %v5871 = vadd.f32 %v5679, 1.0
      %v5872 = vadd.f32 %v5680, 1.0
      %v5873 = vadd.f32 %v5681, 1.0
      %v5874 = vadd.f32 %v5682, 1.0
      %v5875 = vadd.f32 %v5683, 1.0
      %v5876 = vadd.f32 %v5684, 1.0
      %v5877 = vadd.f32 %v5685, 1.0
      %v5878 = vadd.f32 %v5686, 1.0
      %v5879 = vadd.f32 %v5687, 1.0
      %v5880 = vadd.f32 %v5688, 1.0
      %v5881 = vadd.f32 %v5689, 1.0
      %v5882 = vadd.f32 %v5690, 1.0
      %v5883 = vadd.f32 %v5691, 1.0
      %v5884 = vadd.f32 %v5692, 1.0
      %v5885 = vadd.f32 %v5693, 1.0
      %v5886 = vadd.f32 %v5694, 1.0
      %v5887 = vadd.f32 %v5695, 1.0
      %v5888 = vadd.f32 %v5696, 1.0
      %v5889 = vadd.f32 %v5697, 1.0
      %v5890 = vadd.f32 %v5698, 1.0
      %v5891 = vadd.f32 %v5699, 1.0
      %v5892 = vadd.f32 %v5700, 1.0
      %v5893 = vadd.f32 %v5701, 1.0
      %v5894 = vadd.f32 %v5702, 1.0
      %v5895 = vadd.f32 %v5703, 1.0
      %v5896 = vadd.f32 %v5704, 1.0
      %v5897 = vadd.f32 %v5705, 1.0
      %v5898 = vadd.f32 %v5706, 1.0
      %v5899 = vadd.f32 %v5707, 1.0
      %v5900 = vadd.f32 %v5708, 1.0
      %v5901 = vadd.f32 %v5709, 1.0
      %v5902 = vadd.f32 %v5710, 1.0
      %v5903 = vadd.f32 %v5711, 1.0
      %v5904 = vadd.f32 %v5712, 1.0
      %v5905 = vadd.f32 %v5713, 1.0
      %v5906 = vadd.f32 %v5714, 1.0
      %v5907 = vadd.f32 %v5715, 1.0
      %v5908 = vadd.f32 %v5716, 1.0
      %v5909 = vadd.f32 %v5717, 1.0
      %v5910 = vadd.f32 %v5718, 1.0
      %v5911 = vadd.f32 %v5719, 1.0
      %v5912 = vadd.f32 %v5720, 1.0
      %v5913 = vadd.f32 %v5721, 1.0
      %v5914 = vadd.f32 %v5722, 1.0
      %v5915 = vadd.f32 %v5723, 1.0
      %v5916 = vadd.f32 %v5724, 1.0
      %v5917 = vadd.f32 %v5725, 1.0
      %v5918 = vadd.f32 %v5726, 1.0
      %v5919 = vadd.f32 %v5727, 1.0
      %v5920 = vrcp.pop %v5856
      %v5921 = vrcp.pop %v5857
      %v5922 = vrcp.pop %v5858
      %v5923 = vrcp.pop %v5859
      %v5924 = vrcp.pop %v5860
      %v5925 = vrcp.pop %v5861
      %v5926 = vrcp.pop %v5862
      %v5927 = vrcp.pop %v5863
      %v5928 = vrcp.pop %v5864
      %v5929 = vrcp.pop %v5865
      %v5930 = vrcp.pop %v5866
      %v5931 = vrcp.pop %v5867
      %v5932 = vrcp.pop %v5868
      %v5933 = vrcp.pop %v5869
      %v5934 = vrcp.pop %v5870
      %v5935 = vrcp.pop %v5871
      %v5936 = vrcp.pop %v5872
      %v5937 = vrcp.pop %v5873
      %v5938 = vrcp.pop %v5874
      %v5939 = vrcp.pop %v5875
      %v5940 = vrcp.pop %v5876
      %v5941 = vrcp.pop %v5877
      %v5942 = vrcp.pop %v5878
      %v5943 = vrcp.pop %v5879
      %v5944 = vrcp.pop %v5880
      %v5945 = vrcp.pop %v5881
      %v5946 = vrcp.pop %v5882
      %v5947 = vrcp.pop %v5883
      %v5948 = vrcp.pop %v5884
      %v5949 = vrcp.pop %v5885
      %v5950 = vrcp.pop %v5886
      %v5951 = vrcp.pop %v5887
      %v5952 = vrcp.pop %v5888
      %v5953 = vrcp.pop %v5889
      %v5954 = vrcp.pop %v5890
      %v5955 = vrcp.pop %v5891
      %v5956 = vrcp.pop %v5892
      %v5957 = vrcp.pop %v5893
      %v5958 = vrcp.pop %v5894
      %v5959 = vrcp.pop %v5895
      %v5960 = vrcp.pop %v5896
      %v5961 = vrcp.pop %v5897
      %v5962 = vrcp.pop %v5898
      %v5963 = vrcp.pop %v5899
      %v5964 = vrcp.pop %v5900
      %v5965 = vrcp.pop %v5901
      %v5966 = vrcp.pop %v5902
      %v5967 = vrcp.pop %v5903
      %v5968 = vrcp.pop %v5904
      %v5969 = vrcp.pop %v5905
      %v5970 = vrcp.pop %v5906
      %v5971 = vrcp.pop %v5907
      %v5972 = vrcp.pop %v5908
      %v5973 = vrcp.pop %v5909
      %v5974 = vrcp.pop %v5910
      %v5975 = vrcp.pop %v5911
      %v5976 = vrcp.pop %v5912
      %v5977 = vrcp.pop %v5913
      %v5978 = vrcp.pop %v5914
      %v5979 = vrcp.pop %v5915
      %v5980 = vrcp.pop %v5916
      %v5981 = vrcp.pop %v5917
      %v5982 = vrcp.pop %v5918
      %v5983 = vrcp.pop %v5919
      %v5984 = vmul.f32 %v5792, %v5920
      %v5985 = vmul.f32 %v5793, %v5921
      %v5986 = vmul.f32 %v5794, %v5922
      %v5987 = vmul.f32 %v5795, %v5923
      %v5988 = vmul.f32 %v5796, %v5924
      %v5989 = vmul.f32 %v5797, %v5925
      %v5990 = vmul.f32 %v5798, %v5926
      %v5991 = vmul.f32 %v5799, %v5927
      %v5992 = vmul.f32 %v5800, %v5928
      %v5993 = vmul.f32 %v5801, %v5929
      %v5994 = vmul.f32 %v5802, %v5930
      %v5995 = vmul.f32 %v5803, %v5931
      %v5996 = vmul.f32 %v5804, %v5932
      %v5997 = vmul.f32 %v5805, %v5933
      %v5998 = vmul.f32 %v5806, %v5934
      %v5999 = vmul.f32 %v5807, %v5935
      %v6000 = vmul.f32 %v5808, %v5936
      %v6001 = vmul.f32 %v5809, %v5937
      %v6002 = vmul.f32 %v5810, %v5938
      %v6003 = vmul.f32 %v5811, %v5939
      %v6004 = vmul.f32 %v5812, %v5940
      %v6005 = vmul.f32 %v5813, %v5941
      %v6006 = vmul.f32 %v5814, %v5942
      %v6007 = vmul.f32 %v5815, %v5943
      %v6008 = vmul.f32 %v5816, %v5944
      %v6009 = vmul.f32 %v5817, %v5945
      %v6010 = vmul.f32 %v5818, %v5946
      %v6011 = vmul.f32 %v5819, %v5947
      %v6012 = vmul.f32 %v5820, %v5948
      %v6013 = vmul.f32 %v5821, %v5949
      %v6014 = vmul.f32 %v5822, %v5950
      %v6015 = vmul.f32 %v5823, %v5951
      %v6016 = vmul.f32 %v5824, %v5952
      %v6017 = vmul.f32 %v5825, %v5953
      %v6018 = vmul.f32 %v5826, %v5954
      %v6019 = vmul.f32 %v5827, %v5955
      %v6020 = vmul.f32 %v5828, %v5956
      %v6021 = vmul.f32 %v5829, %v5957
      %v6022 = vmul.f32 %v5830, %v5958
      %v6023 = vmul.f32 %v5831, %v5959
      %v6024 = vmul.f32 %v5832, %v5960
      %v6025 = vmul.f32 %v5833, %v5961
      %v6026 = vmul.f32 %v5834, %v5962
      %v6027 = vmul.f32 %v5835, %v5963
      %v6028 = vmul.f32 %v5836, %v5964
      %v6029 = vmul.f32 %v5837, %v5965
      %v6030 = vmul.f32 %v5838, %v5966
      %v6031 = vmul.f32 %v5839, %v5967
      %v6032 = vmul.f32 %v5840, %v5968
      %v6033 = vmul.f32 %v5841, %v5969
      %v6034 = vmul.f32 %v5842, %v5970
      %v6035 = vmul.f32 %v5843, %v5971
      %v6036 = vmul.f32 %v5844, %v5972
      %v6037 = vmul.f32 %v5845, %v5973
      %v6038 = vmul.f32 %v5846, %v5974
      %v6039 = vmul.f32 %v5847, %v5975
      %v6040 = vmul.f32 %v5848, %v5976
      %v6041 = vmul.f32 %v5849, %v5977
      %v6042 = vmul.f32 %v5850, %v5978
      %v6043 = vmul.f32 %v5851, %v5979
      %v6044 = vmul.f32 %v5852, %v5980
      %v6045 = vmul.f32 %v5853, %v5981
      %v6046 = vmul.f32 %v5854, %v5982
      %v6047 = vmul.f32 %v5855, %v5983
      %v6048 = vmul.f32 %v5984, %v1399
      %v6049 = vmul.f32 %v5986, %v1403
      %v6050 = vmul.f32 %v5988, %v1409
      %v6051 = vmul.f32 %v5990, %v1413
      %v6052 = vmul.f32 %v5992, %v1419
      %v6053 = vmul.f32 %v5994, %v1423
      %v6054 = vmul.f32 %v5996, %v1429
      %v6055 = vmul.f32 %v5998, %v1433
      %v6056 = vmul.f32 %v6000, %v1439
      %v6057 = vmul.f32 %v6002, %v1443
      %v6058 = vmul.f32 %v6004, %v1449
      %v6059 = vmul.f32 %v6006, %v1453
      %v6060 = vmul.f32 %v6008, %v1459
      %v6061 = vmul.f32 %v6010, %v1463
      %v6062 = vmul.f32 %v6012, %v1469
      %v6063 = vmul.f32 %v6014, %v1473
      %v6064 = vmul.f32 %v6016, %v1479
      %v6065 = vmul.f32 %v6018, %v1483
      %v6066 = vmul.f32 %v6020, %v1489
      %v6067 = vmul.f32 %v6022, %v1493
      %v6068 = vmul.f32 %v6024, %v1499
      %v6069 = vmul.f32 %v6026, %v1503
      %v6070 = vmul.f32 %v6028, %v1509
      %v6071 = vmul.f32 %v6030, %v1513
      %v6072 = vmul.f32 %v6032, %v1519
      %v6073 = vmul.f32 %v6034, %v1523
      %v6074 = vmul.f32 %v6036, %v1529
      %v6075 = vmul.f32 %v6038, %v1533
      %v6076 = vmul.f32 %v6040, %v1539
      %v6077 = vmul.f32 %v6042, %v1543
      %v6078 = vmul.f32 %v6044, %v1549
      %v6079 = vmul.f32 %v6046, %v1553
      %v6080 = vpack.c.bf16 %v6049, %v6048
      %v6081 = vpack.c.bf16 %v6051, %v6050
      %v6082 = vpack.c.bf16 %v6053, %v6052
      %v6083 = vpack.c.bf16 %v6055, %v6054
      %v6084 = vpack.c.bf16 %v6057, %v6056
      %v6085 = vpack.c.bf16 %v6059, %v6058
      %v6086 = vpack.c.bf16 %v6061, %v6060
      %v6087 = vpack.c.bf16 %v6063, %v6062
      %v6088 = vpack.c.bf16 %v6065, %v6064
      %v6089 = vpack.c.bf16 %v6067, %v6066
      %v6090 = vpack.c.bf16 %v6069, %v6068
      %v6091 = vpack.c.bf16 %v6071, %v6070
      %v6092 = vpack.c.bf16 %v6073, %v6072
      %v6093 = vpack.c.bf16 %v6075, %v6074
      %v6094 = vpack.c.bf16 %v6077, %v6076
      %v6095 = vpack.c.bf16 %v6079, %v6078
      %v6096 = vmul.f32 %v5985, %v5376
      %v6097 = vmul.f32 %v5987, %v5377
      %v6098 = vmul.f32 %v5989, %v5378
      %v6099 = vmul.f32 %v5991, %v5379
      %v6100 = vmul.f32 %v5993, %v5380
      %v6101 = vmul.f32 %v5995, %v5381
      %v6102 = vmul.f32 %v5997, %v5382
      %v6103 = vmul.f32 %v5999, %v5383
      %v6104 = vmul.f32 %v6001, %v5384
      %v6105 = vmul.f32 %v6003, %v5385
      %v6106 = vmul.f32 %v6005, %v5386
      %v6107 = vmul.f32 %v6007, %v5387
      %v6108 = vmul.f32 %v6009, %v5388
      %v6109 = vmul.f32 %v6011, %v5389
      %v6110 = vmul.f32 %v6013, %v5390
      %v6111 = vmul.f32 %v6015, %v5391
      %v6112 = vmul.f32 %v6017, %v5392
      %v6113 = vmul.f32 %v6019, %v5393
      %v6114 = vmul.f32 %v6021, %v5394
      %v6115 = vmul.f32 %v6023, %v5395
      %v6116 = vmul.f32 %v6025, %v5396
      %v6117 = vmul.f32 %v6027, %v5397
      %v6118 = vmul.f32 %v6029, %v5398
      %v6119 = vmul.f32 %v6031, %v5399
      %v6120 = vmul.f32 %v6033, %v5400
      %v6121 = vmul.f32 %v6035, %v5401
      %v6122 = vmul.f32 %v6037, %v5402
      %v6123 = vmul.f32 %v6039, %v5403
      %v6124 = vmul.f32 %v6041, %v5404
      %v6125 = vmul.f32 %v6043, %v5405
      %v6126 = vmul.f32 %v6045, %v5406
      %v6127 = vmul.f32 %v6047, %v5407
      %v6128 = vpack.c.bf16 %v6097, %v6096
      %v6129 = vpack.c.bf16 %v6099, %v6098
      %v6130 = vpack.c.bf16 %v6101, %v6100
      %v6131 = vpack.c.bf16 %v6103, %v6102
      %v6132 = vpack.c.bf16 %v6105, %v6104
      %v6133 = vpack.c.bf16 %v6107, %v6106
      %v6134 = vpack.c.bf16 %v6109, %v6108
      %v6135 = vpack.c.bf16 %v6111, %v6110
      %v6136 = vpack.c.bf16 %v6113, %v6112
      %v6137 = vpack.c.bf16 %v6115, %v6114
      %v6138 = vpack.c.bf16 %v6117, %v6116
      %v6139 = vpack.c.bf16 %v6119, %v6118
      %v6140 = vpack.c.bf16 %v6121, %v6120
      %v6141 = vpack.c.bf16 %v6123, %v6122
      %v6142 = vpack.c.bf16 %v6125, %v6124
      %v6143 = vpack.c.bf16 %v6127, %v6126
      %v6144 = vld [vmem:[%s561] sm:$0xf]
      %v6145 = vld [vmem:[%s561 + $0x4] sm:$0xf]
      %v6146 = vld [vmem:[%s561 + $0x8] sm:$0xf]
      %v6147 = vld [vmem:[%s561 + $0xc] sm:$0xf]
      %v6148 = vld [vmem:[%s561 + $0x10] sm:$0xf]
      %v6149 = vld [vmem:[%s561 + $0x14] sm:$0xf]
      %v6150 = vld [vmem:[%s561 + $0x18] sm:$0xf]
      %v6151 = vld [vmem:[%s561 + $0x1c] sm:$0xf]
      %v6152 = vld [vmem:[%s561 + $0x20] sm:$0xf]
      %v6153 = vld [vmem:[%s561 + $0x24] sm:$0xf]
      %v6154 = vld [vmem:[%s561 + $0x28] sm:$0xf]
      %v6155 = vld [vmem:[%s561 + $0x2c] sm:$0xf]
      %v6156 = vld [vmem:[%s561 + $0x30] sm:$0xf]
      %v6157 = vld [vmem:[%s561 + $0x34] sm:$0xf]
      %v6158 = vld [vmem:[%s561 + $0x38] sm:$0xf]
      %v6159 = vld [vmem:[%s561 + $0x3c] sm:$0xf]
      %v6160 = vld [vmem:[%s566] sm:$0xf]
      %v6161 = vld [vmem:[%s566 + $0x4] sm:$0xf]
      %v6162 = vld [vmem:[%s566 + $0x8] sm:$0xf]
      %v6163 = vld [vmem:[%s566 + $0xc] sm:$0xf]
      %v6164 = vld [vmem:[%s566 + $0x10] sm:$0xf]
      %v6165 = vld [vmem:[%s566 + $0x14] sm:$0xf]
      %v6166 = vld [vmem:[%s566 + $0x18] sm:$0xf]
      %v6167 = vld [vmem:[%s566 + $0x1c] sm:$0xf]
      %v6168 = vld [vmem:[%s566 + $0x20] sm:$0xf]
      %v6169 = vld [vmem:[%s566 + $0x24] sm:$0xf]
      %v6170 = vld [vmem:[%s566 + $0x28] sm:$0xf]
      %v6171 = vld [vmem:[%s566 + $0x2c] sm:$0xf]
      %v6172 = vld [vmem:[%s566 + $0x30] sm:$0xf]
      %v6173 = vld [vmem:[%s566 + $0x34] sm:$0xf]
      %v6174 = vld [vmem:[%s566 + $0x38] sm:$0xf]
      %v6175 = vld [vmem:[%s566 + $0x3c] sm:$0xf]
      %v6192 = vunpack.c.l.b16 %v6160
      %v6193 = vunpack.c.l.b16 %v6161
      %v6194 = vunpack.c.l.b16 %v6162
      %v6195 = vunpack.c.l.b16 %v6163
      %v6196 = vunpack.c.l.b16 %v6164
      %v6197 = vunpack.c.l.b16 %v6165
      %v6198 = vunpack.c.l.b16 %v6166
      %v6199 = vunpack.c.l.b16 %v6167
      %v6200 = vunpack.c.l.b16 %v6168
      %v6201 = vunpack.c.l.b16 %v6169
      %v6202 = vunpack.c.l.b16 %v6170
      %v6203 = vunpack.c.l.b16 %v6171
      %v6204 = vunpack.c.l.b16 %v6172
      %v6205 = vunpack.c.l.b16 %v6173
      %v6206 = vunpack.c.l.b16 %v6174
      %v6207 = vunpack.c.l.b16 %v6175
      %v6208 = vpack.c.b16 %v6193, %v6192
      %v6209 = vpack.c.b16 %v6195, %v6194
      %v6210 = vpack.c.b16 %v6197, %v6196
      %v6211 = vpack.c.b16 %v6199, %v6198
      %v6212 = vpack.c.b16 %v6201, %v6200
      %v6213 = vpack.c.b16 %v6203, %v6202
      %v6214 = vpack.c.b16 %v6205, %v6204
      %v6215 = vpack.c.b16 %v6207, %v6206
      %6224 = vmatprep.subr.bf16.mxu0 0
      %6225 = vmatpush1.bf16.msra.mxu0 %v6215
      %6226 = vmatprep.subr.bf16.mxu0 0
      %6227 = vmatpush1.bf16.msra.mxu0 %v6214
      %6228 = vmatprep.subr.bf16.mxu0 0
      %6229 = vmatpush1.bf16.msra.mxu0 %v6213
      %6230 = vmatprep.subr.bf16.mxu0 0
      %6231 = vmatpush1.bf16.msra.mxu0 %v6212
      %6232 = vmatprep.subr.bf16.mxu0 0
      %6233 = vmatpush1.bf16.msra.mxu0 %v6211
      %6234 = vmatprep.subr.bf16.mxu0 0
      %6235 = vmatpush1.bf16.msra.mxu0 %v6210
      %6236 = vmatprep.subr.bf16.mxu0 0
      %6237 = vmatpush1.bf16.msra.mxu0 %v6209
      %6238 = vmatprep.subr.bf16.mxu0 0
      %6239 = vmatpush1.bf16.msra.mxu0 %v6208
      %6240 = vmatprep.subr.bf16.mxu0 0
      %6241 = vmatpush2.bf16.msra.mxu0 0
      %6242 = vmatprep.subr.bf16.mxu0 0
      %6243 = vmatpush2.bf16.msra.mxu0 0
      %6244 = vmatprep.subr.bf16.mxu0 0
      %6245 = vmatpush2.bf16.msra.mxu0 0
      %6246 = vmatprep.subr.bf16.mxu0 0
      %6247 = vmatpush2.bf16.msra.mxu0 0
      %6248 = vmatprep.subr.bf16.mxu0 0
      %6249 = vmatpush2.bf16.msra.mxu0 0
      %6250 = vmatprep.subr.bf16.mxu0 0
      %6251 = vmatpush2.bf16.msra.mxu0 0
      %6252 = vmatprep.subr.bf16.mxu0 0
      %6253 = vmatpush2.bf16.msra.mxu0 0
      %6254 = vmatprep.subr.bf16.mxu0 0
      %6255 = vmatpush2.bf16.msra.mxu0 0
      %6256 = vmatprep.mubr.bf16.mxu0 0
      %6257 = vmatmul.mubr.bf16.gmra.mxu0 %v6128
      %v6258 = vpop.f32.mrf.mxu0
      %v6259 = vadd.f32 0.0, %v6258
      %v6260 = vpop.f32.mrf.mxu0
      %v6261 = vpop.f32.mrf.mxu0
      %v6262 = vadd.f32 0.0, %v6261
      %v6263 = vpop.f32.mrf.mxu0
      %6264 = vmatprep.mubr.bf16.mxu0 0
      %6265 = vmatmul.mubr.bf16.gmra.mxu0 %v6129
      %v6266 = vpop.f32.mrf.mxu0
      %v6267 = vadd.f32 0.0, %v6266
      %v6268 = vpop.f32.mrf.mxu0
      %v6269 = vpop.f32.mrf.mxu0
      %v6270 = vadd.f32 0.0, %v6269
      %v6271 = vpop.f32.mrf.mxu0
      %6272 = vmatprep.mubr.bf16.mxu0 0
      %6273 = vmatmul.mubr.bf16.gmra.mxu0 %v6130
      %v6274 = vpop.f32.mrf.mxu0
      %v6275 = vadd.f32 0.0, %v6274
      %v6276 = vpop.f32.mrf.mxu0
      %v6277 = vpop.f32.mrf.mxu0
      %v6278 = vadd.f32 0.0, %v6277
      %v6279 = vpop.f32.mrf.mxu0
      %6280 = vmatprep.mubr.bf16.mxu0 0
      %6281 = vmatmul.mubr.bf16.gmra.mxu0 %v6131
      %v6282 = vpop.f32.mrf.mxu0
      %v6283 = vadd.f32 0.0, %v6282
      %v6284 = vpop.f32.mrf.mxu0
      %v6285 = vpop.f32.mrf.mxu0
      %v6286 = vadd.f32 0.0, %v6285
      %v6287 = vpop.f32.mrf.mxu0
      %6288 = vmatprep.mubr.bf16.mxu0 0
      %6289 = vmatmul.mubr.bf16.gmra.mxu0 %v6132
      %v6290 = vpop.f32.mrf.mxu0
      %v6291 = vadd.f32 0.0, %v6290
      %v6292 = vpop.f32.mrf.mxu0
      %v6293 = vpop.f32.mrf.mxu0
      %v6294 = vadd.f32 0.0, %v6293
      %v6295 = vpop.f32.mrf.mxu0
      %6296 = vmatprep.mubr.bf16.mxu0 0
      %6297 = vmatmul.mubr.bf16.gmra.mxu0 %v6133
      %v6298 = vpop.f32.mrf.mxu0
      %v6299 = vadd.f32 0.0, %v6298
      %v6300 = vpop.f32.mrf.mxu0
      %v6301 = vpop.f32.mrf.mxu0
      %v6302 = vadd.f32 0.0, %v6301
      %v6303 = vpop.f32.mrf.mxu0
      %6304 = vmatprep.mubr.bf16.mxu0 0
      %6305 = vmatmul.mubr.bf16.gmra.mxu0 %v6134
      %v6306 = vpop.f32.mrf.mxu0
      %v6307 = vadd.f32 0.0, %v6306
      %v6308 = vpop.f32.mrf.mxu0
      %v6309 = vpop.f32.mrf.mxu0
      %v6310 = vadd.f32 0.0, %v6309
      %v6311 = vpop.f32.mrf.mxu0
      %6312 = vmatprep.mubr.bf16.mxu0 0
      %6313 = vmatmul.mubr.bf16.gmra.mxu0 %v6135
      %v6314 = vpop.f32.mrf.mxu0
      %v6315 = vadd.f32 0.0, %v6314
      %v6316 = vpop.f32.mrf.mxu0
      %v6317 = vpop.f32.mrf.mxu0
      %v6318 = vadd.f32 0.0, %v6317
      %v6319 = vpop.f32.mrf.mxu0
      %6320 = vmatprep.mubr.bf16.mxu0 0
      %6321 = vmatmul.mubr.bf16.gmra.mxu0 %v6136
      %v6322 = vpop.f32.mrf.mxu0
      %v6323 = vadd.f32 0.0, %v6322
      %v6324 = vpop.f32.mrf.mxu0
      %v6325 = vpop.f32.mrf.mxu0
      %v6326 = vadd.f32 0.0, %v6325
      %v6327 = vpop.f32.mrf.mxu0
      %6328 = vmatprep.mubr.bf16.mxu0 0
      %6329 = vmatmul.mubr.bf16.gmra.mxu0 %v6137
      %v6330 = vpop.f32.mrf.mxu0
      %v6331 = vadd.f32 0.0, %v6330
      %v6332 = vpop.f32.mrf.mxu0
      %v6333 = vpop.f32.mrf.mxu0
      %v6334 = vadd.f32 0.0, %v6333
      %v6335 = vpop.f32.mrf.mxu0
      %6336 = vmatprep.mubr.bf16.mxu0 0
      %6337 = vmatmul.mubr.bf16.gmra.mxu0 %v6138
      %v6338 = vpop.f32.mrf.mxu0
      %v6339 = vadd.f32 0.0, %v6338
      %v6340 = vpop.f32.mrf.mxu0
      %v6341 = vpop.f32.mrf.mxu0
      %v6342 = vadd.f32 0.0, %v6341
      %v6343 = vpop.f32.mrf.mxu0
      %6344 = vmatprep.mubr.bf16.mxu0 0
      %6345 = vmatmul.mubr.bf16.gmra.mxu0 %v6139
      %v6346 = vpop.f32.mrf.mxu0
      %v6347 = vadd.f32 0.0, %v6346
      %v6348 = vpop.f32.mrf.mxu0
      %v6349 = vpop.f32.mrf.mxu0
      %v6350 = vadd.f32 0.0, %v6349
      %v6351 = vpop.f32.mrf.mxu0
      %6352 = vmatprep.mubr.bf16.mxu0 0
      %6353 = vmatmul.mubr.bf16.gmra.mxu0 %v6140
      %v6354 = vpop.f32.mrf.mxu0
      %v6355 = vadd.f32 0.0, %v6354
      %v6356 = vpop.f32.mrf.mxu0
      %v6357 = vpop.f32.mrf.mxu0
      %v6358 = vadd.f32 0.0, %v6357
      %v6359 = vpop.f32.mrf.mxu0
      %6360 = vmatprep.mubr.bf16.mxu0 0
      %6361 = vmatmul.mubr.bf16.gmra.mxu0 %v6141
      %v6362 = vpop.f32.mrf.mxu0
      %v6363 = vadd.f32 0.0, %v6362
      %v6364 = vpop.f32.mrf.mxu0
      %v6365 = vpop.f32.mrf.mxu0
      %v6366 = vadd.f32 0.0, %v6365
      %v6367 = vpop.f32.mrf.mxu0
      %6368 = vmatprep.mubr.bf16.mxu0 0
      %6369 = vmatmul.mubr.bf16.gmra.mxu0 %v6142
      %v6370 = vpop.f32.mrf.mxu0
      %v6371 = vadd.f32 0.0, %v6370
      %v6372 = vpop.f32.mrf.mxu0
      %v6373 = vpop.f32.mrf.mxu0
      %v6374 = vadd.f32 0.0, %v6373
      %v6375 = vpop.f32.mrf.mxu0
      %6376 = vmatprep.mubr.bf16.mxu0 0
      %6377 = vmatmul.mubr.bf16.gmra.mxu0 %v6143
      %v6378 = vpop.f32.mrf.mxu0
      %v6379 = vadd.f32 0.0, %v6378
      %v6380 = vpop.f32.mrf.mxu0
      %v6381 = vpop.f32.mrf.mxu0
      %v6382 = vadd.f32 0.0, %v6381
      %v6383 = vpop.f32.mrf.mxu0
      %6384 = vdwg.mxu0
      %v6401 = vunpack.c.l.b16 %v6144
      %v6402 = vunpack.c.l.b16 %v6145
      %v6403 = vunpack.c.l.b16 %v6146
      %v6404 = vunpack.c.l.b16 %v6147
      %v6405 = vunpack.c.l.b16 %v6148
      %v6406 = vunpack.c.l.b16 %v6149
      %v6407 = vunpack.c.l.b16 %v6150
      %v6408 = vunpack.c.l.b16 %v6151
      %v6409 = vunpack.c.l.b16 %v6152
      %v6410 = vunpack.c.l.b16 %v6153
      %v6411 = vunpack.c.l.b16 %v6154
      %v6412 = vunpack.c.l.b16 %v6155
      %v6413 = vunpack.c.l.b16 %v6156
      %v6414 = vunpack.c.l.b16 %v6157
      %v6415 = vunpack.c.l.b16 %v6158
      %v6416 = vunpack.c.l.b16 %v6159
      %v6417 = vpack.c.b16 %v6402, %v6401
      %v6418 = vpack.c.b16 %v6404, %v6403
      %v6419 = vpack.c.b16 %v6406, %v6405
      %v6420 = vpack.c.b16 %v6408, %v6407
      %v6421 = vpack.c.b16 %v6410, %v6409
      %v6422 = vpack.c.b16 %v6412, %v6411
      %v6423 = vpack.c.b16 %v6414, %v6413
      %v6424 = vpack.c.b16 %v6416, %v6415
      %6433 = vmatprep.subr.bf16.mxu0 0
      %6434 = vmatpush1.bf16.msra.mxu0 %v6424
      %6435 = vmatprep.subr.bf16.mxu0 0
      %6436 = vmatpush1.bf16.msra.mxu0 %v6423
      %6437 = vmatprep.subr.bf16.mxu0 0
      %6438 = vmatpush1.bf16.msra.mxu0 %v6422
      %6439 = vmatprep.subr.bf16.mxu0 0
      %6440 = vmatpush1.bf16.msra.mxu0 %v6421
      %6441 = vmatprep.subr.bf16.mxu0 0
      %6442 = vmatpush1.bf16.msra.mxu0 %v6420
      %6443 = vmatprep.subr.bf16.mxu0 0
      %6444 = vmatpush1.bf16.msra.mxu0 %v6419
      %6445 = vmatprep.subr.bf16.mxu0 0
      %6446 = vmatpush1.bf16.msra.mxu0 %v6418
      %6447 = vmatprep.subr.bf16.mxu0 0
      %6448 = vmatpush1.bf16.msra.mxu0 %v6417
      %6449 = vmatprep.subr.bf16.mxu0 0
      %6450 = vmatpush2.bf16.msra.mxu0 0
      %6451 = vmatprep.subr.bf16.mxu0 0
      %6452 = vmatpush2.bf16.msra.mxu0 0
      %6453 = vmatprep.subr.bf16.mxu0 0
      %6454 = vmatpush2.bf16.msra.mxu0 0
      %6455 = vmatprep.subr.bf16.mxu0 0
      %6456 = vmatpush2.bf16.msra.mxu0 0
      %6457 = vmatprep.subr.bf16.mxu0 0
      %6458 = vmatpush2.bf16.msra.mxu0 0
      %6459 = vmatprep.subr.bf16.mxu0 0
      %6460 = vmatpush2.bf16.msra.mxu0 0
      %6461 = vmatprep.subr.bf16.mxu0 0
      %6462 = vmatpush2.bf16.msra.mxu0 0
      %6463 = vmatprep.subr.bf16.mxu0 0
      %6464 = vmatpush2.bf16.msra.mxu0 0
      %6465 = vmatprep.mubr.bf16.mxu0 0
      %6466 = vmatmul.mubr.bf16.gmra.mxu0 %v6080
      %v6467 = vpop.f32.mrf.mxu0
      %v6468 = vadd.f32 %v6259, %v6467
      %v6469 = vpop.f32.mrf.mxu0
      %v6470 = vpop.f32.mrf.mxu0
      %v6471 = vadd.f32 %v6262, %v6470
      %v6472 = vpop.f32.mrf.mxu0
      %6473 = vmatprep.mubr.bf16.mxu0 0
      %6474 = vmatmul.mubr.bf16.gmra.mxu0 %v6081
      %v6475 = vpop.f32.mrf.mxu0
      %v6476 = vadd.f32 %v6267, %v6475
      %v6477 = vpop.f32.mrf.mxu0
      %v6478 = vpop.f32.mrf.mxu0
      %v6479 = vadd.f32 %v6270, %v6478
      %v6480 = vpop.f32.mrf.mxu0
      %6481 = vmatprep.mubr.bf16.mxu0 0
      %6482 = vmatmul.mubr.bf16.gmra.mxu0 %v6082
      %v6483 = vpop.f32.mrf.mxu0
      %v6484 = vadd.f32 %v6275, %v6483
      %v6485 = vpop.f32.mrf.mxu0
      %v6486 = vpop.f32.mrf.mxu0
      %v6487 = vadd.f32 %v6278, %v6486
      %v6488 = vpop.f32.mrf.mxu0
      %6489 = vmatprep.mubr.bf16.mxu0 0
      %6490 = vmatmul.mubr.bf16.gmra.mxu0 %v6083
      %v6491 = vpop.f32.mrf.mxu0
      %v6492 = vadd.f32 %v6283, %v6491
      %v6493 = vpop.f32.mrf.mxu0
      %v6494 = vpop.f32.mrf.mxu0
      %v6495 = vadd.f32 %v6286, %v6494
      %v6496 = vpop.f32.mrf.mxu0
      %6497 = vmatprep.mubr.bf16.mxu0 0
      %6498 = vmatmul.mubr.bf16.gmra.mxu0 %v6084
      %v6499 = vpop.f32.mrf.mxu0
      %v6500 = vadd.f32 %v6291, %v6499
      %v6501 = vpop.f32.mrf.mxu0
      %v6502 = vpop.f32.mrf.mxu0
      %v6503 = vadd.f32 %v6294, %v6502
      %v6504 = vpop.f32.mrf.mxu0
      %6505 = vmatprep.mubr.bf16.mxu0 0
      %6506 = vmatmul.mubr.bf16.gmra.mxu0 %v6085
      %v6507 = vpop.f32.mrf.mxu0
      %v6508 = vadd.f32 %v6299, %v6507
      %v6509 = vpop.f32.mrf.mxu0
      %v6510 = vpop.f32.mrf.mxu0
      %v6511 = vadd.f32 %v6302, %v6510
      %v6512 = vpop.f32.mrf.mxu0
      %6513 = vmatprep.mubr.bf16.mxu0 0
      %6514 = vmatmul.mubr.bf16.gmra.mxu0 %v6086
      %v6515 = vpop.f32.mrf.mxu0
      %v6516 = vadd.f32 %v6307, %v6515
      %v6517 = vpop.f32.mrf.mxu0
      %v6518 = vpop.f32.mrf.mxu0
      %v6519 = vadd.f32 %v6310, %v6518
      %v6520 = vpop.f32.mrf.mxu0
      %6521 = vmatprep.mubr.bf16.mxu0 0
      %6522 = vmatmul.mubr.bf16.gmra.mxu0 %v6087
      %v6523 = vpop.f32.mrf.mxu0
      %v6524 = vadd.f32 %v6315, %v6523
      %v6525 = vpop.f32.mrf.mxu0
      %v6526 = vpop.f32.mrf.mxu0
      %v6527 = vadd.f32 %v6318, %v6526
      %v6528 = vpop.f32.mrf.mxu0
      %6529 = vmatprep.mubr.bf16.mxu0 0
      %6530 = vmatmul.mubr.bf16.gmra.mxu0 %v6088
      %v6531 = vpop.f32.mrf.mxu0
      %v6532 = vadd.f32 %v6323, %v6531
      %v6533 = vpop.f32.mrf.mxu0
      %v6534 = vpop.f32.mrf.mxu0
      %v6535 = vadd.f32 %v6326, %v6534
      %v6536 = vpop.f32.mrf.mxu0
      %6537 = vmatprep.mubr.bf16.mxu0 0
      %6538 = vmatmul.mubr.bf16.gmra.mxu0 %v6089
      %v6539 = vpop.f32.mrf.mxu0
      %v6540 = vadd.f32 %v6331, %v6539
      %v6541 = vpop.f32.mrf.mxu0
      %v6542 = vpop.f32.mrf.mxu0
      %v6543 = vadd.f32 %v6334, %v6542
      %v6544 = vpop.f32.mrf.mxu0
      %6545 = vmatprep.mubr.bf16.mxu0 0
      %6546 = vmatmul.mubr.bf16.gmra.mxu0 %v6090
      %v6547 = vpop.f32.mrf.mxu0
      %v6548 = vadd.f32 %v6339, %v6547
      %v6549 = vpop.f32.mrf.mxu0
      %v6550 = vpop.f32.mrf.mxu0
      %v6551 = vadd.f32 %v6342, %v6550
      %v6552 = vpop.f32.mrf.mxu0
      %6553 = vmatprep.mubr.bf16.mxu0 0
      %6554 = vmatmul.mubr.bf16.gmra.mxu0 %v6091
      %v6555 = vpop.f32.mrf.mxu0
      %v6556 = vadd.f32 %v6347, %v6555
      %v6557 = vpop.f32.mrf.mxu0
      %v6558 = vpop.f32.mrf.mxu0
      %v6559 = vadd.f32 %v6350, %v6558
      %v6560 = vpop.f32.mrf.mxu0
      %6561 = vmatprep.mubr.bf16.mxu0 0
      %6562 = vmatmul.mubr.bf16.gmra.mxu0 %v6092
      %v6563 = vpop.f32.mrf.mxu0
      %v6564 = vadd.f32 %v6355, %v6563
      %v6565 = vpop.f32.mrf.mxu0
      %v6566 = vpop.f32.mrf.mxu0
      %v6567 = vadd.f32 %v6358, %v6566
      %v6568 = vpop.f32.mrf.mxu0
      %6569 = vmatprep.mubr.bf16.mxu0 0
      %6570 = vmatmul.mubr.bf16.gmra.mxu0 %v6093
      %v6571 = vpop.f32.mrf.mxu0
      %v6572 = vadd.f32 %v6363, %v6571
      %v6573 = vpop.f32.mrf.mxu0
      %v6574 = vpop.f32.mrf.mxu0
      %v6575 = vadd.f32 %v6366, %v6574
      %v6576 = vpop.f32.mrf.mxu0
      %6577 = vmatprep.mubr.bf16.mxu0 0
      %6578 = vmatmul.mubr.bf16.gmra.mxu0 %v6094
      %v6579 = vpop.f32.mrf.mxu0
      %v6580 = vadd.f32 %v6371, %v6579
      %v6581 = vpop.f32.mrf.mxu0
      %v6582 = vpop.f32.mrf.mxu0
      %v6583 = vadd.f32 %v6374, %v6582
      %v6584 = vpop.f32.mrf.mxu0
      %6585 = vmatprep.mubr.bf16.mxu0 0
      %6586 = vmatmul.mubr.bf16.gmra.mxu0 %v6095
      %v6587 = vpop.f32.mrf.mxu0
      %v6588 = vadd.f32 %v6379, %v6587
      %v6589 = vpop.f32.mrf.mxu0
      %v6590 = vpop.f32.mrf.mxu0
      %v6591 = vadd.f32 %v6382, %v6590
      %v6592 = vpop.f32.mrf.mxu0
      %6593 = vdwg.mxu0
      %v6594 = vld [vmem:[%s569] sm:$0x1]
      %v6596 = vlaneseq
      %v6597 = vshrl.u32 %v6596, 7
      %v6598 = vsub.s32 0, %v6597
      %v6599 = vrot.slane %v6594, %v6598
      %v6601 = vadd.f32 %v6468, %v6599
      %v6602 = vadd.f32 %v6471, %v6599
      %v6603 = vadd.f32 %v6476, %v6599
      %v6604 = vadd.f32 %v6479, %v6599
      %v6605 = vadd.f32 %v6484, %v6599
      %v6606 = vadd.f32 %v6487, %v6599
      %v6607 = vadd.f32 %v6492, %v6599
      %v6608 = vadd.f32 %v6495, %v6599
      %v6609 = vadd.f32 %v6500, %v6599
      %v6610 = vadd.f32 %v6503, %v6599
      %v6611 = vadd.f32 %v6508, %v6599
      %v6612 = vadd.f32 %v6511, %v6599
      %v6613 = vadd.f32 %v6516, %v6599
      %v6614 = vadd.f32 %v6519, %v6599
      %v6615 = vadd.f32 %v6524, %v6599
      %v6616 = vadd.f32 %v6527, %v6599
      %v6617 = vadd.f32 %v6532, %v6599
      %v6618 = vadd.f32 %v6535, %v6599
      %v6619 = vadd.f32 %v6540, %v6599
      %v6620 = vadd.f32 %v6543, %v6599
      %v6621 = vadd.f32 %v6548, %v6599
      %v6622 = vadd.f32 %v6551, %v6599
      %v6623 = vadd.f32 %v6556, %v6599
      %v6624 = vadd.f32 %v6559, %v6599
      %v6625 = vadd.f32 %v6564, %v6599
      %v6626 = vadd.f32 %v6567, %v6599
      %v6627 = vadd.f32 %v6572, %v6599
      %v6628 = vadd.f32 %v6575, %v6599
      %v6629 = vadd.f32 %v6580, %v6599
      %v6630 = vadd.f32 %v6583, %v6599
      %v6631 = vadd.f32 %v6588, %v6599
      %v6632 = vadd.f32 %v6591, %v6599
      %v6633 = vadd.f32 %v6601, %v644
      %v6634 = vadd.f32 %v6602, %v645
      %v6635 = vadd.f32 %v6603, %v646
      %v6636 = vadd.f32 %v6604, %v647
      %v6637 = vadd.f32 %v6605, %v648
      %v6638 = vadd.f32 %v6606, %v649
      %v6639 = vadd.f32 %v6607, %v650
      %v6640 = vadd.f32 %v6608, %v651
      %v6641 = vadd.f32 %v6609, %v652
      %v6642 = vadd.f32 %v6610, %v653
      %v6643 = vadd.f32 %v6611, %v654
      %v6644 = vadd.f32 %v6612, %v655
      %v6645 = vadd.f32 %v6613, %v656
      %v6646 = vadd.f32 %v6614, %v657
      %v6647 = vadd.f32 %v6615, %v658
      %v6648 = vadd.f32 %v6616, %v659
      %v6649 = vadd.f32 %v6617, %v660
      %v6650 = vadd.f32 %v6618, %v661
      %v6651 = vadd.f32 %v6619, %v662
      %v6652 = vadd.f32 %v6620, %v663
      %v6653 = vadd.f32 %v6621, %v664
      %v6654 = vadd.f32 %v6622, %v665
      %v6655 = vadd.f32 %v6623, %v666
      %v6656 = vadd.f32 %v6624, %v667
      %v6657 = vadd.f32 %v6625, %v668
      %v6658 = vadd.f32 %v6626, %v669
      %v6659 = vadd.f32 %v6627, %v670
      %v6660 = vadd.f32 %v6628, %v671
      %v6661 = vadd.f32 %v6629, %v672
      %v6662 = vadd.f32 %v6630, %v673
      %v6663 = vadd.f32 %v6631, %v674
      %v6664 = vadd.f32 %v6632, %v675
      %6665 = vst [vmem:[%s574] sm:$0xff] %v6633
      %6666 = vst [vmem:[%s574 + $0x8] sm:$0xff] %v6634
      %6667 = vst [vmem:[%s574 + $0x10] sm:$0xff] %v6635
      %6668 = vst [vmem:[%s574 + $0x18] sm:$0xff] %v6636
      %6669 = vst [vmem:[%s574 + $0x20] sm:$0xff] %v6637
      %6670 = vst [vmem:[%s574 + $0x28] sm:$0xff] %v6638
      %6671 = vst [vmem:[%s574 + $0x30] sm:$0xff] %v6639
      %6672 = vst [vmem:[%s574 + $0x38] sm:$0xff] %v6640
      %6673 = vst [vmem:[%s574 + $0x40] sm:$0xff] %v6641
      %6674 = vst [vmem:[%s574 + $0x48] sm:$0xff] %v6642
      %6675 = vst [vmem:[%s574 + $0x50] sm:$0xff] %v6643
      %6676 = vst [vmem:[%s574 + $0x58] sm:$0xff] %v6644
      %6677 = vst [vmem:[%s574 + $0x60] sm:$0xff] %v6645
      %6678 = vst [vmem:[%s574 + $0x68] sm:$0xff] %v6646
      %6679 = vst [vmem:[%s574 + $0x70] sm:$0xff] %v6647
      %6680 = vst [vmem:[%s574 + $0x78] sm:$0xff] %v6648
      %6681 = vst [vmem:[%s574 + $0x80] sm:$0xff] %v6649
      %6682 = vst [vmem:[%s574 + $0x88] sm:$0xff] %v6650
      %6683 = vst [vmem:[%s574 + $0x90] sm:$0xff] %v6651
      %6684 = vst [vmem:[%s574 + $0x98] sm:$0xff] %v6652
      %6685 = vst [vmem:[%s574 + $0xa0] sm:$0xff] %v6653
      %6686 = vst [vmem:[%s574 + $0xa8] sm:$0xff] %v6654
      %6687 = vst [vmem:[%s574 + $0xb0] sm:$0xff] %v6655
      %6688 = vst [vmem:[%s574 + $0xb8] sm:$0xff] %v6656
      %6689 = vst [vmem:[%s574 + $0xc0] sm:$0xff] %v6657
      %6690 = vst [vmem:[%s574 + $0xc8] sm:$0xff] %v6658
      %6691 = vst [vmem:[%s574 + $0xd0] sm:$0xff] %v6659
      %6692 = vst [vmem:[%s574 + $0xd8] sm:$0xff] %v6660
      %6693 = vst [vmem:[%s574 + $0xe0] sm:$0xff] %v6661
      %6694 = vst [vmem:[%s574 + $0xe8] sm:$0xff] %v6662
      %6695 = vst [vmem:[%s574 + $0xf0] sm:$0xff] %v6663
      %6696 = vst [vmem:[%s574 + $0xf8] sm:$0xff] %v6664
      %p6697 = scmp.lt.s32.totalorder %s26, 1
      %s6698 = scalar_select %p6697, %s26, 1
      %s6699 = smul.addr %s6698, 32
      %s6700 = smul.addr %s6699, 8
      %s6701 = scalar_lea.vmem %s11, %s6700
      // Predicated region
      $region69: #{_lambda_.1} parent=63 // pred_check
        %p6702 = pneg %p338
      $region70: #{_lambda_.1} parent=63 // pred_check_branch
        %6704 = sbr.rel (%p6702) target = $region72
      $region71: #{_lambda_.1} parent=63 // pred_region
        _
      $region72: #{_lambda_.1} parent=63 // pred_fallthru
        _
    $region64: #{_lambda_.1} parent=5 // pred_fallthru
      _
    %p6705 = scmp.le.s32.totalorder 2, %s17
    // Predicated region
    $region73: #{_lambda_.1} parent=5 // pred_check
      %p6706 = pneg %p6705
    $region74: #{_lambda_.1} parent=5 // pred_check_branch
      %6708 = sbr.rel (%p6706) target = $region76
    $region75: #{_lambda_.1} parent=5 // pred_region
      %s6709 = ssub.s32 %s17, 2
      // Predicated region
      $region77: #{_lambda_.1} parent=75 // pred_check
        %p6710 = pneg %p344
      $region78: #{_lambda_.1} parent=75 // pred_check_branch
        %6712 = sbr.rel (%p6710) target = $region80
      $region79: #{_lambda_.1} parent=75 // pred_region
        %p6713 = scmp.lt.s32.totalorder %s28, 1
        %s6714 = scalar_select %p6713, %s28, 1
        %s6715 = smul.addr %s6714, 32
        %s6716 = smul.addr %s6715, 8
        %s6717 = scalar_lea.vmem %s11, %s6716
      $region80: #{_lambda_.1} parent=75 // pred_fallthru
        _
    $region76: #{_lambda_.1} parent=5 // pred_fallthru
      _
  $region6: #{_lambda_.1} parent=0 // loop_footer
    %s21 = sadd.s32 1, %s17
  $region7: #{_lambda_.1} parent=0 // loop_footer_branch
    %16 = sbr.rel target = $region3
  $region8: #{_lambda_.1} parent=0 // loop_exit
    _

</llo_original>
